<compile_context>
chip_gen: v7x
topology: tpu7x:2x2x1
jax: 0.10.0
libtpu: 0.0.40
codegen_flags: <defaults>
</compile_context>

<pallas_src>
import numpy as np
import jax
import jax.numpy as jnp
from jax.experimental import pallas as pl
from jax.experimental.pallas import tpu as pltpu


# ----------------------------------------------------------------------------
# Exact PyTorch F.interpolate(mode='bilinear', align_corners=False) expressed
# as a (out_size x in_size) interpolation matrix per spatial axis.
# ----------------------------------------------------------------------------
def _interp_matrix(out_size, in_size):
    scale = in_size / out_size
    i = np.arange(out_size)
    src = (i + 0.5) * scale - 0.5
    src = np.maximum(src, 0.0)               # PyTorch clamps negative src to 0
    x0 = np.floor(src).astype(np.int64)
    x0 = np.minimum(x0, in_size - 1)
    x1 = np.minimum(x0 + 1, in_size - 1)
    w1 = src - x0
    w0 = 1.0 - w1
    R = np.zeros((out_size, in_size), np.float32)
    R[i, x0] += w0
    R[i, x1] += w1
    return R


def _fold_bn(gamma, beta, mean, var, eps=1e-5):
    scale = gamma / jnp.sqrt(var + eps)
    bias = beta - mean * scale
    return scale.reshape(1, -1), bias.reshape(1, -1)


# ----------------------------------------------------------------------------
# Fused kernel builder.
# Per grid step (one batch element, "parallel" so v7x shards across both TCs):
#   (1) bottleneck 1x1 conv + folded BN + ReLU on skip        -> (Hs*Ws, Cmid)
#   (2) bilinear upsample of x (precomputed kron(Rh, Rw) matrix) + skip add
#   (3) 3x3 conv (pad=1) + folded BN + ReLU via in-VMEM halo padding and a
#       single im2col matmul (or 9 accumulated matmuls in the fallback path).
# ----------------------------------------------------------------------------
def _build_fused_call(N, Hs, Ws, Hx, Wx, Cskip, Cmid, Cout,
                      use_im2col, matmul_dtype):
    HWs, HWx = Hs * Ws, Hx * Wx
    PH = Hs + 2          # padded height (outer dim, offsets are free)
    W_OFF = 8            # sublane-tile-aligned interior column offset
    PW = Ws + 2 * W_OFF  # padded width; tap windows start at W_OFF-1..W_OFF+1

    def cast(v):
        return v if matmul_dtype is None else v.astype(matmul_dtype)

    def kernel(skip_ref, x_ref, r2_ref, w1_ref, s1_ref, b1_ref,
               w2_ref, s2_ref, b2_ref, o_ref, xp_ref):
        # (1) bottleneck: one (Hs*Ws, Cskip) @ (Cskip, Cmid) matmul, f32 epilogue.
        sb = jnp.dot(cast(skip_ref[0]), cast(w1_ref[...]),
                     preferred_element_type=jnp.float32)
        sb = jnp.maximum(sb * s1_ref[...] + b1_ref[...], 0.0)        # (HWs, Cmid)

        # (2) bilinear upsample (align_corners=False) + skip add:
        #     one (Hs*Ws, Hx*Wx) @ (Hx*Wx, Cmid) matmul per batch element.
        up = jnp.dot(cast(r2_ref[...]), cast(x_ref[0]),
                     preferred_element_type=jnp.float32)             # (HWs, Cmid)
        blended = up + sb

        # (3) 3x3 conv, pad=1: halo built in VMEM (no HBM pad round trip).
        #     Interior is stored at a sublane-aligned offset (W_OFF=8) so the
        #     write is an aligned full-tile store; the nine shifted views are
        #     unaligned *value* slices (cheap, proven lowering).
        xp_ref[...] = jnp.zeros_like(xp_ref)
        xp_ref[1:Hs + 1, W_OFF:W_OFF + Ws, :] = blended.reshape(Hs, Ws, Cmid)
        xp = xp_ref[...]
        views = [
            xp[dy:dy + Hs, W_OFF - 1 + dx:W_OFF - 1 + dx + Ws, :].reshape(HWs, Cmid)
            for dy in range(3) for dx in range(3)
        ]
        if use_im2col:
            # single K = 9*Cmid matmul (fills the MXU contraction depth).
            patches = jnp.concatenate(views, axis=-1)                # (HWs, 9*Cmid)
            y = jnp.dot(cast(patches), cast(w2_ref[...]),
                        preferred_element_type=jnp.float32)          # (HWs, Cout)
        else:
            # conservative fallback: nine accumulated K=Cmid matmuls.
            y = jnp.zeros((HWs, Cout), jnp.float32)
            for k, v in enumerate(views):
                y = y + jnp.dot(cast(v),
                                cast(w2_ref[k * Cmid:(k + 1) * Cmid, :]),
                                preferred_element_type=jnp.float32)
        y = jnp.maximum(y * s2_ref[...] + b2_ref[...], 0.0)          # f32 epilogue
        o_ref[0] = y.astype(o_ref.dtype)

    return pl.pallas_call(
        kernel,
        grid=(N,),
        out_shape=jax.ShapeDtypeStruct((N, HWs, Cout), jnp.float32),
        in_specs=[
            pl.BlockSpec((1, HWs, Cskip), lambda n: (n, 0, 0)),   # skip (NHWC, flat)
            pl.BlockSpec((1, HWx, Cmid), lambda n: (n, 0, 0)),    # x    (NHWC, flat)
            pl.BlockSpec((HWs, HWx), lambda n: (0, 0)),           # interp matrix
            pl.BlockSpec((Cskip, Cmid), lambda n: (0, 0)),        # w1 (1x1 conv)
            pl.BlockSpec((1, Cmid), lambda n: (0, 0)),            # s1 (folded BN)
            pl.BlockSpec((1, Cmid), lambda n: (0, 0)),            # b1
            pl.BlockSpec((9 * Cmid, Cout), lambda n: (0, 0)),     # w2 (im2col layout)
            pl.BlockSpec((1, Cout), lambda n: (0, 0)),            # s2
            pl.BlockSpec((1, Cout), lambda n: (0, 0)),            # b2
        ],
        out_specs=pl.BlockSpec((1, HWs, Cout), lambda n: (n, 0, 0)),
        scratch_shapes=[pltpu.VMEM((PH, PW, Cmid), jnp.float32)],  # halo scratch
        compiler_params=pltpu.CompilerParams(
            dimension_semantics=("parallel",)),
    )


# ----------------------------------------------------------------------------
# Full _Upsample forward (use_skip=True, detach_skip=False, fixed_size=None,
# separable=False — the module defaults).  API boundary is NCHW like PyTorch;
# everything in between is channels-last inside one fused Pallas kernel.
# ----------------------------------------------------------------------------
def upsample_forward(x_nchw, skip_nchw, params, *,
                     use_im2col=True, matmul_dtype=None):
    N, Cmid, Hx, Wx = x_nchw.shape
    _, Cskip, Hs, Ws = skip_nchw.shape
    Cout = params["w2"].shape[1]

    # API-boundary layout change only (free reshapes + one transpose each).
    skip_cl = jnp.transpose(skip_nchw, (0, 2, 3, 1)).reshape(N, Hs * Ws, Cskip)
    x_cl = jnp.transpose(x_nchw, (0, 2, 3, 1)).reshape(N, Hx * Wx, Cmid)

    # Exact bilinear (align_corners=False) as a single (Hs*Ws, Hx*Wx) matrix.
    # For large spatial sizes this would be replaced by a separable two-pass
    # (height then width) formulation; at decoder sizes it is small.
    r2 = jnp.asarray(np.kron(_interp_matrix(Hs, Hx), _interp_matrix(Ws, Wx)))

    call = _build_fused_call(N, Hs, Ws, Hx, Wx, Cskip, Cmid, Cout,
                             use_im2col, matmul_dtype)
    out = call(skip_cl, x_cl, r2,
               params["w1"], params["s1"], params["b1"],
               params["w2"], params["s2"], params["b2"])       # (N, Hs*Ws, Cout)
    return jnp.transpose(out.reshape(N, Hs, Ws, Cout), (0, 3, 1, 2))   # NCHW


# ----------------------------------------------------------------------------
# Pure-JAX reference (XLA ops only) used to validate the fused kernel.
# ----------------------------------------------------------------------------
def reference_forward(x_nchw, skip_nchw, params):
    N, Cmid, Hx, Wx = x_nchw.shape
    _, Cskip, Hs, Ws = skip_nchw.shape
    Cout = params["w2"].shape[1]
    hi = jax.lax.Precision.HIGHEST

    skip_nhwc = jnp.transpose(skip_nchw, (0, 2, 3, 1))
    x_nhwc = jnp.transpose(x_nchw, (0, 2, 3, 1))

    sb = jnp.einsum('nhwc,cd->nhwd', skip_nhwc, params["w1"], precision=hi)
    sb = jnp.maximum(sb * params["s1"] + params["b1"], 0.0)

    rh = jnp.asarray(_interp_matrix(Hs, Hx))
    rw = jnp.asarray(_interp_matrix(Ws, Wx))
    up = jnp.einsum('ab,cd,nbdk->nack', rh, rw, x_nhwc, precision=hi)
    blended = up + sb

    w_hwio = params["w2"].reshape(3, 3, Cmid, Cout)
    y = jax.lax.conv_general_dilated(
        blended, w_hwio, (1, 1), 'SAME',
        dimension_numbers=('NHWC', 'HWIO', 'NHWC'), precision=hi)
    y = jnp.maximum(y * params["s2"] + params["b2"], 0.0)
    return jnp.transpose(y, (0, 3, 1, 2))


def init_params(key, skip_maps_in, num_maps_in, num_maps_out):
    ks = jax.random.split(key, 10)
    # bottleneck 1x1 conv weight, PyTorch layout [out, in, 1, 1] -> [in, out]
    w1_pt = 0.1 * jax.random.normal(ks[0], (num_maps_in, skip_maps_in, 1, 1), jnp.float32)
    w1 = jnp.transpose(w1_pt[:, :, 0, 0], (1, 0))
    g1 = 1.0 + 0.1 * jax.random.normal(ks[1], (num_maps_in,), jnp.float32)
    be1 = 0.1 * jax.random.normal(ks[2], (num_maps_in,), jnp.float32)
    m1 = 0.1 * jax.random.normal(ks[3], (num_maps_in,), jnp.float32)
    v1 = jax.random.uniform(ks[4], (num_maps_in,), jnp.float32, 0.5, 1.5)
    s1, b1 = _fold_bn(g1, be1, m1, v1)

    # blend 3x3 conv weight, PyTorch layout [out, in, 3, 3]
    #   -> im2col layout [(ky*3+kx)*Cin + cin, out]
    w2_pt = 0.05 * jax.random.normal(ks[5], (num_maps_out, num_maps_in, 3, 3), jnp.float32)
    w2 = jnp.transpose(w2_pt, (2, 3, 1, 0)).reshape(9 * num_maps_in, num_maps_out)
    g2 = 1.0 + 0.1 * jax.random.normal(ks[6], (num_maps_out,), jnp.float32)
    be2 = 0.1 * jax.random.normal(ks[7], (num_maps_out,), jnp.float32)
    m2 = 0.1 * jax.random.normal(ks[8], (num_maps_out,), jnp.float32)
    v2 = jax.random.uniform(ks[9], (num_maps_out,), jnp.float32, 0.5, 1.5)
    s2, b2 = _fold_bn(g2, be2, m2, v2)

    return {"w1": w1, "s1": s1, "b1": b1, "w2": w2, "s2": s2, "b2": b2}


if __name__ == "__main__":
    # _Upsample(num_maps_in=32, skip_maps_in=16, num_maps_out=32)
    N = 2
    skip_maps_in, num_maps_in, num_maps_out = 16, 32, 32
    Hx, Wx = 8, 8          # low-res decoder feature
    Hs, Ws = 16, 16        # skip-connection resolution

    key = jax.random.PRNGKey(0)
    kx, kskip, kparams = jax.random.split(key, 3)
    x = jax.random.normal(kx, (N, num_maps_in, Hx, Wx), jnp.float32)
    skip = jax.random.normal(kskip, (N, skip_maps_in, Hs, Ws), jnp.float32)
    params = init_params(kparams, skip_maps_in, num_maps_in, num_maps_out)

    ref = jax.block_until_ready(reference_forward(x, skip, params))

    fwd = jax.jit(upsample_forward, static_argnames=("use_im2col", "matmul_dtype"))
    # On v6e/v7x, matmul_dtype=jnp.bfloat16 halves matmul-operand traffic while
    # keeping f32 accumulation + f32 epilogue; default f32 matches PyTorch.

    def _run(use_im2col):
        out = jax.block_until_ready(fwd(x, skip, params, use_im2col=use_im2col))
        assert out.shape == (N, num_maps_out, Hs, Ws), out.shape
        np.testing.assert_allclose(np.asarray(out), np.asarray(ref),
                                   rtol=2e-2, atol=2e-2)
        return out

    try:
        out = _run(True)          # single im2col matmul (preferred)
    except Exception:
        out = _run(False)         # fallback: nine accumulated matmuls

    assert bool(jnp.all(jnp.isfinite(out)))
    assert bool(jnp.all(out >= 0.0))  # final ReLU
    print("KERNEL_OK")
</pallas_src>

<mosaic_0001>
module attributes {stable_mosaic.version = 11 : i64} {
  func.func @kernel(%arg0: i32, %arg1: memref<1x256x16xf32, #tpu.memory_space<vmem>>, %arg2: memref<1x64x32xf32, #tpu.memory_space<vmem>>, %arg3: memref<256x64xf32, #tpu.memory_space<vmem>>, %arg4: memref<16x32xf32, #tpu.memory_space<vmem>>, %arg5: memref<1x32xf32, #tpu.memory_space<vmem>>, %arg6: memref<1x32xf32, #tpu.memory_space<vmem>>, %arg7: memref<288x32xf32, #tpu.memory_space<vmem>>, %arg8: memref<1x32xf32, #tpu.memory_space<vmem>>, %arg9: memref<1x32xf32, #tpu.memory_space<vmem>>, %arg10: memref<1x256x32xf32, #tpu.memory_space<vmem>>, %arg11: memref<18x32x32xf32, #tpu.memory_space<vmem>>) attributes {dimension_semantics = [#tpu.dimension_semantics<parallel>], iteration_bounds = array<i64: 2>, scalar_prefetch = 0 : i64, scratch_operands = 1 : i64, tpu.core_type = #tpu.core_type<tc>, window_params = [{transform_indices = @transform_0, window_bounds = array<i64: 1, 256, 16>}, {transform_indices = @transform_1, window_bounds = array<i64: 1, 64, 32>}, {pipeline_mode = #tpu.pipeline_mode<synchronous>, transform_indices = @transform_2, window_bounds = array<i64: 256, 64>}, {pipeline_mode = #tpu.pipeline_mode<synchronous>, transform_indices = @transform_3, window_bounds = array<i64: 16, 32>}, {pipeline_mode = #tpu.pipeline_mode<synchronous>, transform_indices = @transform_4, window_bounds = array<i64: 1, 32>}, {pipeline_mode = #tpu.pipeline_mode<synchronous>, transform_indices = @transform_5, window_bounds = array<i64: 1, 32>}, {pipeline_mode = #tpu.pipeline_mode<synchronous>, transform_indices = @transform_6, window_bounds = array<i64: 288, 32>}, {pipeline_mode = #tpu.pipeline_mode<synchronous>, transform_indices = @transform_7, window_bounds = array<i64: 1, 32>}, {pipeline_mode = #tpu.pipeline_mode<synchronous>, transform_indices = @transform_8, window_bounds = array<i64: 1, 32>}, {transform_indices = @transform_9, window_bounds = array<i64: 1, 256, 32>}]} {
    %c0 = arith.constant 0 : index
    %c0_0 = arith.constant 0 : index
    %c0_1 = arith.constant 0 : index
    %0 = vector.load %arg1[%c0, %c0_0, %c0_1] : memref<1x256x16xf32, #tpu.memory_space<vmem>>, vector<1x256x16xf32>
    %1 = vector.shape_cast %0 : vector<1x256x16xf32> to vector<256x16xf32>
    %c0_2 = arith.constant 0 : index
    %c0_3 = arith.constant 0 : index
    %2 = vector.load %arg4[%c0_2, %c0_3] : memref<16x32xf32, #tpu.memory_space<vmem>>, vector<16x32xf32>
    %cst = arith.constant dense<0.000000e+00> : vector<256x32xf32>
    %3 = tpu.matmul %1, %2, %cst {dimension_numbers = #tpu.dot_dimension_numbers<[1], [0], [0], [1], [0, 0, 1, 1], [], []>} : vector<256x16xf32>, vector<16x32xf32>, vector<256x32xf32> -> vector<256x32xf32>
    %c0_4 = arith.constant 0 : index
    %c0_5 = arith.constant 0 : index
    %4 = vector.load %arg5[%c0_4, %c0_5] : memref<1x32xf32, #tpu.memory_space<vmem>>, vector<1x32xf32>
    %5 = vector.broadcast %4 : vector<1x32xf32> to vector<256x32xf32>
    %6 = arith.mulf %3, %5 : vector<256x32xf32>
    %c0_6 = arith.constant 0 : index
    %c0_7 = arith.constant 0 : index
    %7 = vector.load %arg6[%c0_6, %c0_7] : memref<1x32xf32, #tpu.memory_space<vmem>>, vector<1x32xf32>
    %8 = vector.broadcast %7 : vector<1x32xf32> to vector<256x32xf32>
    %9 = arith.addf %6, %8 : vector<256x32xf32>
    %cst_8 = arith.constant 0.000000e+00 : f32
    %10 = vector.broadcast %cst_8 : f32 to vector<256x32xf32>
    %11 = arith.maximumf %9, %10 : vector<256x32xf32>
    %c0_9 = arith.constant 0 : index
    %c0_10 = arith.constant 0 : index
    %12 = vector.load %arg3[%c0_9, %c0_10] : memref<256x64xf32, #tpu.memory_space<vmem>>, vector<256x64xf32>
    %c0_11 = arith.constant 0 : index
    %c0_12 = arith.constant 0 : index
    %c0_13 = arith.constant 0 : index
    %13 = vector.load %arg2[%c0_11, %c0_12, %c0_13] : memref<1x64x32xf32, #tpu.memory_space<vmem>>, vector<1x64x32xf32>
    %14 = vector.shape_cast %13 : vector<1x64x32xf32> to vector<64x32xf32>
    %cst_14 = arith.constant dense<0.000000e+00> : vector<256x32xf32>
    %15 = tpu.matmul %12, %14, %cst_14 {dimension_numbers = #tpu.dot_dimension_numbers<[1], [0], [0], [1], [0, 0, 1, 1], [], []>} : vector<256x64xf32>, vector<64x32xf32>, vector<256x32xf32> -> vector<256x32xf32>
    %16 = arith.addf %15, %11 : vector<256x32xf32>
    %cst_15 = arith.constant 0.000000e+00 : f32
    %17 = vector.broadcast %cst_15 : f32 to vector<18x32x32xf32>
    %c0_16 = arith.constant 0 : index
    %c0_17 = arith.constant 0 : index
    %c0_18 = arith.constant 0 : index
    %18 = vector.load %arg11[%c0_16, %c0_17, %c0_18] : memref<18x32x32xf32, #tpu.memory_space<vmem>>, vector<18x32x32xf32>
    tpu.vector_store %arg11[%c0_16, %c0_17, %c0_18], %17 {strides = array<i32>} : memref<18x32x32xf32, #tpu.memory_space<vmem>>, vector<18x32x32xf32>,
    %19 = vector.shape_cast %16 : vector<256x32xf32> to vector<16x16x32xf32>
    %c1 = arith.constant 1 : index
    %c8 = arith.constant 8 : index
    %c0_19 = arith.constant 0 : index
    %20 = vector.load %arg11[%c1, %c8, %c0_19] : memref<18x32x32xf32, #tpu.memory_space<vmem>>, vector<16x16x32xf32>
    tpu.vector_store %arg11[%c1, %c8, %c0_19], %19 {strides = array<i32>} : memref<18x32x32xf32, #tpu.memory_space<vmem>>, vector<16x16x32xf32>,
    %c0_20 = arith.constant 0 : index
    %c0_21 = arith.constant 0 : index
    %c0_22 = arith.constant 0 : index
    %21 = vector.load %arg11[%c0_20, %c0_21, %c0_22] : memref<18x32x32xf32, #tpu.memory_space<vmem>>, vector<18x32x32xf32>
    %22 = vector.extract_strided_slice %21 {offsets = [0, 7, 0], sizes = [16, 16, 32], strides = [1, 1, 1]} : vector<18x32x32xf32> to vector<16x16x32xf32>
    %23 = vector.shape_cast %22 : vector<16x16x32xf32> to vector<256x32xf32>
    %24 = vector.extract_strided_slice %21 {offsets = [0, 8, 0], sizes = [16, 16, 32], strides = [1, 1, 1]} : vector<18x32x32xf32> to vector<16x16x32xf32>
    %25 = vector.shape_cast %24 : vector<16x16x32xf32> to vector<256x32xf32>
    %26 = vector.extract_strided_slice %21 {offsets = [0, 9, 0], sizes = [16, 16, 32], strides = [1, 1, 1]} : vector<18x32x32xf32> to vector<16x16x32xf32>
    %27 = vector.shape_cast %26 : vector<16x16x32xf32> to vector<256x32xf32>
    %28 = vector.extract_strided_slice %21 {offsets = [1, 7, 0], sizes = [16, 16, 32], strides = [1, 1, 1]} : vector<18x32x32xf32> to vector<16x16x32xf32>
    %29 = vector.shape_cast %28 : vector<16x16x32xf32> to vector<256x32xf32>
    %30 = vector.extract_strided_slice %21 {offsets = [1, 8, 0], sizes = [16, 16, 32], strides = [1, 1, 1]} : vector<18x32x32xf32> to vector<16x16x32xf32>
    %31 = vector.shape_cast %30 : vector<16x16x32xf32> to vector<256x32xf32>
    %32 = vector.extract_strided_slice %21 {offsets = [1, 9, 0], sizes = [16, 16, 32], strides = [1, 1, 1]} : vector<18x32x32xf32> to vector<16x16x32xf32>
    %33 = vector.shape_cast %32 : vector<16x16x32xf32> to vector<256x32xf32>
    %34 = vector.extract_strided_slice %21 {offsets = [2, 7, 0], sizes = [16, 16, 32], strides = [1, 1, 1]} : vector<18x32x32xf32> to vector<16x16x32xf32>
    %35 = vector.shape_cast %34 : vector<16x16x32xf32> to vector<256x32xf32>
    %36 = vector.extract_strided_slice %21 {offsets = [2, 8, 0], sizes = [16, 16, 32], strides = [1, 1, 1]} : vector<18x32x32xf32> to vector<16x16x32xf32>
    %37 = vector.shape_cast %36 : vector<16x16x32xf32> to vector<256x32xf32>
    %38 = vector.extract_strided_slice %21 {offsets = [2, 9, 0], sizes = [16, 16, 32], strides = [1, 1, 1]} : vector<18x32x32xf32> to vector<16x16x32xf32>
    %39 = vector.shape_cast %38 : vector<16x16x32xf32> to vector<256x32xf32>
    %40 = tpu.concatenate %23, %25, %27, %29, %31, %33, %35, %37, %39 in 1 : vector<256x32xf32>, vector<256x32xf32>, vector<256x32xf32>, vector<256x32xf32>, vector<256x32xf32>, vector<256x32xf32>, vector<256x32xf32>, vector<256x32xf32>, vector<256x32xf32> -> vector<256x288xf32>
    %c0_23 = arith.constant 0 : index
    %c0_24 = arith.constant 0 : index
    %41 = vector.load %arg7[%c0_23, %c0_24] : memref<288x32xf32, #tpu.memory_space<vmem>>, vector<288x32xf32>
    %cst_25 = arith.constant dense<0.000000e+00> : vector<256x32xf32>
    %42 = tpu.matmul %40, %41, %cst_25 {dimension_numbers = #tpu.dot_dimension_numbers<[1], [0], [0], [1], [0, 0, 1, 1], [], []>} : vector<256x288xf32>, vector<288x32xf32>, vector<256x32xf32> -> vector<256x32xf32>
    %c0_26 = arith.constant 0 : index
    %c0_27 = arith.constant 0 : index
    %43 = vector.load %arg8[%c0_26, %c0_27] : memref<1x32xf32, #tpu.memory_space<vmem>>, vector<1x32xf32>
    %44 = vector.broadcast %43 : vector<1x32xf32> to vector<256x32xf32>
    %45 = arith.mulf %42, %44 : vector<256x32xf32>
    %c0_28 = arith.constant 0 : index
    %c0_29 = arith.constant 0 : index
    %46 = vector.load %arg9[%c0_28, %c0_29] : memref<1x32xf32, #tpu.memory_space<vmem>>, vector<1x32xf32>
    %47 = vector.broadcast %46 : vector<1x32xf32> to vector<256x32xf32>
    %48 = arith.addf %45, %47 : vector<256x32xf32>
    %cst_30 = arith.constant 0.000000e+00 : f32
    %49 = vector.broadcast %cst_30 : f32 to vector<256x32xf32>
    %50 = arith.maximumf %48, %49 : vector<256x32xf32>
    %c0_31 = arith.constant 0 : index
    %c0_32 = arith.constant 0 : index
    %c0_33 = arith.constant 0 : index
    %51 = vector.load %arg10[%c0_31, %c0_32, %c0_33] : memref<1x256x32xf32, #tpu.memory_space<vmem>>, vector<1x256x32xf32>
    %52 = vector.shape_cast %51 : vector<1x256x32xf32> to vector<256x32xf32>
    %53 = vector.shape_cast %50 : vector<256x32xf32> to vector<1x256x32xf32>
    tpu.vector_store %arg10[%c0_31, %c0_32, %c0_33], %53 {strides = array<i32>} : memref<1x256x32xf32, #tpu.memory_space<vmem>>, vector<1x256x32xf32>,
    return
  }
  func.func @transform_0(%arg0: i32) -> (i32, i32, i32) {
    %c0_i32 = arith.constant 0 : i32
    %c0_i32_0 = arith.constant 0 : i32
    %c0_i32_1 = arith.constant 0 : i32
    return %arg0, %c0_i32, %c0_i32_0 : i32, i32, i32
  }
  func.func @transform_1(%arg0: i32) -> (i32, i32, i32) {
    %c0_i32 = arith.constant 0 : i32
    %c0_i32_0 = arith.constant 0 : i32
    %c0_i32_1 = arith.constant 0 : i32
    return %arg0, %c0_i32, %c0_i32_0 : i32, i32, i32
  }
  func.func @transform_2(%arg0: i32) -> (i32, i32) {
    %c0_i32 = arith.constant 0 : i32
    %c0_i32_0 = arith.constant 0 : i32
    %c0_i32_1 = arith.constant 0 : i32
    return %c0_i32, %c0_i32_0 : i32, i32
  }
  func.func @transform_3(%arg0: i32) -> (i32, i32) {
    %c0_i32 = arith.constant 0 : i32
    %c0_i32_0 = arith.constant 0 : i32
    %c0_i32_1 = arith.constant 0 : i32
    return %c0_i32, %c0_i32_0 : i32, i32
  }
  func.func @transform_4(%arg0: i32) -> (i32, i32) {
    %c0_i32 = arith.constant 0 : i32
    %c0_i32_0 = arith.constant 0 : i32
    %c0_i32_1 = arith.constant 0 : i32
    return %c0_i32, %c0_i32_0 : i32, i32
  }
  func.func @transform_5(%arg0: i32) -> (i32, i32) {
    %c0_i32 = arith.constant 0 : i32
    %c0_i32_0 = arith.constant 0 : i32
    %c0_i32_1 = arith.constant 0 : i32
    return %c0_i32, %c0_i32_0 : i32, i32
  }
  func.func @transform_6(%arg0: i32) -> (i32, i32) {
    %c0_i32 = arith.constant 0 : i32
    %c0_i32_0 = arith.constant 0 : i32
    %c0_i32_1 = arith.constant 0 : i32
    return %c0_i32, %c0_i32_0 : i32, i32
  }
  func.func @transform_7(%arg0: i32) -> (i32, i32) {
    %c0_i32 = arith.constant 0 : i32
    %c0_i32_0 = arith.constant 0 : i32
    %c0_i32_1 = arith.constant 0 : i32
    return %c0_i32, %c0_i32_0 : i32, i32
  }
  func.func @transform_8(%arg0: i32) -> (i32, i32) {
    %c0_i32 = arith.constant 0 : i32
    %c0_i32_0 = arith.constant 0 : i32
    %c0_i32_1 = arith.constant 0 : i32
    return %c0_i32, %c0_i32_0 : i32, i32
  }
  func.func @transform_9(%arg0: i32) -> (i32, i32, i32) {
    %c0_i32 = arith.constant 0 : i32
    %c0_i32_0 = arith.constant 0 : i32
    %c0_i32_1 = arith.constant 0 : i32
    return %arg0, %c0_i32, %c0_i32_0 : i32, i32, i32
  }
}

module attributes {stable_mosaic.version = 11 : i64} {
  func.func @kernel(%arg0: i32, %arg1: memref<1x256x16xf32, #tpu.memory_space<vmem>>, %arg2: memref<1x64x32xf32, #tpu.memory_space<vmem>>, %arg3: memref<256x64xf32, #tpu.memory_space<vmem>>, %arg4: memref<16x32xf32, #tpu.memory_space<vmem>>, %arg5: memref<1x32xf32, #tpu.memory_space<vmem>>, %arg6: memref<1x32xf32, #tpu.memory_space<vmem>>, %arg7: memref<288x32xf32, #tpu.memory_space<vmem>>, %arg8: memref<1x32xf32, #tpu.memory_space<vmem>>, %arg9: memref<1x32xf32, #tpu.memory_space<vmem>>, %arg10: memref<1x256x32xf32, #tpu.memory_space<vmem>>, %arg11: memref<18x32x32xf32, #tpu.memory_space<vmem>>) attributes {dimension_semantics = [#tpu.dimension_semantics<parallel>], iteration_bounds = array<i64: 2>, scalar_prefetch = 0 : i64, scratch_operands = 1 : i64, tpu.core_type = #tpu.core_type<tc>, window_params = [{transform_indices = @transform_0, window_bounds = array<i64: 1, 256, 16>}, {transform_indices = @transform_1, window_bounds = array<i64: 1, 64, 32>}, {pipeline_mode = #tpu.pipeline_mode<synchronous>, transform_indices = @transform_2, window_bounds = array<i64: 256, 64>}, {pipeline_mode = #tpu.pipeline_mode<synchronous>, transform_indices = @transform_3, window_bounds = array<i64: 16, 32>}, {pipeline_mode = #tpu.pipeline_mode<synchronous>, transform_indices = @transform_4, window_bounds = array<i64: 1, 32>}, {pipeline_mode = #tpu.pipeline_mode<synchronous>, transform_indices = @transform_5, window_bounds = array<i64: 1, 32>}, {pipeline_mode = #tpu.pipeline_mode<synchronous>, transform_indices = @transform_6, window_bounds = array<i64: 288, 32>}, {pipeline_mode = #tpu.pipeline_mode<synchronous>, transform_indices = @transform_7, window_bounds = array<i64: 1, 32>}, {pipeline_mode = #tpu.pipeline_mode<synchronous>, transform_indices = @transform_8, window_bounds = array<i64: 1, 32>}, {transform_indices = @transform_9, window_bounds = array<i64: 1, 256, 32>}]} {
    %c0 = arith.constant 0 : index
    %c0_0 = arith.constant 0 : index
    %c0_1 = arith.constant 0 : index
    %0 = vector.load %arg1[%c0, %c0_0, %c0_1] : memref<1x256x16xf32, #tpu.memory_space<vmem>>, vector<1x256x16xf32>
    %1 = vector.shape_cast %0 : vector<1x256x16xf32> to vector<256x16xf32>
    %c0_2 = arith.constant 0 : index
    %c0_3 = arith.constant 0 : index
    %2 = vector.load %arg4[%c0_2, %c0_3] : memref<16x32xf32, #tpu.memory_space<vmem>>, vector<16x32xf32>
    %cst = arith.constant dense<0.000000e+00> : vector<256x32xf32>
    %3 = tpu.matmul %1, %2, %cst {dimension_numbers = #tpu.dot_dimension_numbers<[1], [0], [0], [1], [0, 0, 1, 1], [], []>} : vector<256x16xf32>, vector<16x32xf32>, vector<256x32xf32> -> vector<256x32xf32>
    %c0_4 = arith.constant 0 : index
    %c0_5 = arith.constant 0 : index
    %4 = vector.load %arg5[%c0_4, %c0_5] : memref<1x32xf32, #tpu.memory_space<vmem>>, vector<1x32xf32>
    %5 = vector.broadcast %4 : vector<1x32xf32> to vector<256x32xf32>
    %6 = arith.mulf %3, %5 : vector<256x32xf32>
    %c0_6 = arith.constant 0 : index
    %c0_7 = arith.constant 0 : index
    %7 = vector.load %arg6[%c0_6, %c0_7] : memref<1x32xf32, #tpu.memory_space<vmem>>, vector<1x32xf32>
    %8 = vector.broadcast %7 : vector<1x32xf32> to vector<256x32xf32>
    %9 = arith.addf %6, %8 : vector<256x32xf32>
    %cst_8 = arith.constant 0.000000e+00 : f32
    %10 = vector.broadcast %cst_8 : f32 to vector<256x32xf32>
    %11 = arith.maximumf %9, %10 : vector<256x32xf32>
    %c0_9 = arith.constant 0 : index
    %c0_10 = arith.constant 0 : index
    %12 = vector.load %arg3[%c0_9, %c0_10] : memref<256x64xf32, #tpu.memory_space<vmem>>, vector<256x64xf32>
    %c0_11 = arith.constant 0 : index
    %c0_12 = arith.constant 0 : index
    %c0_13 = arith.constant 0 : index
    %13 = vector.load %arg2[%c0_11, %c0_12, %c0_13] : memref<1x64x32xf32, #tpu.memory_space<vmem>>, vector<1x64x32xf32>
    %14 = vector.shape_cast %13 : vector<1x64x32xf32> to vector<64x32xf32>
    %cst_14 = arith.constant dense<0.000000e+00> : vector<256x32xf32>
    %15 = tpu.matmul %12, %14, %cst_14 {dimension_numbers = #tpu.dot_dimension_numbers<[1], [0], [0], [1], [0, 0, 1, 1], [], []>} : vector<256x64xf32>, vector<64x32xf32>, vector<256x32xf32> -> vector<256x32xf32>
    %16 = arith.addf %15, %11 : vector<256x32xf32>
    %cst_15 = arith.constant 0.000000e+00 : f32
    %17 = vector.broadcast %cst_15 : f32 to vector<18x32x32xf32>
    %c0_16 = arith.constant 0 : index
    %c0_17 = arith.constant 0 : index
    %c0_18 = arith.constant 0 : index
    %18 = vector.load %arg11[%c0_16, %c0_17, %c0_18] : memref<18x32x32xf32, #tpu.memory_space<vmem>>, vector<18x32x32xf32>
    tpu.vector_store %arg11[%c0_16, %c0_17, %c0_18], %17 {strides = array<i32>} : memref<18x32x32xf32, #tpu.memory_space<vmem>>, vector<18x32x32xf32>,
    %19 = vector.shape_cast %16 : vector<256x32xf32> to vector<16x16x32xf32>
    %c1 = arith.constant 1 : index
    %c8 = arith.constant 8 : index
    %c0_19 = arith.constant 0 : index
    %20 = vector.load %arg11[%c1, %c8, %c0_19] : memref<18x32x32xf32, #tpu.memory_space<vmem>>, vector<16x16x32xf32>
    tpu.vector_store %arg11[%c1, %c8, %c0_19], %19 {strides = array<i32>} : memref<18x32x32xf32, #tpu.memory_space<vmem>>, vector<16x16x32xf32>,
    %c0_20 = arith.constant 0 : index
    %c0_21 = arith.constant 0 : index
    %c0_22 = arith.constant 0 : index
    %21 = vector.load %arg11[%c0_20, %c0_21, %c0_22] : memref<18x32x32xf32, #tpu.memory_space<vmem>>, vector<18x32x32xf32>
    %22 = vector.extract_strided_slice %21 {offsets = [0, 7, 0], sizes = [16, 16, 32], strides = [1, 1, 1]} : vector<18x32x32xf32> to vector<16x16x32xf32>
    %23 = vector.shape_cast %22 : vector<16x16x32xf32> to vector<256x32xf32>
    %24 = vector.extract_strided_slice %21 {offsets = [0, 8, 0], sizes = [16, 16, 32], strides = [1, 1, 1]} : vector<18x32x32xf32> to vector<16x16x32xf32>
    %25 = vector.shape_cast %24 : vector<16x16x32xf32> to vector<256x32xf32>
    %26 = vector.extract_strided_slice %21 {offsets = [0, 9, 0], sizes = [16, 16, 32], strides = [1, 1, 1]} : vector<18x32x32xf32> to vector<16x16x32xf32>
    %27 = vector.shape_cast %26 : vector<16x16x32xf32> to vector<256x32xf32>
    %28 = vector.extract_strided_slice %21 {offsets = [1, 7, 0], sizes = [16, 16, 32], strides = [1, 1, 1]} : vector<18x32x32xf32> to vector<16x16x32xf32>
    %29 = vector.shape_cast %28 : vector<16x16x32xf32> to vector<256x32xf32>
    %30 = vector.extract_strided_slice %21 {offsets = [1, 8, 0], sizes = [16, 16, 32], strides = [1, 1, 1]} : vector<18x32x32xf32> to vector<16x16x32xf32>
    %31 = vector.shape_cast %30 : vector<16x16x32xf32> to vector<256x32xf32>
    %32 = vector.extract_strided_slice %21 {offsets = [1, 9, 0], sizes = [16, 16, 32], strides = [1, 1, 1]} : vector<18x32x32xf32> to vector<16x16x32xf32>
    %33 = vector.shape_cast %32 : vector<16x16x32xf32> to vector<256x32xf32>
    %34 = vector.extract_strided_slice %21 {offsets = [2, 7, 0], sizes = [16, 16, 32], strides = [1, 1, 1]} : vector<18x32x32xf32> to vector<16x16x32xf32>
    %35 = vector.shape_cast %34 : vector<16x16x32xf32> to vector<256x32xf32>
    %36 = vector.extract_strided_slice %21 {offsets = [2, 8, 0], sizes = [16, 16, 32], strides = [1, 1, 1]} : vector<18x32x32xf32> to vector<16x16x32xf32>
    %37 = vector.shape_cast %36 : vector<16x16x32xf32> to vector<256x32xf32>
    %38 = vector.extract_strided_slice %21 {offsets = [2, 9, 0], sizes = [16, 16, 32], strides = [1, 1, 1]} : vector<18x32x32xf32> to vector<16x16x32xf32>
    %39 = vector.shape_cast %38 : vector<16x16x32xf32> to vector<256x32xf32>
    %cst_23 = arith.constant 0.000000e+00 : f32
    %40 = vector.broadcast %cst_23 : f32 to vector<256x32xf32>
    %c0_24 = arith.constant 0 : index
    %c0_25 = arith.constant 0 : index
    %41 = vector.load %arg7[%c0_24, %c0_25] : memref<288x32xf32, #tpu.memory_space<vmem>>, vector<32x32xf32>
    %cst_26 = arith.constant dense<0.000000e+00> : vector<256x32xf32>
    %42 = tpu.matmul %23, %41, %cst_26 {dimension_numbers = #tpu.dot_dimension_numbers<[1], [0], [0], [1], [0, 0, 1, 1], [], []>} : vector<256x32xf32>, vector<32x32xf32>, vector<256x32xf32> -> vector<256x32xf32>
    %43 = arith.addf %40, %42 : vector<256x32xf32>
    %c32 = arith.constant 32 : index
    %c0_27 = arith.constant 0 : index
    %44 = vector.load %arg7[%c32, %c0_27] : memref<288x32xf32, #tpu.memory_space<vmem>>, vector<32x32xf32>
    %cst_28 = arith.constant dense<0.000000e+00> : vector<256x32xf32>
    %45 = tpu.matmul %25, %44, %cst_28 {dimension_numbers = #tpu.dot_dimension_numbers<[1], [0], [0], [1], [0, 0, 1, 1], [], []>} : vector<256x32xf32>, vector<32x32xf32>, vector<256x32xf32> -> vector<256x32xf32>
    %46 = arith.addf %43, %45 : vector<256x32xf32>
    %c64 = arith.constant 64 : index
    %c0_29 = arith.constant 0 : index
    %47 = vector.load %arg7[%c64, %c0_29] : memref<288x32xf32, #tpu.memory_space<vmem>>, vector<32x32xf32>
    %cst_30 = arith.constant dense<0.000000e+00> : vector<256x32xf32>
    %48 = tpu.matmul %27, %47, %cst_30 {dimension_numbers = #tpu.dot_dimension_numbers<[1], [0], [0], [1], [0, 0, 1, 1], [], []>} : vector<256x32xf32>, vector<32x32xf32>, vector<256x32xf32> -> vector<256x32xf32>
    %49 = arith.addf %46, %48 : vector<256x32xf32>
    %c96 = arith.constant 96 : index
    %c0_31 = arith.constant 0 : index
    %50 = vector.load %arg7[%c96, %c0_31] : memref<288x32xf32, #tpu.memory_space<vmem>>, vector<32x32xf32>
    %cst_32 = arith.constant dense<0.000000e+00> : vector<256x32xf32>
    %51 = tpu.matmul %29, %50, %cst_32 {dimension_numbers = #tpu.dot_dimension_numbers<[1], [0], [0], [1], [0, 0, 1, 1], [], []>} : vector<256x32xf32>, vector<32x32xf32>, vector<256x32xf32> -> vector<256x32xf32>
    %52 = arith.addf %49, %51 : vector<256x32xf32>
    %c128 = arith.constant 128 : index
    %c0_33 = arith.constant 0 : index
    %53 = vector.load %arg7[%c128, %c0_33] : memref<288x32xf32, #tpu.memory_space<vmem>>, vector<32x32xf32>
    %cst_34 = arith.constant dense<0.000000e+00> : vector<256x32xf32>
    %54 = tpu.matmul %31, %53, %cst_34 {dimension_numbers = #tpu.dot_dimension_numbers<[1], [0], [0], [1], [0, 0, 1, 1], [], []>} : vector<256x32xf32>, vector<32x32xf32>, vector<256x32xf32> -> vector<256x32xf32>
    %55 = arith.addf %52, %54 : vector<256x32xf32>
    %c160 = arith.constant 160 : index
    %c0_35 = arith.constant 0 : index
    %56 = vector.load %arg7[%c160, %c0_35] : memref<288x32xf32, #tpu.memory_space<vmem>>, vector<32x32xf32>
    %cst_36 = arith.constant dense<0.000000e+00> : vector<256x32xf32>
    %57 = tpu.matmul %33, %56, %cst_36 {dimension_numbers = #tpu.dot_dimension_numbers<[1], [0], [0], [1], [0, 0, 1, 1], [], []>} : vector<256x32xf32>, vector<32x32xf32>, vector<256x32xf32> -> vector<256x32xf32>
    %58 = arith.addf %55, %57 : vector<256x32xf32>
    %c192 = arith.constant 192 : index
    %c0_37 = arith.constant 0 : index
    %59 = vector.load %arg7[%c192, %c0_37] : memref<288x32xf32, #tpu.memory_space<vmem>>, vector<32x32xf32>
    %cst_38 = arith.constant dense<0.000000e+00> : vector<256x32xf32>
    %60 = tpu.matmul %35, %59, %cst_38 {dimension_numbers = #tpu.dot_dimension_numbers<[1], [0], [0], [1], [0, 0, 1, 1], [], []>} : vector<256x32xf32>, vector<32x32xf32>, vector<256x32xf32> -> vector<256x32xf32>
    %61 = arith.addf %58, %60 : vector<256x32xf32>
    %c224 = arith.constant 224 : index
    %c0_39 = arith.constant 0 : index
    %62 = vector.load %arg7[%c224, %c0_39] : memref<288x32xf32, #tpu.memory_space<vmem>>, vector<32x32xf32>
    %cst_40 = arith.constant dense<0.000000e+00> : vector<256x32xf32>
    %63 = tpu.matmul %37, %62, %cst_40 {dimension_numbers = #tpu.dot_dimension_numbers<[1], [0], [0], [1], [0, 0, 1, 1], [], []>} : vector<256x32xf32>, vector<32x32xf32>, vector<256x32xf32> -> vector<256x32xf32>
    %64 = arith.addf %61, %63 : vector<256x32xf32>
    %c256 = arith.constant 256 : index
    %c0_41 = arith.constant 0 : index
    %65 = vector.load %arg7[%c256, %c0_41] : memref<288x32xf32, #tpu.memory_space<vmem>>, vector<32x32xf32>
    %cst_42 = arith.constant dense<0.000000e+00> : vector<256x32xf32>
    %66 = tpu.matmul %39, %65, %cst_42 {dimension_numbers = #tpu.dot_dimension_numbers<[1], [0], [0], [1], [0, 0, 1, 1], [], []>} : vector<256x32xf32>, vector<32x32xf32>, vector<256x32xf32> -> vector<256x32xf32>
    %67 = arith.addf %64, %66 : vector<256x32xf32>
    %c0_43 = arith.constant 0 : index
    %c0_44 = arith.constant 0 : index
    %68 = vector.load %arg8[%c0_43, %c0_44] : memref<1x32xf32, #tpu.memory_space<vmem>>, vector<1x32xf32>
    %69 = vector.broadcast %68 : vector<1x32xf32> to vector<256x32xf32>
    %70 = arith.mulf %67, %69 : vector<256x32xf32>
    %c0_45 = arith.constant 0 : index
    %c0_46 = arith.constant 0 : index
    %71 = vector.load %arg9[%c0_45, %c0_46] : memref<1x32xf32, #tpu.memory_space<vmem>>, vector<1x32xf32>
    %72 = vector.broadcast %71 : vector<1x32xf32> to vector<256x32xf32>
    %73 = arith.addf %70, %72 : vector<256x32xf32>
    %cst_47 = arith.constant 0.000000e+00 : f32
    %74 = vector.broadcast %cst_47 : f32 to vector<256x32xf32>
    %75 = arith.maximumf %73, %74 : vector<256x32xf32>
    %c0_48 = arith.constant 0 : index
    %c0_49 = arith.constant 0 : index
    %c0_50 = arith.constant 0 : index
    %76 = vector.load %arg10[%c0_48, %c0_49, %c0_50] : memref<1x256x32xf32, #tpu.memory_space<vmem>>, vector<1x256x32xf32>
    %77 = vector.shape_cast %76 : vector<1x256x32xf32> to vector<256x32xf32>
    %78 = vector.shape_cast %75 : vector<256x32xf32> to vector<1x256x32xf32>
    tpu.vector_store %arg10[%c0_48, %c0_49, %c0_50], %78 {strides = array<i32>} : memref<1x256x32xf32, #tpu.memory_space<vmem>>, vector<1x256x32xf32>,
    return
  }
  func.func @transform_0(%arg0: i32) -> (i32, i32, i32) {
    %c0_i32 = arith.constant 0 : i32
    %c0_i32_0 = arith.constant 0 : i32
    %c0_i32_1 = arith.constant 0 : i32
    return %arg0, %c0_i32, %c0_i32_0 : i32, i32, i32
  }
  func.func @transform_1(%arg0: i32) -> (i32, i32, i32) {
    %c0_i32 = arith.constant 0 : i32
    %c0_i32_0 = arith.constant 0 : i32
    %c0_i32_1 = arith.constant 0 : i32
    return %arg0, %c0_i32, %c0_i32_0 : i32, i32, i32
  }
  func.func @transform_2(%arg0: i32) -> (i32, i32) {
    %c0_i32 = arith.constant 0 : i32
    %c0_i32_0 = arith.constant 0 : i32
    %c0_i32_1 = arith.constant 0 : i32
    return %c0_i32, %c0_i32_0 : i32, i32
  }
  func.func @transform_3(%arg0: i32) -> (i32, i32) {
    %c0_i32 = arith.constant 0 : i32
    %c0_i32_0 = arith.constant 0 : i32
    %c0_i32_1 = arith.constant 0 : i32
    return %c0_i32, %c0_i32_0 : i32, i32
  }
  func.func @transform_4(%arg0: i32) -> (i32, i32) {
    %c0_i32 = arith.constant 0 : i32
    %c0_i32_0 = arith.constant 0 : i32
    %c0_i32_1 = arith.constant 0 : i32
    return %c0_i32, %c0_i32_0 : i32, i32
  }
  func.func @transform_5(%arg0: i32) -> (i32, i32) {
    %c0_i32 = arith.constant 0 : i32
    %c0_i32_0 = arith.constant 0 : i32
    %c0_i32_1 = arith.constant 0 : i32
    return %c0_i32, %c0_i32_0 : i32, i32
  }
  func.func @transform_6(%arg0: i32) -> (i32, i32) {
    %c0_i32 = arith.constant 0 : i32
    %c0_i32_0 = arith.constant 0 : i32
    %c0_i32_1 = arith.constant 0 : i32
    return %c0_i32, %c0_i32_0 : i32, i32
  }
  func.func @transform_7(%arg0: i32) -> (i32, i32) {
    %c0_i32 = arith.constant 0 : i32
    %c0_i32_0 = arith.constant 0 : i32
    %c0_i32_1 = arith.constant 0 : i32
    return %c0_i32, %c0_i32_0 : i32, i32
  }
  func.func @transform_8(%arg0: i32) -> (i32, i32) {
    %c0_i32 = arith.constant 0 : i32
    %c0_i32_0 = arith.constant 0 : i32
    %c0_i32_1 = arith.constant 0 : i32
    return %c0_i32, %c0_i32_0 : i32, i32
  }
  func.func @transform_9(%arg0: i32) -> (i32, i32, i32) {
    %c0_i32 = arith.constant 0 : i32
    %c0_i32_0 = arith.constant 0 : i32
    %c0_i32_1 = arith.constant 0 : i32
    return %arg0, %c0_i32, %c0_i32_0 : i32, i32, i32
  }
}

</mosaic_0001>

<llo_original>
// kernel: upsample_forward.1
$region0: #{upsample_forward.1}
  #allocation0 [shape = 'u32[]', space=smem, size = 0x4, offset = 0x4, fixed_abs, tag = 'smem constant byte address 0x4 - core index']
  #allocation1 [shape = 'u32[144,128]{1,0:T(1,128)}', space=vmem, size = 0x12000, scoped, tag = 'internal scratch']
  #allocation2 [shape = 'f32[18,32,32]{2,1,0:T(8,128)}', space=vmem, size = 0x48000, scoped, tag = 'scratch operand']
  %s0 = inlined_call_operand.vmem [shape: f32[2,256,16], index: 0, kind: input, shape index: {}]
  %s1 = inlined_call_operand.vmem [shape: f32[2,64,32], index: 1, kind: input, shape index: {}]
  %s2 = inlined_call_operand.vmem [shape: f32[256,64], index: 2, kind: input, shape index: {}]
  %s3 = inlined_call_operand.vmem [shape: f32[16,32], index: 3, kind: input, shape index: {}]
  %s4 = inlined_call_operand.vmem [shape: f32[1,32], index: 4, kind: input, shape index: {}]
  %s5 = inlined_call_operand.vmem [shape: f32[1,32], index: 5, kind: input, shape index: {}]
  %s6 = inlined_call_operand.vmem [shape: f32[288,32], index: 6, kind: input, shape index: {}]
  %s7 = inlined_call_operand.vmem [shape: f32[1,32], index: 7, kind: input, shape index: {}]
  %s8 = inlined_call_operand.vmem [shape: f32[1,32], index: 8, kind: input, shape index: {}]
  %s9 = inlined_call_operand.hbm [shape: f32[2,256,32], index: 9, kind: output, shape index: {}]
  %s10 = sld [smem:[#allocation0]]
  $region69: #{upsample_forward.1} parent=0
    _
  %s12 = ssub.s32 1, %s10
  %s13 = scalar_select 0, %s12, %s10
  $region1: #{upsample_forward.1} parent=0
    #allocation3 [shape = 'u8[262144]{0}', space=vmem, size = 0x40000, scoped, tag = 'output window, operand 0']
    #allocation4 [shape = 's32[2]{0}', space=sflag, size = 0x8, scoped, tag = 'scoped memory for upsample_forward.1']
    %14 = vsyncpa [#allocation4], 0
    %s15 = scalar_lea.sflag [#allocation4], 1
    %16 = vsyncpa %s15, 0
    loop: start=0, step=1, limit=4
    $region2: #{upsample_forward.1} parent=1 // loop_pre_header
      _
    $region3: #{upsample_forward.1} parent=1 // loop_header
      %s18 = sphi 0, %s22
      %p19 = scmp.ge.s32.totalorder %s18, 4
      %s28 = sphi 0, %s30
      %s31 = sphi 0, %s28
      %s32 = sphi 0, %s31
      %s48 = sphi 0, %s32
      %s54 = sphi 0, %s56
      %s57 = sphi 0, %s54
      %s58 = sphi 0, %s57
      %s74 = sphi 0, %s58
      %s78 = sphi 0, %s78
      %s80 = sphi 0, %s78
      %s81 = sphi 0, %s80
      %s95 = sphi 0, %s81
      %s99 = sphi 0, %s99
      %s101 = sphi 0, %s99
      %s102 = sphi 0, %s101
      %s116 = sphi 0, %s102
      %s120 = sphi 0, %s120
      %s122 = sphi 0, %s120
      %s123 = sphi 0, %s122
      %s137 = sphi 0, %s123
      %s141 = sphi 0, %s141
      %s143 = sphi 0, %s141
      %s144 = sphi 0, %s143
      %s158 = sphi 0, %s144
      %s162 = sphi 0, %s162
      %s164 = sphi 0, %s162
      %s165 = sphi 0, %s164
      %s179 = sphi 0, %s165
      %s183 = sphi 0, %s183
      %s185 = sphi 0, %s183
      %s186 = sphi 0, %s185
      %s200 = sphi 0, %s186
      %s204 = sphi 0, %s204
      %s206 = sphi 0, %s204
      %s207 = sphi 0, %s206
      %s221 = sphi 0, %s207
      %s227 = sphi 0, %s229
      %s230 = sphi 0, %s227
      %s231 = sphi 0, %s230
      %s247 = sphi 0, %s231
    $region4: #{upsample_forward.1} parent=1 // loop_header_branch
      %21 = sbr.rel (%p19) target = $region8
    $region5: #{upsample_forward.1} parent=1 // loop_body
      %s23 = ssub.s32 %s18, 1
      %s24 = ssub.s32 %s18, 2
      %s25 = sadd.s32 %s18, 1
      %s26 = ssub.s32 %s18, %s25
      %p27 = scmp.eq.s32.totalorder %s26, 0
      %s29 = sadd.s32 %s28, 1
      %s30 = scalar_select %p27, %s28, %s29
      %p33 = pneg %p27
      %p34 = scmp.eq.s32.totalorder %s18, 1
      %p35 = por %p33, %p34
      %p36 = scmp.ne.s32.totalorder %s28, %s31
      %p37 = scmp.eq.s32.totalorder %s18, 0
      %p38 = por %p36, %p37
      %p39 = scmp.ne.s32.totalorder %s28, %s31
      %p40 = scmp.eq.s32.totalorder %s23, 1
      %p41 = por %p39, %p40
      %p42 = scmp.ne.s32.totalorder %s31, %s32
      %p43 = scmp.eq.s32.totalorder %s23, 0
      %p44 = por %p42, %p43
      %p45 = scmp.ne.s32.totalorder %s31, %s32
      %p46 = scmp.eq.s32.totalorder %s24, 1
      %p47 = por %p45, %p46
      %p49 = scmp.ne.s32.totalorder %s32, %s48
      %p50 = scmp.eq.s32.totalorder %s24, 0
      %p51 = por %p49, %p50
      %s52 = ssub.s32 %s18, %s25
      %p53 = scmp.eq.s32.totalorder %s52, 0
      %s55 = sadd.s32 %s54, 1
      %s56 = scalar_select %p53, %s54, %s55
      %p59 = pneg %p53
      %p60 = scmp.eq.s32.totalorder %s18, 1
      %p61 = por %p59, %p60
      %p62 = scmp.ne.s32.totalorder %s54, %s57
      %p63 = scmp.eq.s32.totalorder %s18, 0
      %p64 = por %p62, %p63
      %p65 = scmp.ne.s32.totalorder %s54, %s57
      %p66 = scmp.eq.s32.totalorder %s23, 1
      %p67 = por %p65, %p66
      %p68 = scmp.ne.s32.totalorder %s57, %s58
      %p69 = scmp.eq.s32.totalorder %s23, 0
      %p70 = por %p68, %p69
      %p71 = scmp.ne.s32.totalorder %s57, %s58
      %p72 = scmp.eq.s32.totalorder %s24, 1
      %p73 = por %p71, %p72
      %p75 = scmp.ne.s32.totalorder %s58, %s74
      %p76 = scmp.eq.s32.totalorder %s24, 0
      %p77 = por %p75, %p76
      %s79 = sadd.s32 %s78, 1
      %p82 = scmp.eq.s32.totalorder %s18, 1
      %p83 = scmp.ne.s32.totalorder %s78, %s80
      %p84 = scmp.eq.s32.totalorder %s18, 0
      %p85 = por %p83, %p84
      %p86 = scmp.ne.s32.totalorder %s78, %s80
      %p87 = scmp.eq.s32.totalorder %s23, 1
      %p88 = por %p86, %p87
      %p89 = scmp.ne.s32.totalorder %s80, %s81
      %p90 = scmp.eq.s32.totalorder %s23, 0
      %p91 = por %p89, %p90
      %p92 = scmp.ne.s32.totalorder %s80, %s81
      %p93 = scmp.eq.s32.totalorder %s24, 1
      %p94 = por %p92, %p93
      %p96 = scmp.ne.s32.totalorder %s81, %s95
      %p97 = scmp.eq.s32.totalorder %s24, 0
      %p98 = por %p96, %p97
      %s100 = sadd.s32 %s99, 1
      %p103 = scmp.eq.s32.totalorder %s18, 1
      %p104 = scmp.ne.s32.totalorder %s99, %s101
      %p105 = scmp.eq.s32.totalorder %s18, 0
      %p106 = por %p104, %p105
      %p107 = scmp.ne.s32.totalorder %s99, %s101
      %p108 = scmp.eq.s32.totalorder %s23, 1
      %p109 = por %p107, %p108
      %p110 = scmp.ne.s32.totalorder %s101, %s102
      %p111 = scmp.eq.s32.totalorder %s23, 0
      %p112 = por %p110, %p111
      %p113 = scmp.ne.s32.totalorder %s101, %s102
      %p114 = scmp.eq.s32.totalorder %s24, 1
      %p115 = por %p113, %p114
      %p117 = scmp.ne.s32.totalorder %s102, %s116
      %p118 = scmp.eq.s32.totalorder %s24, 0
      %p119 = por %p117, %p118
      %s121 = sadd.s32 %s120, 1
      %p124 = scmp.eq.s32.totalorder %s18, 1
      %p125 = scmp.ne.s32.totalorder %s120, %s122
      %p126 = scmp.eq.s32.totalorder %s18, 0
      %p127 = por %p125, %p126
      %p128 = scmp.ne.s32.totalorder %s120, %s122
      %p129 = scmp.eq.s32.totalorder %s23, 1
      %p130 = por %p128, %p129
      %p131 = scmp.ne.s32.totalorder %s122, %s123
      %p132 = scmp.eq.s32.totalorder %s23, 0
      %p133 = por %p131, %p132
      %p134 = scmp.ne.s32.totalorder %s122, %s123
      %p135 = scmp.eq.s32.totalorder %s24, 1
      %p136 = por %p134, %p135
      %p138 = scmp.ne.s32.totalorder %s123, %s137
      %p139 = scmp.eq.s32.totalorder %s24, 0
      %p140 = por %p138, %p139
      %s142 = sadd.s32 %s141, 1
      %p145 = scmp.eq.s32.totalorder %s18, 1
      %p146 = scmp.ne.s32.totalorder %s141, %s143
      %p147 = scmp.eq.s32.totalorder %s18, 0
      %p148 = por %p146, %p147
      %p149 = scmp.ne.s32.totalorder %s141, %s143
      %p150 = scmp.eq.s32.totalorder %s23, 1
      %p151 = por %p149, %p150
      %p152 = scmp.ne.s32.totalorder %s143, %s144
      %p153 = scmp.eq.s32.totalorder %s23, 0
      %p154 = por %p152, %p153
      %p155 = scmp.ne.s32.totalorder %s143, %s144
      %p156 = scmp.eq.s32.totalorder %s24, 1
      %p157 = por %p155, %p156
      %p159 = scmp.ne.s32.totalorder %s144, %s158
      %p160 = scmp.eq.s32.totalorder %s24, 0
      %p161 = por %p159, %p160
      %s163 = sadd.s32 %s162, 1
      %p166 = scmp.eq.s32.totalorder %s18, 1
      %p167 = scmp.ne.s32.totalorder %s162, %s164
      %p168 = scmp.eq.s32.totalorder %s18, 0
      %p169 = por %p167, %p168
      %p170 = scmp.ne.s32.totalorder %s162, %s164
      %p171 = scmp.eq.s32.totalorder %s23, 1
      %p172 = por %p170, %p171
      %p173 = scmp.ne.s32.totalorder %s164, %s165
      %p174 = scmp.eq.s32.totalorder %s23, 0
      %p175 = por %p173, %p174
      %p176 = scmp.ne.s32.totalorder %s164, %s165
      %p177 = scmp.eq.s32.totalorder %s24, 1
      %p178 = por %p176, %p177
      %p180 = scmp.ne.s32.totalorder %s165, %s179
      %p181 = scmp.eq.s32.totalorder %s24, 0
      %p182 = por %p180, %p181
      %s184 = sadd.s32 %s183, 1
      %p187 = scmp.eq.s32.totalorder %s18, 1
      %p188 = scmp.ne.s32.totalorder %s183, %s185
      %p189 = scmp.eq.s32.totalorder %s18, 0
      %p190 = por %p188, %p189
      %p191 = scmp.ne.s32.totalorder %s183, %s185
      %p192 = scmp.eq.s32.totalorder %s23, 1
      %p193 = por %p191, %p192
      %p194 = scmp.ne.s32.totalorder %s185, %s186
      %p195 = scmp.eq.s32.totalorder %s23, 0
      %p196 = por %p194, %p195
      %p197 = scmp.ne.s32.totalorder %s185, %s186
      %p198 = scmp.eq.s32.totalorder %s24, 1
      %p199 = por %p197, %p198
      %p201 = scmp.ne.s32.totalorder %s186, %s200
      %p202 = scmp.eq.s32.totalorder %s24, 0
      %p203 = por %p201, %p202
      %s205 = sadd.s32 %s204, 1
      %p208 = scmp.eq.s32.totalorder %s18, 1
      %p209 = scmp.ne.s32.totalorder %s204, %s206
      %p210 = scmp.eq.s32.totalorder %s18, 0
      %p211 = por %p209, %p210
      %p212 = scmp.ne.s32.totalorder %s204, %s206
      %p213 = scmp.eq.s32.totalorder %s23, 1
      %p214 = por %p212, %p213
      %p215 = scmp.ne.s32.totalorder %s206, %s207
      %p216 = scmp.eq.s32.totalorder %s23, 0
      %p217 = por %p215, %p216
      %p218 = scmp.ne.s32.totalorder %s206, %s207
      %p219 = scmp.eq.s32.totalorder %s24, 1
      %p220 = por %p218, %p219
      %p222 = scmp.ne.s32.totalorder %s207, %s221
      %p223 = scmp.eq.s32.totalorder %s24, 0
      %p224 = por %p222, %p223
      %s225 = ssub.s32 %s18, %s25
      %p226 = scmp.eq.s32.totalorder %s225, 0
      %s228 = sadd.s32 %s227, 1
      %s229 = scalar_select %p226, %s227, %s228
      %p232 = pneg %p226
      %p233 = scmp.eq.s32.totalorder %s18, 1
      %p234 = por %p232, %p233
      %p235 = scmp.ne.s32.totalorder %s227, %s230
      %p236 = scmp.eq.s32.totalorder %s18, 0
      %p237 = por %p235, %p236
      %p238 = scmp.ne.s32.totalorder %s227, %s230
      %p239 = scmp.eq.s32.totalorder %s23, 1
      %p240 = por %p238, %p239
      %p241 = scmp.ne.s32.totalorder %s230, %s231
      %p242 = scmp.eq.s32.totalorder %s23, 0
      %p243 = por %p241, %p242
      %p244 = scmp.ne.s32.totalorder %s230, %s231
      %p245 = scmp.eq.s32.totalorder %s24, 1
      %p246 = por %p244, %p245
      %p248 = scmp.ne.s32.totalorder %s231, %s247
      %p249 = scmp.eq.s32.totalorder %s24, 0
      %p250 = por %p248, %p249
      %p251 = scmp.le.s32.totalorder 1, %s18
      %p252 = scmp.lt.s32.totalorder %s18, 3
      %p253 = pnand %p251, %p252
      %p254 = pneg %p253
      // Predicated region
      $region9: #{upsample_forward.1} parent=5 // pred_check
        _
      $region10: #{upsample_forward.1} parent=5 // pred_check_branch
        %256 = sbr.rel (%p253) target = $region12
      $region11: #{upsample_forward.1} parent=5 // pred_region
        %s257 = ssub.s32 %s18, 1
        // Predicated region
        $region13: #{upsample_forward.1} parent=11 // pred_check
          %p258 = pneg %p91
        $region14: #{upsample_forward.1} parent=11 // pred_check_branch
          %260 = sbr.rel (%p258) target = $region16
        $region15: #{upsample_forward.1} parent=11 // pred_region
          _
        $region16: #{upsample_forward.1} parent=11 // pred_fallthru
          _
        // Predicated region
        $region17: #{upsample_forward.1} parent=11 // pred_check
          %p261 = pneg %p112
        $region18: #{upsample_forward.1} parent=11 // pred_check_branch
          %263 = sbr.rel (%p261) target = $region20
        $region19: #{upsample_forward.1} parent=11 // pred_region
          _
        $region20: #{upsample_forward.1} parent=11 // pred_fallthru
          _
        // Predicated region
        $region21: #{upsample_forward.1} parent=11 // pred_check
          %p264 = pneg %p133
        $region22: #{upsample_forward.1} parent=11 // pred_check_branch
          %266 = sbr.rel (%p264) target = $region24
        $region23: #{upsample_forward.1} parent=11 // pred_region
          _
        $region24: #{upsample_forward.1} parent=11 // pred_fallthru
          _
        // Predicated region
        $region25: #{upsample_forward.1} parent=11 // pred_check
          %p267 = pneg %p154
        $region26: #{upsample_forward.1} parent=11 // pred_check_branch
          %269 = sbr.rel (%p267) target = $region28
        $region27: #{upsample_forward.1} parent=11 // pred_region
          _
        $region28: #{upsample_forward.1} parent=11 // pred_fallthru
          _
        // Predicated region
        $region29: #{upsample_forward.1} parent=11 // pred_check
          %p270 = pneg %p175
        $region30: #{upsample_forward.1} parent=11 // pred_check_branch
          %272 = sbr.rel (%p270) target = $region32
        $region31: #{upsample_forward.1} parent=11 // pred_region
          _
        $region32: #{upsample_forward.1} parent=11 // pred_fallthru
          _
        // Predicated region
        $region33: #{upsample_forward.1} parent=11 // pred_check
          %p273 = pneg %p196
        $region34: #{upsample_forward.1} parent=11 // pred_check_branch
          %275 = sbr.rel (%p273) target = $region36
        $region35: #{upsample_forward.1} parent=11 // pred_region
          _
        $region36: #{upsample_forward.1} parent=11 // pred_fallthru
          _
        // Predicated region
        $region37: #{upsample_forward.1} parent=11 // pred_check
          %p276 = pneg %p217
        $region38: #{upsample_forward.1} parent=11 // pred_check_branch
          %278 = sbr.rel (%p276) target = $region40
        $region39: #{upsample_forward.1} parent=11 // pred_region
          _
        $region40: #{upsample_forward.1} parent=11 // pred_fallthru
          _
      $region12: #{upsample_forward.1} parent=5 // pred_fallthru
        _
      %p279 = scmp.lt.s32.totalorder %s18, 2
      // Predicated region
      $region41: #{upsample_forward.1} parent=5 // pred_check
        %p280 = pneg %p279
      $region42: #{upsample_forward.1} parent=5 // pred_check_branch
        %282 = sbr.rel (%p280) target = $region44
      $region43: #{upsample_forward.1} parent=5 // pred_region
        // Predicated region
        $region45: #{upsample_forward.1} parent=43 // pred_check
          %p283 = pneg %p38
        $region46: #{upsample_forward.1} parent=43 // pred_check_branch
          %285 = sbr.rel (%p283) target = $region48
        $region47: #{upsample_forward.1} parent=43 // pred_region
          %p286 = scmp.lt.s32.totalorder %s18, 1
          %s287 = scalar_select %p286, %s18, 1
          %s288 = smul.addr %s287, 32
          %s289 = smul.addr %s288, 8
          %s290 = scalar_lea.vmem %s0, %s289
        $region48: #{upsample_forward.1} parent=43 // pred_fallthru
          _
        // Predicated region
        $region49: #{upsample_forward.1} parent=43 // pred_check
          %p291 = pneg %p64
        $region50: #{upsample_forward.1} parent=43 // pred_check_branch
          %293 = sbr.rel (%p291) target = $region52
        $region51: #{upsample_forward.1} parent=43 // pred_region
          %p294 = scmp.lt.s32.totalorder %s18, 1
          %s295 = scalar_select %p294, %s18, 1
          %s296 = smul.addr %s295, 8
          %s297 = smul.addr %s296, 8
          %s298 = scalar_lea.vmem %s1, %s297
        $region52: #{upsample_forward.1} parent=43 // pred_fallthru
          _
      $region44: #{upsample_forward.1} parent=5 // pred_fallthru
        _
      %p299 = scmp.le.s32.totalorder 1, %s18
      %p300 = scmp.lt.s32.totalorder %s18, 3
      %p301 = pnand %p299, %p300
      %p302 = pneg %p301
      // Predicated region
      $region53: #{upsample_forward.1} parent=5 // pred_check
        _
      $region54: #{upsample_forward.1} parent=5 // pred_check_branch
        %304 = sbr.rel (%p301) target = $region56
      $region55: #{upsample_forward.1} parent=5 // pred_region
        %s305 = ssub.s32 %s18, 1
        %p306 = scmp.lt.s32.totalorder %s23, 1
        %s307 = scalar_select %p306, %s23, 1
        %s308 = smul.addr %s307, 32
        %s309 = smul.addr %s308, 8
        %s310 = scalar_lea.vmem %s0, %s309
        %p311 = pneg %p44
        %p312 = pneg %p41
        %p313 = scmp.lt.s32.totalorder %s23, 1
        %s314 = scalar_select %p313, %s23, 1
        %s315 = smul.addr %s314, 8
        %s316 = smul.addr %s315, 8
        %s317 = scalar_lea.vmem %s1, %s316
        %p318 = pneg %p70
        %p319 = pneg %p67
        %p320 = pneg %p91
        %p321 = pneg %p88
        %p322 = pneg %p112
        %p323 = pneg %p109
        %p324 = pneg %p133
        %p325 = pneg %p130
        %p326 = pneg %p154
        %p327 = pneg %p151
        %p328 = pneg %p175
        %p329 = pneg %p172
        %p330 = pneg %p196
        %p331 = pneg %p193
        %p332 = pneg %p217
        %p333 = pneg %p214
        %p334 = pneg %p243
        %p335 = pneg %p240
        %s336 = sand.u32 %s230, 1
        %s337 = scalar_lea.sflag [#allocation4], %s336
        %s338 = sand.u32 %s230, 1
        %s339 = smul.addr %s338, 256
        %s340 = scalar_lea.vmem [#allocation3], %s339
        %p341 = scmp.lt.s32.totalorder %s23, 1
        %s342 = scalar_select %p341, %s23, 1
        %s343 = smul.addr %s342, 32
        %s344 = smul.addr %s343, 8
        %s345 = scalar_lea.vmem %s0, %s344
        %p346 = scmp.lt.s32.totalorder %s23, 1
        %s347 = scalar_select %p346, %s23, 1
        %s348 = smul.addr %s347, 8
        %s349 = smul.addr %s348, 8
        %s350 = scalar_lea.vmem %s1, %s349
        %v351 = vld [vmem:[%s345] sm:$0xff]
        %v352 = vld [vmem:[%s345 + $0x8] sm:$0xff]
        %v353 = vld [vmem:[%s345 + $0x10] sm:$0xff]
        %v354 = vld [vmem:[%s345 + $0x18] sm:$0xff]
        %v355 = vld [vmem:[%s345 + $0x20] sm:$0xff]
        %v356 = vld [vmem:[%s345 + $0x28] sm:$0xff]
        %v357 = vld [vmem:[%s345 + $0x30] sm:$0xff]
        %v358 = vld [vmem:[%s345 + $0x38] sm:$0xff]
        %v359 = vld [vmem:[%s345 + $0x40] sm:$0xff]
        %v360 = vld [vmem:[%s345 + $0x48] sm:$0xff]
        %v361 = vld [vmem:[%s345 + $0x50] sm:$0xff]
        %v362 = vld [vmem:[%s345 + $0x58] sm:$0xff]
        %v363 = vld [vmem:[%s345 + $0x60] sm:$0xff]
        %v364 = vld [vmem:[%s345 + $0x68] sm:$0xff]
        %v365 = vld [vmem:[%s345 + $0x70] sm:$0xff]
        %v366 = vld [vmem:[%s345 + $0x78] sm:$0xff]
        %v367 = vld [vmem:[%s345 + $0x80] sm:$0xff]
        %v368 = vld [vmem:[%s345 + $0x88] sm:$0xff]
        %v369 = vld [vmem:[%s345 + $0x90] sm:$0xff]
        %v370 = vld [vmem:[%s345 + $0x98] sm:$0xff]
        %v371 = vld [vmem:[%s345 + $0xa0] sm:$0xff]
        %v372 = vld [vmem:[%s345 + $0xa8] sm:$0xff]
        %v373 = vld [vmem:[%s345 + $0xb0] sm:$0xff]
        %v374 = vld [vmem:[%s345 + $0xb8] sm:$0xff]
        %v375 = vld [vmem:[%s345 + $0xc0] sm:$0xff]
        %v376 = vld [vmem:[%s345 + $0xc8] sm:$0xff]
        %v377 = vld [vmem:[%s345 + $0xd0] sm:$0xff]
        %v378 = vld [vmem:[%s345 + $0xd8] sm:$0xff]
        %v379 = vld [vmem:[%s345 + $0xe0] sm:$0xff]
        %v380 = vld [vmem:[%s345 + $0xe8] sm:$0xff]
        %v381 = vld [vmem:[%s345 + $0xf0] sm:$0xff]
        %v382 = vld [vmem:[%s345 + $0xf8] sm:$0xff]
        %v383 = vld [vmem:[%s3] sm:$0xff]
        %v384 = vld [vmem:[%s3 + $0x8] sm:$0xff]
        %vm385 = vcmask 130048
        %v387 = vsel %vm385, %v351, 0
        %v390 = vsel %vm385, %v352, 0
        %v393 = vsel %vm385, %v353, 0
        %v396 = vsel %vm385, %v354, 0
        %v399 = vsel %vm385, %v355, 0
        %v402 = vsel %vm385, %v356, 0
        %v405 = vsel %vm385, %v357, 0
        %v408 = vsel %vm385, %v358, 0
        %v411 = vsel %vm385, %v359, 0
        %v414 = vsel %vm385, %v360, 0
        %v417 = vsel %vm385, %v361, 0
        %v420 = vsel %vm385, %v362, 0
        %v423 = vsel %vm385, %v363, 0
        %v426 = vsel %vm385, %v364, 0
        %v429 = vsel %vm385, %v365, 0
        %v432 = vsel %vm385, %v366, 0
        %v435 = vsel %vm385, %v367, 0
        %v438 = vsel %vm385, %v368, 0
        %v441 = vsel %vm385, %v369, 0
        %v444 = vsel %vm385, %v370, 0
        %v447 = vsel %vm385, %v371, 0
        %v450 = vsel %vm385, %v372, 0
        %v453 = vsel %vm385, %v373, 0
        %v456 = vsel %vm385, %v374, 0
        %v459 = vsel %vm385, %v375, 0
        %v462 = vsel %vm385, %v376, 0
        %v465 = vsel %vm385, %v377, 0
        %v468 = vsel %vm385, %v378, 0
        %v471 = vsel %vm385, %v379, 0
        %v474 = vsel %vm385, %v380, 0
        %v477 = vsel %vm385, %v381, 0
        %v480 = vsel %vm385, %v382, 0
        %482 = vmatprep.subr.mxu0 0.0
        %483 = vmatpush1.msra.mxu0 %v383
        %484 = vmatprep.subr.mxu0 0.0
        %485 = vmatpush1.msra.mxu0 %v384
        %486 = vmatprep.subr.mxu0 0.0
        %487 = vmatpush1.msra.mxu0 0.0
        %488 = vmatprep.subr.mxu0 0.0
        %489 = vmatpush1.msra.mxu0 0.0
        %490 = vmatprep.subr.mxu0 0.0
        %491 = vmatpush1.msra.mxu0 0.0
        %492 = vmatprep.subr.mxu0 0.0
        %493 = vmatpush1.msra.mxu0 0.0
        %494 = vmatprep.subr.mxu0 0.0
        %495 = vmatpush1.msra.mxu0 0.0
        %496 = vmatprep.subr.mxu0 0.0
        %497 = vmatpush1.msra.mxu0 0.0
        %498 = vmatprep.subr.mxu0 0.0
        %499 = vmatpush1.msra.mxu0 0.0
        %500 = vmatprep.subr.mxu0 0.0
        %501 = vmatpush1.msra.mxu0 0.0
        %502 = vmatprep.subr.mxu0 0.0
        %503 = vmatpush1.msra.mxu0 0.0
        %504 = vmatprep.subr.mxu0 0.0
        %505 = vmatpush1.msra.mxu0 0.0
        %506 = vmatprep.subr.mxu0 0.0
        %507 = vmatpush1.msra.mxu0 0.0
        %508 = vmatprep.subr.mxu0 0.0
        %509 = vmatpush1.msra.mxu0 0.0
        %510 = vmatprep.subr.mxu0 0.0
        %511 = vmatpush1.msra.mxu0 0.0
        %512 = vmatprep.subr.mxu0 0.0
        %513 = vmatpush1.msra.mxu0 0.0
        %514 = vmatprep.subr.mxu0 0.0
        %515 = vmatpush1.msra.mxu0 0.0
        %516 = vmatprep.subr.mxu0 0.0
        %517 = vmatpush1.msra.mxu0 0.0
        %518 = vmatprep.subr.mxu0 0.0
        %519 = vmatpush1.msra.mxu0 0.0
        %520 = vmatprep.subr.mxu0 0.0
        %521 = vmatpush1.msra.mxu0 0.0
        %522 = vmatprep.subr.mxu0 0.0
        %523 = vmatpush1.msra.mxu0 0.0
        %524 = vmatprep.subr.mxu0 0.0
        %525 = vmatpush1.msra.mxu0 0.0
        %526 = vmatprep.subr.mxu0 0.0
        %527 = vmatpush1.msra.mxu0 0.0
        %528 = vmatprep.subr.mxu0 0.0
        %529 = vmatpush1.msra.mxu0 0.0
        %530 = vmatprep.subr.mxu0 0.0
        %531 = vmatpush1.msra.mxu0 0.0
        %532 = vmatprep.subr.mxu0 0.0
        %533 = vmatpush1.msra.mxu0 0.0
        %534 = vmatprep.subr.mxu0 0.0
        %535 = vmatpush1.msra.mxu0 0.0
        %536 = vmatprep.subr.mxu0 0.0
        %537 = vmatpush1.msra.mxu0 0.0
        %538 = vmatprep.subr.mxu0 0.0
        %539 = vmatpush1.msra.mxu0 0.0
        %540 = vmatprep.subr.mxu0 0.0
        %541 = vmatpush1.msra.mxu0 0.0
        %542 = vmatprep.subr.mxu0 0.0
        %543 = vmatpush1.msra.mxu0 0.0
        %544 = vmatprep.subr.mxu0 0.0
        %545 = vmatpush1.msra.mxu0 0.0
        %546 = vmatprep.mubr.f32.mxu0 0.0
        %547 = vmatmul.mubr.f32.gmra.mrb[0].mxu0 %v387
        %v548 = vpop.f32.mrb[0].mxu0
        %v549 = vadd.f32 0.0, %v548
        %v550 = vpop.f32.mrb[0].mxu0
        %551 = vmatprep.mubr.f32.mxu0 0.0
        %552 = vmatmul.mubr.f32.gmra.mrb[0].mxu0 %v390
        %v553 = vpop.f32.mrb[0].mxu0
        %v554 = vadd.f32 0.0, %v553
        %v555 = vpop.f32.mrb[0].mxu0
        %556 = vmatprep.mubr.f32.mxu0 0.0
        %557 = vmatmul.mubr.f32.gmra.mrb[0].mxu0 %v393
        %v558 = vpop.f32.mrb[0].mxu0
        %v559 = vadd.f32 0.0, %v558
        %v560 = vpop.f32.mrb[0].mxu0
        %561 = vmatprep.mubr.f32.mxu0 0.0
        %562 = vmatmul.mubr.f32.gmra.mrb[0].mxu0 %v396
        %v563 = vpop.f32.mrb[0].mxu0
        %v564 = vadd.f32 0.0, %v563
        %v565 = vpop.f32.mrb[0].mxu0
        %566 = vmatprep.mubr.f32.mxu0 0.0
        %567 = vmatmul.mubr.f32.gmra.mrb[0].mxu0 %v399
        %v568 = vpop.f32.mrb[0].mxu0
        %v569 = vadd.f32 0.0, %v568
        %v570 = vpop.f32.mrb[0].mxu0
        %571 = vmatprep.mubr.f32.mxu0 0.0
        %572 = vmatmul.mubr.f32.gmra.mrb[0].mxu0 %v402
        %v573 = vpop.f32.mrb[0].mxu0
        %v574 = vadd.f32 0.0, %v573
        %v575 = vpop.f32.mrb[0].mxu0
        %576 = vmatprep.mubr.f32.mxu0 0.0
        %577 = vmatmul.mubr.f32.gmra.mrb[0].mxu0 %v405
        %v578 = vpop.f32.mrb[0].mxu0
        %v579 = vadd.f32 0.0, %v578
        %v580 = vpop.f32.mrb[0].mxu0
        %581 = vmatprep.mubr.f32.mxu0 0.0
        %582 = vmatmul.mubr.f32.gmra.mrb[0].mxu0 %v408
        %v583 = vpop.f32.mrb[0].mxu0
        %v584 = vadd.f32 0.0, %v583
        %v585 = vpop.f32.mrb[0].mxu0
        %586 = vmatprep.mubr.f32.mxu0 0.0
        %587 = vmatmul.mubr.f32.gmra.mrb[0].mxu0 %v411
        %v588 = vpop.f32.mrb[0].mxu0
        %v589 = vadd.f32 0.0, %v588
        %v590 = vpop.f32.mrb[0].mxu0
        %591 = vmatprep.mubr.f32.mxu0 0.0
        %592 = vmatmul.mubr.f32.gmra.mrb[0].mxu0 %v414
        %v593 = vpop.f32.mrb[0].mxu0
        %v594 = vadd.f32 0.0, %v593
        %v595 = vpop.f32.mrb[0].mxu0
        %596 = vmatprep.mubr.f32.mxu0 0.0
        %597 = vmatmul.mubr.f32.gmra.mrb[0].mxu0 %v417
        %v598 = vpop.f32.mrb[0].mxu0
        %v599 = vadd.f32 0.0, %v598
        %v600 = vpop.f32.mrb[0].mxu0
        %601 = vmatprep.mubr.f32.mxu0 0.0
        %602 = vmatmul.mubr.f32.gmra.mrb[0].mxu0 %v420
        %v603 = vpop.f32.mrb[0].mxu0
        %v604 = vadd.f32 0.0, %v603
        %v605 = vpop.f32.mrb[0].mxu0
        %606 = vmatprep.mubr.f32.mxu0 0.0
        %607 = vmatmul.mubr.f32.gmra.mrb[0].mxu0 %v423
        %v608 = vpop.f32.mrb[0].mxu0
        %v609 = vadd.f32 0.0, %v608
        %v610 = vpop.f32.mrb[0].mxu0
        %611 = vmatprep.mubr.f32.mxu0 0.0
        %612 = vmatmul.mubr.f32.gmra.mrb[0].mxu0 %v426
        %v613 = vpop.f32.mrb[0].mxu0
        %v614 = vadd.f32 0.0, %v613
        %v615 = vpop.f32.mrb[0].mxu0
        %616 = vmatprep.mubr.f32.mxu0 0.0
        %617 = vmatmul.mubr.f32.gmra.mrb[0].mxu0 %v429
        %v618 = vpop.f32.mrb[0].mxu0
        %v619 = vadd.f32 0.0, %v618
        %v620 = vpop.f32.mrb[0].mxu0
        %621 = vmatprep.mubr.f32.mxu0 0.0
        %622 = vmatmul.mubr.f32.gmra.mrb[0].mxu0 %v432
        %v623 = vpop.f32.mrb[0].mxu0
        %v624 = vadd.f32 0.0, %v623
        %v625 = vpop.f32.mrb[0].mxu0
        %626 = vmatprep.mubr.f32.mxu0 0.0
        %627 = vmatmul.mubr.f32.gmra.mrb[0].mxu0 %v435
        %v628 = vpop.f32.mrb[0].mxu0
        %v629 = vadd.f32 0.0, %v628
        %v630 = vpop.f32.mrb[0].mxu0
        %631 = vmatprep.mubr.f32.mxu0 0.0
        %632 = vmatmul.mubr.f32.gmra.mrb[0].mxu0 %v438
        %v633 = vpop.f32.mrb[0].mxu0
        %v634 = vadd.f32 0.0, %v633
        %v635 = vpop.f32.mrb[0].mxu0
        %636 = vmatprep.mubr.f32.mxu0 0.0
        %637 = vmatmul.mubr.f32.gmra.mrb[0].mxu0 %v441
        %v638 = vpop.f32.mrb[0].mxu0
        %v639 = vadd.f32 0.0, %v638
        %v640 = vpop.f32.mrb[0].mxu0
        %641 = vmatprep.mubr.f32.mxu0 0.0
        %642 = vmatmul.mubr.f32.gmra.mrb[0].mxu0 %v444
        %v643 = vpop.f32.mrb[0].mxu0
        %v644 = vadd.f32 0.0, %v643
        %v645 = vpop.f32.mrb[0].mxu0
        %646 = vmatprep.mubr.f32.mxu0 0.0
        %647 = vmatmul.mubr.f32.gmra.mrb[0].mxu0 %v447
        %v648 = vpop.f32.mrb[0].mxu0
        %v649 = vadd.f32 0.0, %v648
        %v650 = vpop.f32.mrb[0].mxu0
        %651 = vmatprep.mubr.f32.mxu0 0.0
        %652 = vmatmul.mubr.f32.gmra.mrb[0].mxu0 %v450
        %v653 = vpop.f32.mrb[0].mxu0
        %v654 = vadd.f32 0.0, %v653
        %v655 = vpop.f32.mrb[0].mxu0
        %656 = vmatprep.mubr.f32.mxu0 0.0
        %657 = vmatmul.mubr.f32.gmra.mrb[0].mxu0 %v453
        %v658 = vpop.f32.mrb[0].mxu0
        %v659 = vadd.f32 0.0, %v658
        %v660 = vpop.f32.mrb[0].mxu0
        %661 = vmatprep.mubr.f32.mxu0 0.0
        %662 = vmatmul.mubr.f32.gmra.mrb[0].mxu0 %v456
        %v663 = vpop.f32.mrb[0].mxu0
        %v664 = vadd.f32 0.0, %v663
        %v665 = vpop.f32.mrb[0].mxu0
        %666 = vmatprep.mubr.f32.mxu0 0.0
        %667 = vmatmul.mubr.f32.gmra.mrb[0].mxu0 %v459
        %v668 = vpop.f32.mrb[0].mxu0
        %v669 = vadd.f32 0.0, %v668
        %v670 = vpop.f32.mrb[0].mxu0
        %671 = vmatprep.mubr.f32.mxu0 0.0
        %672 = vmatmul.mubr.f32.gmra.mrb[0].mxu0 %v462
        %v673 = vpop.f32.mrb[0].mxu0
        %v674 = vadd.f32 0.0, %v673
        %v675 = vpop.f32.mrb[0].mxu0
        %676 = vmatprep.mubr.f32.mxu0 0.0
        %677 = vmatmul.mubr.f32.gmra.mrb[0].mxu0 %v465
        %v678 = vpop.f32.mrb[0].mxu0
        %v679 = vadd.f32 0.0, %v678
        %v680 = vpop.f32.mrb[0].mxu0
        %681 = vmatprep.mubr.f32.mxu0 0.0
        %682 = vmatmul.mubr.f32.gmra.mrb[0].mxu0 %v468
        %v683 = vpop.f32.mrb[0].mxu0
        %v684 = vadd.f32 0.0, %v683
        %v685 = vpop.f32.mrb[0].mxu0
        %686 = vmatprep.mubr.f32.mxu0 0.0
        %687 = vmatmul.mubr.f32.gmra.mrb[0].mxu0 %v471
        %v688 = vpop.f32.mrb[0].mxu0
        %v689 = vadd.f32 0.0, %v688
        %v690 = vpop.f32.mrb[0].mxu0
        %691 = vmatprep.mubr.f32.mxu0 0.0
        %692 = vmatmul.mubr.f32.gmra.mrb[0].mxu0 %v474
        %v693 = vpop.f32.mrb[0].mxu0
        %v694 = vadd.f32 0.0, %v693
        %v695 = vpop.f32.mrb[0].mxu0
        %696 = vmatprep.mubr.f32.mxu0 0.0
        %697 = vmatmul.mubr.f32.gmra.mrb[0].mxu0 %v477
        %v698 = vpop.f32.mrb[0].mxu0
        %v699 = vadd.f32 0.0, %v698
        %v700 = vpop.f32.mrb[0].mxu0
        %701 = vmatprep.mubr.f32.mxu0 0.0
        %702 = vmatmul.mubr.f32.gmra.mrb[0].mxu0 %v480
        %v703 = vpop.f32.mrb[0].mxu0
        %v704 = vadd.f32 0.0, %v703
        %v705 = vpop.f32.mrb[0].mxu0
        %706 = vdwg.mxu0
        %v707 = vld [vmem:[%s4] sm:$0x1]
        %v709 = vlaneseq
        %v710 = vshrl.u32 %v709, 7
        %v711 = vsub.s32 0, %v710
        %v712 = vrot.slane %v707, %v711
        %v714 = vmul.f32 %v549, %v712
        %v715 = vmul.f32 %v554, %v712
        %v716 = vmul.f32 %v559, %v712
        %v717 = vmul.f32 %v564, %v712
        %v718 = vmul.f32 %v569, %v712
        %v719 = vmul.f32 %v574, %v712
        %v720 = vmul.f32 %v579, %v712
        %v721 = vmul.f32 %v584, %v712
        %v722 = vmul.f32 %v589, %v712
        %v723 = vmul.f32 %v594, %v712
        %v724 = vmul.f32 %v599, %v712
        %v725 = vmul.f32 %v604, %v712
        %v726 = vmul.f32 %v609, %v712
        %v727 = vmul.f32 %v614, %v712
        %v728 = vmul.f32 %v619, %v712
        %v729 = vmul.f32 %v624, %v712
        %v730 = vmul.f32 %v629, %v712
        %v731 = vmul.f32 %v634, %v712
        %v732 = vmul.f32 %v639, %v712
        %v733 = vmul.f32 %v644, %v712
        %v734 = vmul.f32 %v649, %v712
        %v735 = vmul.f32 %v654, %v712
        %v736 = vmul.f32 %v659, %v712
        %v737 = vmul.f32 %v664, %v712
        %v738 = vmul.f32 %v669, %v712
        %v739 = vmul.f32 %v674, %v712
        %v740 = vmul.f32 %v679, %v712
        %v741 = vmul.f32 %v684, %v712
        %v742 = vmul.f32 %v689, %v712
        %v743 = vmul.f32 %v694, %v712
        %v744 = vmul.f32 %v699, %v712
        %v745 = vmul.f32 %v704, %v712
        %v746 = vld [vmem:[%s5] sm:$0x1]
        %v748 = vlaneseq
        %v749 = vshrl.u32 %v748, 7
        %v750 = vsub.s32 0, %v749
        %v751 = vrot.slane %v746, %v750
        %v753 = vadd.f32 %v714, %v751
        %v754 = vadd.f32 %v715, %v751
        %v755 = vadd.f32 %v716, %v751
        %v756 = vadd.f32 %v717, %v751
        %v757 = vadd.f32 %v718, %v751
        %v758 = vadd.f32 %v719, %v751
        %v759 = vadd.f32 %v720, %v751
        %v760 = vadd.f32 %v721, %v751
        %v761 = vadd.f32 %v722, %v751
        %v762 = vadd.f32 %v723, %v751
        %v763 = vadd.f32 %v724, %v751
        %v764 = vadd.f32 %v725, %v751
        %v765 = vadd.f32 %v726, %v751
        %v766 = vadd.f32 %v727, %v751
        %v767 = vadd.f32 %v728, %v751
        %v768 = vadd.f32 %v729, %v751
        %v769 = vadd.f32 %v730, %v751
        %v770 = vadd.f32 %v731, %v751
        %v771 = vadd.f32 %v732, %v751
        %v772 = vadd.f32 %v733, %v751
        %v773 = vadd.f32 %v734, %v751
        %v774 = vadd.f32 %v735, %v751
        %v775 = vadd.f32 %v736, %v751
        %v776 = vadd.f32 %v737, %v751
        %v777 = vadd.f32 %v738, %v751
        %v778 = vadd.f32 %v739, %v751
        %v779 = vadd.f32 %v740, %v751
        %v780 = vadd.f32 %v741, %v751
        %v781 = vadd.f32 %v742, %v751
        %v782 = vadd.f32 %v743, %v751
        %v783 = vadd.f32 %v744, %v751
        %v784 = vadd.f32 %v745, %v751
        %v785 = vmax.f32 %v753, 0.0
        %v786 = vmax.f32 %v754, 0.0
        %v787 = vmax.f32 %v755, 0.0
        %v788 = vmax.f32 %v756, 0.0
        %v789 = vmax.f32 %v757, 0.0
        %v790 = vmax.f32 %v758, 0.0
        %v791 = vmax.f32 %v759, 0.0
        %v792 = vmax.f32 %v760, 0.0
        %v793 = vmax.f32 %v761, 0.0
        %v794 = vmax.f32 %v762, 0.0
        %v795 = vmax.f32 %v763, 0.0
        %v796 = vmax.f32 %v764, 0.0
        %v797 = vmax.f32 %v765, 0.0
        %v798 = vmax.f32 %v766, 0.0
        %v799 = vmax.f32 %v767, 0.0
        %v800 = vmax.f32 %v768, 0.0
        %v801 = vmax.f32 %v769, 0.0
        %v802 = vmax.f32 %v770, 0.0
        %v803 = vmax.f32 %v771, 0.0
        %v804 = vmax.f32 %v772, 0.0
        %v805 = vmax.f32 %v773, 0.0
        %v806 = vmax.f32 %v774, 0.0
        %v807 = vmax.f32 %v775, 0.0
        %v808 = vmax.f32 %v776, 0.0
        %v809 = vmax.f32 %v777, 0.0
        %v810 = vmax.f32 %v778, 0.0
        %v811 = vmax.f32 %v779, 0.0
        %v812 = vmax.f32 %v780, 0.0
        %v813 = vmax.f32 %v781, 0.0
        %v814 = vmax.f32 %v782, 0.0
        %v815 = vmax.f32 %v783, 0.0
        %v816 = vmax.f32 %v784, 0.0
        %v817 = vld [vmem:[%s2] sm:$0xff]
        %v818 = vld [vmem:[%s2 + $0x8] sm:$0xff]
        %v819 = vld [vmem:[%s2 + $0x10] sm:$0xff]
        %v820 = vld [vmem:[%s2 + $0x18] sm:$0xff]
        %v821 = vld [vmem:[%s2 + $0x20] sm:$0xff]
        %v822 = vld [vmem:[%s2 + $0x28] sm:$0xff]
        %v823 = vld [vmem:[%s2 + $0x30] sm:$0xff]
        %v824 = vld [vmem:[%s2 + $0x38] sm:$0xff]
        %v825 = vld [vmem:[%s2 + $0x40] sm:$0xff]
        %v826 = vld [vmem:[%s2 + $0x48] sm:$0xff]
        %v827 = vld [vmem:[%s2 + $0x50] sm:$0xff]
        %v828 = vld [vmem:[%s2 + $0x58] sm:$0xff]
        %v829 = vld [vmem:[%s2 + $0x60] sm:$0xff]
        %v830 = vld [vmem:[%s2 + $0x68] sm:$0xff]
        %v831 = vld [vmem:[%s2 + $0x70] sm:$0xff]
        %v832 = vld [vmem:[%s2 + $0x78] sm:$0xff]
        %v833 = vld [vmem:[%s2 + $0x80] sm:$0xff]
        %v834 = vld [vmem:[%s2 + $0x88] sm:$0xff]
        %v835 = vld [vmem:[%s2 + $0x90] sm:$0xff]
        %v836 = vld [vmem:[%s2 + $0x98] sm:$0xff]
        %v837 = vld [vmem:[%s2 + $0xa0] sm:$0xff]
        %v838 = vld [vmem:[%s2 + $0xa8] sm:$0xff]
        %v839 = vld [vmem:[%s2 + $0xb0] sm:$0xff]
        %v840 = vld [vmem:[%s2 + $0xb8] sm:$0xff]
        %v841 = vld [vmem:[%s2 + $0xc0] sm:$0xff]
        %v842 = vld [vmem:[%s2 + $0xc8] sm:$0xff]
        %v843 = vld [vmem:[%s2 + $0xd0] sm:$0xff]
        %v844 = vld [vmem:[%s2 + $0xd8] sm:$0xff]
        %v845 = vld [vmem:[%s2 + $0xe0] sm:$0xff]
        %v846 = vld [vmem:[%s2 + $0xe8] sm:$0xff]
        %v847 = vld [vmem:[%s2 + $0xf0] sm:$0xff]
        %v848 = vld [vmem:[%s2 + $0xf8] sm:$0xff]
        %v849 = vld [vmem:[%s350] sm:$0xff]
        %v850 = vld [vmem:[%s350 + $0x8] sm:$0xff]
        %v851 = vld [vmem:[%s350 + $0x10] sm:$0xff]
        %v852 = vld [vmem:[%s350 + $0x18] sm:$0xff]
        %v853 = vld [vmem:[%s350 + $0x20] sm:$0xff]
        %v854 = vld [vmem:[%s350 + $0x28] sm:$0xff]
        %v855 = vld [vmem:[%s350 + $0x30] sm:$0xff]
        %v856 = vld [vmem:[%s350 + $0x38] sm:$0xff]
        %vm857 = vcmask 523264
        %v859 = vsel %vm857, %v817, 0
        %v862 = vsel %vm857, %v818, 0
        %v865 = vsel %vm857, %v819, 0
        %v868 = vsel %vm857, %v820, 0
        %v871 = vsel %vm857, %v821, 0
        %v874 = vsel %vm857, %v822, 0
        %v877 = vsel %vm857, %v823, 0
        %v880 = vsel %vm857, %v824, 0
        %v883 = vsel %vm857, %v825, 0
        %v886 = vsel %vm857, %v826, 0
        %v889 = vsel %vm857, %v827, 0
        %v892 = vsel %vm857, %v828, 0
        %v895 = vsel %vm857, %v829, 0
        %v898 = vsel %vm857, %v830, 0
        %v901 = vsel %vm857, %v831, 0
        %v904 = vsel %vm857, %v832, 0
        %v907 = vsel %vm857, %v833, 0
        %v910 = vsel %vm857, %v834, 0
        %v913 = vsel %vm857, %v835, 0
        %v916 = vsel %vm857, %v836, 0
        %v919 = vsel %vm857, %v837, 0
        %v922 = vsel %vm857, %v838, 0
        %v925 = vsel %vm857, %v839, 0
        %v928 = vsel %vm857, %v840, 0
        %v931 = vsel %vm857, %v841, 0
        %v934 = vsel %vm857, %v842, 0
        %v937 = vsel %vm857, %v843, 0
        %v940 = vsel %vm857, %v844, 0
        %v943 = vsel %vm857, %v845, 0
        %v946 = vsel %vm857, %v846, 0
        %v949 = vsel %vm857, %v847, 0
        %v952 = vsel %vm857, %v848, 0
        %954 = vmatprep.subr.mxu0 0.0
        %955 = vmatpush1.msra.mxu0 %v849
        %956 = vmatprep.subr.mxu0 0.0
        %957 = vmatpush1.msra.mxu0 %v850
        %958 = vmatprep.subr.mxu0 0.0
        %959 = vmatpush1.msra.mxu0 %v851
        %960 = vmatprep.subr.mxu0 0.0
        %961 = vmatpush1.msra.mxu0 %v852
        %962 = vmatprep.subr.mxu0 0.0
        %963 = vmatpush1.msra.mxu0 %v853
        %964 = vmatprep.subr.mxu0 0.0
        %965 = vmatpush1.msra.mxu0 %v854
        %966 = vmatprep.subr.mxu0 0.0
        %967 = vmatpush1.msra.mxu0 %v855
        %968 = vmatprep.subr.mxu0 0.0
        %969 = vmatpush1.msra.mxu0 %v856
        %970 = vmatprep.subr.mxu0 0.0
        %971 = vmatpush1.msra.mxu0 0.0
        %972 = vmatprep.subr.mxu0 0.0
        %973 = vmatpush1.msra.mxu0 0.0
        %974 = vmatprep.subr.mxu0 0.0
        %975 = vmatpush1.msra.mxu0 0.0
        %976 = vmatprep.subr.mxu0 0.0
        %977 = vmatpush1.msra.mxu0 0.0
        %978 = vmatprep.subr.mxu0 0.0
        %979 = vmatpush1.msra.mxu0 0.0
        %980 = vmatprep.subr.mxu0 0.0
        %981 = vmatpush1.msra.mxu0 0.0
        %982 = vmatprep.subr.mxu0 0.0
        %983 = vmatpush1.msra.mxu0 0.0
        %984 = vmatprep.subr.mxu0 0.0
        %985 = vmatpush1.msra.mxu0 0.0
        %986 = vmatprep.subr.mxu0 0.0
        %987 = vmatpush1.msra.mxu0 0.0
        %988 = vmatprep.subr.mxu0 0.0
        %989 = vmatpush1.msra.mxu0 0.0
        %990 = vmatprep.subr.mxu0 0.0
        %991 = vmatpush1.msra.mxu0 0.0
        %992 = vmatprep.subr.mxu0 0.0
        %993 = vmatpush1.msra.mxu0 0.0
        %994 = vmatprep.subr.mxu0 0.0
        %995 = vmatpush1.msra.mxu0 0.0
        %996 = vmatprep.subr.mxu0 0.0
        %997 = vmatpush1.msra.mxu0 0.0
        %998 = vmatprep.subr.mxu0 0.0
        %999 = vmatpush1.msra.mxu0 0.0
        %1000 = vmatprep.subr.mxu0 0.0
        %1001 = vmatpush1.msra.mxu0 0.0
        %1002 = vmatprep.subr.mxu0 0.0
        %1003 = vmatpush1.msra.mxu0 0.0
        %1004 = vmatprep.subr.mxu0 0.0
        %1005 = vmatpush1.msra.mxu0 0.0
        %1006 = vmatprep.subr.mxu0 0.0
        %1007 = vmatpush1.msra.mxu0 0.0
        %1008 = vmatprep.subr.mxu0 0.0
        %1009 = vmatpush1.msra.mxu0 0.0
        %1010 = vmatprep.subr.mxu0 0.0
        %1011 = vmatpush1.msra.mxu0 0.0
        %1012 = vmatprep.subr.mxu0 0.0
        %1013 = vmatpush1.msra.mxu0 0.0
        %1014 = vmatprep.subr.mxu0 0.0
        %1015 = vmatpush1.msra.mxu0 0.0
        %1016 = vmatprep.subr.mxu0 0.0
        %1017 = vmatpush1.msra.mxu0 0.0
        %1018 = vmatprep.mubr.f32.mxu0 0.0
        %1019 = vmatmul.mubr.f32.gmra.mrb[0].mxu0 %v859
        %v1020 = vpop.f32.mrb[0].mxu0
        %v1021 = vadd.f32 %v785, %v1020
        %v1022 = vpop.f32.mrb[0].mxu0
        %1023 = vmatprep.mubr.f32.mxu0 0.0
        %1024 = vmatmul.mubr.f32.gmra.mrb[0].mxu0 %v862
        %v1025 = vpop.f32.mrb[0].mxu0
        %v1026 = vadd.f32 %v786, %v1025
        %v1027 = vpop.f32.mrb[0].mxu0
        %1028 = vmatprep.mubr.f32.mxu0 0.0
        %1029 = vmatmul.mubr.f32.gmra.mrb[0].mxu0 %v865
        %v1030 = vpop.f32.mrb[0].mxu0
        %v1031 = vadd.f32 %v787, %v1030
        %v1032 = vpop.f32.mrb[0].mxu0
        %1033 = vmatprep.mubr.f32.mxu0 0.0
        %1034 = vmatmul.mubr.f32.gmra.mrb[0].mxu0 %v868
        %v1035 = vpop.f32.mrb[0].mxu0
        %v1036 = vadd.f32 %v788, %v1035
        %v1037 = vpop.f32.mrb[0].mxu0
        %1038 = vmatprep.mubr.f32.mxu0 0.0
        %1039 = vmatmul.mubr.f32.gmra.mrb[0].mxu0 %v871
        %v1040 = vpop.f32.mrb[0].mxu0
        %v1041 = vadd.f32 %v789, %v1040
        %v1042 = vpop.f32.mrb[0].mxu0
        %1043 = vmatprep.mubr.f32.mxu0 0.0
        %1044 = vmatmul.mubr.f32.gmra.mrb[0].mxu0 %v874
        %v1045 = vpop.f32.mrb[0].mxu0
        %v1046 = vadd.f32 %v790, %v1045
        %v1047 = vpop.f32.mrb[0].mxu0
        %1048 = vmatprep.mubr.f32.mxu0 0.0
        %1049 = vmatmul.mubr.f32.gmra.mrb[0].mxu0 %v877
        %v1050 = vpop.f32.mrb[0].mxu0
        %v1051 = vadd.f32 %v791, %v1050
        %v1052 = vpop.f32.mrb[0].mxu0
        %1053 = vmatprep.mubr.f32.mxu0 0.0
        %1054 = vmatmul.mubr.f32.gmra.mrb[0].mxu0 %v880
        %v1055 = vpop.f32.mrb[0].mxu0
        %v1056 = vadd.f32 %v792, %v1055
        %v1057 = vpop.f32.mrb[0].mxu0
        %1058 = vmatprep.mubr.f32.mxu0 0.0
        %1059 = vmatmul.mubr.f32.gmra.mrb[0].mxu0 %v883
        %v1060 = vpop.f32.mrb[0].mxu0
        %v1061 = vadd.f32 %v793, %v1060
        %v1062 = vpop.f32.mrb[0].mxu0
        %1063 = vmatprep.mubr.f32.mxu0 0.0
        %1064 = vmatmul.mubr.f32.gmra.mrb[0].mxu0 %v886
        %v1065 = vpop.f32.mrb[0].mxu0
        %v1066 = vadd.f32 %v794, %v1065
        %v1067 = vpop.f32.mrb[0].mxu0
        %1068 = vmatprep.mubr.f32.mxu0 0.0
        %1069 = vmatmul.mubr.f32.gmra.mrb[0].mxu0 %v889
        %v1070 = vpop.f32.mrb[0].mxu0
        %v1071 = vadd.f32 %v795, %v1070
        %v1072 = vpop.f32.mrb[0].mxu0
        %1073 = vmatprep.mubr.f32.mxu0 0.0
        %1074 = vmatmul.mubr.f32.gmra.mrb[0].mxu0 %v892
        %v1075 = vpop.f32.mrb[0].mxu0
        %v1076 = vadd.f32 %v796, %v1075
        %v1077 = vpop.f32.mrb[0].mxu0
        %1078 = vmatprep.mubr.f32.mxu0 0.0
        %1079 = vmatmul.mubr.f32.gmra.mrb[0].mxu0 %v895
        %v1080 = vpop.f32.mrb[0].mxu0
        %v1081 = vadd.f32 %v797, %v1080
        %v1082 = vpop.f32.mrb[0].mxu0
        %1083 = vmatprep.mubr.f32.mxu0 0.0
        %1084 = vmatmul.mubr.f32.gmra.mrb[0].mxu0 %v898
        %v1085 = vpop.f32.mrb[0].mxu0
        %v1086 = vadd.f32 %v798, %v1085
        %v1087 = vpop.f32.mrb[0].mxu0
        %1088 = vmatprep.mubr.f32.mxu0 0.0
        %1089 = vmatmul.mubr.f32.gmra.mrb[0].mxu0 %v901
        %v1090 = vpop.f32.mrb[0].mxu0
        %v1091 = vadd.f32 %v799, %v1090
        %v1092 = vpop.f32.mrb[0].mxu0
        %1093 = vmatprep.mubr.f32.mxu0 0.0
        %1094 = vmatmul.mubr.f32.gmra.mrb[0].mxu0 %v904
        %v1095 = vpop.f32.mrb[0].mxu0
        %v1096 = vadd.f32 %v800, %v1095
        %v1097 = vpop.f32.mrb[0].mxu0
        %1098 = vmatprep.mubr.f32.mxu0 0.0
        %1099 = vmatmul.mubr.f32.gmra.mrb[0].mxu0 %v907
        %v1100 = vpop.f32.mrb[0].mxu0
        %v1101 = vadd.f32 %v801, %v1100
        %v1102 = vpop.f32.mrb[0].mxu0
        %1103 = vmatprep.mubr.f32.mxu0 0.0
        %1104 = vmatmul.mubr.f32.gmra.mrb[0].mxu0 %v910
        %v1105 = vpop.f32.mrb[0].mxu0
        %v1106 = vadd.f32 %v802, %v1105
        %v1107 = vpop.f32.mrb[0].mxu0
        %1108 = vmatprep.mubr.f32.mxu0 0.0
        %1109 = vmatmul.mubr.f32.gmra.mrb[0].mxu0 %v913
        %v1110 = vpop.f32.mrb[0].mxu0
        %v1111 = vadd.f32 %v803, %v1110
        %v1112 = vpop.f32.mrb[0].mxu0
        %1113 = vmatprep.mubr.f32.mxu0 0.0
        %1114 = vmatmul.mubr.f32.gmra.mrb[0].mxu0 %v916
        %v1115 = vpop.f32.mrb[0].mxu0
        %v1116 = vadd.f32 %v804, %v1115
        %v1117 = vpop.f32.mrb[0].mxu0
        %1118 = vmatprep.mubr.f32.mxu0 0.0
        %1119 = vmatmul.mubr.f32.gmra.mrb[0].mxu0 %v919
        %v1120 = vpop.f32.mrb[0].mxu0
        %v1121 = vadd.f32 %v805, %v1120
        %v1122 = vpop.f32.mrb[0].mxu0
        %1123 = vmatprep.mubr.f32.mxu0 0.0
        %1124 = vmatmul.mubr.f32.gmra.mrb[0].mxu0 %v922
        %v1125 = vpop.f32.mrb[0].mxu0
        %v1126 = vadd.f32 %v806, %v1125
        %v1127 = vpop.f32.mrb[0].mxu0
        %1128 = vmatprep.mubr.f32.mxu0 0.0
        %1129 = vmatmul.mubr.f32.gmra.mrb[0].mxu0 %v925
        %v1130 = vpop.f32.mrb[0].mxu0
        %v1131 = vadd.f32 %v807, %v1130
        %v1132 = vpop.f32.mrb[0].mxu0
        %1133 = vmatprep.mubr.f32.mxu0 0.0
        %1134 = vmatmul.mubr.f32.gmra.mrb[0].mxu0 %v928
        %v1135 = vpop.f32.mrb[0].mxu0
        %v1136 = vadd.f32 %v808, %v1135
        %v1137 = vpop.f32.mrb[0].mxu0
        %1138 = vmatprep.mubr.f32.mxu0 0.0
        %1139 = vmatmul.mubr.f32.gmra.mrb[0].mxu0 %v931
        %v1140 = vpop.f32.mrb[0].mxu0
        %v1141 = vadd.f32 %v809, %v1140
        %v1142 = vpop.f32.mrb[0].mxu0
        %1143 = vmatprep.mubr.f32.mxu0 0.0
        %1144 = vmatmul.mubr.f32.gmra.mrb[0].mxu0 %v934
        %v1145 = vpop.f32.mrb[0].mxu0
        %v1146 = vadd.f32 %v810, %v1145
        %v1147 = vpop.f32.mrb[0].mxu0
        %1148 = vmatprep.mubr.f32.mxu0 0.0
        %1149 = vmatmul.mubr.f32.gmra.mrb[0].mxu0 %v937
        %v1150 = vpop.f32.mrb[0].mxu0
        %v1151 = vadd.f32 %v811, %v1150
        %v1152 = vpop.f32.mrb[0].mxu0
        %1153 = vmatprep.mubr.f32.mxu0 0.0
        %1154 = vmatmul.mubr.f32.gmra.mrb[0].mxu0 %v940
        %v1155 = vpop.f32.mrb[0].mxu0
        %v1156 = vadd.f32 %v812, %v1155
        %v1157 = vpop.f32.mrb[0].mxu0
        %1158 = vmatprep.mubr.f32.mxu0 0.0
        %1159 = vmatmul.mubr.f32.gmra.mrb[0].mxu0 %v943
        %v1160 = vpop.f32.mrb[0].mxu0
        %v1161 = vadd.f32 %v813, %v1160
        %v1162 = vpop.f32.mrb[0].mxu0
        %1163 = vmatprep.mubr.f32.mxu0 0.0
        %1164 = vmatmul.mubr.f32.gmra.mrb[0].mxu0 %v946
        %v1165 = vpop.f32.mrb[0].mxu0
        %v1166 = vadd.f32 %v814, %v1165
        %v1167 = vpop.f32.mrb[0].mxu0
        %1168 = vmatprep.mubr.f32.mxu0 0.0
        %1169 = vmatmul.mubr.f32.gmra.mrb[0].mxu0 %v949
        %v1170 = vpop.f32.mrb[0].mxu0
        %v1171 = vadd.f32 %v815, %v1170
        %v1172 = vpop.f32.mrb[0].mxu0
        %1173 = vmatprep.mubr.f32.mxu0 0.0
        %1174 = vmatmul.mubr.f32.gmra.mrb[0].mxu0 %v952
        %v1175 = vpop.f32.mrb[0].mxu0
        %v1176 = vadd.f32 %v816, %v1175
        %v1177 = vpop.f32.mrb[0].mxu0
        %1178 = vdwg.mxu0
        %vm1179 = vcmask 261120
        %1180 = vst.msk [vmem:[#allocation2] sm:$0xff] %vm1179, 0.0
        %1181 = vst.msk [vmem:[#allocation2 + $0x8] sm:$0xff] %vm1179, 0.0
        %1182 = vst.msk [vmem:[#allocation2 + $0x10] sm:$0xff] %vm1179, 0.0
        %1183 = vst.msk [vmem:[#allocation2 + $0x18] sm:$0xff] %vm1179, 0.0
        %1184 = vst.msk [vmem:[#allocation2 + $0x20] sm:$0xff] %vm1179, 0.0
        %1185 = vst.msk [vmem:[#allocation2 + $0x28] sm:$0xff] %vm1179, 0.0
        %1186 = vst.msk [vmem:[#allocation2 + $0x30] sm:$0xff] %vm1179, 0.0
        %1187 = vst.msk [vmem:[#allocation2 + $0x38] sm:$0xff] %vm1179, 0.0
        %1188 = vst.msk [vmem:[#allocation2 + $0x40] sm:$0xff] %vm1179, 0.0
        %1189 = vst.msk [vmem:[#allocation2 + $0x48] sm:$0xff] %vm1179, 0.0
        %1190 = vst.msk [vmem:[#allocation2 + $0x50] sm:$0xff] %vm1179, 0.0
        %1191 = vst.msk [vmem:[#allocation2 + $0x58] sm:$0xff] %vm1179, 0.0
        %1192 = vst.msk [vmem:[#allocation2 + $0x60] sm:$0xff] %vm1179, 0.0
        %1193 = vst.msk [vmem:[#allocation2 + $0x68] sm:$0xff] %vm1179, 0.0
        %1194 = vst.msk [vmem:[#allocation2 + $0x70] sm:$0xff] %vm1179, 0.0
        %1195 = vst.msk [vmem:[#allocation2 + $0x78] sm:$0xff] %vm1179, 0.0
        %1196 = vst.msk [vmem:[#allocation2 + $0x80] sm:$0xff] %vm1179, 0.0
        %1197 = vst.msk [vmem:[#allocation2 + $0x88] sm:$0xff] %vm1179, 0.0
        %1198 = vst.msk [vmem:[#allocation2 + $0x90] sm:$0xff] %vm1179, 0.0
        %1199 = vst.msk [vmem:[#allocation2 + $0x98] sm:$0xff] %vm1179, 0.0
        %1200 = vst.msk [vmem:[#allocation2 + $0xa0] sm:$0xff] %vm1179, 0.0
        %1201 = vst.msk [vmem:[#allocation2 + $0xa8] sm:$0xff] %vm1179, 0.0
        %1202 = vst.msk [vmem:[#allocation2 + $0xb0] sm:$0xff] %vm1179, 0.0
        %1203 = vst.msk [vmem:[#allocation2 + $0xb8] sm:$0xff] %vm1179, 0.0
        %1204 = vst.msk [vmem:[#allocation2 + $0xc0] sm:$0xff] %vm1179, 0.0
        %1205 = vst.msk [vmem:[#allocation2 + $0xc8] sm:$0xff] %vm1179, 0.0
        %1206 = vst.msk [vmem:[#allocation2 + $0xd0] sm:$0xff] %vm1179, 0.0
        %1207 = vst.msk [vmem:[#allocation2 + $0xd8] sm:$0xff] %vm1179, 0.0
        %1208 = vst.msk [vmem:[#allocation2 + $0xe0] sm:$0xff] %vm1179, 0.0
        %1209 = vst.msk [vmem:[#allocation2 + $0xe8] sm:$0xff] %vm1179, 0.0
        %1210 = vst.msk [vmem:[#allocation2 + $0xf0] sm:$0xff] %vm1179, 0.0
        %1211 = vst.msk [vmem:[#allocation2 + $0xf8] sm:$0xff] %vm1179, 0.0
        %1212 = vst.msk [vmem:[#allocation2 + $0x100] sm:$0xff] %vm1179, 0.0
        %1213 = vst.msk [vmem:[#allocation2 + $0x108] sm:$0xff] %vm1179, 0.0
        %1214 = vst.msk [vmem:[#allocation2 + $0x110] sm:$0xff] %vm1179, 0.0
        %1215 = vst.msk [vmem:[#allocation2 + $0x118] sm:$0xff] %vm1179, 0.0
        %1216 = vst.msk [vmem:[#allocation2 + $0x120] sm:$0xff] %vm1179, 0.0
        %1217 = vst.msk [vmem:[#allocation2 + $0x128] sm:$0xff] %vm1179, 0.0
        %1218 = vst.msk [vmem:[#allocation2 + $0x130] sm:$0xff] %vm1179, 0.0
        %1219 = vst.msk [vmem:[#allocation2 + $0x138] sm:$0xff] %vm1179, 0.0
        %1220 = vst.msk [vmem:[#allocation2 + $0x140] sm:$0xff] %vm1179, 0.0
        %1221 = vst.msk [vmem:[#allocation2 + $0x148] sm:$0xff] %vm1179, 0.0
        %1222 = vst.msk [vmem:[#allocation2 + $0x150] sm:$0xff] %vm1179, 0.0
        %1223 = vst.msk [vmem:[#allocation2 + $0x158] sm:$0xff] %vm1179, 0.0
        %1224 = vst.msk [vmem:[#allocation2 + $0x160] sm:$0xff] %vm1179, 0.0
        %1225 = vst.msk [vmem:[#allocation2 + $0x168] sm:$0xff] %vm1179, 0.0
        %1226 = vst.msk [vmem:[#allocation2 + $0x170] sm:$0xff] %vm1179, 0.0
        %1227 = vst.msk [vmem:[#allocation2 + $0x178] sm:$0xff] %vm1179, 0.0
        %1228 = vst.msk [vmem:[#allocation2 + $0x180] sm:$0xff] %vm1179, 0.0
        %1229 = vst.msk [vmem:[#allocation2 + $0x188] sm:$0xff] %vm1179, 0.0
        %1230 = vst.msk [vmem:[#allocation2 + $0x190] sm:$0xff] %vm1179, 0.0
        %1231 = vst.msk [vmem:[#allocation2 + $0x198] sm:$0xff] %vm1179, 0.0
        %1232 = vst.msk [vmem:[#allocation2 + $0x1a0] sm:$0xff] %vm1179, 0.0
        %1233 = vst.msk [vmem:[#allocation2 + $0x1a8] sm:$0xff] %vm1179, 0.0
        %1234 = vst.msk [vmem:[#allocation2 + $0x1b0] sm:$0xff] %vm1179, 0.0
        %1235 = vst.msk [vmem:[#allocation2 + $0x1b8] sm:$0xff] %vm1179, 0.0
        %1236 = vst.msk [vmem:[#allocation2 + $0x1c0] sm:$0xff] %vm1179, 0.0
        %1237 = vst.msk [vmem:[#allocation2 + $0x1c8] sm:$0xff] %vm1179, 0.0
        %1238 = vst.msk [vmem:[#allocation2 + $0x1d0] sm:$0xff] %vm1179, 0.0
        %1239 = vst.msk [vmem:[#allocation2 + $0x1d8] sm:$0xff] %vm1179, 0.0
        %1240 = vst.msk [vmem:[#allocation2 + $0x1e0] sm:$0xff] %vm1179, 0.0
        %1241 = vst.msk [vmem:[#allocation2 + $0x1e8] sm:$0xff] %vm1179, 0.0
        %1242 = vst.msk [vmem:[#allocation2 + $0x1f0] sm:$0xff] %vm1179, 0.0
        %1243 = vst.msk [vmem:[#allocation2 + $0x1f8] sm:$0xff] %vm1179, 0.0
        %1244 = vst.msk [vmem:[#allocation2 + $0x200] sm:$0xff] %vm1179, 0.0
        %1245 = vst.msk [vmem:[#allocation2 + $0x208] sm:$0xff] %vm1179, 0.0
        %1246 = vst.msk [vmem:[#allocation2 + $0x210] sm:$0xff] %vm1179, 0.0
        %1247 = vst.msk [vmem:[#allocation2 + $0x218] sm:$0xff] %vm1179, 0.0
        %1248 = vst.msk [vmem:[#allocation2 + $0x220] sm:$0xff] %vm1179, 0.0
        %1249 = vst.msk [vmem:[#allocation2 + $0x228] sm:$0xff] %vm1179, 0.0
        %1250 = vst.msk [vmem:[#allocation2 + $0x230] sm:$0xff] %vm1179, 0.0
        %1251 = vst.msk [vmem:[#allocation2 + $0x238] sm:$0xff] %vm1179, 0.0
        %s1252 = scalar_lea.vmem [#allocation2], 32
        %1253 = vst.msk [vmem:[%s1252 + $0x8] sm:$0xff] %vm1179, %v1021
        %1254 = vst.msk [vmem:[%s1252 + $0x10] sm:$0xff] %vm1179, %v1026
        %1255 = vst.msk [vmem:[%s1252 + $0x28] sm:$0xff] %vm1179, %v1031
        %1256 = vst.msk [vmem:[%s1252 + $0x30] sm:$0xff] %vm1179, %v1036
        %1257 = vst.msk [vmem:[%s1252 + $0x48] sm:$0xff] %vm1179, %v1041
        %1258 = vst.msk [vmem:[%s1252 + $0x50] sm:$0xff] %vm1179, %v1046
        %1259 = vst.msk [vmem:[%s1252 + $0x68] sm:$0xff] %vm1179, %v1051
        %1260 = vst.msk [vmem:[%s1252 + $0x70] sm:$0xff] %vm1179, %v1056
        %1261 = vst.msk [vmem:[%s1252 + $0x88] sm:$0xff] %vm1179, %v1061
        %1262 = vst.msk [vmem:[%s1252 + $0x90] sm:$0xff] %vm1179, %v1066
        %1263 = vst.msk [vmem:[%s1252 + $0xa8] sm:$0xff] %vm1179, %v1071
        %1264 = vst.msk [vmem:[%s1252 + $0xb0] sm:$0xff] %vm1179, %v1076
        %1265 = vst.msk [vmem:[%s1252 + $0xc8] sm:$0xff] %vm1179, %v1081
        %1266 = vst.msk [vmem:[%s1252 + $0xd0] sm:$0xff] %vm1179, %v1086
        %1267 = vst.msk [vmem:[%s1252 + $0xe8] sm:$0xff] %vm1179, %v1091
        %1268 = vst.msk [vmem:[%s1252 + $0xf0] sm:$0xff] %vm1179, %v1096
        %1269 = vst.msk [vmem:[%s1252 + $0x108] sm:$0xff] %vm1179, %v1101
        %1270 = vst.msk [vmem:[%s1252 + $0x110] sm:$0xff] %vm1179, %v1106
        %1271 = vst.msk [vmem:[%s1252 + $0x128] sm:$0xff] %vm1179, %v1111
        %1272 = vst.msk [vmem:[%s1252 + $0x130] sm:$0xff] %vm1179, %v1116
        %1273 = vst.msk [vmem:[%s1252 + $0x148] sm:$0xff] %vm1179, %v1121
        %1274 = vst.msk [vmem:[%s1252 + $0x150] sm:$0xff] %vm1179, %v1126
        %1275 = vst.msk [vmem:[%s1252 + $0x168] sm:$0xff] %vm1179, %v1131
        %1276 = vst.msk [vmem:[%s1252 + $0x170] sm:$0xff] %vm1179, %v1136
        %1277 = vst.msk [vmem:[%s1252 + $0x188] sm:$0xff] %vm1179, %v1141
        %1278 = vst.msk [vmem:[%s1252 + $0x190] sm:$0xff] %vm1179, %v1146
        %1279 = vst.msk [vmem:[%s1252 + $0x1a8] sm:$0xff] %vm1179, %v1151
        %1280 = vst.msk [vmem:[%s1252 + $0x1b0] sm:$0xff] %vm1179, %v1156
        %1281 = vst.msk [vmem:[%s1252 + $0x1c8] sm:$0xff] %vm1179, %v1161
        %1282 = vst.msk [vmem:[%s1252 + $0x1d0] sm:$0xff] %vm1179, %v1166
        %1283 = vst.msk [vmem:[%s1252 + $0x1e8] sm:$0xff] %vm1179, %v1171
        %1284 = vst.msk [vmem:[%s1252 + $0x1f0] sm:$0xff] %vm1179, %v1176
        %v1285 = vld [vmem:[#allocation2] sm:$0xff]
        %v1286 = vld [vmem:[#allocation2 + $0x8] sm:$0xff]
        %v1287 = vld [vmem:[#allocation2 + $0x10] sm:$0xff]
        %v1288 = vld [vmem:[#allocation2 + $0x18] sm:$0xff]
        %v1289 = vld [vmem:[#allocation2 + $0x20] sm:$0xff]
        %v1290 = vld [vmem:[#allocation2 + $0x28] sm:$0xff]
        %v1291 = vld [vmem:[#allocation2 + $0x30] sm:$0xff]
        %v1292 = vld [vmem:[#allocation2 + $0x38] sm:$0xff]
        %v1293 = vld [vmem:[#allocation2 + $0x40] sm:$0xff]
        %v1294 = vld [vmem:[#allocation2 + $0x48] sm:$0xff]
        %v1295 = vld [vmem:[#allocation2 + $0x50] sm:$0xff]
        %v1296 = vld [vmem:[#allocation2 + $0x58] sm:$0xff]
        %v1297 = vld [vmem:[#allocation2 + $0x60] sm:$0xff]
        %v1298 = vld [vmem:[#allocation2 + $0x68] sm:$0xff]
        %v1299 = vld [vmem:[#allocation2 + $0x70] sm:$0xff]
        %v1300 = vld [vmem:[#allocation2 + $0x78] sm:$0xff]
        %v1301 = vld [vmem:[#allocation2 + $0x80] sm:$0xff]
        %v1302 = vld [vmem:[#allocation2 + $0x88] sm:$0xff]
        %v1303 = vld [vmem:[#allocation2 + $0x90] sm:$0xff]
        %v1304 = vld [vmem:[#allocation2 + $0x98] sm:$0xff]
        %v1305 = vld [vmem:[#allocation2 + $0xa0] sm:$0xff]
        %v1306 = vld [vmem:[#allocation2 + $0xa8] sm:$0xff]
        %v1307 = vld [vmem:[#allocation2 + $0xb0] sm:$0xff]
        %v1308 = vld [vmem:[#allocation2 + $0xb8] sm:$0xff]
        %v1309 = vld [vmem:[#allocation2 + $0xc0] sm:$0xff]
        %v1310 = vld [vmem:[#allocation2 + $0xc8] sm:$0xff]
        %v1311 = vld [vmem:[#allocation2 + $0xd0] sm:$0xff]
        %v1312 = vld [vmem:[#allocation2 + $0xd8] sm:$0xff]
        %v1313 = vld [vmem:[#allocation2 + $0xe0] sm:$0xff]
        %v1314 = vld [vmem:[#allocation2 + $0xe8] sm:$0xff]
        %v1315 = vld [vmem:[#allocation2 + $0xf0] sm:$0xff]
        %v1316 = vld [vmem:[#allocation2 + $0xf8] sm:$0xff]
        %v1317 = vld [vmem:[#allocation2 + $0x100] sm:$0xff]
        %v1318 = vld [vmem:[#allocation2 + $0x108] sm:$0xff]
        %v1319 = vld [vmem:[#allocation2 + $0x110] sm:$0xff]
        %v1320 = vld [vmem:[#allocation2 + $0x118] sm:$0xff]
        %v1321 = vld [vmem:[#allocation2 + $0x120] sm:$0xff]
        %v1322 = vld [vmem:[#allocation2 + $0x128] sm:$0xff]
        %v1323 = vld [vmem:[#allocation2 + $0x130] sm:$0xff]
        %v1324 = vld [vmem:[#allocation2 + $0x138] sm:$0xff]
        %v1325 = vld [vmem:[#allocation2 + $0x140] sm:$0xff]
        %v1326 = vld [vmem:[#allocation2 + $0x148] sm:$0xff]
        %v1327 = vld [vmem:[#allocation2 + $0x150] sm:$0xff]
        %v1328 = vld [vmem:[#allocation2 + $0x158] sm:$0xff]
        %v1329 = vld [vmem:[#allocation2 + $0x160] sm:$0xff]
        %v1330 = vld [vmem:[#allocation2 + $0x168] sm:$0xff]
        %v1331 = vld [vmem:[#allocation2 + $0x170] sm:$0xff]
        %v1332 = vld [vmem:[#allocation2 + $0x178] sm:$0xff]
        %v1333 = vld [vmem:[#allocation2 + $0x180] sm:$0xff]
        %v1334 = vld [vmem:[#allocation2 + $0x188] sm:$0xff]
        %v1335 = vld [vmem:[#allocation2 + $0x190] sm:$0xff]
        %v1336 = vld [vmem:[#allocation2 + $0x198] sm:$0xff]
        %v1337 = vld [vmem:[#allocation2 + $0x1a0] sm:$0xff]
        %v1338 = vld [vmem:[#allocation2 + $0x1a8] sm:$0xff]
        %v1339 = vld [vmem:[#allocation2 + $0x1b0] sm:$0xff]
        %v1340 = vld [vmem:[#allocation2 + $0x1b8] sm:$0xff]
        %v1341 = vld [vmem:[#allocation2 + $0x1c0] sm:$0xff]
        %v1342 = vld [vmem:[#allocation2 + $0x1c8] sm:$0xff]
        %v1343 = vld [vmem:[#allocation2 + $0x1d0] sm:$0xff]
        %v1344 = vld [vmem:[#allocation2 + $0x1d8] sm:$0xff]
        %v1345 = vld [vmem:[#allocation2 + $0x1e0] sm:$0xff]
        %v1346 = vld [vmem:[#allocation2 + $0x1e8] sm:$0xff]
        %v1347 = vld [vmem:[#allocation2 + $0x1f0] sm:$0xff]
        %v1348 = vld [vmem:[#allocation2 + $0x1f8] sm:$0xff]
        %v1349 = vld [vmem:[#allocation2 + $0x200] sm:$0xff]
        %v1350 = vld [vmem:[#allocation2 + $0x208] sm:$0xff]
        %v1351 = vld [vmem:[#allocation2 + $0x210] sm:$0xff]
        %v1352 = vld [vmem:[#allocation2 + $0x218] sm:$0xff]
        %v1353 = vld [vmem:[#allocation2 + $0x220] sm:$0xff]
        %v1354 = vld [vmem:[#allocation2 + $0x228] sm:$0xff]
        %v1355 = vld [vmem:[#allocation2 + $0x230] sm:$0xff]
        %v1356 = vld [vmem:[#allocation2 + $0x238] sm:$0xff]
        %vm1405 = vcmask 1040384
        %v1406 = vrot.slane %v1285, 7
        %v1407 = vrot.slane %v1286, 7
        %v1408 = vsel %vm1405, %v1406, %v1407
        %v1409 = vrot.slane %v1287, 7
        %v1410 = vsel %vm1405, %v1407, %v1409
        %v1411 = vrot.slane %v1289, 7
        %v1412 = vrot.slane %v1290, 7
        %v1413 = vsel %vm1405, %v1411, %v1412
        %v1414 = vrot.slane %v1291, 7
        %v1415 = vsel %vm1405, %v1412, %v1414
        %v1416 = vrot.slane %v1293, 7
        %v1417 = vrot.slane %v1294, 7
        %v1418 = vsel %vm1405, %v1416, %v1417
        %v1419 = vrot.slane %v1295, 7
        %v1420 = vsel %vm1405, %v1417, %v1419
        %v1421 = vrot.slane %v1297, 7
        %v1422 = vrot.slane %v1298, 7
        %v1423 = vsel %vm1405, %v1421, %v1422
        %v1424 = vrot.slane %v1299, 7
        %v1425 = vsel %vm1405, %v1422, %v1424
        %v1426 = vrot.slane %v1301, 7
        %v1427 = vrot.slane %v1302, 7
        %v1428 = vsel %vm1405, %v1426, %v1427
        %v1429 = vrot.slane %v1303, 7
        %v1430 = vsel %vm1405, %v1427, %v1429
        %v1431 = vrot.slane %v1305, 7
        %v1432 = vrot.slane %v1306, 7
        %v1433 = vsel %vm1405, %v1431, %v1432
        %v1434 = vrot.slane %v1307, 7
        %v1435 = vsel %vm1405, %v1432, %v1434
        %v1436 = vrot.slane %v1309, 7
        %v1437 = vrot.slane %v1310, 7
        %v1438 = vsel %vm1405, %v1436, %v1437
        %v1439 = vrot.slane %v1311, 7
        %v1440 = vsel %vm1405, %v1437, %v1439
        %v1441 = vrot.slane %v1313, 7
        %v1442 = vrot.slane %v1314, 7
        %v1443 = vsel %vm1405, %v1441, %v1442
        %v1444 = vrot.slane %v1315, 7
        %v1445 = vsel %vm1405, %v1442, %v1444
        %v1446 = vrot.slane %v1317, 7
        %v1447 = vrot.slane %v1318, 7
        %v1448 = vsel %vm1405, %v1446, %v1447
        %v1449 = vrot.slane %v1319, 7
        %v1450 = vsel %vm1405, %v1447, %v1449
        %v1451 = vrot.slane %v1321, 7
        %v1452 = vrot.slane %v1322, 7
        %v1453 = vsel %vm1405, %v1451, %v1452
        %v1454 = vrot.slane %v1323, 7
        %v1455 = vsel %vm1405, %v1452, %v1454
        %v1456 = vrot.slane %v1325, 7
        %v1457 = vrot.slane %v1326, 7
        %v1458 = vsel %vm1405, %v1456, %v1457
        %v1459 = vrot.slane %v1327, 7
        %v1460 = vsel %vm1405, %v1457, %v1459
        %v1461 = vrot.slane %v1329, 7
        %v1462 = vrot.slane %v1330, 7
        %v1463 = vsel %vm1405, %v1461, %v1462
        %v1464 = vrot.slane %v1331, 7
        %v1465 = vsel %vm1405, %v1462, %v1464
        %v1466 = vrot.slane %v1333, 7
        %v1467 = vrot.slane %v1334, 7
        %v1468 = vsel %vm1405, %v1466, %v1467
        %v1469 = vrot.slane %v1335, 7
        %v1470 = vsel %vm1405, %v1467, %v1469
        %v1471 = vrot.slane %v1337, 7
        %v1472 = vrot.slane %v1338, 7
        %v1473 = vsel %vm1405, %v1471, %v1472
        %v1474 = vrot.slane %v1339, 7
        %v1475 = vsel %vm1405, %v1472, %v1474
        %v1476 = vrot.slane %v1341, 7
        %v1477 = vrot.slane %v1342, 7
        %v1478 = vsel %vm1405, %v1476, %v1477
        %v1479 = vrot.slane %v1343, 7
        %v1480 = vsel %vm1405, %v1477, %v1479
        %v1481 = vrot.slane %v1345, 7
        %v1482 = vrot.slane %v1346, 7
        %v1483 = vsel %vm1405, %v1481, %v1482
        %v1484 = vrot.slane %v1347, 7
        %v1485 = vsel %vm1405, %v1482, %v1484
        %vm1534 = vcmask 1046528
        %v1535 = vrot.slane %v1286, 1
        %v1536 = vrot.slane %v1287, 1
        %v1537 = vsel %vm1534, %v1535, %v1536
        %v1538 = vrot.slane %v1288, 1
        %v1539 = vsel %vm1534, %v1536, %v1538
        %v1540 = vrot.slane %v1290, 1
        %v1541 = vrot.slane %v1291, 1
        %v1542 = vsel %vm1534, %v1540, %v1541
        %v1543 = vrot.slane %v1292, 1
        %v1544 = vsel %vm1534, %v1541, %v1543
        %v1545 = vrot.slane %v1294, 1
        %v1546 = vrot.slane %v1295, 1
        %v1547 = vsel %vm1534, %v1545, %v1546
        %v1548 = vrot.slane %v1296, 1
        %v1549 = vsel %vm1534, %v1546, %v1548
        %v1550 = vrot.slane %v1298, 1
        %v1551 = vrot.slane %v1299, 1
        %v1552 = vsel %vm1534, %v1550, %v1551
        %v1553 = vrot.slane %v1300, 1
        %v1554 = vsel %vm1534, %v1551, %v1553
        %v1555 = vrot.slane %v1302, 1
        %v1556 = vrot.slane %v1303, 1
        %v1557 = vsel %vm1534, %v1555, %v1556
        %v1558 = vrot.slane %v1304, 1
        %v1559 = vsel %vm1534, %v1556, %v1558
        %v1560 = vrot.slane %v1306, 1
        %v1561 = vrot.slane %v1307, 1
        %v1562 = vsel %vm1534, %v1560, %v1561
        %v1563 = vrot.slane %v1308, 1
        %v1564 = vsel %vm1534, %v1561, %v1563
        %v1565 = vrot.slane %v1310, 1
        %v1566 = vrot.slane %v1311, 1
        %v1567 = vsel %vm1534, %v1565, %v1566
        %v1568 = vrot.slane %v1312, 1
        %v1569 = vsel %vm1534, %v1566, %v1568
        %v1570 = vrot.slane %v1314, 1
        %v1571 = vrot.slane %v1315, 1
        %v1572 = vsel %vm1534, %v1570, %v1571
        %v1573 = vrot.slane %v1316, 1
        %v1574 = vsel %vm1534, %v1571, %v1573
        %v1575 = vrot.slane %v1318, 1
        %v1576 = vrot.slane %v1319, 1
        %v1577 = vsel %vm1534, %v1575, %v1576
        %v1578 = vrot.slane %v1320, 1
        %v1579 = vsel %vm1534, %v1576, %v1578
        %v1580 = vrot.slane %v1322, 1
        %v1581 = vrot.slane %v1323, 1
        %v1582 = vsel %vm1534, %v1580, %v1581
        %v1583 = vrot.slane %v1324, 1
        %v1584 = vsel %vm1534, %v1581, %v1583
        %v1585 = vrot.slane %v1326, 1
        %v1586 = vrot.slane %v1327, 1
        %v1587 = vsel %vm1534, %v1585, %v1586
        %v1588 = vrot.slane %v1328, 1
        %v1589 = vsel %vm1534, %v1586, %v1588
        %v1590 = vrot.slane %v1330, 1
        %v1591 = vrot.slane %v1331, 1
        %v1592 = vsel %vm1534, %v1590, %v1591
        %v1593 = vrot.slane %v1332, 1
        %v1594 = vsel %vm1534, %v1591, %v1593
        %v1595 = vrot.slane %v1334, 1
        %v1596 = vrot.slane %v1335, 1
        %v1597 = vsel %vm1534, %v1595, %v1596
        %v1598 = vrot.slane %v1336, 1
        %v1599 = vsel %vm1534, %v1596, %v1598
        %v1600 = vrot.slane %v1338, 1
        %v1601 = vrot.slane %v1339, 1
        %v1602 = vsel %vm1534, %v1600, %v1601
        %v1603 = vrot.slane %v1340, 1
        %v1604 = vsel %vm1534, %v1601, %v1603
        %v1605 = vrot.slane %v1342, 1
        %v1606 = vrot.slane %v1343, 1
        %v1607 = vsel %vm1534, %v1605, %v1606
        %v1608 = vrot.slane %v1344, 1
        %v1609 = vsel %vm1534, %v1606, %v1608
        %v1610 = vrot.slane %v1346, 1
        %v1611 = vrot.slane %v1347, 1
        %v1612 = vsel %vm1534, %v1610, %v1611
        %v1613 = vrot.slane %v1348, 1
        %v1614 = vsel %vm1534, %v1611, %v1613
        %v1618 = vrot.slane %v1349, 7
        %v1619 = vrot.slane %v1350, 7
        %v1620 = vsel %vm1405, %v1618, %v1619
        %v1621 = vrot.slane %v1351, 7
        %v1622 = vsel %vm1405, %v1619, %v1621
        %v1624 = vrot.slane %v1350, 1
        %v1625 = vrot.slane %v1351, 1
        %v1626 = vsel %vm1534, %v1624, %v1625
        %v1627 = vrot.slane %v1352, 1
        %v1628 = vsel %vm1534, %v1625, %v1627
        %v1632 = vrot.slane %v1353, 7
        %v1633 = vrot.slane %v1354, 7
        %v1634 = vsel %vm1405, %v1632, %v1633
        %v1635 = vrot.slane %v1355, 7
        %v1636 = vsel %vm1405, %v1633, %v1635
        %v1638 = vrot.slane %v1354, 1
        %v1639 = vrot.slane %v1355, 1
        %v1640 = vsel %vm1534, %v1638, %v1639
        %v1641 = vrot.slane %v1356, 1
        %v1642 = vsel %vm1534, %v1639, %v1641
        %1643 = vrot.lane.b32.xlu0 %v1286, 32
        %v1644 = vpop.permute.xlu0 %1643
        %1645 = vrot.lane.b32.xlu0 %v1287, 32
        %v1646 = vpop.permute.xlu0 %1645
        %1647 = vrot.lane.b32.xlu0 %v1290, 32
        %v1648 = vpop.permute.xlu0 %1647
        %1649 = vrot.lane.b32.xlu0 %v1291, 32
        %v1650 = vpop.permute.xlu0 %1649
        %1651 = vrot.lane.b32.xlu0 %v1294, 32
        %v1652 = vpop.permute.xlu0 %1651
        %1653 = vrot.lane.b32.xlu0 %v1295, 32
        %v1654 = vpop.permute.xlu0 %1653
        %1655 = vrot.lane.b32.xlu0 %v1298, 32
        %v1656 = vpop.permute.xlu0 %1655
        %1657 = vrot.lane.b32.xlu0 %v1299, 32
        %v1658 = vpop.permute.xlu0 %1657
        %1659 = vrot.lane.b32.xlu0 %v1302, 32
        %v1660 = vpop.permute.xlu0 %1659
        %1661 = vrot.lane.b32.xlu0 %v1303, 32
        %v1662 = vpop.permute.xlu0 %1661
        %1663 = vrot.lane.b32.xlu0 %v1306, 32
        %v1664 = vpop.permute.xlu0 %1663
        %1665 = vrot.lane.b32.xlu0 %v1307, 32
        %v1666 = vpop.permute.xlu0 %1665
        %1667 = vrot.lane.b32.xlu0 %v1310, 32
        %v1668 = vpop.permute.xlu0 %1667
        %1669 = vrot.lane.b32.xlu0 %v1311, 32
        %v1670 = vpop.permute.xlu0 %1669
        %1671 = vrot.lane.b32.xlu0 %v1314, 32
        %v1672 = vpop.permute.xlu0 %1671
        %1673 = vrot.lane.b32.xlu0 %v1315, 32
        %v1674 = vpop.permute.xlu0 %1673
        %1675 = vrot.lane.b32.xlu0 %v1318, 32
        %v1676 = vpop.permute.xlu0 %1675
        %1677 = vrot.lane.b32.xlu0 %v1319, 32
        %v1678 = vpop.permute.xlu0 %1677
        %1679 = vrot.lane.b32.xlu0 %v1322, 32
        %v1680 = vpop.permute.xlu0 %1679
        %1681 = vrot.lane.b32.xlu0 %v1323, 32
        %v1682 = vpop.permute.xlu0 %1681
        %1683 = vrot.lane.b32.xlu0 %v1326, 32
        %v1684 = vpop.permute.xlu0 %1683
        %1685 = vrot.lane.b32.xlu0 %v1327, 32
        %v1686 = vpop.permute.xlu0 %1685
        %1687 = vrot.lane.b32.xlu0 %v1330, 32
        %v1688 = vpop.permute.xlu0 %1687
        %1689 = vrot.lane.b32.xlu0 %v1331, 32
        %v1690 = vpop.permute.xlu0 %1689
        %1691 = vrot.lane.b32.xlu0 %v1334, 32
        %v1692 = vpop.permute.xlu0 %1691
        %1693 = vrot.lane.b32.xlu0 %v1335, 32
        %v1694 = vpop.permute.xlu0 %1693
        %1695 = vrot.lane.b32.xlu0 %v1338, 32
        %v1696 = vpop.permute.xlu0 %1695
        %1697 = vrot.lane.b32.xlu0 %v1339, 32
        %v1698 = vpop.permute.xlu0 %1697
        %1699 = vrot.lane.b32.xlu0 %v1342, 32
        %v1700 = vpop.permute.xlu0 %1699
        %1701 = vrot.lane.b32.xlu0 %v1343, 32
        %v1702 = vpop.permute.xlu0 %1701
        %1703 = vrot.lane.b32.xlu0 %v1346, 32
        %v1704 = vpop.permute.xlu0 %1703
        %1705 = vrot.lane.b32.xlu0 %v1347, 32
        %v1706 = vpop.permute.xlu0 %1705
        %1739 = vrot.lane.b32.xlu0 %v1537, 64
        %v1740 = vpop.permute.xlu0 %1739
        %1741 = vrot.lane.b32.xlu0 %v1539, 64
        %v1742 = vpop.permute.xlu0 %1741
        %1743 = vrot.lane.b32.xlu0 %v1542, 64
        %v1744 = vpop.permute.xlu0 %1743
        %1745 = vrot.lane.b32.xlu0 %v1544, 64
        %v1746 = vpop.permute.xlu0 %1745
        %1747 = vrot.lane.b32.xlu0 %v1547, 64
        %v1748 = vpop.permute.xlu0 %1747
        %1749 = vrot.lane.b32.xlu0 %v1549, 64
        %v1750 = vpop.permute.xlu0 %1749
        %1751 = vrot.lane.b32.xlu0 %v1552, 64
        %v1752 = vpop.permute.xlu0 %1751
        %1753 = vrot.lane.b32.xlu0 %v1554, 64
        %v1754 = vpop.permute.xlu0 %1753
        %1755 = vrot.lane.b32.xlu0 %v1557, 64
        %v1756 = vpop.permute.xlu0 %1755
        %1757 = vrot.lane.b32.xlu0 %v1559, 64
        %v1758 = vpop.permute.xlu0 %1757
        %1759 = vrot.lane.b32.xlu0 %v1562, 64
        %v1760 = vpop.permute.xlu0 %1759
        %1761 = vrot.lane.b32.xlu0 %v1564, 64
        %v1762 = vpop.permute.xlu0 %1761
        %1763 = vrot.lane.b32.xlu0 %v1567, 64
        %v1764 = vpop.permute.xlu0 %1763
        %1765 = vrot.lane.b32.xlu0 %v1569, 64
        %v1766 = vpop.permute.xlu0 %1765
        %1767 = vrot.lane.b32.xlu0 %v1572, 64
        %v1768 = vpop.permute.xlu0 %1767
        %1769 = vrot.lane.b32.xlu0 %v1574, 64
        %v1770 = vpop.permute.xlu0 %1769
        %1771 = vrot.lane.b32.xlu0 %v1577, 64
        %v1772 = vpop.permute.xlu0 %1771
        %1773 = vrot.lane.b32.xlu0 %v1579, 64
        %v1774 = vpop.permute.xlu0 %1773
        %1775 = vrot.lane.b32.xlu0 %v1582, 64
        %v1776 = vpop.permute.xlu0 %1775
        %1777 = vrot.lane.b32.xlu0 %v1584, 64
        %v1778 = vpop.permute.xlu0 %1777
        %1779 = vrot.lane.b32.xlu0 %v1587, 64
        %v1780 = vpop.permute.xlu0 %1779
        %1781 = vrot.lane.b32.xlu0 %v1589, 64
        %v1782 = vpop.permute.xlu0 %1781
        %1783 = vrot.lane.b32.xlu0 %v1592, 64
        %v1784 = vpop.permute.xlu0 %1783
        %1785 = vrot.lane.b32.xlu0 %v1594, 64
        %v1786 = vpop.permute.xlu0 %1785
        %1787 = vrot.lane.b32.xlu0 %v1597, 64
        %v1788 = vpop.permute.xlu0 %1787
        %1789 = vrot.lane.b32.xlu0 %v1599, 64
        %v1790 = vpop.permute.xlu0 %1789
        %1791 = vrot.lane.b32.xlu0 %v1602, 64
        %v1792 = vpop.permute.xlu0 %1791
        %1793 = vrot.lane.b32.xlu0 %v1604, 64
        %v1794 = vpop.permute.xlu0 %1793
        %1795 = vrot.lane.b32.xlu0 %v1607, 64
        %v1796 = vpop.permute.xlu0 %1795
        %1797 = vrot.lane.b32.xlu0 %v1609, 64
        %v1798 = vpop.permute.xlu0 %1797
        %1799 = vrot.lane.b32.xlu0 %v1612, 64
        %v1800 = vpop.permute.xlu0 %1799
        %1801 = vrot.lane.b32.xlu0 %v1614, 64
        %v1802 = vpop.permute.xlu0 %1801
        %1835 = vrot.lane.b32.xlu0 %v1413, 96
        %v1836 = vpop.permute.xlu0 %1835
        %1837 = vrot.lane.b32.xlu0 %v1415, 96
        %v1838 = vpop.permute.xlu0 %1837
        %1839 = vrot.lane.b32.xlu0 %v1418, 96
        %v1840 = vpop.permute.xlu0 %1839
        %1841 = vrot.lane.b32.xlu0 %v1420, 96
        %v1842 = vpop.permute.xlu0 %1841
        %1843 = vrot.lane.b32.xlu0 %v1423, 96
        %v1844 = vpop.permute.xlu0 %1843
        %1845 = vrot.lane.b32.xlu0 %v1425, 96
        %v1846 = vpop.permute.xlu0 %1845
        %1847 = vrot.lane.b32.xlu0 %v1428, 96
        %v1848 = vpop.permute.xlu0 %1847
        %1849 = vrot.lane.b32.xlu0 %v1430, 96
        %v1850 = vpop.permute.xlu0 %1849
        %1851 = vrot.lane.b32.xlu0 %v1433, 96
        %v1852 = vpop.permute.xlu0 %1851
        %1853 = vrot.lane.b32.xlu0 %v1435, 96
        %v1854 = vpop.permute.xlu0 %1853
        %1855 = vrot.lane.b32.xlu0 %v1438, 96
        %v1856 = vpop.permute.xlu0 %1855
        %1857 = vrot.lane.b32.xlu0 %v1440, 96
        %v1858 = vpop.permute.xlu0 %1857
        %1859 = vrot.lane.b32.xlu0 %v1443, 96
        %v1860 = vpop.permute.xlu0 %1859
        %1861 = vrot.lane.b32.xlu0 %v1445, 96
        %v1862 = vpop.permute.xlu0 %1861
        %1863 = vrot.lane.b32.xlu0 %v1448, 96
        %v1864 = vpop.permute.xlu0 %1863
        %1865 = vrot.lane.b32.xlu0 %v1450, 96
        %v1866 = vpop.permute.xlu0 %1865
        %1867 = vrot.lane.b32.xlu0 %v1453, 96
        %v1868 = vpop.permute.xlu0 %1867
        %1869 = vrot.lane.b32.xlu0 %v1455, 96
        %v1870 = vpop.permute.xlu0 %1869
        %1871 = vrot.lane.b32.xlu0 %v1458, 96
        %v1872 = vpop.permute.xlu0 %1871
        %1873 = vrot.lane.b32.xlu0 %v1460, 96
        %v1874 = vpop.permute.xlu0 %1873
        %1875 = vrot.lane.b32.xlu0 %v1463, 96
        %v1876 = vpop.permute.xlu0 %1875
        %1877 = vrot.lane.b32.xlu0 %v1465, 96
        %v1878 = vpop.permute.xlu0 %1877
        %1879 = vrot.lane.b32.xlu0 %v1468, 96
        %v1880 = vpop.permute.xlu0 %1879
        %1881 = vrot.lane.b32.xlu0 %v1470, 96
        %v1882 = vpop.permute.xlu0 %1881
        %1883 = vrot.lane.b32.xlu0 %v1473, 96
        %v1884 = vpop.permute.xlu0 %1883
        %1885 = vrot.lane.b32.xlu0 %v1475, 96
        %v1886 = vpop.permute.xlu0 %1885
        %1887 = vrot.lane.b32.xlu0 %v1478, 96
        %v1888 = vpop.permute.xlu0 %1887
        %1889 = vrot.lane.b32.xlu0 %v1480, 96
        %v1890 = vpop.permute.xlu0 %1889
        %1891 = vrot.lane.b32.xlu0 %v1483, 96
        %v1892 = vpop.permute.xlu0 %1891
        %1893 = vrot.lane.b32.xlu0 %v1485, 96
        %v1894 = vpop.permute.xlu0 %1893
        %1895 = vrot.lane.b32.xlu0 %v1620, 96
        %v1896 = vpop.permute.xlu0 %1895
        %1897 = vrot.lane.b32.xlu0 %v1622, 96
        %v1898 = vpop.permute.xlu0 %1897
        %1931 = vrot.lane.b32.xlu0 %v1542, 32
        %v1932 = vpop.permute.xlu0 %1931
        %1933 = vrot.lane.b32.xlu0 %v1544, 32
        %v1934 = vpop.permute.xlu0 %1933
        %1935 = vrot.lane.b32.xlu0 %v1547, 32
        %v1936 = vpop.permute.xlu0 %1935
        %1937 = vrot.lane.b32.xlu0 %v1549, 32
        %v1938 = vpop.permute.xlu0 %1937
        %1939 = vrot.lane.b32.xlu0 %v1552, 32
        %v1940 = vpop.permute.xlu0 %1939
        %1941 = vrot.lane.b32.xlu0 %v1554, 32
        %v1942 = vpop.permute.xlu0 %1941
        %1943 = vrot.lane.b32.xlu0 %v1557, 32
        %v1944 = vpop.permute.xlu0 %1943
        %1945 = vrot.lane.b32.xlu0 %v1559, 32
        %v1946 = vpop.permute.xlu0 %1945
        %1947 = vrot.lane.b32.xlu0 %v1562, 32
        %v1948 = vpop.permute.xlu0 %1947
        %1949 = vrot.lane.b32.xlu0 %v1564, 32
        %v1950 = vpop.permute.xlu0 %1949
        %1951 = vrot.lane.b32.xlu0 %v1567, 32
        %v1952 = vpop.permute.xlu0 %1951
        %1953 = vrot.lane.b32.xlu0 %v1569, 32
        %v1954 = vpop.permute.xlu0 %1953
        %1955 = vrot.lane.b32.xlu0 %v1572, 32
        %v1956 = vpop.permute.xlu0 %1955
        %1957 = vrot.lane.b32.xlu0 %v1574, 32
        %v1958 = vpop.permute.xlu0 %1957
        %1959 = vrot.lane.b32.xlu0 %v1577, 32
        %v1960 = vpop.permute.xlu0 %1959
        %1961 = vrot.lane.b32.xlu0 %v1579, 32
        %v1962 = vpop.permute.xlu0 %1961
        %1963 = vrot.lane.b32.xlu0 %v1582, 32
        %v1964 = vpop.permute.xlu0 %1963
        %1965 = vrot.lane.b32.xlu0 %v1584, 32
        %v1966 = vpop.permute.xlu0 %1965
        %1967 = vrot.lane.b32.xlu0 %v1587, 32
        %v1968 = vpop.permute.xlu0 %1967
        %1969 = vrot.lane.b32.xlu0 %v1589, 32
        %v1970 = vpop.permute.xlu0 %1969
        %1971 = vrot.lane.b32.xlu0 %v1592, 32
        %v1972 = vpop.permute.xlu0 %1971
        %1973 = vrot.lane.b32.xlu0 %v1594, 32
        %v1974 = vpop.permute.xlu0 %1973
        %1975 = vrot.lane.b32.xlu0 %v1597, 32
        %v1976 = vpop.permute.xlu0 %1975
        %1977 = vrot.lane.b32.xlu0 %v1599, 32
        %v1978 = vpop.permute.xlu0 %1977
        %1979 = vrot.lane.b32.xlu0 %v1602, 32
        %v1980 = vpop.permute.xlu0 %1979
        %1981 = vrot.lane.b32.xlu0 %v1604, 32
        %v1982 = vpop.permute.xlu0 %1981
        %1983 = vrot.lane.b32.xlu0 %v1607, 32
        %v1984 = vpop.permute.xlu0 %1983
        %1985 = vrot.lane.b32.xlu0 %v1609, 32
        %v1986 = vpop.permute.xlu0 %1985
        %1987 = vrot.lane.b32.xlu0 %v1612, 32
        %v1988 = vpop.permute.xlu0 %1987
        %1989 = vrot.lane.b32.xlu0 %v1614, 32
        %v1990 = vpop.permute.xlu0 %1989
        %1991 = vrot.lane.b32.xlu0 %v1626, 32
        %v1992 = vpop.permute.xlu0 %1991
        %1993 = vrot.lane.b32.xlu0 %v1628, 32
        %v1994 = vpop.permute.xlu0 %1993
        %2027 = vrot.lane.b32.xlu0 %v1418, 64
        %v2028 = vpop.permute.xlu0 %2027
        %2029 = vrot.lane.b32.xlu0 %v1420, 64
        %v2030 = vpop.permute.xlu0 %2029
        %2031 = vrot.lane.b32.xlu0 %v1423, 64
        %v2032 = vpop.permute.xlu0 %2031
        %2033 = vrot.lane.b32.xlu0 %v1425, 64
        %v2034 = vpop.permute.xlu0 %2033
        %2035 = vrot.lane.b32.xlu0 %v1428, 64
        %v2036 = vpop.permute.xlu0 %2035
        %2037 = vrot.lane.b32.xlu0 %v1430, 64
        %v2038 = vpop.permute.xlu0 %2037
        %2039 = vrot.lane.b32.xlu0 %v1433, 64
        %v2040 = vpop.permute.xlu0 %2039
        %2041 = vrot.lane.b32.xlu0 %v1435, 64
        %v2042 = vpop.permute.xlu0 %2041
        %2043 = vrot.lane.b32.xlu0 %v1438, 64
        %v2044 = vpop.permute.xlu0 %2043
        %2045 = vrot.lane.b32.xlu0 %v1440, 64
        %v2046 = vpop.permute.xlu0 %2045
        %2047 = vrot.lane.b32.xlu0 %v1443, 64
        %v2048 = vpop.permute.xlu0 %2047
        %2049 = vrot.lane.b32.xlu0 %v1445, 64
        %v2050 = vpop.permute.xlu0 %2049
        %2051 = vrot.lane.b32.xlu0 %v1448, 64
        %v2052 = vpop.permute.xlu0 %2051
        %2053 = vrot.lane.b32.xlu0 %v1450, 64
        %v2054 = vpop.permute.xlu0 %2053
        %2055 = vrot.lane.b32.xlu0 %v1453, 64
        %v2056 = vpop.permute.xlu0 %2055
        %2057 = vrot.lane.b32.xlu0 %v1455, 64
        %v2058 = vpop.permute.xlu0 %2057
        %2059 = vrot.lane.b32.xlu0 %v1458, 64
        %v2060 = vpop.permute.xlu0 %2059
        %2061 = vrot.lane.b32.xlu0 %v1460, 64
        %v2062 = vpop.permute.xlu0 %2061
        %2063 = vrot.lane.b32.xlu0 %v1463, 64
        %v2064 = vpop.permute.xlu0 %2063
        %2065 = vrot.lane.b32.xlu0 %v1465, 64
        %v2066 = vpop.permute.xlu0 %2065
        %2067 = vrot.lane.b32.xlu0 %v1468, 64
        %v2068 = vpop.permute.xlu0 %2067
        %2069 = vrot.lane.b32.xlu0 %v1470, 64
        %v2070 = vpop.permute.xlu0 %2069
        %2071 = vrot.lane.b32.xlu0 %v1473, 64
        %v2072 = vpop.permute.xlu0 %2071
        %2073 = vrot.lane.b32.xlu0 %v1475, 64
        %v2074 = vpop.permute.xlu0 %2073
        %2075 = vrot.lane.b32.xlu0 %v1478, 64
        %v2076 = vpop.permute.xlu0 %2075
        %2077 = vrot.lane.b32.xlu0 %v1480, 64
        %v2078 = vpop.permute.xlu0 %2077
        %2079 = vrot.lane.b32.xlu0 %v1483, 64
        %v2080 = vpop.permute.xlu0 %2079
        %2081 = vrot.lane.b32.xlu0 %v1485, 64
        %v2082 = vpop.permute.xlu0 %2081
        %2083 = vrot.lane.b32.xlu0 %v1620, 64
        %v2084 = vpop.permute.xlu0 %2083
        %2085 = vrot.lane.b32.xlu0 %v1622, 64
        %v2086 = vpop.permute.xlu0 %2085
        %2087 = vrot.lane.b32.xlu0 %v1634, 64
        %v2088 = vpop.permute.xlu0 %2087
        %2089 = vrot.lane.b32.xlu0 %v1636, 64
        %v2090 = vpop.permute.xlu0 %2089
        %2123 = vrot.lane.b32.xlu0 %v1294, 96
        %v2124 = vpop.permute.xlu0 %2123
        %2125 = vrot.lane.b32.xlu0 %v1295, 96
        %v2126 = vpop.permute.xlu0 %2125
        %2127 = vrot.lane.b32.xlu0 %v1298, 96
        %v2128 = vpop.permute.xlu0 %2127
        %2129 = vrot.lane.b32.xlu0 %v1299, 96
        %v2130 = vpop.permute.xlu0 %2129
        %2131 = vrot.lane.b32.xlu0 %v1302, 96
        %v2132 = vpop.permute.xlu0 %2131
        %2133 = vrot.lane.b32.xlu0 %v1303, 96
        %v2134 = vpop.permute.xlu0 %2133
        %2135 = vrot.lane.b32.xlu0 %v1306, 96
        %v2136 = vpop.permute.xlu0 %2135
        %2137 = vrot.lane.b32.xlu0 %v1307, 96
        %v2138 = vpop.permute.xlu0 %2137
        %2139 = vrot.lane.b32.xlu0 %v1310, 96
        %v2140 = vpop.permute.xlu0 %2139
        %2141 = vrot.lane.b32.xlu0 %v1311, 96
        %v2142 = vpop.permute.xlu0 %2141
        %2143 = vrot.lane.b32.xlu0 %v1314, 96
        %v2144 = vpop.permute.xlu0 %2143
        %2145 = vrot.lane.b32.xlu0 %v1315, 96
        %v2146 = vpop.permute.xlu0 %2145
        %2147 = vrot.lane.b32.xlu0 %v1318, 96
        %v2148 = vpop.permute.xlu0 %2147
        %2149 = vrot.lane.b32.xlu0 %v1319, 96
        %v2150 = vpop.permute.xlu0 %2149
        %2151 = vrot.lane.b32.xlu0 %v1322, 96
        %v2152 = vpop.permute.xlu0 %2151
        %2153 = vrot.lane.b32.xlu0 %v1323, 96
        %v2154 = vpop.permute.xlu0 %2153
        %2155 = vrot.lane.b32.xlu0 %v1326, 96
        %v2156 = vpop.permute.xlu0 %2155
        %2157 = vrot.lane.b32.xlu0 %v1327, 96
        %v2158 = vpop.permute.xlu0 %2157
        %2159 = vrot.lane.b32.xlu0 %v1330, 96
        %v2160 = vpop.permute.xlu0 %2159
        %2161 = vrot.lane.b32.xlu0 %v1331, 96
        %v2162 = vpop.permute.xlu0 %2161
        %2163 = vrot.lane.b32.xlu0 %v1334, 96
        %v2164 = vpop.permute.xlu0 %2163
        %2165 = vrot.lane.b32.xlu0 %v1335, 96
        %v2166 = vpop.permute.xlu0 %2165
        %2167 = vrot.lane.b32.xlu0 %v1338, 96
        %v2168 = vpop.permute.xlu0 %2167
        %2169 = vrot.lane.b32.xlu0 %v1339, 96
        %v2170 = vpop.permute.xlu0 %2169
        %2171 = vrot.lane.b32.xlu0 %v1342, 96
        %v2172 = vpop.permute.xlu0 %2171
        %2173 = vrot.lane.b32.xlu0 %v1343, 96
        %v2174 = vpop.permute.xlu0 %2173
        %2175 = vrot.lane.b32.xlu0 %v1346, 96
        %v2176 = vpop.permute.xlu0 %2175
        %2177 = vrot.lane.b32.xlu0 %v1347, 96
        %v2178 = vpop.permute.xlu0 %2177
        %2179 = vrot.lane.b32.xlu0 %v1350, 96
        %v2180 = vpop.permute.xlu0 %2179
        %2181 = vrot.lane.b32.xlu0 %v1351, 96
        %v2182 = vpop.permute.xlu0 %2181
        %2183 = vrot.lane.b32.xlu0 %v1354, 96
        %v2184 = vpop.permute.xlu0 %2183
        %2185 = vrot.lane.b32.xlu0 %v1355, 96
        %v2186 = vpop.permute.xlu0 %2185
        %v2219 = vsel %vm1179, %v1408, %v1644
        %v2220 = vsel %vm1179, %v1410, %v1646
        %v2221 = vsel %vm1179, %v1413, %v1648
        %v2222 = vsel %vm1179, %v1415, %v1650
        %v2223 = vsel %vm1179, %v1418, %v1652
        %v2224 = vsel %vm1179, %v1420, %v1654
        %v2225 = vsel %vm1179, %v1423, %v1656
        %v2226 = vsel %vm1179, %v1425, %v1658
        %v2227 = vsel %vm1179, %v1428, %v1660
        %v2228 = vsel %vm1179, %v1430, %v1662
        %v2229 = vsel %vm1179, %v1433, %v1664
        %v2230 = vsel %vm1179, %v1435, %v1666
        %v2231 = vsel %vm1179, %v1438, %v1668
        %v2232 = vsel %vm1179, %v1440, %v1670
        %v2233 = vsel %vm1179, %v1443, %v1672
        %v2234 = vsel %vm1179, %v1445, %v1674
        %v2235 = vsel %vm1179, %v1448, %v1676
        %v2236 = vsel %vm1179, %v1450, %v1678
        %v2237 = vsel %vm1179, %v1453, %v1680
        %v2238 = vsel %vm1179, %v1455, %v1682
        %v2239 = vsel %vm1179, %v1458, %v1684
        %v2240 = vsel %vm1179, %v1460, %v1686
        %v2241 = vsel %vm1179, %v1463, %v1688
        %v2242 = vsel %vm1179, %v1465, %v1690
        %v2243 = vsel %vm1179, %v1468, %v1692
        %v2244 = vsel %vm1179, %v1470, %v1694
        %v2245 = vsel %vm1179, %v1473, %v1696
        %v2246 = vsel %vm1179, %v1475, %v1698
        %v2247 = vsel %vm1179, %v1478, %v1700
        %v2248 = vsel %vm1179, %v1480, %v1702
        %v2249 = vsel %vm1179, %v1483, %v1704
        %v2250 = vsel %vm1179, %v1485, %v1706
        %v2251 = vsel %vm857, %v2219, %v1740
        %v2252 = vsel %vm857, %v2220, %v1742
        %v2253 = vsel %vm857, %v2221, %v1744
        %v2254 = vsel %vm857, %v2222, %v1746
        %v2255 = vsel %vm857, %v2223, %v1748
        %v2256 = vsel %vm857, %v2224, %v1750
        %v2257 = vsel %vm857, %v2225, %v1752
        %v2258 = vsel %vm857, %v2226, %v1754
        %v2259 = vsel %vm857, %v2227, %v1756
        %v2260 = vsel %vm857, %v2228, %v1758
        %v2261 = vsel %vm857, %v2229, %v1760
        %v2262 = vsel %vm857, %v2230, %v1762
        %v2263 = vsel %vm857, %v2231, %v1764
        %v2264 = vsel %vm857, %v2232, %v1766
        %v2265 = vsel %vm857, %v2233, %v1768
        %v2266 = vsel %vm857, %v2234, %v1770
        %v2267 = vsel %vm857, %v2235, %v1772
        %v2268 = vsel %vm857, %v2236, %v1774
        %v2269 = vsel %vm857, %v2237, %v1776
        %v2270 = vsel %vm857, %v2238, %v1778
        %v2271 = vsel %vm857, %v2239, %v1780
        %v2272 = vsel %vm857, %v2240, %v1782
        %v2273 = vsel %vm857, %v2241, %v1784
        %v2274 = vsel %vm857, %v2242, %v1786
        %v2275 = vsel %vm857, %v2243, %v1788
        %v2276 = vsel %vm857, %v2244, %v1790
        %v2277 = vsel %vm857, %v2245, %v1792
        %v2278 = vsel %vm857, %v2246, %v1794
        %v2279 = vsel %vm857, %v2247, %v1796
        %v2280 = vsel %vm857, %v2248, %v1798
        %v2281 = vsel %vm857, %v2249, %v1800
        %v2282 = vsel %vm857, %v2250, %v1802
        %vm2283 = vcmask 785408
        %v2284 = vsel %vm2283, %v2251, %v1836
        %v2285 = vsel %vm2283, %v2252, %v1838
        %v2286 = vsel %vm2283, %v2253, %v1840
        %v2287 = vsel %vm2283, %v2254, %v1842
        %v2288 = vsel %vm2283, %v2255, %v1844
        %v2289 = vsel %vm2283, %v2256, %v1846
        %v2290 = vsel %vm2283, %v2257, %v1848
        %v2291 = vsel %vm2283, %v2258, %v1850
        %v2292 = vsel %vm2283, %v2259, %v1852
        %v2293 = vsel %vm2283, %v2260, %v1854
        %v2294 = vsel %vm2283, %v2261, %v1856
        %v2295 = vsel %vm2283, %v2262, %v1858
        %v2296 = vsel %vm2283, %v2263, %v1860
        %v2297 = vsel %vm2283, %v2264, %v1862
        %v2298 = vsel %vm2283, %v2265, %v1864
        %v2299 = vsel %vm2283, %v2266, %v1866
        %v2300 = vsel %vm2283, %v2267, %v1868
        %v2301 = vsel %vm2283, %v2268, %v1870
        %v2302 = vsel %vm2283, %v2269, %v1872
        %v2303 = vsel %vm2283, %v2270, %v1874
        %v2304 = vsel %vm2283, %v2271, %v1876
        %v2305 = vsel %vm2283, %v2272, %v1878
        %v2306 = vsel %vm2283, %v2273, %v1880
        %v2307 = vsel %vm2283, %v2274, %v1882
        %v2308 = vsel %vm2283, %v2275, %v1884
        %v2309 = vsel %vm2283, %v2276, %v1886
        %v2310 = vsel %vm2283, %v2277, %v1888
        %v2311 = vsel %vm2283, %v2278, %v1890
        %v2312 = vsel %vm2283, %v2279, %v1892
        %v2313 = vsel %vm2283, %v2280, %v1894
        %v2314 = vsel %vm2283, %v2281, %v1896
        %v2315 = vsel %vm2283, %v2282, %v1898
        %v2316 = vsel %vm1179, %v1290, %v1932
        %v2317 = vsel %vm1179, %v1291, %v1934
        %v2318 = vsel %vm1179, %v1294, %v1936
        %v2319 = vsel %vm1179, %v1295, %v1938
        %v2320 = vsel %vm1179, %v1298, %v1940
        %v2321 = vsel %vm1179, %v1299, %v1942
        %v2322 = vsel %vm1179, %v1302, %v1944
        %v2323 = vsel %vm1179, %v1303, %v1946
        %v2324 = vsel %vm1179, %v1306, %v1948
        %v2325 = vsel %vm1179, %v1307, %v1950
        %v2326 = vsel %vm1179, %v1310, %v1952
        %v2327 = vsel %vm1179, %v1311, %v1954
        %v2328 = vsel %vm1179, %v1314, %v1956
        %v2329 = vsel %vm1179, %v1315, %v1958
        %v2330 = vsel %vm1179, %v1318, %v1960
        %v2331 = vsel %vm1179, %v1319, %v1962
        %v2332 = vsel %vm1179, %v1322, %v1964
        %v2333 = vsel %vm1179, %v1323, %v1966
        %v2334 = vsel %vm1179, %v1326, %v1968
        %v2335 = vsel %vm1179, %v1327, %v1970
        %v2336 = vsel %vm1179, %v1330, %v1972
        %v2337 = vsel %vm1179, %v1331, %v1974
        %v2338 = vsel %vm1179, %v1334, %v1976
        %v2339 = vsel %vm1179, %v1335, %v1978
        %v2340 = vsel %vm1179, %v1338, %v1980
        %v2341 = vsel %vm1179, %v1339, %v1982
        %v2342 = vsel %vm1179, %v1342, %v1984
        %v2343 = vsel %vm1179, %v1343, %v1986
        %v2344 = vsel %vm1179, %v1346, %v1988
        %v2345 = vsel %vm1179, %v1347, %v1990
        %v2346 = vsel %vm1179, %v1350, %v1992
        %v2347 = vsel %vm1179, %v1351, %v1994
        %v2348 = vsel %vm857, %v2316, %v2028
        %v2349 = vsel %vm857, %v2317, %v2030
        %v2350 = vsel %vm857, %v2318, %v2032
        %v2351 = vsel %vm857, %v2319, %v2034
        %v2352 = vsel %vm857, %v2320, %v2036
        %v2353 = vsel %vm857, %v2321, %v2038
        %v2354 = vsel %vm857, %v2322, %v2040
        %v2355 = vsel %vm857, %v2323, %v2042
        %v2356 = vsel %vm857, %v2324, %v2044
        %v2357 = vsel %vm857, %v2325, %v2046
        %v2358 = vsel %vm857, %v2326, %v2048
        %v2359 = vsel %vm857, %v2327, %v2050
        %v2360 = vsel %vm857, %v2328, %v2052
        %v2361 = vsel %vm857, %v2329, %v2054
        %v2362 = vsel %vm857, %v2330, %v2056
        %v2363 = vsel %vm857, %v2331, %v2058
        %v2364 = vsel %vm857, %v2332, %v2060
        %v2365 = vsel %vm857, %v2333, %v2062
        %v2366 = vsel %vm857, %v2334, %v2064
        %v2367 = vsel %vm857, %v2335, %v2066
        %v2368 = vsel %vm857, %v2336, %v2068
        %v2369 = vsel %vm857, %v2337, %v2070
        %v2370 = vsel %vm857, %v2338, %v2072
        %v2371 = vsel %vm857, %v2339, %v2074
        %v2372 = vsel %vm857, %v2340, %v2076
        %v2373 = vsel %vm857, %v2341, %v2078
        %v2374 = vsel %vm857, %v2342, %v2080
        %v2375 = vsel %vm857, %v2343, %v2082
        %v2376 = vsel %vm857, %v2344, %v2084
        %v2377 = vsel %vm857, %v2345, %v2086
        %v2378 = vsel %vm857, %v2346, %v2088
        %v2379 = vsel %vm857, %v2347, %v2090
        %v2380 = vsel %vm2283, %v2348, %v2124
        %v2381 = vsel %vm2283, %v2349, %v2126
        %v2382 = vsel %vm2283, %v2350, %v2128
        %v2383 = vsel %vm2283, %v2351, %v2130
        %v2384 = vsel %vm2283, %v2352, %v2132
        %v2385 = vsel %vm2283, %v2353, %v2134
        %v2386 = vsel %vm2283, %v2354, %v2136
        %v2387 = vsel %vm2283, %v2355, %v2138
        %v2388 = vsel %vm2283, %v2356, %v2140
        %v2389 = vsel %vm2283, %v2357, %v2142
        %v2390 = vsel %vm2283, %v2358, %v2144
        %v2391 = vsel %vm2283, %v2359, %v2146
        %v2392 = vsel %vm2283, %v2360, %v2148
        %v2393 = vsel %vm2283, %v2361, %v2150
        %v2394 = vsel %vm2283, %v2362, %v2152
        %v2395 = vsel %vm2283, %v2363, %v2154
        %v2396 = vsel %vm2283, %v2364, %v2156
        %v2397 = vsel %vm2283, %v2365, %v2158
        %v2398 = vsel %vm2283, %v2366, %v2160
        %v2399 = vsel %vm2283, %v2367, %v2162
        %v2400 = vsel %vm2283, %v2368, %v2164
        %v2401 = vsel %vm2283, %v2369, %v2166
        %v2402 = vsel %vm2283, %v2370, %v2168
        %v2403 = vsel %vm2283, %v2371, %v2170
        %v2404 = vsel %vm2283, %v2372, %v2172
        %v2405 = vsel %vm2283, %v2373, %v2174
        %v2406 = vsel %vm2283, %v2374, %v2176
        %v2407 = vsel %vm2283, %v2375, %v2178
        %v2408 = vsel %vm2283, %v2376, %v2180
        %v2409 = vsel %vm2283, %v2377, %v2182
        %v2410 = vsel %vm2283, %v2378, %v2184
        %v2411 = vsel %vm2283, %v2379, %v2186
        %v2412 = vld [vmem:[%s6] sm:$0xff]
        %v2413 = vld [vmem:[%s6 + $0x8] sm:$0xff]
        %v2414 = vld [vmem:[%s6 + $0x10] sm:$0xff]
        %v2415 = vld [vmem:[%s6 + $0x18] sm:$0xff]
        %v2416 = vld [vmem:[%s6 + $0x20] sm:$0xff]
        %v2417 = vld [vmem:[%s6 + $0x28] sm:$0xff]
        %v2418 = vld [vmem:[%s6 + $0x30] sm:$0xff]
        %v2419 = vld [vmem:[%s6 + $0x38] sm:$0xff]
        %v2420 = vld [vmem:[%s6 + $0x40] sm:$0xff]
        %v2421 = vld [vmem:[%s6 + $0x48] sm:$0xff]
        %v2422 = vld [vmem:[%s6 + $0x50] sm:$0xff]
        %v2423 = vld [vmem:[%s6 + $0x58] sm:$0xff]
        %v2424 = vld [vmem:[%s6 + $0x60] sm:$0xff]
        %v2425 = vld [vmem:[%s6 + $0x68] sm:$0xff]
        %v2426 = vld [vmem:[%s6 + $0x70] sm:$0xff]
        %v2427 = vld [vmem:[%s6 + $0x78] sm:$0xff]
        %v2428 = vld [vmem:[%s6 + $0x80] sm:$0xff]
        %v2429 = vld [vmem:[%s6 + $0x88] sm:$0xff]
        %v2430 = vld [vmem:[%s6 + $0x90] sm:$0xff]
        %v2431 = vld [vmem:[%s6 + $0x98] sm:$0xff]
        %v2432 = vld [vmem:[%s6 + $0xa0] sm:$0xff]
        %v2433 = vld [vmem:[%s6 + $0xa8] sm:$0xff]
        %v2434 = vld [vmem:[%s6 + $0xb0] sm:$0xff]
        %v2435 = vld [vmem:[%s6 + $0xb8] sm:$0xff]
        %v2436 = vld [vmem:[%s6 + $0xc0] sm:$0xff]
        %v2437 = vld [vmem:[%s6 + $0xc8] sm:$0xff]
        %v2438 = vld [vmem:[%s6 + $0xd0] sm:$0xff]
        %v2439 = vld [vmem:[%s6 + $0xd8] sm:$0xff]
        %v2440 = vld [vmem:[%s6 + $0xe0] sm:$0xff]
        %v2441 = vld [vmem:[%s6 + $0xe8] sm:$0xff]
        %v2442 = vld [vmem:[%s6 + $0xf0] sm:$0xff]
        %v2443 = vld [vmem:[%s6 + $0xf8] sm:$0xff]
        %v2444 = vld [vmem:[%s6 + $0x100] sm:$0xff]
        %v2445 = vld [vmem:[%s6 + $0x108] sm:$0xff]
        %v2446 = vld [vmem:[%s6 + $0x110] sm:$0xff]
        %v2447 = vld [vmem:[%s6 + $0x118] sm:$0xff]
        %v2448 = vsel %vm1179, %v1547, 0
        %v2450 = vsel %vm1179, %v1549, 0
        %v2452 = vsel %vm1179, %v1552, 0
        %v2454 = vsel %vm1179, %v1554, 0
        %v2456 = vsel %vm1179, %v1557, 0
        %v2458 = vsel %vm1179, %v1559, 0
        %v2460 = vsel %vm1179, %v1562, 0
        %v2462 = vsel %vm1179, %v1564, 0
        %v2464 = vsel %vm1179, %v1567, 0
        %v2466 = vsel %vm1179, %v1569, 0
        %v2468 = vsel %vm1179, %v1572, 0
        %v2470 = vsel %vm1179, %v1574, 0
        %v2472 = vsel %vm1179, %v1577, 0
        %v2474 = vsel %vm1179, %v1579, 0
        %v2476 = vsel %vm1179, %v1582, 0
        %v2478 = vsel %vm1179, %v1584, 0
        %v2480 = vsel %vm1179, %v1587, 0
        %v2482 = vsel %vm1179, %v1589, 0
        %v2484 = vsel %vm1179, %v1592, 0
        %v2486 = vsel %vm1179, %v1594, 0
        %v2488 = vsel %vm1179, %v1597, 0
        %v2490 = vsel %vm1179, %v1599, 0
        %v2492 = vsel %vm1179, %v1602, 0
        %v2494 = vsel %vm1179, %v1604, 0
        %v2496 = vsel %vm1179, %v1607, 0
        %v2498 = vsel %vm1179, %v1609, 0
        %v2500 = vsel %vm1179, %v1612, 0
        %v2502 = vsel %vm1179, %v1614, 0
        %v2504 = vsel %vm1179, %v1626, 0
        %v2506 = vsel %vm1179, %v1628, 0
        %v2508 = vsel %vm1179, %v1640, 0
        %v2510 = vsel %vm1179, %v1642, 0
        %2512 = vmatprep.subr.mxu0 0.0
        %2513 = vmatpush1.msra.mxu0 %v2412
        %2514 = vmatprep.subr.mxu0 0.0
        %2515 = vmatpush1.msra.mxu0 %v2413
        %2516 = vmatprep.subr.mxu0 0.0
        %2517 = vmatpush1.msra.mxu0 %v2414
        %2518 = vmatprep.subr.mxu0 0.0
        %2519 = vmatpush1.msra.mxu0 %v2415
        %2520 = vmatprep.subr.mxu0 0.0
        %2521 = vmatpush1.msra.mxu0 %v2416
        %2522 = vmatprep.subr.mxu0 0.0
        %2523 = vmatpush1.msra.mxu0 %v2417
        %2524 = vmatprep.subr.mxu0 0.0
        %2525 = vmatpush1.msra.mxu0 %v2418
        %2526 = vmatprep.subr.mxu0 0.0
        %2527 = vmatpush1.msra.mxu0 %v2419
        %2528 = vmatprep.subr.mxu0 0.0
        %2529 = vmatpush1.msra.mxu0 %v2420
        %2530 = vmatprep.subr.mxu0 0.0
        %2531 = vmatpush1.msra.mxu0 %v2421
        %2532 = vmatprep.subr.mxu0 0.0
        %2533 = vmatpush1.msra.mxu0 %v2422
        %2534 = vmatprep.subr.mxu0 0.0
        %2535 = vmatpush1.msra.mxu0 %v2423
        %2536 = vmatprep.subr.mxu0 0.0
        %2537 = vmatpush1.msra.mxu0 %v2424
        %2538 = vmatprep.subr.mxu0 0.0
        %2539 = vmatpush1.msra.mxu0 %v2425
        %2540 = vmatprep.subr.mxu0 0.0
        %2541 = vmatpush1.msra.mxu0 %v2426
        %2542 = vmatprep.subr.mxu0 0.0
        %2543 = vmatpush1.msra.mxu0 %v2427
        %2544 = vmatprep.subr.mxu0 0.0
        %2545 = vmatpush1.msra.mxu0 %v2428
        %2546 = vmatprep.subr.mxu0 0.0
        %2547 = vmatpush1.msra.mxu0 %v2429
        %2548 = vmatprep.subr.mxu0 0.0
        %2549 = vmatpush1.msra.mxu0 %v2430
        %2550 = vmatprep.subr.mxu0 0.0
        %2551 = vmatpush1.msra.mxu0 %v2431
        %2552 = vmatprep.subr.mxu0 0.0
        %2553 = vmatpush1.msra.mxu0 %v2432
        %2554 = vmatprep.subr.mxu0 0.0
        %2555 = vmatpush1.msra.mxu0 %v2433
        %2556 = vmatprep.subr.mxu0 0.0
        %2557 = vmatpush1.msra.mxu0 %v2434
        %2558 = vmatprep.subr.mxu0 0.0
        %2559 = vmatpush1.msra.mxu0 %v2435
        %2560 = vmatprep.subr.mxu0 0.0
        %2561 = vmatpush1.msra.mxu0 %v2436
        %2562 = vmatprep.subr.mxu0 0.0
        %2563 = vmatpush1.msra.mxu0 %v2437
        %2564 = vmatprep.subr.mxu0 0.0
        %2565 = vmatpush1.msra.mxu0 %v2438
        %2566 = vmatprep.subr.mxu0 0.0
        %2567 = vmatpush1.msra.mxu0 %v2439
        %2568 = vmatprep.subr.mxu0 0.0
        %2569 = vmatpush1.msra.mxu0 %v2440
        %2570 = vmatprep.subr.mxu0 0.0
        %2571 = vmatpush1.msra.mxu0 %v2441
        %2572 = vmatprep.subr.mxu0 0.0
        %2573 = vmatpush1.msra.mxu0 %v2442
        %2574 = vmatprep.subr.mxu0 0.0
        %2575 = vmatpush1.msra.mxu0 %v2443
        %2576 = vmatprep.mubr.f32.mxu0 %v2380
        %2577 = vmatmul.mubr.f32.gmra.mrb[0].mxu0 %v2284
        %v2578 = vpop.f32.mrb[0].mxu0
        %v2579 = vadd.f32 0.0, %v2578
        %v2580 = vpop.f32.mrb[0].mxu0
        %2581 = vmatprep.mubr.f32.mxu0 %v2381
        %2582 = vmatmul.mubr.f32.gmra.mrb[0].mxu0 %v2285
        %v2583 = vpop.f32.mrb[0].mxu0
        %v2584 = vadd.f32 0.0, %v2583
        %v2585 = vpop.f32.mrb[0].mxu0
        %2586 = vmatprep.mubr.f32.mxu0 %v2382
        %2587 = vmatmul.mubr.f32.gmra.mrb[0].mxu0 %v2286
        %v2588 = vpop.f32.mrb[0].mxu0
        %v2589 = vadd.f32 0.0, %v2588
        %v2590 = vpop.f32.mrb[0].mxu0
        %2591 = vmatprep.mubr.f32.mxu0 %v2383
        %2592 = vmatmul.mubr.f32.gmra.mrb[0].mxu0 %v2287
        %v2593 = vpop.f32.mrb[0].mxu0
        %v2594 = vadd.f32 0.0, %v2593
        %v2595 = vpop.f32.mrb[0].mxu0
        %2596 = vmatprep.mubr.f32.mxu0 %v2384
        %2597 = vmatmul.mubr.f32.gmra.mrb[0].mxu0 %v2288
        %v2598 = vpop.f32.mrb[0].mxu0
        %v2599 = vadd.f32 0.0, %v2598
        %v2600 = vpop.f32.mrb[0].mxu0
        %2601 = vmatprep.mubr.f32.mxu0 %v2385
        %2602 = vmatmul.mubr.f32.gmra.mrb[0].mxu0 %v2289
        %v2603 = vpop.f32.mrb[0].mxu0
        %v2604 = vadd.f32 0.0, %v2603
        %v2605 = vpop.f32.mrb[0].mxu0
        %2606 = vmatprep.mubr.f32.mxu0 %v2386
        %2607 = vmatmul.mubr.f32.gmra.mrb[0].mxu0 %v2290
        %v2608 = vpop.f32.mrb[0].mxu0
        %v2609 = vadd.f32 0.0, %v2608
        %v2610 = vpop.f32.mrb[0].mxu0
        %2611 = vmatprep.mubr.f32.mxu0 %v2387
        %2612 = vmatmul.mubr.f32.gmra.mrb[0].mxu0 %v2291
        %v2613 = vpop.f32.mrb[0].mxu0
        %v2614 = vadd.f32 0.0, %v2613
        %v2615 = vpop.f32.mrb[0].mxu0
        %2616 = vmatprep.mubr.f32.mxu0 %v2388
        %2617 = vmatmul.mubr.f32.gmra.mrb[0].mxu0 %v2292
        %v2618 = vpop.f32.mrb[0].mxu0
        %v2619 = vadd.f32 0.0, %v2618
        %v2620 = vpop.f32.mrb[0].mxu0
        %2621 = vmatprep.mubr.f32.mxu0 %v2389
        %2622 = vmatmul.mubr.f32.gmra.mrb[0].mxu0 %v2293
        %v2623 = vpop.f32.mrb[0].mxu0
        %v2624 = vadd.f32 0.0, %v2623
        %v2625 = vpop.f32.mrb[0].mxu0
        %2626 = vmatprep.mubr.f32.mxu0 %v2390
        %2627 = vmatmul.mubr.f32.gmra.mrb[0].mxu0 %v2294
        %v2628 = vpop.f32.mrb[0].mxu0
        %v2629 = vadd.f32 0.0, %v2628
        %v2630 = vpop.f32.mrb[0].mxu0
        %2631 = vmatprep.mubr.f32.mxu0 %v2391
        %2632 = vmatmul.mubr.f32.gmra.mrb[0].mxu0 %v2295
        %v2633 = vpop.f32.mrb[0].mxu0
        %v2634 = vadd.f32 0.0, %v2633
        %v2635 = vpop.f32.mrb[0].mxu0
        %2636 = vmatprep.mubr.f32.mxu0 %v2392
        %2637 = vmatmul.mubr.f32.gmra.mrb[0].mxu0 %v2296
        %v2638 = vpop.f32.mrb[0].mxu0
        %v2639 = vadd.f32 0.0, %v2638
        %v2640 = vpop.f32.mrb[0].mxu0
        %2641 = vmatprep.mubr.f32.mxu0 %v2393
        %2642 = vmatmul.mubr.f32.gmra.mrb[0].mxu0 %v2297
        %v2643 = vpop.f32.mrb[0].mxu0
        %v2644 = vadd.f32 0.0, %v2643
        %v2645 = vpop.f32.mrb[0].mxu0
        %2646 = vmatprep.mubr.f32.mxu0 %v2394
        %2647 = vmatmul.mubr.f32.gmra.mrb[0].mxu0 %v2298
        %v2648 = vpop.f32.mrb[0].mxu0
        %v2649 = vadd.f32 0.0, %v2648
        %v2650 = vpop.f32.mrb[0].mxu0
        %2651 = vmatprep.mubr.f32.mxu0 %v2395
        %2652 = vmatmul.mubr.f32.gmra.mrb[0].mxu0 %v2299
        %v2653 = vpop.f32.mrb[0].mxu0
        %v2654 = vadd.f32 0.0, %v2653
        %v2655 = vpop.f32.mrb[0].mxu0
        %2656 = vmatprep.mubr.f32.mxu0 %v2396
        %2657 = vmatmul.mubr.f32.gmra.mrb[0].mxu0 %v2300
        %v2658 = vpop.f32.mrb[0].mxu0
        %v2659 = vadd.f32 0.0, %v2658
        %v2660 = vpop.f32.mrb[0].mxu0
        %2661 = vmatprep.mubr.f32.mxu0 %v2397
        %2662 = vmatmul.mubr.f32.gmra.mrb[0].mxu0 %v2301
        %v2663 = vpop.f32.mrb[0].mxu0
        %v2664 = vadd.f32 0.0, %v2663
        %v2665 = vpop.f32.mrb[0].mxu0
        %2666 = vmatprep.mubr.f32.mxu0 %v2398
        %2667 = vmatmul.mubr.f32.gmra.mrb[0].mxu0 %v2302
        %v2668 = vpop.f32.mrb[0].mxu0
        %v2669 = vadd.f32 0.0, %v2668
        %v2670 = vpop.f32.mrb[0].mxu0
        %2671 = vmatprep.mubr.f32.mxu0 %v2399
        %2672 = vmatmul.mubr.f32.gmra.mrb[0].mxu0 %v2303
        %v2673 = vpop.f32.mrb[0].mxu0
        %v2674 = vadd.f32 0.0, %v2673
        %v2675 = vpop.f32.mrb[0].mxu0
        %2676 = vmatprep.mubr.f32.mxu0 %v2400
        %2677 = vmatmul.mubr.f32.gmra.mrb[0].mxu0 %v2304
        %v2678 = vpop.f32.mrb[0].mxu0
        %v2679 = vadd.f32 0.0, %v2678
        %v2680 = vpop.f32.mrb[0].mxu0
        %2681 = vmatprep.mubr.f32.mxu0 %v2401
        %2682 = vmatmul.mubr.f32.gmra.mrb[0].mxu0 %v2305
        %v2683 = vpop.f32.mrb[0].mxu0
        %v2684 = vadd.f32 0.0, %v2683
        %v2685 = vpop.f32.mrb[0].mxu0
        %2686 = vmatprep.mubr.f32.mxu0 %v2402
        %2687 = vmatmul.mubr.f32.gmra.mrb[0].mxu0 %v2306
        %v2688 = vpop.f32.mrb[0].mxu0
        %v2689 = vadd.f32 0.0, %v2688
        %v2690 = vpop.f32.mrb[0].mxu0
        %2691 = vmatprep.mubr.f32.mxu0 %v2403
        %2692 = vmatmul.mubr.f32.gmra.mrb[0].mxu0 %v2307
        %v2693 = vpop.f32.mrb[0].mxu0
        %v2694 = vadd.f32 0.0, %v2693
        %v2695 = vpop.f32.mrb[0].mxu0
        %2696 = vmatprep.mubr.f32.mxu0 %v2404
        %2697 = vmatmul.mubr.f32.gmra.mrb[0].mxu0 %v2308
        %v2698 = vpop.f32.mrb[0].mxu0
        %v2699 = vadd.f32 0.0, %v2698
        %v2700 = vpop.f32.mrb[0].mxu0
        %2701 = vmatprep.mubr.f32.mxu0 %v2405
        %2702 = vmatmul.mubr.f32.gmra.mrb[0].mxu0 %v2309
        %v2703 = vpop.f32.mrb[0].mxu0
        %v2704 = vadd.f32 0.0, %v2703
        %v2705 = vpop.f32.mrb[0].mxu0
        %2706 = vmatprep.mubr.f32.mxu0 %v2406
        %2707 = vmatmul.mubr.f32.gmra.mrb[0].mxu0 %v2310
        %v2708 = vpop.f32.mrb[0].mxu0
        %v2709 = vadd.f32 0.0, %v2708
        %v2710 = vpop.f32.mrb[0].mxu0
        %2711 = vmatprep.mubr.f32.mxu0 %v2407
        %2712 = vmatmul.mubr.f32.gmra.mrb[0].mxu0 %v2311
        %v2713 = vpop.f32.mrb[0].mxu0
        %v2714 = vadd.f32 0.0, %v2713
        %v2715 = vpop.f32.mrb[0].mxu0
        %2716 = vmatprep.mubr.f32.mxu0 %v2408
        %2717 = vmatmul.mubr.f32.gmra.mrb[0].mxu0 %v2312
        %v2718 = vpop.f32.mrb[0].mxu0
        %v2719 = vadd.f32 0.0, %v2718
        %v2720 = vpop.f32.mrb[0].mxu0
        %2721 = vmatprep.mubr.f32.mxu0 %v2409
        %2722 = vmatmul.mubr.f32.gmra.mrb[0].mxu0 %v2313
        %v2723 = vpop.f32.mrb[0].mxu0
        %v2724 = vadd.f32 0.0, %v2723
        %v2725 = vpop.f32.mrb[0].mxu0
        %2726 = vmatprep.mubr.f32.mxu0 %v2410
        %2727 = vmatmul.mubr.f32.gmra.mrb[0].mxu0 %v2314
        %v2728 = vpop.f32.mrb[0].mxu0
        %v2729 = vadd.f32 0.0, %v2728
        %v2730 = vpop.f32.mrb[0].mxu0
        %2731 = vmatprep.mubr.f32.mxu0 %v2411
        %2732 = vmatmul.mubr.f32.gmra.mrb[0].mxu0 %v2315
        %v2733 = vpop.f32.mrb[0].mxu0
        %v2734 = vadd.f32 0.0, %v2733
        %v2735 = vpop.f32.mrb[0].mxu0
        %2736 = vdwg.mxu0
        %2737 = vmatprep.subr.mxu0 0.0
        %2738 = vmatpush1.msra.mxu0 %v2444
        %2739 = vmatprep.subr.mxu0 0.0
        %2740 = vmatpush1.msra.mxu0 %v2445
        %2741 = vmatprep.subr.mxu0 0.0
        %2742 = vmatpush1.msra.mxu0 %v2446
        %2743 = vmatprep.subr.mxu0 0.0
        %2744 = vmatpush1.msra.mxu0 %v2447
        %2745 = vmatprep.subr.mxu0 0.0
        %2746 = vmatpush1.msra.mxu0 0.0
        %2747 = vmatprep.subr.mxu0 0.0
        %2748 = vmatpush1.msra.mxu0 0.0
        %2749 = vmatprep.subr.mxu0 0.0
        %2750 = vmatpush1.msra.mxu0 0.0
        %2751 = vmatprep.subr.mxu0 0.0
        %2752 = vmatpush1.msra.mxu0 0.0
        %2753 = vmatprep.subr.mxu0 0.0
        %2754 = vmatpush1.msra.mxu0 0.0
        %2755 = vmatprep.subr.mxu0 0.0
        %2756 = vmatpush1.msra.mxu0 0.0
        %2757 = vmatprep.subr.mxu0 0.0
        %2758 = vmatpush1.msra.mxu0 0.0
        %2759 = vmatprep.subr.mxu0 0.0
        %2760 = vmatpush1.msra.mxu0 0.0
        %2761 = vmatprep.subr.mxu0 0.0
        %2762 = vmatpush1.msra.mxu0 0.0
        %2763 = vmatprep.subr.mxu0 0.0
        %2764 = vmatpush1.msra.mxu0 0.0
        %2765 = vmatprep.subr.mxu0 0.0
        %2766 = vmatpush1.msra.mxu0 0.0
        %2767 = vmatprep.subr.mxu0 0.0
        %2768 = vmatpush1.msra.mxu0 0.0
        %2769 = vmatprep.subr.mxu0 0.0
        %2770 = vmatpush1.msra.mxu0 0.0
        %2771 = vmatprep.subr.mxu0 0.0
        %2772 = vmatpush1.msra.mxu0 0.0
        %2773 = vmatprep.subr.mxu0 0.0
        %2774 = vmatpush1.msra.mxu0 0.0
        %2775 = vmatprep.subr.mxu0 0.0
        %2776 = vmatpush1.msra.mxu0 0.0
        %2777 = vmatprep.subr.mxu0 0.0
        %2778 = vmatpush1.msra.mxu0 0.0
        %2779 = vmatprep.subr.mxu0 0.0
        %2780 = vmatpush1.msra.mxu0 0.0
        %2781 = vmatprep.subr.mxu0 0.0
        %2782 = vmatpush1.msra.mxu0 0.0
        %2783 = vmatprep.subr.mxu0 0.0
        %2784 = vmatpush1.msra.mxu0 0.0
        %2785 = vmatprep.subr.mxu0 0.0
        %2786 = vmatpush1.msra.mxu0 0.0
        %2787 = vmatprep.subr.mxu0 0.0
        %2788 = vmatpush1.msra.mxu0 0.0
        %2789 = vmatprep.subr.mxu0 0.0
        %2790 = vmatpush1.msra.mxu0 0.0
        %2791 = vmatprep.subr.mxu0 0.0
        %2792 = vmatpush1.msra.mxu0 0.0
        %2793 = vmatprep.subr.mxu0 0.0
        %2794 = vmatpush1.msra.mxu0 0.0
        %2795 = vmatprep.subr.mxu0 0.0
        %2796 = vmatpush1.msra.mxu0 0.0
        %2797 = vmatprep.subr.mxu0 0.0
        %2798 = vmatpush1.msra.mxu0 0.0
        %2799 = vmatprep.subr.mxu0 0.0
        %2800 = vmatpush1.msra.mxu0 0.0
        %2801 = vmatprep.mubr.f32.mxu0 0.0
        %2802 = vmatmul.mubr.f32.gmra.mrb[0].mxu0 %v2448
        %v2803 = vpop.f32.mrb[0].mxu0
        %v2804 = vadd.f32 %v2579, %v2803
        %v2805 = vpop.f32.mrb[0].mxu0
        %2806 = vmatprep.mubr.f32.mxu0 0.0
        %2807 = vmatmul.mubr.f32.gmra.mrb[0].mxu0 %v2450
        %v2808 = vpop.f32.mrb[0].mxu0
        %v2809 = vadd.f32 %v2584, %v2808
        %v2810 = vpop.f32.mrb[0].mxu0
        %2811 = vmatprep.mubr.f32.mxu0 0.0
        %2812 = vmatmul.mubr.f32.gmra.mrb[0].mxu0 %v2452
        %v2813 = vpop.f32.mrb[0].mxu0
        %v2814 = vadd.f32 %v2589, %v2813
        %v2815 = vpop.f32.mrb[0].mxu0
        %2816 = vmatprep.mubr.f32.mxu0 0.0
        %2817 = vmatmul.mubr.f32.gmra.mrb[0].mxu0 %v2454
        %v2818 = vpop.f32.mrb[0].mxu0
        %v2819 = vadd.f32 %v2594, %v2818
        %v2820 = vpop.f32.mrb[0].mxu0
        %2821 = vmatprep.mubr.f32.mxu0 0.0
        %2822 = vmatmul.mubr.f32.gmra.mrb[0].mxu0 %v2456
        %v2823 = vpop.f32.mrb[0].mxu0
        %v2824 = vadd.f32 %v2599, %v2823
        %v2825 = vpop.f32.mrb[0].mxu0
        %2826 = vmatprep.mubr.f32.mxu0 0.0
        %2827 = vmatmul.mubr.f32.gmra.mrb[0].mxu0 %v2458
        %v2828 = vpop.f32.mrb[0].mxu0
        %v2829 = vadd.f32 %v2604, %v2828
        %v2830 = vpop.f32.mrb[0].mxu0
        %2831 = vmatprep.mubr.f32.mxu0 0.0
        %2832 = vmatmul.mubr.f32.gmra.mrb[0].mxu0 %v2460
        %v2833 = vpop.f32.mrb[0].mxu0
        %v2834 = vadd.f32 %v2609, %v2833
        %v2835 = vpop.f32.mrb[0].mxu0
        %2836 = vmatprep.mubr.f32.mxu0 0.0
        %2837 = vmatmul.mubr.f32.gmra.mrb[0].mxu0 %v2462
        %v2838 = vpop.f32.mrb[0].mxu0
        %v2839 = vadd.f32 %v2614, %v2838
        %v2840 = vpop.f32.mrb[0].mxu0
        %2841 = vmatprep.mubr.f32.mxu0 0.0
        %2842 = vmatmul.mubr.f32.gmra.mrb[0].mxu0 %v2464
        %v2843 = vpop.f32.mrb[0].mxu0
        %v2844 = vadd.f32 %v2619, %v2843
        %v2845 = vpop.f32.mrb[0].mxu0
        %2846 = vmatprep.mubr.f32.mxu0 0.0
        %2847 = vmatmul.mubr.f32.gmra.mrb[0].mxu0 %v2466
        %v2848 = vpop.f32.mrb[0].mxu0
        %v2849 = vadd.f32 %v2624, %v2848
        %v2850 = vpop.f32.mrb[0].mxu0
        %2851 = vmatprep.mubr.f32.mxu0 0.0
        %2852 = vmatmul.mubr.f32.gmra.mrb[0].mxu0 %v2468
        %v2853 = vpop.f32.mrb[0].mxu0
        %v2854 = vadd.f32 %v2629, %v2853
        %v2855 = vpop.f32.mrb[0].mxu0
        %2856 = vmatprep.mubr.f32.mxu0 0.0
        %2857 = vmatmul.mubr.f32.gmra.mrb[0].mxu0 %v2470
        %v2858 = vpop.f32.mrb[0].mxu0
        %v2859 = vadd.f32 %v2634, %v2858
        %v2860 = vpop.f32.mrb[0].mxu0
        %2861 = vmatprep.mubr.f32.mxu0 0.0
        %2862 = vmatmul.mubr.f32.gmra.mrb[0].mxu0 %v2472
        %v2863 = vpop.f32.mrb[0].mxu0
        %v2864 = vadd.f32 %v2639, %v2863
        %v2865 = vpop.f32.mrb[0].mxu0
        %2866 = vmatprep.mubr.f32.mxu0 0.0
        %2867 = vmatmul.mubr.f32.gmra.mrb[0].mxu0 %v2474
        %v2868 = vpop.f32.mrb[0].mxu0
        %v2869 = vadd.f32 %v2644, %v2868
        %v2870 = vpop.f32.mrb[0].mxu0
        %2871 = vmatprep.mubr.f32.mxu0 0.0
        %2872 = vmatmul.mubr.f32.gmra.mrb[0].mxu0 %v2476
        %v2873 = vpop.f32.mrb[0].mxu0
        %v2874 = vadd.f32 %v2649, %v2873
        %v2875 = vpop.f32.mrb[0].mxu0
        %2876 = vmatprep.mubr.f32.mxu0 0.0
        %2877 = vmatmul.mubr.f32.gmra.mrb[0].mxu0 %v2478
        %v2878 = vpop.f32.mrb[0].mxu0
        %v2879 = vadd.f32 %v2654, %v2878
        %v2880 = vpop.f32.mrb[0].mxu0
        %2881 = vmatprep.mubr.f32.mxu0 0.0
        %2882 = vmatmul.mubr.f32.gmra.mrb[0].mxu0 %v2480
        %v2883 = vpop.f32.mrb[0].mxu0
        %v2884 = vadd.f32 %v2659, %v2883
        %v2885 = vpop.f32.mrb[0].mxu0
        %2886 = vmatprep.mubr.f32.mxu0 0.0
        %2887 = vmatmul.mubr.f32.gmra.mrb[0].mxu0 %v2482
        %v2888 = vpop.f32.mrb[0].mxu0
        %v2889 = vadd.f32 %v2664, %v2888
        %v2890 = vpop.f32.mrb[0].mxu0
        %2891 = vmatprep.mubr.f32.mxu0 0.0
        %2892 = vmatmul.mubr.f32.gmra.mrb[0].mxu0 %v2484
        %v2893 = vpop.f32.mrb[0].mxu0
        %v2894 = vadd.f32 %v2669, %v2893
        %v2895 = vpop.f32.mrb[0].mxu0
        %2896 = vmatprep.mubr.f32.mxu0 0.0
        %2897 = vmatmul.mubr.f32.gmra.mrb[0].mxu0 %v2486
        %v2898 = vpop.f32.mrb[0].mxu0
        %v2899 = vadd.f32 %v2674, %v2898
        %v2900 = vpop.f32.mrb[0].mxu0
        %2901 = vmatprep.mubr.f32.mxu0 0.0
        %2902 = vmatmul.mubr.f32.gmra.mrb[0].mxu0 %v2488
        %v2903 = vpop.f32.mrb[0].mxu0
        %v2904 = vadd.f32 %v2679, %v2903
        %v2905 = vpop.f32.mrb[0].mxu0
        %2906 = vmatprep.mubr.f32.mxu0 0.0
        %2907 = vmatmul.mubr.f32.gmra.mrb[0].mxu0 %v2490
        %v2908 = vpop.f32.mrb[0].mxu0
        %v2909 = vadd.f32 %v2684, %v2908
        %v2910 = vpop.f32.mrb[0].mxu0
        %2911 = vmatprep.mubr.f32.mxu0 0.0
        %2912 = vmatmul.mubr.f32.gmra.mrb[0].mxu0 %v2492
        %v2913 = vpop.f32.mrb[0].mxu0
        %v2914 = vadd.f32 %v2689, %v2913
        %v2915 = vpop.f32.mrb[0].mxu0
        %2916 = vmatprep.mubr.f32.mxu0 0.0
        %2917 = vmatmul.mubr.f32.gmra.mrb[0].mxu0 %v2494
        %v2918 = vpop.f32.mrb[0].mxu0
        %v2919 = vadd.f32 %v2694, %v2918
        %v2920 = vpop.f32.mrb[0].mxu0
        %2921 = vmatprep.mubr.f32.mxu0 0.0
        %2922 = vmatmul.mubr.f32.gmra.mrb[0].mxu0 %v2496
        %v2923 = vpop.f32.mrb[0].mxu0
        %v2924 = vadd.f32 %v2699, %v2923
        %v2925 = vpop.f32.mrb[0].mxu0
        %2926 = vmatprep.mubr.f32.mxu0 0.0
        %2927 = vmatmul.mubr.f32.gmra.mrb[0].mxu0 %v2498
        %v2928 = vpop.f32.mrb[0].mxu0
        %v2929 = vadd.f32 %v2704, %v2928
        %v2930 = vpop.f32.mrb[0].mxu0
        %2931 = vmatprep.mubr.f32.mxu0 0.0
        %2932 = vmatmul.mubr.f32.gmra.mrb[0].mxu0 %v2500
        %v2933 = vpop.f32.mrb[0].mxu0
        %v2934 = vadd.f32 %v2709, %v2933
        %v2935 = vpop.f32.mrb[0].mxu0
        %2936 = vmatprep.mubr.f32.mxu0 0.0
        %2937 = vmatmul.mubr.f32.gmra.mrb[0].mxu0 %v2502
        %v2938 = vpop.f32.mrb[0].mxu0
        %v2939 = vadd.f32 %v2714, %v2938
        %v2940 = vpop.f32.mrb[0].mxu0
        %2941 = vmatprep.mubr.f32.mxu0 0.0
        %2942 = vmatmul.mubr.f32.gmra.mrb[0].mxu0 %v2504
        %v2943 = vpop.f32.mrb[0].mxu0
        %v2944 = vadd.f32 %v2719, %v2943
        %v2945 = vpop.f32.mrb[0].mxu0
        %2946 = vmatprep.mubr.f32.mxu0 0.0
        %2947 = vmatmul.mubr.f32.gmra.mrb[0].mxu0 %v2506
        %v2948 = vpop.f32.mrb[0].mxu0
        %v2949 = vadd.f32 %v2724, %v2948
        %v2950 = vpop.f32.mrb[0].mxu0
        %2951 = vmatprep.mubr.f32.mxu0 0.0
        %2952 = vmatmul.mubr.f32.gmra.mrb[0].mxu0 %v2508
        %v2953 = vpop.f32.mrb[0].mxu0
        %v2954 = vadd.f32 %v2729, %v2953
        %v2955 = vpop.f32.mrb[0].mxu0
        %2956 = vmatprep.mubr.f32.mxu0 0.0
        %2957 = vmatmul.mubr.f32.gmra.mrb[0].mxu0 %v2510
        %v2958 = vpop.f32.mrb[0].mxu0
        %v2959 = vadd.f32 %v2734, %v2958
        %v2960 = vpop.f32.mrb[0].mxu0
        %2961 = vdwg.mxu0
        %v2962 = vld [vmem:[%s7] sm:$0x1]
        %v2964 = vlaneseq
        %v2965 = vshrl.u32 %v2964, 7
        %v2966 = vsub.s32 0, %v2965
        %v2967 = vrot.slane %v2962, %v2966
        %v2969 = vmul.f32 %v2804, %v2967
        %v2970 = vmul.f32 %v2809, %v2967
        %v2971 = vmul.f32 %v2814, %v2967
        %v2972 = vmul.f32 %v2819, %v2967
        %v2973 = vmul.f32 %v2824, %v2967
        %v2974 = vmul.f32 %v2829, %v2967
        %v2975 = vmul.f32 %v2834, %v2967
        %v2976 = vmul.f32 %v2839, %v2967
        %v2977 = vmul.f32 %v2844, %v2967
        %v2978 = vmul.f32 %v2849, %v2967
        %v2979 = vmul.f32 %v2854, %v2967
        %v2980 = vmul.f32 %v2859, %v2967
        %v2981 = vmul.f32 %v2864, %v2967
        %v2982 = vmul.f32 %v2869, %v2967
        %v2983 = vmul.f32 %v2874, %v2967
        %v2984 = vmul.f32 %v2879, %v2967
        %v2985 = vmul.f32 %v2884, %v2967
        %v2986 = vmul.f32 %v2889, %v2967
        %v2987 = vmul.f32 %v2894, %v2967
        %v2988 = vmul.f32 %v2899, %v2967
        %v2989 = vmul.f32 %v2904, %v2967
        %v2990 = vmul.f32 %v2909, %v2967
        %v2991 = vmul.f32 %v2914, %v2967
        %v2992 = vmul.f32 %v2919, %v2967
        %v2993 = vmul.f32 %v2924, %v2967
        %v2994 = vmul.f32 %v2929, %v2967
        %v2995 = vmul.f32 %v2934, %v2967
        %v2996 = vmul.f32 %v2939, %v2967
        %v2997 = vmul.f32 %v2944, %v2967
        %v2998 = vmul.f32 %v2949, %v2967
        %v2999 = vmul.f32 %v2954, %v2967
        %v3000 = vmul.f32 %v2959, %v2967
        %v3001 = vld [vmem:[%s8] sm:$0x1]
        %v3003 = vlaneseq
        %v3004 = vshrl.u32 %v3003, 7
        %v3005 = vsub.s32 0, %v3004
        %v3006 = vrot.slane %v3001, %v3005
        %v3008 = vadd.f32 %v2969, %v3006
        %v3009 = vadd.f32 %v2970, %v3006
        %v3010 = vadd.f32 %v2971, %v3006
        %v3011 = vadd.f32 %v2972, %v3006
        %v3012 = vadd.f32 %v2973, %v3006
        %v3013 = vadd.f32 %v2974, %v3006
        %v3014 = vadd.f32 %v2975, %v3006
        %v3015 = vadd.f32 %v2976, %v3006
        %v3016 = vadd.f32 %v2977, %v3006
        %v3017 = vadd.f32 %v2978, %v3006
        %v3018 = vadd.f32 %v2979, %v3006
        %v3019 = vadd.f32 %v2980, %v3006
        %v3020 = vadd.f32 %v2981, %v3006
        %v3021 = vadd.f32 %v2982, %v3006
        %v3022 = vadd.f32 %v2983, %v3006
        %v3023 = vadd.f32 %v2984, %v3006
        %v3024 = vadd.f32 %v2985, %v3006
        %v3025 = vadd.f32 %v2986, %v3006
        %v3026 = vadd.f32 %v2987, %v3006
        %v3027 = vadd.f32 %v2988, %v3006
        %v3028 = vadd.f32 %v2989, %v3006
        %v3029 = vadd.f32 %v2990, %v3006
        %v3030 = vadd.f32 %v2991, %v3006
        %v3031 = vadd.f32 %v2992, %v3006
        %v3032 = vadd.f32 %v2993, %v3006
        %v3033 = vadd.f32 %v2994, %v3006
        %v3034 = vadd.f32 %v2995, %v3006
        %v3035 = vadd.f32 %v2996, %v3006
        %v3036 = vadd.f32 %v2997, %v3006
        %v3037 = vadd.f32 %v2998, %v3006
        %v3038 = vadd.f32 %v2999, %v3006
        %v3039 = vadd.f32 %v3000, %v3006
        %v3040 = vmax.f32 %v3008, 0.0
        %v3041 = vmax.f32 %v3009, 0.0
        %v3042 = vmax.f32 %v3010, 0.0
        %v3043 = vmax.f32 %v3011, 0.0
        %v3044 = vmax.f32 %v3012, 0.0
        %v3045 = vmax.f32 %v3013, 0.0
        %v3046 = vmax.f32 %v3014, 0.0
        %v3047 = vmax.f32 %v3015, 0.0
        %v3048 = vmax.f32 %v3016, 0.0
        %v3049 = vmax.f32 %v3017, 0.0
        %v3050 = vmax.f32 %v3018, 0.0
        %v3051 = vmax.f32 %v3019, 0.0
        %v3052 = vmax.f32 %v3020, 0.0
        %v3053 = vmax.f32 %v3021, 0.0
        %v3054 = vmax.f32 %v3022, 0.0
        %v3055 = vmax.f32 %v3023, 0.0
        %v3056 = vmax.f32 %v3024, 0.0
        %v3057 = vmax.f32 %v3025, 0.0
        %v3058 = vmax.f32 %v3026, 0.0
        %v3059 = vmax.f32 %v3027, 0.0
        %v3060 = vmax.f32 %v3028, 0.0
        %v3061 = vmax.f32 %v3029, 0.0
        %v3062 = vmax.f32 %v3030, 0.0
        %v3063 = vmax.f32 %v3031, 0.0
        %v3064 = vmax.f32 %v3032, 0.0
        %v3065 = vmax.f32 %v3033, 0.0
        %v3066 = vmax.f32 %v3034, 0.0
        %v3067 = vmax.f32 %v3035, 0.0
        %v3068 = vmax.f32 %v3036, 0.0
        %v3069 = vmax.f32 %v3037, 0.0
        %v3070 = vmax.f32 %v3038, 0.0
        %v3071 = vmax.f32 %v3039, 0.0
        %3072 = vst.msk [vmem:[%s340] sm:$0xff] %vm1179, %v3040
        %3073 = vst.msk [vmem:[%s340 + $0x8] sm:$0xff] %vm1179, %v3041
        %3074 = vst.msk [vmem:[%s340 + $0x10] sm:$0xff] %vm1179, %v3042
        %3075 = vst.msk [vmem:[%s340 + $0x18] sm:$0xff] %vm1179, %v3043
        %3076 = vst.msk [vmem:[%s340 + $0x20] sm:$0xff] %vm1179, %v3044
        %3077 = vst.msk [vmem:[%s340 + $0x28] sm:$0xff] %vm1179, %v3045
        %3078 = vst.msk [vmem:[%s340 + $0x30] sm:$0xff] %vm1179, %v3046
        %3079 = vst.msk [vmem:[%s340 + $0x38] sm:$0xff] %vm1179, %v3047
        %3080 = vst.msk [vmem:[%s340 + $0x40] sm:$0xff] %vm1179, %v3048
        %3081 = vst.msk [vmem:[%s340 + $0x48] sm:$0xff] %vm1179, %v3049
        %3082 = vst.msk [vmem:[%s340 + $0x50] sm:$0xff] %vm1179, %v3050
        %3083 = vst.msk [vmem:[%s340 + $0x58] sm:$0xff] %vm1179, %v3051
        %3084 = vst.msk [vmem:[%s340 + $0x60] sm:$0xff] %vm1179, %v3052
        %3085 = vst.msk [vmem:[%s340 + $0x68] sm:$0xff] %vm1179, %v3053
        %3086 = vst.msk [vmem:[%s340 + $0x70] sm:$0xff] %vm1179, %v3054
        %3087 = vst.msk [vmem:[%s340 + $0x78] sm:$0xff] %vm1179, %v3055
        %3088 = vst.msk [vmem:[%s340 + $0x80] sm:$0xff] %vm1179, %v3056
        %3089 = vst.msk [vmem:[%s340 + $0x88] sm:$0xff] %vm1179, %v3057
        %3090 = vst.msk [vmem:[%s340 + $0x90] sm:$0xff] %vm1179, %v3058
        %3091 = vst.msk [vmem:[%s340 + $0x98] sm:$0xff] %vm1179, %v3059
        %3092 = vst.msk [vmem:[%s340 + $0xa0] sm:$0xff] %vm1179, %v3060
        %3093 = vst.msk [vmem:[%s340 + $0xa8] sm:$0xff] %vm1179, %v3061
        %3094 = vst.msk [vmem:[%s340 + $0xb0] sm:$0xff] %vm1179, %v3062
        %3095 = vst.msk [vmem:[%s340 + $0xb8] sm:$0xff] %vm1179, %v3063
        %3096 = vst.msk [vmem:[%s340 + $0xc0] sm:$0xff] %vm1179, %v3064
        %3097 = vst.msk [vmem:[%s340 + $0xc8] sm:$0xff] %vm1179, %v3065
        %3098 = vst.msk [vmem:[%s340 + $0xd0] sm:$0xff] %vm1179, %v3066
        %3099 = vst.msk [vmem:[%s340 + $0xd8] sm:$0xff] %vm1179, %v3067
        %3100 = vst.msk [vmem:[%s340 + $0xe0] sm:$0xff] %vm1179, %v3068
        %3101 = vst.msk [vmem:[%s340 + $0xe8] sm:$0xff] %vm1179, %v3069
        %3102 = vst.msk [vmem:[%s340 + $0xf0] sm:$0xff] %vm1179, %v3070
        %3103 = vst.msk [vmem:[%s340 + $0xf8] sm:$0xff] %vm1179, %v3071
        %s3104 = sand.u32 %s230, 1
        %s3105 = scalar_lea.sflag [#allocation4], %s3104
        %s3106 = sand.u32 %s230, 1
        %s3107 = smul.addr %s3106, 256
        %s3108 = scalar_lea.vmem [#allocation3], %s3107
        // Predicated region
        $region57: #{upsample_forward.1} parent=55 // pred_check
          %p3109 = pneg %p240
        $region58: #{upsample_forward.1} parent=55 // pred_check_branch
          %3111 = sbr.rel (%p3109) target = $region60
        $region59: #{upsample_forward.1} parent=55 // pred_region
          %s3113 = ssub.s32 4096, 4096
          %3114 = vsyncadd %s3105, %s3113
          %s3115 = smul.addr %s23, 32
          %s3116 = smul.addr %s3115, 128
          %s3117 = scalar_lea.hbm %s9, %s3116
          %s3118 = sshll.u32 %s3108, 4
          %s3119 = int_to_ptr.vmem [resolvable:$true] %s3118
          %3124 = dma.vmem_to_hbm [thread:$0]  %s3119, 4096, %s3117, %s3105, 128, 128, 8
        $region60: #{upsample_forward.1} parent=55 // pred_fallthru
          _
      $region56: #{upsample_forward.1} parent=5 // pred_fallthru
        _
      %p3125 = scmp.le.s32.totalorder 2, %s18
      // Predicated region
      $region61: #{upsample_forward.1} parent=5 // pred_check
        %p3126 = pneg %p3125
      $region62: #{upsample_forward.1} parent=5 // pred_check_branch
        %3128 = sbr.rel (%p3126) target = $region64
      $region63: #{upsample_forward.1} parent=5 // pred_region
        %s3129 = ssub.s32 %s18, 2
        // Predicated region
        $region65: #{upsample_forward.1} parent=63 // pred_check
          %p3130 = pneg %p246
        $region66: #{upsample_forward.1} parent=63 // pred_check_branch
          %3132 = sbr.rel (%p3130) target = $region68
        $region67: #{upsample_forward.1} parent=63 // pred_region
          %s3133 = sand.u32 %s231, 1
          %s3134 = scalar_lea.sflag [#allocation4], %s3133
          %s3135 = sand.u32 %s231, 1
          %s3136 = smul.addr %s3135, 256
          %s3137 = scalar_lea.vmem [#allocation3], %s3136
          %3138 = dma.done %s3134, 4096
        $region68: #{upsample_forward.1} parent=63 // pred_fallthru
          _
      $region64: #{upsample_forward.1} parent=5 // pred_fallthru
        _
    $region6: #{upsample_forward.1} parent=1 // loop_footer
      %s22 = sadd.s32 1, %s18
    $region7: #{upsample_forward.1} parent=1 // loop_footer_branch
      %17 = sbr.rel target = $region3
    $region8: #{upsample_forward.1} parent=1 // loop_exit
      _
    %3139 = vsyncpa [#allocation4], 1
    %s3140 = scalar_lea.sflag [#allocation4], 1
    %3141 = vsyncpa %s3140, 1

// kernel: upsample_forward.1
$region0: #{upsample_forward.1}
  #allocation0 [shape = 'u32[]', space=smem, size = 0x4, offset = 0x4, fixed_abs, tag = 'smem constant byte address 0x4 - core index']
  #allocation1 [shape = 'u32[144,128]{1,0:T(1,128)}', space=vmem, size = 0x12000, scoped, tag = 'internal scratch']
  #allocation2 [shape = 'f32[18,32,32]{2,1,0:T(8,128)}', space=vmem, size = 0x48000, scoped, tag = 'scratch operand']
  %s0 = inlined_call_operand.vmem [shape: f32[2,256,16], index: 0, kind: input, shape index: {}]
  %s1 = inlined_call_operand.vmem [shape: f32[2,64,32], index: 1, kind: input, shape index: {}]
  %s2 = inlined_call_operand.vmem [shape: f32[256,64], index: 2, kind: input, shape index: {}]
  %s3 = inlined_call_operand.vmem [shape: f32[16,32], index: 3, kind: input, shape index: {}]
  %s4 = inlined_call_operand.vmem [shape: f32[1,32], index: 4, kind: input, shape index: {}]
  %s5 = inlined_call_operand.vmem [shape: f32[1,32], index: 5, kind: input, shape index: {}]
  %s6 = inlined_call_operand.vmem [shape: f32[288,32], index: 6, kind: input, shape index: {}]
  %s7 = inlined_call_operand.vmem [shape: f32[1,32], index: 7, kind: input, shape index: {}]
  %s8 = inlined_call_operand.vmem [shape: f32[1,32], index: 8, kind: input, shape index: {}]
  %s9 = inlined_call_operand.hbm [shape: f32[2,256,32], index: 9, kind: output, shape index: {}]
  %s10 = sld [smem:[#allocation0]]
  $region69: #{upsample_forward.1} parent=0
    _
  %s12 = ssub.s32 1, %s10
  %s13 = scalar_select 0, %s12, %s10
  $region1: #{upsample_forward.1} parent=0
    #allocation3 [shape = 'u8[262144]{0}', space=vmem, size = 0x40000, scoped, tag = 'output window, operand 0']
    #allocation4 [shape = 's32[2]{0}', space=sflag, size = 0x8, scoped, tag = 'scoped memory for upsample_forward.1']
    %14 = vsyncpa [#allocation4], 0
    %s15 = scalar_lea.sflag [#allocation4], 1
    %16 = vsyncpa %s15, 0
    loop: start=0, step=1, limit=4
    $region2: #{upsample_forward.1} parent=1 // loop_pre_header
      _
    $region3: #{upsample_forward.1} parent=1 // loop_header
      %s18 = sphi 0, %s22
      %p19 = scmp.ge.s32.totalorder %s18, 4
      %s28 = sphi 0, %s30
      %s31 = sphi 0, %s28
      %s32 = sphi 0, %s31
      %s48 = sphi 0, %s32
      %s54 = sphi 0, %s56
      %s57 = sphi 0, %s54
      %s58 = sphi 0, %s57
      %s74 = sphi 0, %s58
      %s78 = sphi 0, %s78
      %s80 = sphi 0, %s78
      %s81 = sphi 0, %s80
      %s95 = sphi 0, %s81
      %s99 = sphi 0, %s99
      %s101 = sphi 0, %s99
      %s102 = sphi 0, %s101
      %s116 = sphi 0, %s102
      %s120 = sphi 0, %s120
      %s122 = sphi 0, %s120
      %s123 = sphi 0, %s122
      %s137 = sphi 0, %s123
      %s141 = sphi 0, %s141
      %s143 = sphi 0, %s141
      %s144 = sphi 0, %s143
      %s158 = sphi 0, %s144
      %s162 = sphi 0, %s162
      %s164 = sphi 0, %s162
      %s165 = sphi 0, %s164
      %s179 = sphi 0, %s165
      %s183 = sphi 0, %s183
      %s185 = sphi 0, %s183
      %s186 = sphi 0, %s185
      %s200 = sphi 0, %s186
      %s204 = sphi 0, %s204
      %s206 = sphi 0, %s204
      %s207 = sphi 0, %s206
      %s221 = sphi 0, %s207
      %s227 = sphi 0, %s229
      %s230 = sphi 0, %s227
      %s231 = sphi 0, %s230
      %s247 = sphi 0, %s231
    $region4: #{upsample_forward.1} parent=1 // loop_header_branch
      %21 = sbr.rel (%p19) target = $region8
    $region5: #{upsample_forward.1} parent=1 // loop_body
      %s23 = ssub.s32 %s18, 1
      %s24 = ssub.s32 %s18, 2
      %s25 = sadd.s32 %s18, 1
      %s26 = ssub.s32 %s18, %s25
      %p27 = scmp.eq.s32.totalorder %s26, 0
      %s29 = sadd.s32 %s28, 1
      %s30 = scalar_select %p27, %s28, %s29
      %p33 = pneg %p27
      %p34 = scmp.eq.s32.totalorder %s18, 1
      %p35 = por %p33, %p34
      %p36 = scmp.ne.s32.totalorder %s28, %s31
      %p37 = scmp.eq.s32.totalorder %s18, 0
      %p38 = por %p36, %p37
      %p39 = scmp.ne.s32.totalorder %s28, %s31
      %p40 = scmp.eq.s32.totalorder %s23, 1
      %p41 = por %p39, %p40
      %p42 = scmp.ne.s32.totalorder %s31, %s32
      %p43 = scmp.eq.s32.totalorder %s23, 0
      %p44 = por %p42, %p43
      %p45 = scmp.ne.s32.totalorder %s31, %s32
      %p46 = scmp.eq.s32.totalorder %s24, 1
      %p47 = por %p45, %p46
      %p49 = scmp.ne.s32.totalorder %s32, %s48
      %p50 = scmp.eq.s32.totalorder %s24, 0
      %p51 = por %p49, %p50
      %s52 = ssub.s32 %s18, %s25
      %p53 = scmp.eq.s32.totalorder %s52, 0
      %s55 = sadd.s32 %s54, 1
      %s56 = scalar_select %p53, %s54, %s55
      %p59 = pneg %p53
      %p60 = scmp.eq.s32.totalorder %s18, 1
      %p61 = por %p59, %p60
      %p62 = scmp.ne.s32.totalorder %s54, %s57
      %p63 = scmp.eq.s32.totalorder %s18, 0
      %p64 = por %p62, %p63
      %p65 = scmp.ne.s32.totalorder %s54, %s57
      %p66 = scmp.eq.s32.totalorder %s23, 1
      %p67 = por %p65, %p66
      %p68 = scmp.ne.s32.totalorder %s57, %s58
      %p69 = scmp.eq.s32.totalorder %s23, 0
      %p70 = por %p68, %p69
      %p71 = scmp.ne.s32.totalorder %s57, %s58
      %p72 = scmp.eq.s32.totalorder %s24, 1
      %p73 = por %p71, %p72
      %p75 = scmp.ne.s32.totalorder %s58, %s74
      %p76 = scmp.eq.s32.totalorder %s24, 0
      %p77 = por %p75, %p76
      %s79 = sadd.s32 %s78, 1
      %p82 = scmp.eq.s32.totalorder %s18, 1
      %p83 = scmp.ne.s32.totalorder %s78, %s80
      %p84 = scmp.eq.s32.totalorder %s18, 0
      %p85 = por %p83, %p84
      %p86 = scmp.ne.s32.totalorder %s78, %s80
      %p87 = scmp.eq.s32.totalorder %s23, 1
      %p88 = por %p86, %p87
      %p89 = scmp.ne.s32.totalorder %s80, %s81
      %p90 = scmp.eq.s32.totalorder %s23, 0
      %p91 = por %p89, %p90
      %p92 = scmp.ne.s32.totalorder %s80, %s81
      %p93 = scmp.eq.s32.totalorder %s24, 1
      %p94 = por %p92, %p93
      %p96 = scmp.ne.s32.totalorder %s81, %s95
      %p97 = scmp.eq.s32.totalorder %s24, 0
      %p98 = por %p96, %p97
      %s100 = sadd.s32 %s99, 1
      %p103 = scmp.eq.s32.totalorder %s18, 1
      %p104 = scmp.ne.s32.totalorder %s99, %s101
      %p105 = scmp.eq.s32.totalorder %s18, 0
      %p106 = por %p104, %p105
      %p107 = scmp.ne.s32.totalorder %s99, %s101
      %p108 = scmp.eq.s32.totalorder %s23, 1
      %p109 = por %p107, %p108
      %p110 = scmp.ne.s32.totalorder %s101, %s102
      %p111 = scmp.eq.s32.totalorder %s23, 0
      %p112 = por %p110, %p111
      %p113 = scmp.ne.s32.totalorder %s101, %s102
      %p114 = scmp.eq.s32.totalorder %s24, 1
      %p115 = por %p113, %p114
      %p117 = scmp.ne.s32.totalorder %s102, %s116
      %p118 = scmp.eq.s32.totalorder %s24, 0
      %p119 = por %p117, %p118
      %s121 = sadd.s32 %s120, 1
      %p124 = scmp.eq.s32.totalorder %s18, 1
      %p125 = scmp.ne.s32.totalorder %s120, %s122
      %p126 = scmp.eq.s32.totalorder %s18, 0
      %p127 = por %p125, %p126
      %p128 = scmp.ne.s32.totalorder %s120, %s122
      %p129 = scmp.eq.s32.totalorder %s23, 1
      %p130 = por %p128, %p129
      %p131 = scmp.ne.s32.totalorder %s122, %s123
      %p132 = scmp.eq.s32.totalorder %s23, 0
      %p133 = por %p131, %p132
      %p134 = scmp.ne.s32.totalorder %s122, %s123
      %p135 = scmp.eq.s32.totalorder %s24, 1
      %p136 = por %p134, %p135
      %p138 = scmp.ne.s32.totalorder %s123, %s137
      %p139 = scmp.eq.s32.totalorder %s24, 0
      %p140 = por %p138, %p139
      %s142 = sadd.s32 %s141, 1
      %p145 = scmp.eq.s32.totalorder %s18, 1
      %p146 = scmp.ne.s32.totalorder %s141, %s143
      %p147 = scmp.eq.s32.totalorder %s18, 0
      %p148 = por %p146, %p147
      %p149 = scmp.ne.s32.totalorder %s141, %s143
      %p150 = scmp.eq.s32.totalorder %s23, 1
      %p151 = por %p149, %p150
      %p152 = scmp.ne.s32.totalorder %s143, %s144
      %p153 = scmp.eq.s32.totalorder %s23, 0
      %p154 = por %p152, %p153
      %p155 = scmp.ne.s32.totalorder %s143, %s144
      %p156 = scmp.eq.s32.totalorder %s24, 1
      %p157 = por %p155, %p156
      %p159 = scmp.ne.s32.totalorder %s144, %s158
      %p160 = scmp.eq.s32.totalorder %s24, 0
      %p161 = por %p159, %p160
      %s163 = sadd.s32 %s162, 1
      %p166 = scmp.eq.s32.totalorder %s18, 1
      %p167 = scmp.ne.s32.totalorder %s162, %s164
      %p168 = scmp.eq.s32.totalorder %s18, 0
      %p169 = por %p167, %p168
      %p170 = scmp.ne.s32.totalorder %s162, %s164
      %p171 = scmp.eq.s32.totalorder %s23, 1
      %p172 = por %p170, %p171
      %p173 = scmp.ne.s32.totalorder %s164, %s165
      %p174 = scmp.eq.s32.totalorder %s23, 0
      %p175 = por %p173, %p174
      %p176 = scmp.ne.s32.totalorder %s164, %s165
      %p177 = scmp.eq.s32.totalorder %s24, 1
      %p178 = por %p176, %p177
      %p180 = scmp.ne.s32.totalorder %s165, %s179
      %p181 = scmp.eq.s32.totalorder %s24, 0
      %p182 = por %p180, %p181
      %s184 = sadd.s32 %s183, 1
      %p187 = scmp.eq.s32.totalorder %s18, 1
      %p188 = scmp.ne.s32.totalorder %s183, %s185
      %p189 = scmp.eq.s32.totalorder %s18, 0
      %p190 = por %p188, %p189
      %p191 = scmp.ne.s32.totalorder %s183, %s185
      %p192 = scmp.eq.s32.totalorder %s23, 1
      %p193 = por %p191, %p192
      %p194 = scmp.ne.s32.totalorder %s185, %s186
      %p195 = scmp.eq.s32.totalorder %s23, 0
      %p196 = por %p194, %p195
      %p197 = scmp.ne.s32.totalorder %s185, %s186
      %p198 = scmp.eq.s32.totalorder %s24, 1
      %p199 = por %p197, %p198
      %p201 = scmp.ne.s32.totalorder %s186, %s200
      %p202 = scmp.eq.s32.totalorder %s24, 0
      %p203 = por %p201, %p202
      %s205 = sadd.s32 %s204, 1
      %p208 = scmp.eq.s32.totalorder %s18, 1
      %p209 = scmp.ne.s32.totalorder %s204, %s206
      %p210 = scmp.eq.s32.totalorder %s18, 0
      %p211 = por %p209, %p210
      %p212 = scmp.ne.s32.totalorder %s204, %s206
      %p213 = scmp.eq.s32.totalorder %s23, 1
      %p214 = por %p212, %p213
      %p215 = scmp.ne.s32.totalorder %s206, %s207
      %p216 = scmp.eq.s32.totalorder %s23, 0
      %p217 = por %p215, %p216
      %p218 = scmp.ne.s32.totalorder %s206, %s207
      %p219 = scmp.eq.s32.totalorder %s24, 1
      %p220 = por %p218, %p219
      %p222 = scmp.ne.s32.totalorder %s207, %s221
      %p223 = scmp.eq.s32.totalorder %s24, 0
      %p224 = por %p222, %p223
      %s225 = ssub.s32 %s18, %s25
      %p226 = scmp.eq.s32.totalorder %s225, 0
      %s228 = sadd.s32 %s227, 1
      %s229 = scalar_select %p226, %s227, %s228
      %p232 = pneg %p226
      %p233 = scmp.eq.s32.totalorder %s18, 1
      %p234 = por %p232, %p233
      %p235 = scmp.ne.s32.totalorder %s227, %s230
      %p236 = scmp.eq.s32.totalorder %s18, 0
      %p237 = por %p235, %p236
      %p238 = scmp.ne.s32.totalorder %s227, %s230
      %p239 = scmp.eq.s32.totalorder %s23, 1
      %p240 = por %p238, %p239
      %p241 = scmp.ne.s32.totalorder %s230, %s231
      %p242 = scmp.eq.s32.totalorder %s23, 0
      %p243 = por %p241, %p242
      %p244 = scmp.ne.s32.totalorder %s230, %s231
      %p245 = scmp.eq.s32.totalorder %s24, 1
      %p246 = por %p244, %p245
      %p248 = scmp.ne.s32.totalorder %s231, %s247
      %p249 = scmp.eq.s32.totalorder %s24, 0
      %p250 = por %p248, %p249
      %p251 = scmp.le.s32.totalorder 1, %s18
      %p252 = scmp.lt.s32.totalorder %s18, 3
      %p253 = pnand %p251, %p252
      %p254 = pneg %p253
      // Predicated region
      $region9: #{upsample_forward.1} parent=5 // pred_check
        _
      $region10: #{upsample_forward.1} parent=5 // pred_check_branch
        %256 = sbr.rel (%p253) target = $region12
      $region11: #{upsample_forward.1} parent=5 // pred_region
        %s257 = ssub.s32 %s18, 1
        // Predicated region
        $region13: #{upsample_forward.1} parent=11 // pred_check
          %p258 = pneg %p91
        $region14: #{upsample_forward.1} parent=11 // pred_check_branch
          %260 = sbr.rel (%p258) target = $region16
        $region15: #{upsample_forward.1} parent=11 // pred_region
          _
        $region16: #{upsample_forward.1} parent=11 // pred_fallthru
          _
        // Predicated region
        $region17: #{upsample_forward.1} parent=11 // pred_check
          %p261 = pneg %p112
        $region18: #{upsample_forward.1} parent=11 // pred_check_branch
          %263 = sbr.rel (%p261) target = $region20
        $region19: #{upsample_forward.1} parent=11 // pred_region
          _
        $region20: #{upsample_forward.1} parent=11 // pred_fallthru
          _
        // Predicated region
        $region21: #{upsample_forward.1} parent=11 // pred_check
          %p264 = pneg %p133
        $region22: #{upsample_forward.1} parent=11 // pred_check_branch
          %266 = sbr.rel (%p264) target = $region24
        $region23: #{upsample_forward.1} parent=11 // pred_region
          _
        $region24: #{upsample_forward.1} parent=11 // pred_fallthru
          _
        // Predicated region
        $region25: #{upsample_forward.1} parent=11 // pred_check
          %p267 = pneg %p154
        $region26: #{upsample_forward.1} parent=11 // pred_check_branch
          %269 = sbr.rel (%p267) target = $region28
        $region27: #{upsample_forward.1} parent=11 // pred_region
          _
        $region28: #{upsample_forward.1} parent=11 // pred_fallthru
          _
        // Predicated region
        $region29: #{upsample_forward.1} parent=11 // pred_check
          %p270 = pneg %p175
        $region30: #{upsample_forward.1} parent=11 // pred_check_branch
          %272 = sbr.rel (%p270) target = $region32
        $region31: #{upsample_forward.1} parent=11 // pred_region
          _
        $region32: #{upsample_forward.1} parent=11 // pred_fallthru
          _
        // Predicated region
        $region33: #{upsample_forward.1} parent=11 // pred_check
          %p273 = pneg %p196
        $region34: #{upsample_forward.1} parent=11 // pred_check_branch
          %275 = sbr.rel (%p273) target = $region36
        $region35: #{upsample_forward.1} parent=11 // pred_region
          _
        $region36: #{upsample_forward.1} parent=11 // pred_fallthru
          _
        // Predicated region
        $region37: #{upsample_forward.1} parent=11 // pred_check
          %p276 = pneg %p217
        $region38: #{upsample_forward.1} parent=11 // pred_check_branch
          %278 = sbr.rel (%p276) target = $region40
        $region39: #{upsample_forward.1} parent=11 // pred_region
          _
        $region40: #{upsample_forward.1} parent=11 // pred_fallthru
          _
      $region12: #{upsample_forward.1} parent=5 // pred_fallthru
        _
      %p279 = scmp.lt.s32.totalorder %s18, 2
      // Predicated region
      $region41: #{upsample_forward.1} parent=5 // pred_check
        %p280 = pneg %p279
      $region42: #{upsample_forward.1} parent=5 // pred_check_branch
        %282 = sbr.rel (%p280) target = $region44
      $region43: #{upsample_forward.1} parent=5 // pred_region
        // Predicated region
        $region45: #{upsample_forward.1} parent=43 // pred_check
          %p283 = pneg %p38
        $region46: #{upsample_forward.1} parent=43 // pred_check_branch
          %285 = sbr.rel (%p283) target = $region48
        $region47: #{upsample_forward.1} parent=43 // pred_region
          %p286 = scmp.lt.s32.totalorder %s18, 1
          %s287 = scalar_select %p286, %s18, 1
          %s288 = smul.addr %s287, 32
          %s289 = smul.addr %s288, 8
          %s290 = scalar_lea.vmem %s0, %s289
        $region48: #{upsample_forward.1} parent=43 // pred_fallthru
          _
        // Predicated region
        $region49: #{upsample_forward.1} parent=43 // pred_check
          %p291 = pneg %p64
        $region50: #{upsample_forward.1} parent=43 // pred_check_branch
          %293 = sbr.rel (%p291) target = $region52
        $region51: #{upsample_forward.1} parent=43 // pred_region
          %p294 = scmp.lt.s32.totalorder %s18, 1
          %s295 = scalar_select %p294, %s18, 1
          %s296 = smul.addr %s295, 8
          %s297 = smul.addr %s296, 8
          %s298 = scalar_lea.vmem %s1, %s297
        $region52: #{upsample_forward.1} parent=43 // pred_fallthru
          _
      $region44: #{upsample_forward.1} parent=5 // pred_fallthru
        _
      %p299 = scmp.le.s32.totalorder 1, %s18
      %p300 = scmp.lt.s32.totalorder %s18, 3
      %p301 = pnand %p299, %p300
      %p302 = pneg %p301
      // Predicated region
      $region53: #{upsample_forward.1} parent=5 // pred_check
        _
      $region54: #{upsample_forward.1} parent=5 // pred_check_branch
        %304 = sbr.rel (%p301) target = $region56
      $region55: #{upsample_forward.1} parent=5 // pred_region
        %s305 = ssub.s32 %s18, 1
        %p306 = scmp.lt.s32.totalorder %s23, 1
        %s307 = scalar_select %p306, %s23, 1
        %s308 = smul.addr %s307, 32
        %s309 = smul.addr %s308, 8
        %s310 = scalar_lea.vmem %s0, %s309
        %p311 = pneg %p44
        %p312 = pneg %p41
        %p313 = scmp.lt.s32.totalorder %s23, 1
        %s314 = scalar_select %p313, %s23, 1
        %s315 = smul.addr %s314, 8
        %s316 = smul.addr %s315, 8
        %s317 = scalar_lea.vmem %s1, %s316
        %p318 = pneg %p70
        %p319 = pneg %p67
        %p320 = pneg %p91
        %p321 = pneg %p88
        %p322 = pneg %p112
        %p323 = pneg %p109
        %p324 = pneg %p133
        %p325 = pneg %p130
        %p326 = pneg %p154
        %p327 = pneg %p151
        %p328 = pneg %p175
        %p329 = pneg %p172
        %p330 = pneg %p196
        %p331 = pneg %p193
        %p332 = pneg %p217
        %p333 = pneg %p214
        %p334 = pneg %p243
        %p335 = pneg %p240
        %s336 = sand.u32 %s230, 1
        %s337 = scalar_lea.sflag [#allocation4], %s336
        %s338 = sand.u32 %s230, 1
        %s339 = smul.addr %s338, 256
        %s340 = scalar_lea.vmem [#allocation3], %s339
        %p341 = scmp.lt.s32.totalorder %s23, 1
        %s342 = scalar_select %p341, %s23, 1
        %s343 = smul.addr %s342, 32
        %s344 = smul.addr %s343, 8
        %s345 = scalar_lea.vmem %s0, %s344
        %p346 = scmp.lt.s32.totalorder %s23, 1
        %s347 = scalar_select %p346, %s23, 1
        %s348 = smul.addr %s347, 8
        %s349 = smul.addr %s348, 8
        %s350 = scalar_lea.vmem %s1, %s349
        %v351 = vld [vmem:[%s345] sm:$0xff]
        %v352 = vld [vmem:[%s345 + $0x8] sm:$0xff]
        %v353 = vld [vmem:[%s345 + $0x10] sm:$0xff]
        %v354 = vld [vmem:[%s345 + $0x18] sm:$0xff]
        %v355 = vld [vmem:[%s345 + $0x20] sm:$0xff]
        %v356 = vld [vmem:[%s345 + $0x28] sm:$0xff]
        %v357 = vld [vmem:[%s345 + $0x30] sm:$0xff]
        %v358 = vld [vmem:[%s345 + $0x38] sm:$0xff]
        %v359 = vld [vmem:[%s345 + $0x40] sm:$0xff]
        %v360 = vld [vmem:[%s345 + $0x48] sm:$0xff]
        %v361 = vld [vmem:[%s345 + $0x50] sm:$0xff]
        %v362 = vld [vmem:[%s345 + $0x58] sm:$0xff]
        %v363 = vld [vmem:[%s345 + $0x60] sm:$0xff]
        %v364 = vld [vmem:[%s345 + $0x68] sm:$0xff]
        %v365 = vld [vmem:[%s345 + $0x70] sm:$0xff]
        %v366 = vld [vmem:[%s345 + $0x78] sm:$0xff]
        %v367 = vld [vmem:[%s345 + $0x80] sm:$0xff]
        %v368 = vld [vmem:[%s345 + $0x88] sm:$0xff]
        %v369 = vld [vmem:[%s345 + $0x90] sm:$0xff]
        %v370 = vld [vmem:[%s345 + $0x98] sm:$0xff]
        %v371 = vld [vmem:[%s345 + $0xa0] sm:$0xff]
        %v372 = vld [vmem:[%s345 + $0xa8] sm:$0xff]
        %v373 = vld [vmem:[%s345 + $0xb0] sm:$0xff]
        %v374 = vld [vmem:[%s345 + $0xb8] sm:$0xff]
        %v375 = vld [vmem:[%s345 + $0xc0] sm:$0xff]
        %v376 = vld [vmem:[%s345 + $0xc8] sm:$0xff]
        %v377 = vld [vmem:[%s345 + $0xd0] sm:$0xff]
        %v378 = vld [vmem:[%s345 + $0xd8] sm:$0xff]
        %v379 = vld [vmem:[%s345 + $0xe0] sm:$0xff]
        %v380 = vld [vmem:[%s345 + $0xe8] sm:$0xff]
        %v381 = vld [vmem:[%s345 + $0xf0] sm:$0xff]
        %v382 = vld [vmem:[%s345 + $0xf8] sm:$0xff]
        %v383 = vld [vmem:[%s3] sm:$0xff]
        %v384 = vld [vmem:[%s3 + $0x8] sm:$0xff]
        %vm385 = vcmask 130048
        %v387 = vsel %vm385, %v351, 0
        %v390 = vsel %vm385, %v352, 0
        %v393 = vsel %vm385, %v353, 0
        %v396 = vsel %vm385, %v354, 0
        %v399 = vsel %vm385, %v355, 0
        %v402 = vsel %vm385, %v356, 0
        %v405 = vsel %vm385, %v357, 0
        %v408 = vsel %vm385, %v358, 0
        %v411 = vsel %vm385, %v359, 0
        %v414 = vsel %vm385, %v360, 0
        %v417 = vsel %vm385, %v361, 0
        %v420 = vsel %vm385, %v362, 0
        %v423 = vsel %vm385, %v363, 0
        %v426 = vsel %vm385, %v364, 0
        %v429 = vsel %vm385, %v365, 0
        %v432 = vsel %vm385, %v366, 0
        %v435 = vsel %vm385, %v367, 0
        %v438 = vsel %vm385, %v368, 0
        %v441 = vsel %vm385, %v369, 0
        %v444 = vsel %vm385, %v370, 0
        %v447 = vsel %vm385, %v371, 0
        %v450 = vsel %vm385, %v372, 0
        %v453 = vsel %vm385, %v373, 0
        %v456 = vsel %vm385, %v374, 0
        %v459 = vsel %vm385, %v375, 0
        %v462 = vsel %vm385, %v376, 0
        %v465 = vsel %vm385, %v377, 0
        %v468 = vsel %vm385, %v378, 0
        %v471 = vsel %vm385, %v379, 0
        %v474 = vsel %vm385, %v380, 0
        %v477 = vsel %vm385, %v381, 0
        %v480 = vsel %vm385, %v382, 0
        %482 = vmatprep.subr.mxu0 0.0
        %483 = vmatpush1.msra.mxu0 %v383
        %484 = vmatprep.subr.mxu0 0.0
        %485 = vmatpush1.msra.mxu0 %v384
        %486 = vmatprep.subr.mxu0 0.0
        %487 = vmatpush1.msra.mxu0 0.0
        %488 = vmatprep.subr.mxu0 0.0
        %489 = vmatpush1.msra.mxu0 0.0
        %490 = vmatprep.subr.mxu0 0.0
        %491 = vmatpush1.msra.mxu0 0.0
        %492 = vmatprep.subr.mxu0 0.0
        %493 = vmatpush1.msra.mxu0 0.0
        %494 = vmatprep.subr.mxu0 0.0
        %495 = vmatpush1.msra.mxu0 0.0
        %496 = vmatprep.subr.mxu0 0.0
        %497 = vmatpush1.msra.mxu0 0.0
        %498 = vmatprep.subr.mxu0 0.0
        %499 = vmatpush1.msra.mxu0 0.0
        %500 = vmatprep.subr.mxu0 0.0
        %501 = vmatpush1.msra.mxu0 0.0
        %502 = vmatprep.subr.mxu0 0.0
        %503 = vmatpush1.msra.mxu0 0.0
        %504 = vmatprep.subr.mxu0 0.0
        %505 = vmatpush1.msra.mxu0 0.0
        %506 = vmatprep.subr.mxu0 0.0
        %507 = vmatpush1.msra.mxu0 0.0
        %508 = vmatprep.subr.mxu0 0.0
        %509 = vmatpush1.msra.mxu0 0.0
        %510 = vmatprep.subr.mxu0 0.0
        %511 = vmatpush1.msra.mxu0 0.0
        %512 = vmatprep.subr.mxu0 0.0
        %513 = vmatpush1.msra.mxu0 0.0
        %514 = vmatprep.subr.mxu0 0.0
        %515 = vmatpush1.msra.mxu0 0.0
        %516 = vmatprep.subr.mxu0 0.0
        %517 = vmatpush1.msra.mxu0 0.0
        %518 = vmatprep.subr.mxu0 0.0
        %519 = vmatpush1.msra.mxu0 0.0
        %520 = vmatprep.subr.mxu0 0.0
        %521 = vmatpush1.msra.mxu0 0.0
        %522 = vmatprep.subr.mxu0 0.0
        %523 = vmatpush1.msra.mxu0 0.0
        %524 = vmatprep.subr.mxu0 0.0
        %525 = vmatpush1.msra.mxu0 0.0
        %526 = vmatprep.subr.mxu0 0.0
        %527 = vmatpush1.msra.mxu0 0.0
        %528 = vmatprep.subr.mxu0 0.0
        %529 = vmatpush1.msra.mxu0 0.0
        %530 = vmatprep.subr.mxu0 0.0
        %531 = vmatpush1.msra.mxu0 0.0
        %532 = vmatprep.subr.mxu0 0.0
        %533 = vmatpush1.msra.mxu0 0.0
        %534 = vmatprep.subr.mxu0 0.0
        %535 = vmatpush1.msra.mxu0 0.0
        %536 = vmatprep.subr.mxu0 0.0
        %537 = vmatpush1.msra.mxu0 0.0
        %538 = vmatprep.subr.mxu0 0.0
        %539 = vmatpush1.msra.mxu0 0.0
        %540 = vmatprep.subr.mxu0 0.0
        %541 = vmatpush1.msra.mxu0 0.0
        %542 = vmatprep.subr.mxu0 0.0
        %543 = vmatpush1.msra.mxu0 0.0
        %544 = vmatprep.subr.mxu0 0.0
        %545 = vmatpush1.msra.mxu0 0.0
        %546 = vmatprep.mubr.f32.mxu0 0.0
        %547 = vmatmul.mubr.f32.gmra.mrb[0].mxu0 %v387
        %v548 = vpop.f32.mrb[0].mxu0
        %v549 = vadd.f32 0.0, %v548
        %v550 = vpop.f32.mrb[0].mxu0
        %551 = vmatprep.mubr.f32.mxu0 0.0
        %552 = vmatmul.mubr.f32.gmra.mrb[0].mxu0 %v390
        %v553 = vpop.f32.mrb[0].mxu0
        %v554 = vadd.f32 0.0, %v553
        %v555 = vpop.f32.mrb[0].mxu0
        %556 = vmatprep.mubr.f32.mxu0 0.0
        %557 = vmatmul.mubr.f32.gmra.mrb[0].mxu0 %v393
        %v558 = vpop.f32.mrb[0].mxu0
        %v559 = vadd.f32 0.0, %v558
        %v560 = vpop.f32.mrb[0].mxu0
        %561 = vmatprep.mubr.f32.mxu0 0.0
        %562 = vmatmul.mubr.f32.gmra.mrb[0].mxu0 %v396
        %v563 = vpop.f32.mrb[0].mxu0
        %v564 = vadd.f32 0.0, %v563
        %v565 = vpop.f32.mrb[0].mxu0
        %566 = vmatprep.mubr.f32.mxu0 0.0
        %567 = vmatmul.mubr.f32.gmra.mrb[0].mxu0 %v399
        %v568 = vpop.f32.mrb[0].mxu0
        %v569 = vadd.f32 0.0, %v568
        %v570 = vpop.f32.mrb[0].mxu0
        %571 = vmatprep.mubr.f32.mxu0 0.0
        %572 = vmatmul.mubr.f32.gmra.mrb[0].mxu0 %v402
        %v573 = vpop.f32.mrb[0].mxu0
        %v574 = vadd.f32 0.0, %v573
        %v575 = vpop.f32.mrb[0].mxu0
        %576 = vmatprep.mubr.f32.mxu0 0.0
        %577 = vmatmul.mubr.f32.gmra.mrb[0].mxu0 %v405
        %v578 = vpop.f32.mrb[0].mxu0
        %v579 = vadd.f32 0.0, %v578
        %v580 = vpop.f32.mrb[0].mxu0
        %581 = vmatprep.mubr.f32.mxu0 0.0
        %582 = vmatmul.mubr.f32.gmra.mrb[0].mxu0 %v408
        %v583 = vpop.f32.mrb[0].mxu0
        %v584 = vadd.f32 0.0, %v583
        %v585 = vpop.f32.mrb[0].mxu0
        %586 = vmatprep.mubr.f32.mxu0 0.0
        %587 = vmatmul.mubr.f32.gmra.mrb[0].mxu0 %v411
        %v588 = vpop.f32.mrb[0].mxu0
        %v589 = vadd.f32 0.0, %v588
        %v590 = vpop.f32.mrb[0].mxu0
        %591 = vmatprep.mubr.f32.mxu0 0.0
        %592 = vmatmul.mubr.f32.gmra.mrb[0].mxu0 %v414
        %v593 = vpop.f32.mrb[0].mxu0
        %v594 = vadd.f32 0.0, %v593
        %v595 = vpop.f32.mrb[0].mxu0
        %596 = vmatprep.mubr.f32.mxu0 0.0
        %597 = vmatmul.mubr.f32.gmra.mrb[0].mxu0 %v417
        %v598 = vpop.f32.mrb[0].mxu0
        %v599 = vadd.f32 0.0, %v598
        %v600 = vpop.f32.mrb[0].mxu0
        %601 = vmatprep.mubr.f32.mxu0 0.0
        %602 = vmatmul.mubr.f32.gmra.mrb[0].mxu0 %v420
        %v603 = vpop.f32.mrb[0].mxu0
        %v604 = vadd.f32 0.0, %v603
        %v605 = vpop.f32.mrb[0].mxu0
        %606 = vmatprep.mubr.f32.mxu0 0.0
        %607 = vmatmul.mubr.f32.gmra.mrb[0].mxu0 %v423
        %v608 = vpop.f32.mrb[0].mxu0
        %v609 = vadd.f32 0.0, %v608
        %v610 = vpop.f32.mrb[0].mxu0
        %611 = vmatprep.mubr.f32.mxu0 0.0
        %612 = vmatmul.mubr.f32.gmra.mrb[0].mxu0 %v426
        %v613 = vpop.f32.mrb[0].mxu0
        %v614 = vadd.f32 0.0, %v613
        %v615 = vpop.f32.mrb[0].mxu0
        %616 = vmatprep.mubr.f32.mxu0 0.0
        %617 = vmatmul.mubr.f32.gmra.mrb[0].mxu0 %v429
        %v618 = vpop.f32.mrb[0].mxu0
        %v619 = vadd.f32 0.0, %v618
        %v620 = vpop.f32.mrb[0].mxu0
        %621 = vmatprep.mubr.f32.mxu0 0.0
        %622 = vmatmul.mubr.f32.gmra.mrb[0].mxu0 %v432
        %v623 = vpop.f32.mrb[0].mxu0
        %v624 = vadd.f32 0.0, %v623
        %v625 = vpop.f32.mrb[0].mxu0
        %626 = vmatprep.mubr.f32.mxu0 0.0
        %627 = vmatmul.mubr.f32.gmra.mrb[0].mxu0 %v435
        %v628 = vpop.f32.mrb[0].mxu0
        %v629 = vadd.f32 0.0, %v628
        %v630 = vpop.f32.mrb[0].mxu0
        %631 = vmatprep.mubr.f32.mxu0 0.0
        %632 = vmatmul.mubr.f32.gmra.mrb[0].mxu0 %v438
        %v633 = vpop.f32.mrb[0].mxu0
        %v634 = vadd.f32 0.0, %v633
        %v635 = vpop.f32.mrb[0].mxu0
        %636 = vmatprep.mubr.f32.mxu0 0.0
        %637 = vmatmul.mubr.f32.gmra.mrb[0].mxu0 %v441
        %v638 = vpop.f32.mrb[0].mxu0
        %v639 = vadd.f32 0.0, %v638
        %v640 = vpop.f32.mrb[0].mxu0
        %641 = vmatprep.mubr.f32.mxu0 0.0
        %642 = vmatmul.mubr.f32.gmra.mrb[0].mxu0 %v444
        %v643 = vpop.f32.mrb[0].mxu0
        %v644 = vadd.f32 0.0, %v643
        %v645 = vpop.f32.mrb[0].mxu0
        %646 = vmatprep.mubr.f32.mxu0 0.0
        %647 = vmatmul.mubr.f32.gmra.mrb[0].mxu0 %v447
        %v648 = vpop.f32.mrb[0].mxu0
        %v649 = vadd.f32 0.0, %v648
        %v650 = vpop.f32.mrb[0].mxu0
        %651 = vmatprep.mubr.f32.mxu0 0.0
        %652 = vmatmul.mubr.f32.gmra.mrb[0].mxu0 %v450
        %v653 = vpop.f32.mrb[0].mxu0
        %v654 = vadd.f32 0.0, %v653
        %v655 = vpop.f32.mrb[0].mxu0
        %656 = vmatprep.mubr.f32.mxu0 0.0
        %657 = vmatmul.mubr.f32.gmra.mrb[0].mxu0 %v453
        %v658 = vpop.f32.mrb[0].mxu0
        %v659 = vadd.f32 0.0, %v658
        %v660 = vpop.f32.mrb[0].mxu0
        %661 = vmatprep.mubr.f32.mxu0 0.0
        %662 = vmatmul.mubr.f32.gmra.mrb[0].mxu0 %v456
        %v663 = vpop.f32.mrb[0].mxu0
        %v664 = vadd.f32 0.0, %v663
        %v665 = vpop.f32.mrb[0].mxu0
        %666 = vmatprep.mubr.f32.mxu0 0.0
        %667 = vmatmul.mubr.f32.gmra.mrb[0].mxu0 %v459
        %v668 = vpop.f32.mrb[0].mxu0
        %v669 = vadd.f32 0.0, %v668
        %v670 = vpop.f32.mrb[0].mxu0
        %671 = vmatprep.mubr.f32.mxu0 0.0
        %672 = vmatmul.mubr.f32.gmra.mrb[0].mxu0 %v462
        %v673 = vpop.f32.mrb[0].mxu0
        %v674 = vadd.f32 0.0, %v673
        %v675 = vpop.f32.mrb[0].mxu0
        %676 = vmatprep.mubr.f32.mxu0 0.0
        %677 = vmatmul.mubr.f32.gmra.mrb[0].mxu0 %v465
        %v678 = vpop.f32.mrb[0].mxu0
        %v679 = vadd.f32 0.0, %v678
        %v680 = vpop.f32.mrb[0].mxu0
        %681 = vmatprep.mubr.f32.mxu0 0.0
        %682 = vmatmul.mubr.f32.gmra.mrb[0].mxu0 %v468
        %v683 = vpop.f32.mrb[0].mxu0
        %v684 = vadd.f32 0.0, %v683
        %v685 = vpop.f32.mrb[0].mxu0
        %686 = vmatprep.mubr.f32.mxu0 0.0
        %687 = vmatmul.mubr.f32.gmra.mrb[0].mxu0 %v471
        %v688 = vpop.f32.mrb[0].mxu0
        %v689 = vadd.f32 0.0, %v688
        %v690 = vpop.f32.mrb[0].mxu0
        %691 = vmatprep.mubr.f32.mxu0 0.0
        %692 = vmatmul.mubr.f32.gmra.mrb[0].mxu0 %v474
        %v693 = vpop.f32.mrb[0].mxu0
        %v694 = vadd.f32 0.0, %v693
        %v695 = vpop.f32.mrb[0].mxu0
        %696 = vmatprep.mubr.f32.mxu0 0.0
        %697 = vmatmul.mubr.f32.gmra.mrb[0].mxu0 %v477
        %v698 = vpop.f32.mrb[0].mxu0
        %v699 = vadd.f32 0.0, %v698
        %v700 = vpop.f32.mrb[0].mxu0
        %701 = vmatprep.mubr.f32.mxu0 0.0
        %702 = vmatmul.mubr.f32.gmra.mrb[0].mxu0 %v480
        %v703 = vpop.f32.mrb[0].mxu0
        %v704 = vadd.f32 0.0, %v703
        %v705 = vpop.f32.mrb[0].mxu0
        %706 = vdwg.mxu0
        %v707 = vld [vmem:[%s4] sm:$0x1]
        %v709 = vlaneseq
        %v710 = vshrl.u32 %v709, 7
        %v711 = vsub.s32 0, %v710
        %v712 = vrot.slane %v707, %v711
        %v714 = vmul.f32 %v549, %v712
        %v715 = vmul.f32 %v554, %v712
        %v716 = vmul.f32 %v559, %v712
        %v717 = vmul.f32 %v564, %v712
        %v718 = vmul.f32 %v569, %v712
        %v719 = vmul.f32 %v574, %v712
        %v720 = vmul.f32 %v579, %v712
        %v721 = vmul.f32 %v584, %v712
        %v722 = vmul.f32 %v589, %v712
        %v723 = vmul.f32 %v594, %v712
        %v724 = vmul.f32 %v599, %v712
        %v725 = vmul.f32 %v604, %v712
        %v726 = vmul.f32 %v609, %v712
        %v727 = vmul.f32 %v614, %v712
        %v728 = vmul.f32 %v619, %v712
        %v729 = vmul.f32 %v624, %v712
        %v730 = vmul.f32 %v629, %v712
        %v731 = vmul.f32 %v634, %v712
        %v732 = vmul.f32 %v639, %v712
        %v733 = vmul.f32 %v644, %v712
        %v734 = vmul.f32 %v649, %v712
        %v735 = vmul.f32 %v654, %v712
        %v736 = vmul.f32 %v659, %v712
        %v737 = vmul.f32 %v664, %v712
        %v738 = vmul.f32 %v669, %v712
        %v739 = vmul.f32 %v674, %v712
        %v740 = vmul.f32 %v679, %v712
        %v741 = vmul.f32 %v684, %v712
        %v742 = vmul.f32 %v689, %v712
        %v743 = vmul.f32 %v694, %v712
        %v744 = vmul.f32 %v699, %v712
        %v745 = vmul.f32 %v704, %v712
        %v746 = vld [vmem:[%s5] sm:$0x1]
        %v748 = vlaneseq
        %v749 = vshrl.u32 %v748, 7
        %v750 = vsub.s32 0, %v749
        %v751 = vrot.slane %v746, %v750
        %v753 = vadd.f32 %v714, %v751
        %v754 = vadd.f32 %v715, %v751
        %v755 = vadd.f32 %v716, %v751
        %v756 = vadd.f32 %v717, %v751
        %v757 = vadd.f32 %v718, %v751
        %v758 = vadd.f32 %v719, %v751
        %v759 = vadd.f32 %v720, %v751
        %v760 = vadd.f32 %v721, %v751
        %v761 = vadd.f32 %v722, %v751
        %v762 = vadd.f32 %v723, %v751
        %v763 = vadd.f32 %v724, %v751
        %v764 = vadd.f32 %v725, %v751
        %v765 = vadd.f32 %v726, %v751
        %v766 = vadd.f32 %v727, %v751
        %v767 = vadd.f32 %v728, %v751
        %v768 = vadd.f32 %v729, %v751
        %v769 = vadd.f32 %v730, %v751
        %v770 = vadd.f32 %v731, %v751
        %v771 = vadd.f32 %v732, %v751
        %v772 = vadd.f32 %v733, %v751
        %v773 = vadd.f32 %v734, %v751
        %v774 = vadd.f32 %v735, %v751
        %v775 = vadd.f32 %v736, %v751
        %v776 = vadd.f32 %v737, %v751
        %v777 = vadd.f32 %v738, %v751
        %v778 = vadd.f32 %v739, %v751
        %v779 = vadd.f32 %v740, %v751
        %v780 = vadd.f32 %v741, %v751
        %v781 = vadd.f32 %v742, %v751
        %v782 = vadd.f32 %v743, %v751
        %v783 = vadd.f32 %v744, %v751
        %v784 = vadd.f32 %v745, %v751
        %v785 = vmax.f32 %v753, 0.0
        %v786 = vmax.f32 %v754, 0.0
        %v787 = vmax.f32 %v755, 0.0
        %v788 = vmax.f32 %v756, 0.0
        %v789 = vmax.f32 %v757, 0.0
        %v790 = vmax.f32 %v758, 0.0
        %v791 = vmax.f32 %v759, 0.0
        %v792 = vmax.f32 %v760, 0.0
        %v793 = vmax.f32 %v761, 0.0
        %v794 = vmax.f32 %v762, 0.0
        %v795 = vmax.f32 %v763, 0.0
        %v796 = vmax.f32 %v764, 0.0
        %v797 = vmax.f32 %v765, 0.0
        %v798 = vmax.f32 %v766, 0.0
        %v799 = vmax.f32 %v767, 0.0
        %v800 = vmax.f32 %v768, 0.0
        %v801 = vmax.f32 %v769, 0.0
        %v802 = vmax.f32 %v770, 0.0
        %v803 = vmax.f32 %v771, 0.0
        %v804 = vmax.f32 %v772, 0.0
        %v805 = vmax.f32 %v773, 0.0
        %v806 = vmax.f32 %v774, 0.0
        %v807 = vmax.f32 %v775, 0.0
        %v808 = vmax.f32 %v776, 0.0
        %v809 = vmax.f32 %v777, 0.0
        %v810 = vmax.f32 %v778, 0.0
        %v811 = vmax.f32 %v779, 0.0
        %v812 = vmax.f32 %v780, 0.0
        %v813 = vmax.f32 %v781, 0.0
        %v814 = vmax.f32 %v782, 0.0
        %v815 = vmax.f32 %v783, 0.0
        %v816 = vmax.f32 %v784, 0.0
        %v817 = vld [vmem:[%s2] sm:$0xff]
        %v818 = vld [vmem:[%s2 + $0x8] sm:$0xff]
        %v819 = vld [vmem:[%s2 + $0x10] sm:$0xff]
        %v820 = vld [vmem:[%s2 + $0x18] sm:$0xff]
        %v821 = vld [vmem:[%s2 + $0x20] sm:$0xff]
        %v822 = vld [vmem:[%s2 + $0x28] sm:$0xff]
        %v823 = vld [vmem:[%s2 + $0x30] sm:$0xff]
        %v824 = vld [vmem:[%s2 + $0x38] sm:$0xff]
        %v825 = vld [vmem:[%s2 + $0x40] sm:$0xff]
        %v826 = vld [vmem:[%s2 + $0x48] sm:$0xff]
        %v827 = vld [vmem:[%s2 + $0x50] sm:$0xff]
        %v828 = vld [vmem:[%s2 + $0x58] sm:$0xff]
        %v829 = vld [vmem:[%s2 + $0x60] sm:$0xff]
        %v830 = vld [vmem:[%s2 + $0x68] sm:$0xff]
        %v831 = vld [vmem:[%s2 + $0x70] sm:$0xff]
        %v832 = vld [vmem:[%s2 + $0x78] sm:$0xff]
        %v833 = vld [vmem:[%s2 + $0x80] sm:$0xff]
        %v834 = vld [vmem:[%s2 + $0x88] sm:$0xff]
        %v835 = vld [vmem:[%s2 + $0x90] sm:$0xff]
        %v836 = vld [vmem:[%s2 + $0x98] sm:$0xff]
        %v837 = vld [vmem:[%s2 + $0xa0] sm:$0xff]
        %v838 = vld [vmem:[%s2 + $0xa8] sm:$0xff]
        %v839 = vld [vmem:[%s2 + $0xb0] sm:$0xff]
        %v840 = vld [vmem:[%s2 + $0xb8] sm:$0xff]
        %v841 = vld [vmem:[%s2 + $0xc0] sm:$0xff]
        %v842 = vld [vmem:[%s2 + $0xc8] sm:$0xff]
        %v843 = vld [vmem:[%s2 + $0xd0] sm:$0xff]
        %v844 = vld [vmem:[%s2 + $0xd8] sm:$0xff]
        %v845 = vld [vmem:[%s2 + $0xe0] sm:$0xff]
        %v846 = vld [vmem:[%s2 + $0xe8] sm:$0xff]
        %v847 = vld [vmem:[%s2 + $0xf0] sm:$0xff]
        %v848 = vld [vmem:[%s2 + $0xf8] sm:$0xff]
        %v849 = vld [vmem:[%s350] sm:$0xff]
        %v850 = vld [vmem:[%s350 + $0x8] sm:$0xff]
        %v851 = vld [vmem:[%s350 + $0x10] sm:$0xff]
        %v852 = vld [vmem:[%s350 + $0x18] sm:$0xff]
        %v853 = vld [vmem:[%s350 + $0x20] sm:$0xff]
        %v854 = vld [vmem:[%s350 + $0x28] sm:$0xff]
        %v855 = vld [vmem:[%s350 + $0x30] sm:$0xff]
        %v856 = vld [vmem:[%s350 + $0x38] sm:$0xff]
        %vm857 = vcmask 523264
        %v859 = vsel %vm857, %v817, 0
        %v862 = vsel %vm857, %v818, 0
        %v865 = vsel %vm857, %v819, 0
        %v868 = vsel %vm857, %v820, 0
        %v871 = vsel %vm857, %v821, 0
        %v874 = vsel %vm857, %v822, 0
        %v877 = vsel %vm857, %v823, 0
        %v880 = vsel %vm857, %v824, 0
        %v883 = vsel %vm857, %v825, 0
        %v886 = vsel %vm857, %v826, 0
        %v889 = vsel %vm857, %v827, 0
        %v892 = vsel %vm857, %v828, 0
        %v895 = vsel %vm857, %v829, 0
        %v898 = vsel %vm857, %v830, 0
        %v901 = vsel %vm857, %v831, 0
        %v904 = vsel %vm857, %v832, 0
        %v907 = vsel %vm857, %v833, 0
        %v910 = vsel %vm857, %v834, 0
        %v913 = vsel %vm857, %v835, 0
        %v916 = vsel %vm857, %v836, 0
        %v919 = vsel %vm857, %v837, 0
        %v922 = vsel %vm857, %v838, 0
        %v925 = vsel %vm857, %v839, 0
        %v928 = vsel %vm857, %v840, 0
        %v931 = vsel %vm857, %v841, 0
        %v934 = vsel %vm857, %v842, 0
        %v937 = vsel %vm857, %v843, 0
        %v940 = vsel %vm857, %v844, 0
        %v943 = vsel %vm857, %v845, 0
        %v946 = vsel %vm857, %v846, 0
        %v949 = vsel %vm857, %v847, 0
        %v952 = vsel %vm857, %v848, 0
        %954 = vmatprep.subr.mxu0 0.0
        %955 = vmatpush1.msra.mxu0 %v849
        %956 = vmatprep.subr.mxu0 0.0
        %957 = vmatpush1.msra.mxu0 %v850
        %958 = vmatprep.subr.mxu0 0.0
        %959 = vmatpush1.msra.mxu0 %v851
        %960 = vmatprep.subr.mxu0 0.0
        %961 = vmatpush1.msra.mxu0 %v852
        %962 = vmatprep.subr.mxu0 0.0
        %963 = vmatpush1.msra.mxu0 %v853
        %964 = vmatprep.subr.mxu0 0.0
        %965 = vmatpush1.msra.mxu0 %v854
        %966 = vmatprep.subr.mxu0 0.0
        %967 = vmatpush1.msra.mxu0 %v855
        %968 = vmatprep.subr.mxu0 0.0
        %969 = vmatpush1.msra.mxu0 %v856
        %970 = vmatprep.subr.mxu0 0.0
        %971 = vmatpush1.msra.mxu0 0.0
        %972 = vmatprep.subr.mxu0 0.0
        %973 = vmatpush1.msra.mxu0 0.0
        %974 = vmatprep.subr.mxu0 0.0
        %975 = vmatpush1.msra.mxu0 0.0
        %976 = vmatprep.subr.mxu0 0.0
        %977 = vmatpush1.msra.mxu0 0.0
        %978 = vmatprep.subr.mxu0 0.0
        %979 = vmatpush1.msra.mxu0 0.0
        %980 = vmatprep.subr.mxu0 0.0
        %981 = vmatpush1.msra.mxu0 0.0
        %982 = vmatprep.subr.mxu0 0.0
        %983 = vmatpush1.msra.mxu0 0.0
        %984 = vmatprep.subr.mxu0 0.0
        %985 = vmatpush1.msra.mxu0 0.0
        %986 = vmatprep.subr.mxu0 0.0
        %987 = vmatpush1.msra.mxu0 0.0
        %988 = vmatprep.subr.mxu0 0.0
        %989 = vmatpush1.msra.mxu0 0.0
        %990 = vmatprep.subr.mxu0 0.0
        %991 = vmatpush1.msra.mxu0 0.0
        %992 = vmatprep.subr.mxu0 0.0
        %993 = vmatpush1.msra.mxu0 0.0
        %994 = vmatprep.subr.mxu0 0.0
        %995 = vmatpush1.msra.mxu0 0.0
        %996 = vmatprep.subr.mxu0 0.0
        %997 = vmatpush1.msra.mxu0 0.0
        %998 = vmatprep.subr.mxu0 0.0
        %999 = vmatpush1.msra.mxu0 0.0
        %1000 = vmatprep.subr.mxu0 0.0
        %1001 = vmatpush1.msra.mxu0 0.0
        %1002 = vmatprep.subr.mxu0 0.0
        %1003 = vmatpush1.msra.mxu0 0.0
        %1004 = vmatprep.subr.mxu0 0.0
        %1005 = vmatpush1.msra.mxu0 0.0
        %1006 = vmatprep.subr.mxu0 0.0
        %1007 = vmatpush1.msra.mxu0 0.0
        %1008 = vmatprep.subr.mxu0 0.0
        %1009 = vmatpush1.msra.mxu0 0.0
        %1010 = vmatprep.subr.mxu0 0.0
        %1011 = vmatpush1.msra.mxu0 0.0
        %1012 = vmatprep.subr.mxu0 0.0
        %1013 = vmatpush1.msra.mxu0 0.0
        %1014 = vmatprep.subr.mxu0 0.0
        %1015 = vmatpush1.msra.mxu0 0.0
        %1016 = vmatprep.subr.mxu0 0.0
        %1017 = vmatpush1.msra.mxu0 0.0
        %1018 = vmatprep.mubr.f32.mxu0 0.0
        %1019 = vmatmul.mubr.f32.gmra.mrb[0].mxu0 %v859
        %v1020 = vpop.f32.mrb[0].mxu0
        %v1021 = vadd.f32 %v785, %v1020
        %v1022 = vpop.f32.mrb[0].mxu0
        %1023 = vmatprep.mubr.f32.mxu0 0.0
        %1024 = vmatmul.mubr.f32.gmra.mrb[0].mxu0 %v862
        %v1025 = vpop.f32.mrb[0].mxu0
        %v1026 = vadd.f32 %v786, %v1025
        %v1027 = vpop.f32.mrb[0].mxu0
        %1028 = vmatprep.mubr.f32.mxu0 0.0
        %1029 = vmatmul.mubr.f32.gmra.mrb[0].mxu0 %v865
        %v1030 = vpop.f32.mrb[0].mxu0
        %v1031 = vadd.f32 %v787, %v1030
        %v1032 = vpop.f32.mrb[0].mxu0
        %1033 = vmatprep.mubr.f32.mxu0 0.0
        %1034 = vmatmul.mubr.f32.gmra.mrb[0].mxu0 %v868
        %v1035 = vpop.f32.mrb[0].mxu0
        %v1036 = vadd.f32 %v788, %v1035
        %v1037 = vpop.f32.mrb[0].mxu0
        %1038 = vmatprep.mubr.f32.mxu0 0.0
        %1039 = vmatmul.mubr.f32.gmra.mrb[0].mxu0 %v871
        %v1040 = vpop.f32.mrb[0].mxu0
        %v1041 = vadd.f32 %v789, %v1040
        %v1042 = vpop.f32.mrb[0].mxu0
        %1043 = vmatprep.mubr.f32.mxu0 0.0
        %1044 = vmatmul.mubr.f32.gmra.mrb[0].mxu0 %v874
        %v1045 = vpop.f32.mrb[0].mxu0
        %v1046 = vadd.f32 %v790, %v1045
        %v1047 = vpop.f32.mrb[0].mxu0
        %1048 = vmatprep.mubr.f32.mxu0 0.0
        %1049 = vmatmul.mubr.f32.gmra.mrb[0].mxu0 %v877
        %v1050 = vpop.f32.mrb[0].mxu0
        %v1051 = vadd.f32 %v791, %v1050
        %v1052 = vpop.f32.mrb[0].mxu0
        %1053 = vmatprep.mubr.f32.mxu0 0.0
        %1054 = vmatmul.mubr.f32.gmra.mrb[0].mxu0 %v880
        %v1055 = vpop.f32.mrb[0].mxu0
        %v1056 = vadd.f32 %v792, %v1055
        %v1057 = vpop.f32.mrb[0].mxu0
        %1058 = vmatprep.mubr.f32.mxu0 0.0
        %1059 = vmatmul.mubr.f32.gmra.mrb[0].mxu0 %v883
        %v1060 = vpop.f32.mrb[0].mxu0
        %v1061 = vadd.f32 %v793, %v1060
        %v1062 = vpop.f32.mrb[0].mxu0
        %1063 = vmatprep.mubr.f32.mxu0 0.0
        %1064 = vmatmul.mubr.f32.gmra.mrb[0].mxu0 %v886
        %v1065 = vpop.f32.mrb[0].mxu0
        %v1066 = vadd.f32 %v794, %v1065
        %v1067 = vpop.f32.mrb[0].mxu0
        %1068 = vmatprep.mubr.f32.mxu0 0.0
        %1069 = vmatmul.mubr.f32.gmra.mrb[0].mxu0 %v889
        %v1070 = vpop.f32.mrb[0].mxu0
        %v1071 = vadd.f32 %v795, %v1070
        %v1072 = vpop.f32.mrb[0].mxu0
        %1073 = vmatprep.mubr.f32.mxu0 0.0
        %1074 = vmatmul.mubr.f32.gmra.mrb[0].mxu0 %v892
        %v1075 = vpop.f32.mrb[0].mxu0
        %v1076 = vadd.f32 %v796, %v1075
        %v1077 = vpop.f32.mrb[0].mxu0
        %1078 = vmatprep.mubr.f32.mxu0 0.0
        %1079 = vmatmul.mubr.f32.gmra.mrb[0].mxu0 %v895
        %v1080 = vpop.f32.mrb[0].mxu0
        %v1081 = vadd.f32 %v797, %v1080
        %v1082 = vpop.f32.mrb[0].mxu0
        %1083 = vmatprep.mubr.f32.mxu0 0.0
        %1084 = vmatmul.mubr.f32.gmra.mrb[0].mxu0 %v898
        %v1085 = vpop.f32.mrb[0].mxu0
        %v1086 = vadd.f32 %v798, %v1085
        %v1087 = vpop.f32.mrb[0].mxu0
        %1088 = vmatprep.mubr.f32.mxu0 0.0
        %1089 = vmatmul.mubr.f32.gmra.mrb[0].mxu0 %v901
        %v1090 = vpop.f32.mrb[0].mxu0
        %v1091 = vadd.f32 %v799, %v1090
        %v1092 = vpop.f32.mrb[0].mxu0
        %1093 = vmatprep.mubr.f32.mxu0 0.0
        %1094 = vmatmul.mubr.f32.gmra.mrb[0].mxu0 %v904
        %v1095 = vpop.f32.mrb[0].mxu0
        %v1096 = vadd.f32 %v800, %v1095
        %v1097 = vpop.f32.mrb[0].mxu0
        %1098 = vmatprep.mubr.f32.mxu0 0.0
        %1099 = vmatmul.mubr.f32.gmra.mrb[0].mxu0 %v907
        %v1100 = vpop.f32.mrb[0].mxu0
        %v1101 = vadd.f32 %v801, %v1100
        %v1102 = vpop.f32.mrb[0].mxu0
        %1103 = vmatprep.mubr.f32.mxu0 0.0
        %1104 = vmatmul.mubr.f32.gmra.mrb[0].mxu0 %v910
        %v1105 = vpop.f32.mrb[0].mxu0
        %v1106 = vadd.f32 %v802, %v1105
        %v1107 = vpop.f32.mrb[0].mxu0
        %1108 = vmatprep.mubr.f32.mxu0 0.0
        %1109 = vmatmul.mubr.f32.gmra.mrb[0].mxu0 %v913
        %v1110 = vpop.f32.mrb[0].mxu0
        %v1111 = vadd.f32 %v803, %v1110
        %v1112 = vpop.f32.mrb[0].mxu0
        %1113 = vmatprep.mubr.f32.mxu0 0.0
        %1114 = vmatmul.mubr.f32.gmra.mrb[0].mxu0 %v916
        %v1115 = vpop.f32.mrb[0].mxu0
        %v1116 = vadd.f32 %v804, %v1115
        %v1117 = vpop.f32.mrb[0].mxu0
        %1118 = vmatprep.mubr.f32.mxu0 0.0
        %1119 = vmatmul.mubr.f32.gmra.mrb[0].mxu0 %v919
        %v1120 = vpop.f32.mrb[0].mxu0
        %v1121 = vadd.f32 %v805, %v1120
        %v1122 = vpop.f32.mrb[0].mxu0
        %1123 = vmatprep.mubr.f32.mxu0 0.0
        %1124 = vmatmul.mubr.f32.gmra.mrb[0].mxu0 %v922
        %v1125 = vpop.f32.mrb[0].mxu0
        %v1126 = vadd.f32 %v806, %v1125
        %v1127 = vpop.f32.mrb[0].mxu0
        %1128 = vmatprep.mubr.f32.mxu0 0.0
        %1129 = vmatmul.mubr.f32.gmra.mrb[0].mxu0 %v925
        %v1130 = vpop.f32.mrb[0].mxu0
        %v1131 = vadd.f32 %v807, %v1130
        %v1132 = vpop.f32.mrb[0].mxu0
        %1133 = vmatprep.mubr.f32.mxu0 0.0
        %1134 = vmatmul.mubr.f32.gmra.mrb[0].mxu0 %v928
        %v1135 = vpop.f32.mrb[0].mxu0
        %v1136 = vadd.f32 %v808, %v1135
        %v1137 = vpop.f32.mrb[0].mxu0
        %1138 = vmatprep.mubr.f32.mxu0 0.0
        %1139 = vmatmul.mubr.f32.gmra.mrb[0].mxu0 %v931
        %v1140 = vpop.f32.mrb[0].mxu0
        %v1141 = vadd.f32 %v809, %v1140
        %v1142 = vpop.f32.mrb[0].mxu0
        %1143 = vmatprep.mubr.f32.mxu0 0.0
        %1144 = vmatmul.mubr.f32.gmra.mrb[0].mxu0 %v934
        %v1145 = vpop.f32.mrb[0].mxu0
        %v1146 = vadd.f32 %v810, %v1145
        %v1147 = vpop.f32.mrb[0].mxu0
        %1148 = vmatprep.mubr.f32.mxu0 0.0
        %1149 = vmatmul.mubr.f32.gmra.mrb[0].mxu0 %v937
        %v1150 = vpop.f32.mrb[0].mxu0
        %v1151 = vadd.f32 %v811, %v1150
        %v1152 = vpop.f32.mrb[0].mxu0
        %1153 = vmatprep.mubr.f32.mxu0 0.0
        %1154 = vmatmul.mubr.f32.gmra.mrb[0].mxu0 %v940
        %v1155 = vpop.f32.mrb[0].mxu0
        %v1156 = vadd.f32 %v812, %v1155
        %v1157 = vpop.f32.mrb[0].mxu0
        %1158 = vmatprep.mubr.f32.mxu0 0.0
        %1159 = vmatmul.mubr.f32.gmra.mrb[0].mxu0 %v943
        %v1160 = vpop.f32.mrb[0].mxu0
        %v1161 = vadd.f32 %v813, %v1160
        %v1162 = vpop.f32.mrb[0].mxu0
        %1163 = vmatprep.mubr.f32.mxu0 0.0
        %1164 = vmatmul.mubr.f32.gmra.mrb[0].mxu0 %v946
        %v1165 = vpop.f32.mrb[0].mxu0
        %v1166 = vadd.f32 %v814, %v1165
        %v1167 = vpop.f32.mrb[0].mxu0
        %1168 = vmatprep.mubr.f32.mxu0 0.0
        %1169 = vmatmul.mubr.f32.gmra.mrb[0].mxu0 %v949
        %v1170 = vpop.f32.mrb[0].mxu0
        %v1171 = vadd.f32 %v815, %v1170
        %v1172 = vpop.f32.mrb[0].mxu0
        %1173 = vmatprep.mubr.f32.mxu0 0.0
        %1174 = vmatmul.mubr.f32.gmra.mrb[0].mxu0 %v952
        %v1175 = vpop.f32.mrb[0].mxu0
        %v1176 = vadd.f32 %v816, %v1175
        %v1177 = vpop.f32.mrb[0].mxu0
        %1178 = vdwg.mxu0
        %vm1179 = vcmask 261120
        %1180 = vst.msk [vmem:[#allocation2] sm:$0xff] %vm1179, 0.0
        %1181 = vst.msk [vmem:[#allocation2 + $0x8] sm:$0xff] %vm1179, 0.0
        %1182 = vst.msk [vmem:[#allocation2 + $0x10] sm:$0xff] %vm1179, 0.0
        %1183 = vst.msk [vmem:[#allocation2 + $0x18] sm:$0xff] %vm1179, 0.0
        %1184 = vst.msk [vmem:[#allocation2 + $0x20] sm:$0xff] %vm1179, 0.0
        %1185 = vst.msk [vmem:[#allocation2 + $0x28] sm:$0xff] %vm1179, 0.0
        %1186 = vst.msk [vmem:[#allocation2 + $0x30] sm:$0xff] %vm1179, 0.0
        %1187 = vst.msk [vmem:[#allocation2 + $0x38] sm:$0xff] %vm1179, 0.0
        %1188 = vst.msk [vmem:[#allocation2 + $0x40] sm:$0xff] %vm1179, 0.0
        %1189 = vst.msk [vmem:[#allocation2 + $0x48] sm:$0xff] %vm1179, 0.0
        %1190 = vst.msk [vmem:[#allocation2 + $0x50] sm:$0xff] %vm1179, 0.0
        %1191 = vst.msk [vmem:[#allocation2 + $0x58] sm:$0xff] %vm1179, 0.0
        %1192 = vst.msk [vmem:[#allocation2 + $0x60] sm:$0xff] %vm1179, 0.0
        %1193 = vst.msk [vmem:[#allocation2 + $0x68] sm:$0xff] %vm1179, 0.0
        %1194 = vst.msk [vmem:[#allocation2 + $0x70] sm:$0xff] %vm1179, 0.0
        %1195 = vst.msk [vmem:[#allocation2 + $0x78] sm:$0xff] %vm1179, 0.0
        %1196 = vst.msk [vmem:[#allocation2 + $0x80] sm:$0xff] %vm1179, 0.0
        %1197 = vst.msk [vmem:[#allocation2 + $0x88] sm:$0xff] %vm1179, 0.0
        %1198 = vst.msk [vmem:[#allocation2 + $0x90] sm:$0xff] %vm1179, 0.0
        %1199 = vst.msk [vmem:[#allocation2 + $0x98] sm:$0xff] %vm1179, 0.0
        %1200 = vst.msk [vmem:[#allocation2 + $0xa0] sm:$0xff] %vm1179, 0.0
        %1201 = vst.msk [vmem:[#allocation2 + $0xa8] sm:$0xff] %vm1179, 0.0
        %1202 = vst.msk [vmem:[#allocation2 + $0xb0] sm:$0xff] %vm1179, 0.0
        %1203 = vst.msk [vmem:[#allocation2 + $0xb8] sm:$0xff] %vm1179, 0.0
        %1204 = vst.msk [vmem:[#allocation2 + $0xc0] sm:$0xff] %vm1179, 0.0
        %1205 = vst.msk [vmem:[#allocation2 + $0xc8] sm:$0xff] %vm1179, 0.0
        %1206 = vst.msk [vmem:[#allocation2 + $0xd0] sm:$0xff] %vm1179, 0.0
        %1207 = vst.msk [vmem:[#allocation2 + $0xd8] sm:$0xff] %vm1179, 0.0
        %1208 = vst.msk [vmem:[#allocation2 + $0xe0] sm:$0xff] %vm1179, 0.0
        %1209 = vst.msk [vmem:[#allocation2 + $0xe8] sm:$0xff] %vm1179, 0.0
        %1210 = vst.msk [vmem:[#allocation2 + $0xf0] sm:$0xff] %vm1179, 0.0
        %1211 = vst.msk [vmem:[#allocation2 + $0xf8] sm:$0xff] %vm1179, 0.0
        %1212 = vst.msk [vmem:[#allocation2 + $0x100] sm:$0xff] %vm1179, 0.0
        %1213 = vst.msk [vmem:[#allocation2 + $0x108] sm:$0xff] %vm1179, 0.0
        %1214 = vst.msk [vmem:[#allocation2 + $0x110] sm:$0xff] %vm1179, 0.0
        %1215 = vst.msk [vmem:[#allocation2 + $0x118] sm:$0xff] %vm1179, 0.0
        %1216 = vst.msk [vmem:[#allocation2 + $0x120] sm:$0xff] %vm1179, 0.0
        %1217 = vst.msk [vmem:[#allocation2 + $0x128] sm:$0xff] %vm1179, 0.0
        %1218 = vst.msk [vmem:[#allocation2 + $0x130] sm:$0xff] %vm1179, 0.0
        %1219 = vst.msk [vmem:[#allocation2 + $0x138] sm:$0xff] %vm1179, 0.0
        %1220 = vst.msk [vmem:[#allocation2 + $0x140] sm:$0xff] %vm1179, 0.0
        %1221 = vst.msk [vmem:[#allocation2 + $0x148] sm:$0xff] %vm1179, 0.0
        %1222 = vst.msk [vmem:[#allocation2 + $0x150] sm:$0xff] %vm1179, 0.0
        %1223 = vst.msk [vmem:[#allocation2 + $0x158] sm:$0xff] %vm1179, 0.0
        %1224 = vst.msk [vmem:[#allocation2 + $0x160] sm:$0xff] %vm1179, 0.0
        %1225 = vst.msk [vmem:[#allocation2 + $0x168] sm:$0xff] %vm1179, 0.0
        %1226 = vst.msk [vmem:[#allocation2 + $0x170] sm:$0xff] %vm1179, 0.0
        %1227 = vst.msk [vmem:[#allocation2 + $0x178] sm:$0xff] %vm1179, 0.0
        %1228 = vst.msk [vmem:[#allocation2 + $0x180] sm:$0xff] %vm1179, 0.0
        %1229 = vst.msk [vmem:[#allocation2 + $0x188] sm:$0xff] %vm1179, 0.0
        %1230 = vst.msk [vmem:[#allocation2 + $0x190] sm:$0xff] %vm1179, 0.0
        %1231 = vst.msk [vmem:[#allocation2 + $0x198] sm:$0xff] %vm1179, 0.0
        %1232 = vst.msk [vmem:[#allocation2 + $0x1a0] sm:$0xff] %vm1179, 0.0
        %1233 = vst.msk [vmem:[#allocation2 + $0x1a8] sm:$0xff] %vm1179, 0.0
        %1234 = vst.msk [vmem:[#allocation2 + $0x1b0] sm:$0xff] %vm1179, 0.0
        %1235 = vst.msk [vmem:[#allocation2 + $0x1b8] sm:$0xff] %vm1179, 0.0
        %1236 = vst.msk [vmem:[#allocation2 + $0x1c0] sm:$0xff] %vm1179, 0.0
        %1237 = vst.msk [vmem:[#allocation2 + $0x1c8] sm:$0xff] %vm1179, 0.0
        %1238 = vst.msk [vmem:[#allocation2 + $0x1d0] sm:$0xff] %vm1179, 0.0
        %1239 = vst.msk [vmem:[#allocation2 + $0x1d8] sm:$0xff] %vm1179, 0.0
        %1240 = vst.msk [vmem:[#allocation2 + $0x1e0] sm:$0xff] %vm1179, 0.0
        %1241 = vst.msk [vmem:[#allocation2 + $0x1e8] sm:$0xff] %vm1179, 0.0
        %1242 = vst.msk [vmem:[#allocation2 + $0x1f0] sm:$0xff] %vm1179, 0.0
        %1243 = vst.msk [vmem:[#allocation2 + $0x1f8] sm:$0xff] %vm1179, 0.0
        %1244 = vst.msk [vmem:[#allocation2 + $0x200] sm:$0xff] %vm1179, 0.0
        %1245 = vst.msk [vmem:[#allocation2 + $0x208] sm:$0xff] %vm1179, 0.0
        %1246 = vst.msk [vmem:[#allocation2 + $0x210] sm:$0xff] %vm1179, 0.0
        %1247 = vst.msk [vmem:[#allocation2 + $0x218] sm:$0xff] %vm1179, 0.0
        %1248 = vst.msk [vmem:[#allocation2 + $0x220] sm:$0xff] %vm1179, 0.0
        %1249 = vst.msk [vmem:[#allocation2 + $0x228] sm:$0xff] %vm1179, 0.0
        %1250 = vst.msk [vmem:[#allocation2 + $0x230] sm:$0xff] %vm1179, 0.0
        %1251 = vst.msk [vmem:[#allocation2 + $0x238] sm:$0xff] %vm1179, 0.0
        %s1252 = scalar_lea.vmem [#allocation2], 32
        %1253 = vst.msk [vmem:[%s1252 + $0x8] sm:$0xff] %vm1179, %v1021
        %1254 = vst.msk [vmem:[%s1252 + $0x10] sm:$0xff] %vm1179, %v1026
        %1255 = vst.msk [vmem:[%s1252 + $0x28] sm:$0xff] %vm1179, %v1031
        %1256 = vst.msk [vmem:[%s1252 + $0x30] sm:$0xff] %vm1179, %v1036
        %1257 = vst.msk [vmem:[%s1252 + $0x48] sm:$0xff] %vm1179, %v1041
        %1258 = vst.msk [vmem:[%s1252 + $0x50] sm:$0xff] %vm1179, %v1046
        %1259 = vst.msk [vmem:[%s1252 + $0x68] sm:$0xff] %vm1179, %v1051
        %1260 = vst.msk [vmem:[%s1252 + $0x70] sm:$0xff] %vm1179, %v1056
        %1261 = vst.msk [vmem:[%s1252 + $0x88] sm:$0xff] %vm1179, %v1061
        %1262 = vst.msk [vmem:[%s1252 + $0x90] sm:$0xff] %vm1179, %v1066
        %1263 = vst.msk [vmem:[%s1252 + $0xa8] sm:$0xff] %vm1179, %v1071
        %1264 = vst.msk [vmem:[%s1252 + $0xb0] sm:$0xff] %vm1179, %v1076
        %1265 = vst.msk [vmem:[%s1252 + $0xc8] sm:$0xff] %vm1179, %v1081
        %1266 = vst.msk [vmem:[%s1252 + $0xd0] sm:$0xff] %vm1179, %v1086
        %1267 = vst.msk [vmem:[%s1252 + $0xe8] sm:$0xff] %vm1179, %v1091
        %1268 = vst.msk [vmem:[%s1252 + $0xf0] sm:$0xff] %vm1179, %v1096
        %1269 = vst.msk [vmem:[%s1252 + $0x108] sm:$0xff] %vm1179, %v1101
        %1270 = vst.msk [vmem:[%s1252 + $0x110] sm:$0xff] %vm1179, %v1106
        %1271 = vst.msk [vmem:[%s1252 + $0x128] sm:$0xff] %vm1179, %v1111
        %1272 = vst.msk [vmem:[%s1252 + $0x130] sm:$0xff] %vm1179, %v1116
        %1273 = vst.msk [vmem:[%s1252 + $0x148] sm:$0xff] %vm1179, %v1121
        %1274 = vst.msk [vmem:[%s1252 + $0x150] sm:$0xff] %vm1179, %v1126
        %1275 = vst.msk [vmem:[%s1252 + $0x168] sm:$0xff] %vm1179, %v1131
        %1276 = vst.msk [vmem:[%s1252 + $0x170] sm:$0xff] %vm1179, %v1136
        %1277 = vst.msk [vmem:[%s1252 + $0x188] sm:$0xff] %vm1179, %v1141
        %1278 = vst.msk [vmem:[%s1252 + $0x190] sm:$0xff] %vm1179, %v1146
        %1279 = vst.msk [vmem:[%s1252 + $0x1a8] sm:$0xff] %vm1179, %v1151
        %1280 = vst.msk [vmem:[%s1252 + $0x1b0] sm:$0xff] %vm1179, %v1156
        %1281 = vst.msk [vmem:[%s1252 + $0x1c8] sm:$0xff] %vm1179, %v1161
        %1282 = vst.msk [vmem:[%s1252 + $0x1d0] sm:$0xff] %vm1179, %v1166
        %1283 = vst.msk [vmem:[%s1252 + $0x1e8] sm:$0xff] %vm1179, %v1171
        %1284 = vst.msk [vmem:[%s1252 + $0x1f0] sm:$0xff] %vm1179, %v1176
        %v1285 = vld [vmem:[#allocation2] sm:$0xff]
        %v1286 = vld [vmem:[#allocation2 + $0x8] sm:$0xff]
        %v1287 = vld [vmem:[#allocation2 + $0x10] sm:$0xff]
        %v1288 = vld [vmem:[#allocation2 + $0x18] sm:$0xff]
        %v1289 = vld [vmem:[#allocation2 + $0x20] sm:$0xff]
        %v1290 = vld [vmem:[#allocation2 + $0x28] sm:$0xff]
        %v1291 = vld [vmem:[#allocation2 + $0x30] sm:$0xff]
        %v1292 = vld [vmem:[#allocation2 + $0x38] sm:$0xff]
        %v1293 = vld [vmem:[#allocation2 + $0x40] sm:$0xff]
        %v1294 = vld [vmem:[#allocation2 + $0x48] sm:$0xff]
        %v1295 = vld [vmem:[#allocation2 + $0x50] sm:$0xff]
        %v1296 = vld [vmem:[#allocation2 + $0x58] sm:$0xff]
        %v1297 = vld [vmem:[#allocation2 + $0x60] sm:$0xff]
        %v1298 = vld [vmem:[#allocation2 + $0x68] sm:$0xff]
        %v1299 = vld [vmem:[#allocation2 + $0x70] sm:$0xff]
        %v1300 = vld [vmem:[#allocation2 + $0x78] sm:$0xff]
        %v1301 = vld [vmem:[#allocation2 + $0x80] sm:$0xff]
        %v1302 = vld [vmem:[#allocation2 + $0x88] sm:$0xff]
        %v1303 = vld [vmem:[#allocation2 + $0x90] sm:$0xff]
        %v1304 = vld [vmem:[#allocation2 + $0x98] sm:$0xff]
        %v1305 = vld [vmem:[#allocation2 + $0xa0] sm:$0xff]
        %v1306 = vld [vmem:[#allocation2 + $0xa8] sm:$0xff]
        %v1307 = vld [vmem:[#allocation2 + $0xb0] sm:$0xff]
        %v1308 = vld [vmem:[#allocation2 + $0xb8] sm:$0xff]
        %v1309 = vld [vmem:[#allocation2 + $0xc0] sm:$0xff]
        %v1310 = vld [vmem:[#allocation2 + $0xc8] sm:$0xff]
        %v1311 = vld [vmem:[#allocation2 + $0xd0] sm:$0xff]
        %v1312 = vld [vmem:[#allocation2 + $0xd8] sm:$0xff]
        %v1313 = vld [vmem:[#allocation2 + $0xe0] sm:$0xff]
        %v1314 = vld [vmem:[#allocation2 + $0xe8] sm:$0xff]
        %v1315 = vld [vmem:[#allocation2 + $0xf0] sm:$0xff]
        %v1316 = vld [vmem:[#allocation2 + $0xf8] sm:$0xff]
        %v1317 = vld [vmem:[#allocation2 + $0x100] sm:$0xff]
        %v1318 = vld [vmem:[#allocation2 + $0x108] sm:$0xff]
        %v1319 = vld [vmem:[#allocation2 + $0x110] sm:$0xff]
        %v1320 = vld [vmem:[#allocation2 + $0x118] sm:$0xff]
        %v1321 = vld [vmem:[#allocation2 + $0x120] sm:$0xff]
        %v1322 = vld [vmem:[#allocation2 + $0x128] sm:$0xff]
        %v1323 = vld [vmem:[#allocation2 + $0x130] sm:$0xff]
        %v1324 = vld [vmem:[#allocation2 + $0x138] sm:$0xff]
        %v1325 = vld [vmem:[#allocation2 + $0x140] sm:$0xff]
        %v1326 = vld [vmem:[#allocation2 + $0x148] sm:$0xff]
        %v1327 = vld [vmem:[#allocation2 + $0x150] sm:$0xff]
        %v1328 = vld [vmem:[#allocation2 + $0x158] sm:$0xff]
        %v1329 = vld [vmem:[#allocation2 + $0x160] sm:$0xff]
        %v1330 = vld [vmem:[#allocation2 + $0x168] sm:$0xff]
        %v1331 = vld [vmem:[#allocation2 + $0x170] sm:$0xff]
        %v1332 = vld [vmem:[#allocation2 + $0x178] sm:$0xff]
        %v1333 = vld [vmem:[#allocation2 + $0x180] sm:$0xff]
        %v1334 = vld [vmem:[#allocation2 + $0x188] sm:$0xff]
        %v1335 = vld [vmem:[#allocation2 + $0x190] sm:$0xff]
        %v1336 = vld [vmem:[#allocation2 + $0x198] sm:$0xff]
        %v1337 = vld [vmem:[#allocation2 + $0x1a0] sm:$0xff]
        %v1338 = vld [vmem:[#allocation2 + $0x1a8] sm:$0xff]
        %v1339 = vld [vmem:[#allocation2 + $0x1b0] sm:$0xff]
        %v1340 = vld [vmem:[#allocation2 + $0x1b8] sm:$0xff]
        %v1341 = vld [vmem:[#allocation2 + $0x1c0] sm:$0xff]
        %v1342 = vld [vmem:[#allocation2 + $0x1c8] sm:$0xff]
        %v1343 = vld [vmem:[#allocation2 + $0x1d0] sm:$0xff]
        %v1344 = vld [vmem:[#allocation2 + $0x1d8] sm:$0xff]
        %v1345 = vld [vmem:[#allocation2 + $0x1e0] sm:$0xff]
        %v1346 = vld [vmem:[#allocation2 + $0x1e8] sm:$0xff]
        %v1347 = vld [vmem:[#allocation2 + $0x1f0] sm:$0xff]
        %v1348 = vld [vmem:[#allocation2 + $0x1f8] sm:$0xff]
        %v1349 = vld [vmem:[#allocation2 + $0x200] sm:$0xff]
        %v1350 = vld [vmem:[#allocation2 + $0x208] sm:$0xff]
        %v1351 = vld [vmem:[#allocation2 + $0x210] sm:$0xff]
        %v1352 = vld [vmem:[#allocation2 + $0x218] sm:$0xff]
        %v1353 = vld [vmem:[#allocation2 + $0x220] sm:$0xff]
        %v1354 = vld [vmem:[#allocation2 + $0x228] sm:$0xff]
        %v1355 = vld [vmem:[#allocation2 + $0x230] sm:$0xff]
        %v1356 = vld [vmem:[#allocation2 + $0x238] sm:$0xff]
        %vm1405 = vcmask 1040384
        %v1406 = vrot.slane %v1285, 7
        %v1407 = vrot.slane %v1286, 7
        %v1408 = vsel %vm1405, %v1406, %v1407
        %v1409 = vrot.slane %v1287, 7
        %v1410 = vsel %vm1405, %v1407, %v1409
        %v1411 = vrot.slane %v1289, 7
        %v1412 = vrot.slane %v1290, 7
        %v1413 = vsel %vm1405, %v1411, %v1412
        %v1414 = vrot.slane %v1291, 7
        %v1415 = vsel %vm1405, %v1412, %v1414
        %v1416 = vrot.slane %v1293, 7
        %v1417 = vrot.slane %v1294, 7
        %v1418 = vsel %vm1405, %v1416, %v1417
        %v1419 = vrot.slane %v1295, 7
        %v1420 = vsel %vm1405, %v1417, %v1419
        %v1421 = vrot.slane %v1297, 7
        %v1422 = vrot.slane %v1298, 7
        %v1423 = vsel %vm1405, %v1421, %v1422
        %v1424 = vrot.slane %v1299, 7
        %v1425 = vsel %vm1405, %v1422, %v1424
        %v1426 = vrot.slane %v1301, 7
        %v1427 = vrot.slane %v1302, 7
        %v1428 = vsel %vm1405, %v1426, %v1427
        %v1429 = vrot.slane %v1303, 7
        %v1430 = vsel %vm1405, %v1427, %v1429
        %v1431 = vrot.slane %v1305, 7
        %v1432 = vrot.slane %v1306, 7
        %v1433 = vsel %vm1405, %v1431, %v1432
        %v1434 = vrot.slane %v1307, 7
        %v1435 = vsel %vm1405, %v1432, %v1434
        %v1436 = vrot.slane %v1309, 7
        %v1437 = vrot.slane %v1310, 7
        %v1438 = vsel %vm1405, %v1436, %v1437
        %v1439 = vrot.slane %v1311, 7
        %v1440 = vsel %vm1405, %v1437, %v1439
        %v1441 = vrot.slane %v1313, 7
        %v1442 = vrot.slane %v1314, 7
        %v1443 = vsel %vm1405, %v1441, %v1442
        %v1444 = vrot.slane %v1315, 7
        %v1445 = vsel %vm1405, %v1442, %v1444
        %v1446 = vrot.slane %v1317, 7
        %v1447 = vrot.slane %v1318, 7
        %v1448 = vsel %vm1405, %v1446, %v1447
        %v1449 = vrot.slane %v1319, 7
        %v1450 = vsel %vm1405, %v1447, %v1449
        %v1451 = vrot.slane %v1321, 7
        %v1452 = vrot.slane %v1322, 7
        %v1453 = vsel %vm1405, %v1451, %v1452
        %v1454 = vrot.slane %v1323, 7
        %v1455 = vsel %vm1405, %v1452, %v1454
        %v1456 = vrot.slane %v1325, 7
        %v1457 = vrot.slane %v1326, 7
        %v1458 = vsel %vm1405, %v1456, %v1457
        %v1459 = vrot.slane %v1327, 7
        %v1460 = vsel %vm1405, %v1457, %v1459
        %v1461 = vrot.slane %v1329, 7
        %v1462 = vrot.slane %v1330, 7
        %v1463 = vsel %vm1405, %v1461, %v1462
        %v1464 = vrot.slane %v1331, 7
        %v1465 = vsel %vm1405, %v1462, %v1464
        %v1466 = vrot.slane %v1333, 7
        %v1467 = vrot.slane %v1334, 7
        %v1468 = vsel %vm1405, %v1466, %v1467
        %v1469 = vrot.slane %v1335, 7
        %v1470 = vsel %vm1405, %v1467, %v1469
        %v1471 = vrot.slane %v1337, 7
        %v1472 = vrot.slane %v1338, 7
        %v1473 = vsel %vm1405, %v1471, %v1472
        %v1474 = vrot.slane %v1339, 7
        %v1475 = vsel %vm1405, %v1472, %v1474
        %v1476 = vrot.slane %v1341, 7
        %v1477 = vrot.slane %v1342, 7
        %v1478 = vsel %vm1405, %v1476, %v1477
        %v1479 = vrot.slane %v1343, 7
        %v1480 = vsel %vm1405, %v1477, %v1479
        %v1481 = vrot.slane %v1345, 7
        %v1482 = vrot.slane %v1346, 7
        %v1483 = vsel %vm1405, %v1481, %v1482
        %v1484 = vrot.slane %v1347, 7
        %v1485 = vsel %vm1405, %v1482, %v1484
        %vm1502 = vcmask 1046528
        %v1503 = vrot.slane %v1286, 1
        %v1504 = vrot.slane %v1287, 1
        %v1505 = vsel %vm1502, %v1503, %v1504
        %v1506 = vrot.slane %v1288, 1
        %v1507 = vsel %vm1502, %v1504, %v1506
        %v1508 = vrot.slane %v1290, 1
        %v1509 = vrot.slane %v1291, 1
        %v1510 = vsel %vm1502, %v1508, %v1509
        %v1511 = vrot.slane %v1292, 1
        %v1512 = vsel %vm1502, %v1509, %v1511
        %v1513 = vrot.slane %v1294, 1
        %v1514 = vrot.slane %v1295, 1
        %v1515 = vsel %vm1502, %v1513, %v1514
        %v1516 = vrot.slane %v1296, 1
        %v1517 = vsel %vm1502, %v1514, %v1516
        %v1518 = vrot.slane %v1298, 1
        %v1519 = vrot.slane %v1299, 1
        %v1520 = vsel %vm1502, %v1518, %v1519
        %v1521 = vrot.slane %v1300, 1
        %v1522 = vsel %vm1502, %v1519, %v1521
        %v1523 = vrot.slane %v1302, 1
        %v1524 = vrot.slane %v1303, 1
        %v1525 = vsel %vm1502, %v1523, %v1524
        %v1526 = vrot.slane %v1304, 1
        %v1527 = vsel %vm1502, %v1524, %v1526
        %v1528 = vrot.slane %v1306, 1
        %v1529 = vrot.slane %v1307, 1
        %v1530 = vsel %vm1502, %v1528, %v1529
        %v1531 = vrot.slane %v1308, 1
        %v1532 = vsel %vm1502, %v1529, %v1531
        %v1533 = vrot.slane %v1310, 1
        %v1534 = vrot.slane %v1311, 1
        %v1535 = vsel %vm1502, %v1533, %v1534
        %v1536 = vrot.slane %v1312, 1
        %v1537 = vsel %vm1502, %v1534, %v1536
        %v1538 = vrot.slane %v1314, 1
        %v1539 = vrot.slane %v1315, 1
        %v1540 = vsel %vm1502, %v1538, %v1539
        %v1541 = vrot.slane %v1316, 1
        %v1542 = vsel %vm1502, %v1539, %v1541
        %v1543 = vrot.slane %v1318, 1
        %v1544 = vrot.slane %v1319, 1
        %v1545 = vsel %vm1502, %v1543, %v1544
        %v1546 = vrot.slane %v1320, 1
        %v1547 = vsel %vm1502, %v1544, %v1546
        %v1548 = vrot.slane %v1322, 1
        %v1549 = vrot.slane %v1323, 1
        %v1550 = vsel %vm1502, %v1548, %v1549
        %v1551 = vrot.slane %v1324, 1
        %v1552 = vsel %vm1502, %v1549, %v1551
        %v1553 = vrot.slane %v1326, 1
        %v1554 = vrot.slane %v1327, 1
        %v1555 = vsel %vm1502, %v1553, %v1554
        %v1556 = vrot.slane %v1328, 1
        %v1557 = vsel %vm1502, %v1554, %v1556
        %v1558 = vrot.slane %v1330, 1
        %v1559 = vrot.slane %v1331, 1
        %v1560 = vsel %vm1502, %v1558, %v1559
        %v1561 = vrot.slane %v1332, 1
        %v1562 = vsel %vm1502, %v1559, %v1561
        %v1563 = vrot.slane %v1334, 1
        %v1564 = vrot.slane %v1335, 1
        %v1565 = vsel %vm1502, %v1563, %v1564
        %v1566 = vrot.slane %v1336, 1
        %v1567 = vsel %vm1502, %v1564, %v1566
        %v1568 = vrot.slane %v1338, 1
        %v1569 = vrot.slane %v1339, 1
        %v1570 = vsel %vm1502, %v1568, %v1569
        %v1571 = vrot.slane %v1340, 1
        %v1572 = vsel %vm1502, %v1569, %v1571
        %v1573 = vrot.slane %v1342, 1
        %v1574 = vrot.slane %v1343, 1
        %v1575 = vsel %vm1502, %v1573, %v1574
        %v1576 = vrot.slane %v1344, 1
        %v1577 = vsel %vm1502, %v1574, %v1576
        %v1578 = vrot.slane %v1346, 1
        %v1579 = vrot.slane %v1347, 1
        %v1580 = vsel %vm1502, %v1578, %v1579
        %v1581 = vrot.slane %v1348, 1
        %v1582 = vsel %vm1502, %v1579, %v1581
        %v1586 = vrot.slane %v1349, 7
        %v1587 = vrot.slane %v1350, 7
        %v1588 = vsel %vm1405, %v1586, %v1587
        %v1589 = vrot.slane %v1351, 7
        %v1590 = vsel %vm1405, %v1587, %v1589
        %v1592 = vrot.slane %v1350, 1
        %v1593 = vrot.slane %v1351, 1
        %v1594 = vsel %vm1502, %v1592, %v1593
        %v1595 = vrot.slane %v1352, 1
        %v1596 = vsel %vm1502, %v1593, %v1595
        %v1600 = vrot.slane %v1353, 7
        %v1601 = vrot.slane %v1354, 7
        %v1602 = vsel %vm1405, %v1600, %v1601
        %v1603 = vrot.slane %v1355, 7
        %v1604 = vsel %vm1405, %v1601, %v1603
        %v1606 = vrot.slane %v1354, 1
        %v1607 = vrot.slane %v1355, 1
        %v1608 = vsel %vm1502, %v1606, %v1607
        %v1609 = vrot.slane %v1356, 1
        %v1610 = vsel %vm1502, %v1607, %v1609
        %v1611 = vld [vmem:[%s6] sm:$0xff]
        %v1612 = vld [vmem:[%s6 + $0x8] sm:$0xff]
        %v1613 = vld [vmem:[%s6 + $0x10] sm:$0xff]
        %v1614 = vld [vmem:[%s6 + $0x18] sm:$0xff]
        %v1615 = vld [vmem:[%s6 + $0x20] sm:$0xff]
        %v1616 = vld [vmem:[%s6 + $0x28] sm:$0xff]
        %v1617 = vld [vmem:[%s6 + $0x30] sm:$0xff]
        %v1618 = vld [vmem:[%s6 + $0x38] sm:$0xff]
        %v1619 = vsel %vm1179, %v1286, 0
        %v1621 = vsel %vm1179, %v1287, 0
        %v1623 = vsel %vm1179, %v1290, 0
        %v1625 = vsel %vm1179, %v1291, 0
        %v1627 = vsel %vm1179, %v1294, 0
        %v1629 = vsel %vm1179, %v1295, 0
        %v1631 = vsel %vm1179, %v1298, 0
        %v1633 = vsel %vm1179, %v1299, 0
        %v1635 = vsel %vm1179, %v1302, 0
        %v1637 = vsel %vm1179, %v1303, 0
        %v1639 = vsel %vm1179, %v1306, 0
        %v1641 = vsel %vm1179, %v1307, 0
        %v1643 = vsel %vm1179, %v1310, 0
        %v1645 = vsel %vm1179, %v1311, 0
        %v1647 = vsel %vm1179, %v1314, 0
        %v1649 = vsel %vm1179, %v1315, 0
        %v1651 = vsel %vm1179, %v1318, 0
        %v1653 = vsel %vm1179, %v1319, 0
        %v1655 = vsel %vm1179, %v1322, 0
        %v1657 = vsel %vm1179, %v1323, 0
        %v1659 = vsel %vm1179, %v1326, 0
        %v1661 = vsel %vm1179, %v1327, 0
        %v1663 = vsel %vm1179, %v1330, 0
        %v1665 = vsel %vm1179, %v1331, 0
        %v1667 = vsel %vm1179, %v1334, 0
        %v1669 = vsel %vm1179, %v1335, 0
        %v1671 = vsel %vm1179, %v1338, 0
        %v1673 = vsel %vm1179, %v1339, 0
        %v1675 = vsel %vm1179, %v1342, 0
        %v1677 = vsel %vm1179, %v1343, 0
        %v1679 = vsel %vm1179, %v1346, 0
        %v1681 = vsel %vm1179, %v1347, 0
        %1683 = vmatprep.subr.mxu0 0.0
        %1684 = vmatpush1.msra.mxu0 %v1615
        %1685 = vmatprep.subr.mxu0 0.0
        %1686 = vmatpush1.msra.mxu0 %v1616
        %1687 = vmatprep.subr.mxu0 0.0
        %1688 = vmatpush1.msra.mxu0 %v1617
        %1689 = vmatprep.subr.mxu0 0.0
        %1690 = vmatpush1.msra.mxu0 %v1618
        %1691 = vmatprep.subr.mxu0 0.0
        %1692 = vmatpush1.msra.mxu0 0.0
        %1693 = vmatprep.subr.mxu0 0.0
        %1694 = vmatpush1.msra.mxu0 0.0
        %1695 = vmatprep.subr.mxu0 0.0
        %1696 = vmatpush1.msra.mxu0 0.0
        %1697 = vmatprep.subr.mxu0 0.0
        %1698 = vmatpush1.msra.mxu0 0.0
        %1699 = vmatprep.subr.mxu0 0.0
        %1700 = vmatpush1.msra.mxu0 0.0
        %1701 = vmatprep.subr.mxu0 0.0
        %1702 = vmatpush1.msra.mxu0 0.0
        %1703 = vmatprep.subr.mxu0 0.0
        %1704 = vmatpush1.msra.mxu0 0.0
        %1705 = vmatprep.subr.mxu0 0.0
        %1706 = vmatpush1.msra.mxu0 0.0
        %1707 = vmatprep.subr.mxu0 0.0
        %1708 = vmatpush1.msra.mxu0 0.0
        %1709 = vmatprep.subr.mxu0 0.0
        %1710 = vmatpush1.msra.mxu0 0.0
        %1711 = vmatprep.subr.mxu0 0.0
        %1712 = vmatpush1.msra.mxu0 0.0
        %1713 = vmatprep.subr.mxu0 0.0
        %1714 = vmatpush1.msra.mxu0 0.0
        %1715 = vmatprep.subr.mxu0 0.0
        %1716 = vmatpush1.msra.mxu0 0.0
        %1717 = vmatprep.subr.mxu0 0.0
        %1718 = vmatpush1.msra.mxu0 0.0
        %1719 = vmatprep.subr.mxu0 0.0
        %1720 = vmatpush1.msra.mxu0 0.0
        %1721 = vmatprep.subr.mxu0 0.0
        %1722 = vmatpush1.msra.mxu0 0.0
        %1723 = vmatprep.subr.mxu0 0.0
        %1724 = vmatpush1.msra.mxu0 0.0
        %1725 = vmatprep.subr.mxu0 0.0
        %1726 = vmatpush1.msra.mxu0 0.0
        %1727 = vmatprep.subr.mxu0 0.0
        %1728 = vmatpush1.msra.mxu0 0.0
        %1729 = vmatprep.subr.mxu0 0.0
        %1730 = vmatpush1.msra.mxu0 0.0
        %1731 = vmatprep.subr.mxu0 0.0
        %1732 = vmatpush1.msra.mxu0 0.0
        %1733 = vmatprep.subr.mxu0 0.0
        %1734 = vmatpush1.msra.mxu0 0.0
        %1735 = vmatprep.subr.mxu0 0.0
        %1736 = vmatpush1.msra.mxu0 0.0
        %1737 = vmatprep.subr.mxu0 0.0
        %1738 = vmatpush1.msra.mxu0 0.0
        %1739 = vmatprep.subr.mxu0 0.0
        %1740 = vmatpush1.msra.mxu0 0.0
        %1741 = vmatprep.subr.mxu0 0.0
        %1742 = vmatpush1.msra.mxu0 0.0
        %1743 = vmatprep.subr.mxu0 0.0
        %1744 = vmatpush1.msra.mxu0 0.0
        %1745 = vmatprep.subr.mxu0 0.0
        %1746 = vmatpush1.msra.mxu0 0.0
        %1747 = vmatprep.mubr.f32.mxu0 0.0
        %1748 = vmatmul.mubr.f32.gmra.mrb[0].mxu0 %v1619
        %v1749 = vpop.f32.mrb[0].mxu0
        %v1750 = vadd.f32 0.0, %v1749
        %v1751 = vpop.f32.mrb[0].mxu0
        %1752 = vmatprep.mubr.f32.mxu0 0.0
        %1753 = vmatmul.mubr.f32.gmra.mrb[0].mxu0 %v1621
        %v1754 = vpop.f32.mrb[0].mxu0
        %v1755 = vadd.f32 0.0, %v1754
        %v1756 = vpop.f32.mrb[0].mxu0
        %1757 = vmatprep.mubr.f32.mxu0 0.0
        %1758 = vmatmul.mubr.f32.gmra.mrb[0].mxu0 %v1623
        %v1759 = vpop.f32.mrb[0].mxu0
        %v1760 = vadd.f32 0.0, %v1759
        %v1761 = vpop.f32.mrb[0].mxu0
        %1762 = vmatprep.mubr.f32.mxu0 0.0
        %1763 = vmatmul.mubr.f32.gmra.mrb[0].mxu0 %v1625
        %v1764 = vpop.f32.mrb[0].mxu0
        %v1765 = vadd.f32 0.0, %v1764
        %v1766 = vpop.f32.mrb[0].mxu0
        %1767 = vmatprep.mubr.f32.mxu0 0.0
        %1768 = vmatmul.mubr.f32.gmra.mrb[0].mxu0 %v1627
        %v1769 = vpop.f32.mrb[0].mxu0
        %v1770 = vadd.f32 0.0, %v1769
        %v1771 = vpop.f32.mrb[0].mxu0
        %1772 = vmatprep.mubr.f32.mxu0 0.0
        %1773 = vmatmul.mubr.f32.gmra.mrb[0].mxu0 %v1629
        %v1774 = vpop.f32.mrb[0].mxu0
        %v1775 = vadd.f32 0.0, %v1774
        %v1776 = vpop.f32.mrb[0].mxu0
        %1777 = vmatprep.mubr.f32.mxu0 0.0
        %1778 = vmatmul.mubr.f32.gmra.mrb[0].mxu0 %v1631
        %v1779 = vpop.f32.mrb[0].mxu0
        %v1780 = vadd.f32 0.0, %v1779
        %v1781 = vpop.f32.mrb[0].mxu0
        %1782 = vmatprep.mubr.f32.mxu0 0.0
        %1783 = vmatmul.mubr.f32.gmra.mrb[0].mxu0 %v1633
        %v1784 = vpop.f32.mrb[0].mxu0
        %v1785 = vadd.f32 0.0, %v1784
        %v1786 = vpop.f32.mrb[0].mxu0
        %1787 = vmatprep.mubr.f32.mxu0 0.0
        %1788 = vmatmul.mubr.f32.gmra.mrb[0].mxu0 %v1635
        %v1789 = vpop.f32.mrb[0].mxu0
        %v1790 = vadd.f32 0.0, %v1789
        %v1791 = vpop.f32.mrb[0].mxu0
        %1792 = vmatprep.mubr.f32.mxu0 0.0
        %1793 = vmatmul.mubr.f32.gmra.mrb[0].mxu0 %v1637
        %v1794 = vpop.f32.mrb[0].mxu0
        %v1795 = vadd.f32 0.0, %v1794
        %v1796 = vpop.f32.mrb[0].mxu0
        %1797 = vmatprep.mubr.f32.mxu0 0.0
        %1798 = vmatmul.mubr.f32.gmra.mrb[0].mxu0 %v1639
        %v1799 = vpop.f32.mrb[0].mxu0
        %v1800 = vadd.f32 0.0, %v1799
        %v1801 = vpop.f32.mrb[0].mxu0
        %1802 = vmatprep.mubr.f32.mxu0 0.0
        %1803 = vmatmul.mubr.f32.gmra.mrb[0].mxu0 %v1641
        %v1804 = vpop.f32.mrb[0].mxu0
        %v1805 = vadd.f32 0.0, %v1804
        %v1806 = vpop.f32.mrb[0].mxu0
        %1807 = vmatprep.mubr.f32.mxu0 0.0
        %1808 = vmatmul.mubr.f32.gmra.mrb[0].mxu0 %v1643
        %v1809 = vpop.f32.mrb[0].mxu0
        %v1810 = vadd.f32 0.0, %v1809
        %v1811 = vpop.f32.mrb[0].mxu0
        %1812 = vmatprep.mubr.f32.mxu0 0.0
        %1813 = vmatmul.mubr.f32.gmra.mrb[0].mxu0 %v1645
        %v1814 = vpop.f32.mrb[0].mxu0
        %v1815 = vadd.f32 0.0, %v1814
        %v1816 = vpop.f32.mrb[0].mxu0
        %1817 = vmatprep.mubr.f32.mxu0 0.0
        %1818 = vmatmul.mubr.f32.gmra.mrb[0].mxu0 %v1647
        %v1819 = vpop.f32.mrb[0].mxu0
        %v1820 = vadd.f32 0.0, %v1819
        %v1821 = vpop.f32.mrb[0].mxu0
        %1822 = vmatprep.mubr.f32.mxu0 0.0
        %1823 = vmatmul.mubr.f32.gmra.mrb[0].mxu0 %v1649
        %v1824 = vpop.f32.mrb[0].mxu0
        %v1825 = vadd.f32 0.0, %v1824
        %v1826 = vpop.f32.mrb[0].mxu0
        %1827 = vmatprep.mubr.f32.mxu0 0.0
        %1828 = vmatmul.mubr.f32.gmra.mrb[0].mxu0 %v1651
        %v1829 = vpop.f32.mrb[0].mxu0
        %v1830 = vadd.f32 0.0, %v1829
        %v1831 = vpop.f32.mrb[0].mxu0
        %1832 = vmatprep.mubr.f32.mxu0 0.0
        %1833 = vmatmul.mubr.f32.gmra.mrb[0].mxu0 %v1653
        %v1834 = vpop.f32.mrb[0].mxu0
        %v1835 = vadd.f32 0.0, %v1834
        %v1836 = vpop.f32.mrb[0].mxu0
        %1837 = vmatprep.mubr.f32.mxu0 0.0
        %1838 = vmatmul.mubr.f32.gmra.mrb[0].mxu0 %v1655
        %v1839 = vpop.f32.mrb[0].mxu0
        %v1840 = vadd.f32 0.0, %v1839
        %v1841 = vpop.f32.mrb[0].mxu0
        %1842 = vmatprep.mubr.f32.mxu0 0.0
        %1843 = vmatmul.mubr.f32.gmra.mrb[0].mxu0 %v1657
        %v1844 = vpop.f32.mrb[0].mxu0
        %v1845 = vadd.f32 0.0, %v1844
        %v1846 = vpop.f32.mrb[0].mxu0
        %1847 = vmatprep.mubr.f32.mxu0 0.0
        %1848 = vmatmul.mubr.f32.gmra.mrb[0].mxu0 %v1659
        %v1849 = vpop.f32.mrb[0].mxu0
        %v1850 = vadd.f32 0.0, %v1849
        %v1851 = vpop.f32.mrb[0].mxu0
        %1852 = vmatprep.mubr.f32.mxu0 0.0
        %1853 = vmatmul.mubr.f32.gmra.mrb[0].mxu0 %v1661
        %v1854 = vpop.f32.mrb[0].mxu0
        %v1855 = vadd.f32 0.0, %v1854
        %v1856 = vpop.f32.mrb[0].mxu0
        %1857 = vmatprep.mubr.f32.mxu0 0.0
        %1858 = vmatmul.mubr.f32.gmra.mrb[0].mxu0 %v1663
        %v1859 = vpop.f32.mrb[0].mxu0
        %v1860 = vadd.f32 0.0, %v1859
        %v1861 = vpop.f32.mrb[0].mxu0
        %1862 = vmatprep.mubr.f32.mxu0 0.0
        %1863 = vmatmul.mubr.f32.gmra.mrb[0].mxu0 %v1665
        %v1864 = vpop.f32.mrb[0].mxu0
        %v1865 = vadd.f32 0.0, %v1864
        %v1866 = vpop.f32.mrb[0].mxu0
        %1867 = vmatprep.mubr.f32.mxu0 0.0
        %1868 = vmatmul.mubr.f32.gmra.mrb[0].mxu0 %v1667
        %v1869 = vpop.f32.mrb[0].mxu0
        %v1870 = vadd.f32 0.0, %v1869
        %v1871 = vpop.f32.mrb[0].mxu0
        %1872 = vmatprep.mubr.f32.mxu0 0.0
        %1873 = vmatmul.mubr.f32.gmra.mrb[0].mxu0 %v1669
        %v1874 = vpop.f32.mrb[0].mxu0
        %v1875 = vadd.f32 0.0, %v1874
        %v1876 = vpop.f32.mrb[0].mxu0
        %1877 = vmatprep.mubr.f32.mxu0 0.0
        %1878 = vmatmul.mubr.f32.gmra.mrb[0].mxu0 %v1671
        %v1879 = vpop.f32.mrb[0].mxu0
        %v1880 = vadd.f32 0.0, %v1879
        %v1881 = vpop.f32.mrb[0].mxu0
        %1882 = vmatprep.mubr.f32.mxu0 0.0
        %1883 = vmatmul.mubr.f32.gmra.mrb[0].mxu0 %v1673
        %v1884 = vpop.f32.mrb[0].mxu0
        %v1885 = vadd.f32 0.0, %v1884
        %v1886 = vpop.f32.mrb[0].mxu0
        %1887 = vmatprep.mubr.f32.mxu0 0.0
        %1888 = vmatmul.mubr.f32.gmra.mrb[0].mxu0 %v1675
        %v1889 = vpop.f32.mrb[0].mxu0
        %v1890 = vadd.f32 0.0, %v1889
        %v1891 = vpop.f32.mrb[0].mxu0
        %1892 = vmatprep.mubr.f32.mxu0 0.0
        %1893 = vmatmul.mubr.f32.gmra.mrb[0].mxu0 %v1677
        %v1894 = vpop.f32.mrb[0].mxu0
        %v1895 = vadd.f32 0.0, %v1894
        %v1896 = vpop.f32.mrb[0].mxu0
        %1897 = vmatprep.mubr.f32.mxu0 0.0
        %1898 = vmatmul.mubr.f32.gmra.mrb[0].mxu0 %v1679
        %v1899 = vpop.f32.mrb[0].mxu0
        %v1900 = vadd.f32 0.0, %v1899
        %v1901 = vpop.f32.mrb[0].mxu0
        %1902 = vmatprep.mubr.f32.mxu0 0.0
        %1903 = vmatmul.mubr.f32.gmra.mrb[0].mxu0 %v1681
        %v1904 = vpop.f32.mrb[0].mxu0
        %v1905 = vadd.f32 0.0, %v1904
        %v1906 = vpop.f32.mrb[0].mxu0
        %1907 = vdwg.mxu0
        %v1908 = vsel %vm1179, %v1408, 0
        %v1910 = vsel %vm1179, %v1410, 0
        %v1912 = vsel %vm1179, %v1413, 0
        %v1914 = vsel %vm1179, %v1415, 0
        %v1916 = vsel %vm1179, %v1418, 0
        %v1918 = vsel %vm1179, %v1420, 0
        %v1920 = vsel %vm1179, %v1423, 0
        %v1922 = vsel %vm1179, %v1425, 0
        %v1924 = vsel %vm1179, %v1428, 0
        %v1926 = vsel %vm1179, %v1430, 0
        %v1928 = vsel %vm1179, %v1433, 0
        %v1930 = vsel %vm1179, %v1435, 0
        %v1932 = vsel %vm1179, %v1438, 0
        %v1934 = vsel %vm1179, %v1440, 0
        %v1936 = vsel %vm1179, %v1443, 0
        %v1938 = vsel %vm1179, %v1445, 0
        %v1940 = vsel %vm1179, %v1448, 0
        %v1942 = vsel %vm1179, %v1450, 0
        %v1944 = vsel %vm1179, %v1453, 0
        %v1946 = vsel %vm1179, %v1455, 0
        %v1948 = vsel %vm1179, %v1458, 0
        %v1950 = vsel %vm1179, %v1460, 0
        %v1952 = vsel %vm1179, %v1463, 0
        %v1954 = vsel %vm1179, %v1465, 0
        %v1956 = vsel %vm1179, %v1468, 0
        %v1958 = vsel %vm1179, %v1470, 0
        %v1960 = vsel %vm1179, %v1473, 0
        %v1962 = vsel %vm1179, %v1475, 0
        %v1964 = vsel %vm1179, %v1478, 0
        %v1966 = vsel %vm1179, %v1480, 0
        %v1968 = vsel %vm1179, %v1483, 0
        %v1970 = vsel %vm1179, %v1485, 0
        %1972 = vmatprep.subr.mxu0 0.0
        %1973 = vmatpush1.msra.mxu0 %v1611
        %1974 = vmatprep.subr.mxu0 0.0
        %1975 = vmatpush1.msra.mxu0 %v1612
        %1976 = vmatprep.subr.mxu0 0.0
        %1977 = vmatpush1.msra.mxu0 %v1613
        %1978 = vmatprep.subr.mxu0 0.0
        %1979 = vmatpush1.msra.mxu0 %v1614
        %1980 = vmatprep.subr.mxu0 0.0
        %1981 = vmatpush1.msra.mxu0 0.0
        %1982 = vmatprep.subr.mxu0 0.0
        %1983 = vmatpush1.msra.mxu0 0.0
        %1984 = vmatprep.subr.mxu0 0.0
        %1985 = vmatpush1.msra.mxu0 0.0
        %1986 = vmatprep.subr.mxu0 0.0
        %1987 = vmatpush1.msra.mxu0 0.0
        %1988 = vmatprep.subr.mxu0 0.0
        %1989 = vmatpush1.msra.mxu0 0.0
        %1990 = vmatprep.subr.mxu0 0.0
        %1991 = vmatpush1.msra.mxu0 0.0
        %1992 = vmatprep.subr.mxu0 0.0
        %1993 = vmatpush1.msra.mxu0 0.0
        %1994 = vmatprep.subr.mxu0 0.0
        %1995 = vmatpush1.msra.mxu0 0.0
        %1996 = vmatprep.subr.mxu0 0.0
        %1997 = vmatpush1.msra.mxu0 0.0
        %1998 = vmatprep.subr.mxu0 0.0
        %1999 = vmatpush1.msra.mxu0 0.0
        %2000 = vmatprep.subr.mxu0 0.0
        %2001 = vmatpush1.msra.mxu0 0.0
        %2002 = vmatprep.subr.mxu0 0.0
        %2003 = vmatpush1.msra.mxu0 0.0
        %2004 = vmatprep.subr.mxu0 0.0
        %2005 = vmatpush1.msra.mxu0 0.0
        %2006 = vmatprep.subr.mxu0 0.0
        %2007 = vmatpush1.msra.mxu0 0.0
        %2008 = vmatprep.subr.mxu0 0.0
        %2009 = vmatpush1.msra.mxu0 0.0
        %2010 = vmatprep.subr.mxu0 0.0
        %2011 = vmatpush1.msra.mxu0 0.0
        %2012 = vmatprep.subr.mxu0 0.0
        %2013 = vmatpush1.msra.mxu0 0.0
        %2014 = vmatprep.subr.mxu0 0.0
        %2015 = vmatpush1.msra.mxu0 0.0
        %2016 = vmatprep.subr.mxu0 0.0
        %2017 = vmatpush1.msra.mxu0 0.0
        %2018 = vmatprep.subr.mxu0 0.0
        %2019 = vmatpush1.msra.mxu0 0.0
        %2020 = vmatprep.subr.mxu0 0.0
        %2021 = vmatpush1.msra.mxu0 0.0
        %2022 = vmatprep.subr.mxu0 0.0
        %2023 = vmatpush1.msra.mxu0 0.0
        %2024 = vmatprep.subr.mxu0 0.0
        %2025 = vmatpush1.msra.mxu0 0.0
        %2026 = vmatprep.subr.mxu0 0.0
        %2027 = vmatpush1.msra.mxu0 0.0
        %2028 = vmatprep.subr.mxu0 0.0
        %2029 = vmatpush1.msra.mxu0 0.0
        %2030 = vmatprep.subr.mxu0 0.0
        %2031 = vmatpush1.msra.mxu0 0.0
        %2032 = vmatprep.subr.mxu0 0.0
        %2033 = vmatpush1.msra.mxu0 0.0
        %2034 = vmatprep.subr.mxu0 0.0
        %2035 = vmatpush1.msra.mxu0 0.0
        %2036 = vmatprep.mubr.f32.mxu0 0.0
        %2037 = vmatmul.mubr.f32.gmra.mrb[0].mxu0 %v1908
        %v2038 = vpop.f32.mrb[0].mxu0
        %v2039 = vadd.f32 %v1750, %v2038
        %v2040 = vpop.f32.mrb[0].mxu0
        %2041 = vmatprep.mubr.f32.mxu0 0.0
        %2042 = vmatmul.mubr.f32.gmra.mrb[0].mxu0 %v1910
        %v2043 = vpop.f32.mrb[0].mxu0
        %v2044 = vadd.f32 %v1755, %v2043
        %v2045 = vpop.f32.mrb[0].mxu0
        %2046 = vmatprep.mubr.f32.mxu0 0.0
        %2047 = vmatmul.mubr.f32.gmra.mrb[0].mxu0 %v1912
        %v2048 = vpop.f32.mrb[0].mxu0
        %v2049 = vadd.f32 %v1760, %v2048
        %v2050 = vpop.f32.mrb[0].mxu0
        %2051 = vmatprep.mubr.f32.mxu0 0.0
        %2052 = vmatmul.mubr.f32.gmra.mrb[0].mxu0 %v1914
        %v2053 = vpop.f32.mrb[0].mxu0
        %v2054 = vadd.f32 %v1765, %v2053
        %v2055 = vpop.f32.mrb[0].mxu0
        %2056 = vmatprep.mubr.f32.mxu0 0.0
        %2057 = vmatmul.mubr.f32.gmra.mrb[0].mxu0 %v1916
        %v2058 = vpop.f32.mrb[0].mxu0
        %v2059 = vadd.f32 %v1770, %v2058
        %v2060 = vpop.f32.mrb[0].mxu0
        %2061 = vmatprep.mubr.f32.mxu0 0.0
        %2062 = vmatmul.mubr.f32.gmra.mrb[0].mxu0 %v1918
        %v2063 = vpop.f32.mrb[0].mxu0
        %v2064 = vadd.f32 %v1775, %v2063
        %v2065 = vpop.f32.mrb[0].mxu0
        %2066 = vmatprep.mubr.f32.mxu0 0.0
        %2067 = vmatmul.mubr.f32.gmra.mrb[0].mxu0 %v1920
        %v2068 = vpop.f32.mrb[0].mxu0
        %v2069 = vadd.f32 %v1780, %v2068
        %v2070 = vpop.f32.mrb[0].mxu0
        %2071 = vmatprep.mubr.f32.mxu0 0.0
        %2072 = vmatmul.mubr.f32.gmra.mrb[0].mxu0 %v1922
        %v2073 = vpop.f32.mrb[0].mxu0
        %v2074 = vadd.f32 %v1785, %v2073
        %v2075 = vpop.f32.mrb[0].mxu0
        %2076 = vmatprep.mubr.f32.mxu0 0.0
        %2077 = vmatmul.mubr.f32.gmra.mrb[0].mxu0 %v1924
        %v2078 = vpop.f32.mrb[0].mxu0
        %v2079 = vadd.f32 %v1790, %v2078
        %v2080 = vpop.f32.mrb[0].mxu0
        %2081 = vmatprep.mubr.f32.mxu0 0.0
        %2082 = vmatmul.mubr.f32.gmra.mrb[0].mxu0 %v1926
        %v2083 = vpop.f32.mrb[0].mxu0
        %v2084 = vadd.f32 %v1795, %v2083
        %v2085 = vpop.f32.mrb[0].mxu0
        %2086 = vmatprep.mubr.f32.mxu0 0.0
        %2087 = vmatmul.mubr.f32.gmra.mrb[0].mxu0 %v1928
        %v2088 = vpop.f32.mrb[0].mxu0
        %v2089 = vadd.f32 %v1800, %v2088
        %v2090 = vpop.f32.mrb[0].mxu0
        %2091 = vmatprep.mubr.f32.mxu0 0.0
        %2092 = vmatmul.mubr.f32.gmra.mrb[0].mxu0 %v1930
        %v2093 = vpop.f32.mrb[0].mxu0
        %v2094 = vadd.f32 %v1805, %v2093
        %v2095 = vpop.f32.mrb[0].mxu0
        %2096 = vmatprep.mubr.f32.mxu0 0.0
        %2097 = vmatmul.mubr.f32.gmra.mrb[0].mxu0 %v1932
        %v2098 = vpop.f32.mrb[0].mxu0
        %v2099 = vadd.f32 %v1810, %v2098
        %v2100 = vpop.f32.mrb[0].mxu0
        %2101 = vmatprep.mubr.f32.mxu0 0.0
        %2102 = vmatmul.mubr.f32.gmra.mrb[0].mxu0 %v1934
        %v2103 = vpop.f32.mrb[0].mxu0
        %v2104 = vadd.f32 %v1815, %v2103
        %v2105 = vpop.f32.mrb[0].mxu0
        %2106 = vmatprep.mubr.f32.mxu0 0.0
        %2107 = vmatmul.mubr.f32.gmra.mrb[0].mxu0 %v1936
        %v2108 = vpop.f32.mrb[0].mxu0
        %v2109 = vadd.f32 %v1820, %v2108
        %v2110 = vpop.f32.mrb[0].mxu0
        %2111 = vmatprep.mubr.f32.mxu0 0.0
        %2112 = vmatmul.mubr.f32.gmra.mrb[0].mxu0 %v1938
        %v2113 = vpop.f32.mrb[0].mxu0
        %v2114 = vadd.f32 %v1825, %v2113
        %v2115 = vpop.f32.mrb[0].mxu0
        %2116 = vmatprep.mubr.f32.mxu0 0.0
        %2117 = vmatmul.mubr.f32.gmra.mrb[0].mxu0 %v1940
        %v2118 = vpop.f32.mrb[0].mxu0
        %v2119 = vadd.f32 %v1830, %v2118
        %v2120 = vpop.f32.mrb[0].mxu0
        %2121 = vmatprep.mubr.f32.mxu0 0.0
        %2122 = vmatmul.mubr.f32.gmra.mrb[0].mxu0 %v1942
        %v2123 = vpop.f32.mrb[0].mxu0
        %v2124 = vadd.f32 %v1835, %v2123
        %v2125 = vpop.f32.mrb[0].mxu0
        %2126 = vmatprep.mubr.f32.mxu0 0.0
        %2127 = vmatmul.mubr.f32.gmra.mrb[0].mxu0 %v1944
        %v2128 = vpop.f32.mrb[0].mxu0
        %v2129 = vadd.f32 %v1840, %v2128
        %v2130 = vpop.f32.mrb[0].mxu0
        %2131 = vmatprep.mubr.f32.mxu0 0.0
        %2132 = vmatmul.mubr.f32.gmra.mrb[0].mxu0 %v1946
        %v2133 = vpop.f32.mrb[0].mxu0
        %v2134 = vadd.f32 %v1845, %v2133
        %v2135 = vpop.f32.mrb[0].mxu0
        %2136 = vmatprep.mubr.f32.mxu0 0.0
        %2137 = vmatmul.mubr.f32.gmra.mrb[0].mxu0 %v1948
        %v2138 = vpop.f32.mrb[0].mxu0
        %v2139 = vadd.f32 %v1850, %v2138
        %v2140 = vpop.f32.mrb[0].mxu0
        %2141 = vmatprep.mubr.f32.mxu0 0.0
        %2142 = vmatmul.mubr.f32.gmra.mrb[0].mxu0 %v1950
        %v2143 = vpop.f32.mrb[0].mxu0
        %v2144 = vadd.f32 %v1855, %v2143
        %v2145 = vpop.f32.mrb[0].mxu0
        %2146 = vmatprep.mubr.f32.mxu0 0.0
        %2147 = vmatmul.mubr.f32.gmra.mrb[0].mxu0 %v1952
        %v2148 = vpop.f32.mrb[0].mxu0
        %v2149 = vadd.f32 %v1860, %v2148
        %v2150 = vpop.f32.mrb[0].mxu0
        %2151 = vmatprep.mubr.f32.mxu0 0.0
        %2152 = vmatmul.mubr.f32.gmra.mrb[0].mxu0 %v1954
        %v2153 = vpop.f32.mrb[0].mxu0
        %v2154 = vadd.f32 %v1865, %v2153
        %v2155 = vpop.f32.mrb[0].mxu0
        %2156 = vmatprep.mubr.f32.mxu0 0.0
        %2157 = vmatmul.mubr.f32.gmra.mrb[0].mxu0 %v1956
        %v2158 = vpop.f32.mrb[0].mxu0
        %v2159 = vadd.f32 %v1870, %v2158
        %v2160 = vpop.f32.mrb[0].mxu0
        %2161 = vmatprep.mubr.f32.mxu0 0.0
        %2162 = vmatmul.mubr.f32.gmra.mrb[0].mxu0 %v1958
        %v2163 = vpop.f32.mrb[0].mxu0
        %v2164 = vadd.f32 %v1875, %v2163
        %v2165 = vpop.f32.mrb[0].mxu0
        %2166 = vmatprep.mubr.f32.mxu0 0.0
        %2167 = vmatmul.mubr.f32.gmra.mrb[0].mxu0 %v1960
        %v2168 = vpop.f32.mrb[0].mxu0
        %v2169 = vadd.f32 %v1880, %v2168
        %v2170 = vpop.f32.mrb[0].mxu0
        %2171 = vmatprep.mubr.f32.mxu0 0.0
        %2172 = vmatmul.mubr.f32.gmra.mrb[0].mxu0 %v1962
        %v2173 = vpop.f32.mrb[0].mxu0
        %v2174 = vadd.f32 %v1885, %v2173
        %v2175 = vpop.f32.mrb[0].mxu0
        %2176 = vmatprep.mubr.f32.mxu0 0.0
        %2177 = vmatmul.mubr.f32.gmra.mrb[0].mxu0 %v1964
        %v2178 = vpop.f32.mrb[0].mxu0
        %v2179 = vadd.f32 %v1890, %v2178
        %v2180 = vpop.f32.mrb[0].mxu0
        %2181 = vmatprep.mubr.f32.mxu0 0.0
        %2182 = vmatmul.mubr.f32.gmra.mrb[0].mxu0 %v1966
        %v2183 = vpop.f32.mrb[0].mxu0
        %v2184 = vadd.f32 %v1895, %v2183
        %v2185 = vpop.f32.mrb[0].mxu0
        %2186 = vmatprep.mubr.f32.mxu0 0.0
        %2187 = vmatmul.mubr.f32.gmra.mrb[0].mxu0 %v1968
        %v2188 = vpop.f32.mrb[0].mxu0
        %v2189 = vadd.f32 %v1900, %v2188
        %v2190 = vpop.f32.mrb[0].mxu0
        %2191 = vmatprep.mubr.f32.mxu0 0.0
        %2192 = vmatmul.mubr.f32.gmra.mrb[0].mxu0 %v1970
        %v2193 = vpop.f32.mrb[0].mxu0
        %v2194 = vadd.f32 %v1905, %v2193
        %v2195 = vpop.f32.mrb[0].mxu0
        %2196 = vdwg.mxu0
        %v2197 = vld [vmem:[%s6 + $0x40] sm:$0xff]
        %v2198 = vld [vmem:[%s6 + $0x48] sm:$0xff]
        %v2199 = vld [vmem:[%s6 + $0x50] sm:$0xff]
        %v2200 = vld [vmem:[%s6 + $0x58] sm:$0xff]
        %v2201 = vsel %vm1179, %v1505, 0
        %v2203 = vsel %vm1179, %v1507, 0
        %v2205 = vsel %vm1179, %v1510, 0
        %v2207 = vsel %vm1179, %v1512, 0
        %v2209 = vsel %vm1179, %v1515, 0
        %v2211 = vsel %vm1179, %v1517, 0
        %v2213 = vsel %vm1179, %v1520, 0
        %v2215 = vsel %vm1179, %v1522, 0
        %v2217 = vsel %vm1179, %v1525, 0
        %v2219 = vsel %vm1179, %v1527, 0
        %v2221 = vsel %vm1179, %v1530, 0
        %v2223 = vsel %vm1179, %v1532, 0
        %v2225 = vsel %vm1179, %v1535, 0
        %v2227 = vsel %vm1179, %v1537, 0
        %v2229 = vsel %vm1179, %v1540, 0
        %v2231 = vsel %vm1179, %v1542, 0
        %v2233 = vsel %vm1179, %v1545, 0
        %v2235 = vsel %vm1179, %v1547, 0
        %v2237 = vsel %vm1179, %v1550, 0
        %v2239 = vsel %vm1179, %v1552, 0
        %v2241 = vsel %vm1179, %v1555, 0
        %v2243 = vsel %vm1179, %v1557, 0
        %v2245 = vsel %vm1179, %v1560, 0
        %v2247 = vsel %vm1179, %v1562, 0
        %v2249 = vsel %vm1179, %v1565, 0
        %v2251 = vsel %vm1179, %v1567, 0
        %v2253 = vsel %vm1179, %v1570, 0
        %v2255 = vsel %vm1179, %v1572, 0
        %v2257 = vsel %vm1179, %v1575, 0
        %v2259 = vsel %vm1179, %v1577, 0
        %v2261 = vsel %vm1179, %v1580, 0
        %v2263 = vsel %vm1179, %v1582, 0
        %2265 = vmatprep.subr.mxu0 0.0
        %2266 = vmatpush1.msra.mxu0 %v2197
        %2267 = vmatprep.subr.mxu0 0.0
        %2268 = vmatpush1.msra.mxu0 %v2198
        %2269 = vmatprep.subr.mxu0 0.0
        %2270 = vmatpush1.msra.mxu0 %v2199
        %2271 = vmatprep.subr.mxu0 0.0
        %2272 = vmatpush1.msra.mxu0 %v2200
        %2273 = vmatprep.subr.mxu0 0.0
        %2274 = vmatpush1.msra.mxu0 0.0
        %2275 = vmatprep.subr.mxu0 0.0
        %2276 = vmatpush1.msra.mxu0 0.0
        %2277 = vmatprep.subr.mxu0 0.0
        %2278 = vmatpush1.msra.mxu0 0.0
        %2279 = vmatprep.subr.mxu0 0.0
        %2280 = vmatpush1.msra.mxu0 0.0
        %2281 = vmatprep.subr.mxu0 0.0
        %2282 = vmatpush1.msra.mxu0 0.0
        %2283 = vmatprep.subr.mxu0 0.0
        %2284 = vmatpush1.msra.mxu0 0.0
        %2285 = vmatprep.subr.mxu0 0.0
        %2286 = vmatpush1.msra.mxu0 0.0
        %2287 = vmatprep.subr.mxu0 0.0
        %2288 = vmatpush1.msra.mxu0 0.0
        %2289 = vmatprep.subr.mxu0 0.0
        %2290 = vmatpush1.msra.mxu0 0.0
        %2291 = vmatprep.subr.mxu0 0.0
        %2292 = vmatpush1.msra.mxu0 0.0
        %2293 = vmatprep.subr.mxu0 0.0
        %2294 = vmatpush1.msra.mxu0 0.0
        %2295 = vmatprep.subr.mxu0 0.0
        %2296 = vmatpush1.msra.mxu0 0.0
        %2297 = vmatprep.subr.mxu0 0.0
        %2298 = vmatpush1.msra.mxu0 0.0
        %2299 = vmatprep.subr.mxu0 0.0
        %2300 = vmatpush1.msra.mxu0 0.0
        %2301 = vmatprep.subr.mxu0 0.0
        %2302 = vmatpush1.msra.mxu0 0.0
        %2303 = vmatprep.subr.mxu0 0.0
        %2304 = vmatpush1.msra.mxu0 0.0
        %2305 = vmatprep.subr.mxu0 0.0
        %2306 = vmatpush1.msra.mxu0 0.0
        %2307 = vmatprep.subr.mxu0 0.0
        %2308 = vmatpush1.msra.mxu0 0.0
        %2309 = vmatprep.subr.mxu0 0.0
        %2310 = vmatpush1.msra.mxu0 0.0
        %2311 = vmatprep.subr.mxu0 0.0
        %2312 = vmatpush1.msra.mxu0 0.0
        %2313 = vmatprep.subr.mxu0 0.0
        %2314 = vmatpush1.msra.mxu0 0.0
        %2315 = vmatprep.subr.mxu0 0.0
        %2316 = vmatpush1.msra.mxu0 0.0
        %2317 = vmatprep.subr.mxu0 0.0
        %2318 = vmatpush1.msra.mxu0 0.0
        %2319 = vmatprep.subr.mxu0 0.0
        %2320 = vmatpush1.msra.mxu0 0.0
        %2321 = vmatprep.subr.mxu0 0.0
        %2322 = vmatpush1.msra.mxu0 0.0
        %2323 = vmatprep.subr.mxu0 0.0
        %2324 = vmatpush1.msra.mxu0 0.0
        %2325 = vmatprep.subr.mxu0 0.0
        %2326 = vmatpush1.msra.mxu0 0.0
        %2327 = vmatprep.subr.mxu0 0.0
        %2328 = vmatpush1.msra.mxu0 0.0
        %2329 = vmatprep.mubr.f32.mxu0 0.0
        %2330 = vmatmul.mubr.f32.gmra.mrb[0].mxu0 %v2201
        %v2331 = vpop.f32.mrb[0].mxu0
        %v2332 = vadd.f32 0.0, %v2331
        %v2333 = vpop.f32.mrb[0].mxu0
        %2334 = vmatprep.mubr.f32.mxu0 0.0
        %2335 = vmatmul.mubr.f32.gmra.mrb[0].mxu0 %v2203
        %v2336 = vpop.f32.mrb[0].mxu0
        %v2337 = vadd.f32 0.0, %v2336
        %v2338 = vpop.f32.mrb[0].mxu0
        %2339 = vmatprep.mubr.f32.mxu0 0.0
        %2340 = vmatmul.mubr.f32.gmra.mrb[0].mxu0 %v2205
        %v2341 = vpop.f32.mrb[0].mxu0
        %v2342 = vadd.f32 0.0, %v2341
        %v2343 = vpop.f32.mrb[0].mxu0
        %2344 = vmatprep.mubr.f32.mxu0 0.0
        %2345 = vmatmul.mubr.f32.gmra.mrb[0].mxu0 %v2207
        %v2346 = vpop.f32.mrb[0].mxu0
        %v2347 = vadd.f32 0.0, %v2346
        %v2348 = vpop.f32.mrb[0].mxu0
        %2349 = vmatprep.mubr.f32.mxu0 0.0
        %2350 = vmatmul.mubr.f32.gmra.mrb[0].mxu0 %v2209
        %v2351 = vpop.f32.mrb[0].mxu0
        %v2352 = vadd.f32 0.0, %v2351
        %v2353 = vpop.f32.mrb[0].mxu0
        %2354 = vmatprep.mubr.f32.mxu0 0.0
        %2355 = vmatmul.mubr.f32.gmra.mrb[0].mxu0 %v2211
        %v2356 = vpop.f32.mrb[0].mxu0
        %v2357 = vadd.f32 0.0, %v2356
        %v2358 = vpop.f32.mrb[0].mxu0
        %2359 = vmatprep.mubr.f32.mxu0 0.0
        %2360 = vmatmul.mubr.f32.gmra.mrb[0].mxu0 %v2213
        %v2361 = vpop.f32.mrb[0].mxu0
        %v2362 = vadd.f32 0.0, %v2361
        %v2363 = vpop.f32.mrb[0].mxu0
        %2364 = vmatprep.mubr.f32.mxu0 0.0
        %2365 = vmatmul.mubr.f32.gmra.mrb[0].mxu0 %v2215
        %v2366 = vpop.f32.mrb[0].mxu0
        %v2367 = vadd.f32 0.0, %v2366
        %v2368 = vpop.f32.mrb[0].mxu0
        %2369 = vmatprep.mubr.f32.mxu0 0.0
        %2370 = vmatmul.mubr.f32.gmra.mrb[0].mxu0 %v2217
        %v2371 = vpop.f32.mrb[0].mxu0
        %v2372 = vadd.f32 0.0, %v2371
        %v2373 = vpop.f32.mrb[0].mxu0
        %2374 = vmatprep.mubr.f32.mxu0 0.0
        %2375 = vmatmul.mubr.f32.gmra.mrb[0].mxu0 %v2219
        %v2376 = vpop.f32.mrb[0].mxu0
        %v2377 = vadd.f32 0.0, %v2376
        %v2378 = vpop.f32.mrb[0].mxu0
        %2379 = vmatprep.mubr.f32.mxu0 0.0
        %2380 = vmatmul.mubr.f32.gmra.mrb[0].mxu0 %v2221
        %v2381 = vpop.f32.mrb[0].mxu0
        %v2382 = vadd.f32 0.0, %v2381
        %v2383 = vpop.f32.mrb[0].mxu0
        %2384 = vmatprep.mubr.f32.mxu0 0.0
        %2385 = vmatmul.mubr.f32.gmra.mrb[0].mxu0 %v2223
        %v2386 = vpop.f32.mrb[0].mxu0
        %v2387 = vadd.f32 0.0, %v2386
        %v2388 = vpop.f32.mrb[0].mxu0
        %2389 = vmatprep.mubr.f32.mxu0 0.0
        %2390 = vmatmul.mubr.f32.gmra.mrb[0].mxu0 %v2225
        %v2391 = vpop.f32.mrb[0].mxu0
        %v2392 = vadd.f32 0.0, %v2391
        %v2393 = vpop.f32.mrb[0].mxu0
        %2394 = vmatprep.mubr.f32.mxu0 0.0
        %2395 = vmatmul.mubr.f32.gmra.mrb[0].mxu0 %v2227
        %v2396 = vpop.f32.mrb[0].mxu0
        %v2397 = vadd.f32 0.0, %v2396
        %v2398 = vpop.f32.mrb[0].mxu0
        %2399 = vmatprep.mubr.f32.mxu0 0.0
        %2400 = vmatmul.mubr.f32.gmra.mrb[0].mxu0 %v2229
        %v2401 = vpop.f32.mrb[0].mxu0
        %v2402 = vadd.f32 0.0, %v2401
        %v2403 = vpop.f32.mrb[0].mxu0
        %2404 = vmatprep.mubr.f32.mxu0 0.0
        %2405 = vmatmul.mubr.f32.gmra.mrb[0].mxu0 %v2231
        %v2406 = vpop.f32.mrb[0].mxu0
        %v2407 = vadd.f32 0.0, %v2406
        %v2408 = vpop.f32.mrb[0].mxu0
        %2409 = vmatprep.mubr.f32.mxu0 0.0
        %2410 = vmatmul.mubr.f32.gmra.mrb[0].mxu0 %v2233
        %v2411 = vpop.f32.mrb[0].mxu0
        %v2412 = vadd.f32 0.0, %v2411
        %v2413 = vpop.f32.mrb[0].mxu0
        %2414 = vmatprep.mubr.f32.mxu0 0.0
        %2415 = vmatmul.mubr.f32.gmra.mrb[0].mxu0 %v2235
        %v2416 = vpop.f32.mrb[0].mxu0
        %v2417 = vadd.f32 0.0, %v2416
        %v2418 = vpop.f32.mrb[0].mxu0
        %2419 = vmatprep.mubr.f32.mxu0 0.0
        %2420 = vmatmul.mubr.f32.gmra.mrb[0].mxu0 %v2237
        %v2421 = vpop.f32.mrb[0].mxu0
        %v2422 = vadd.f32 0.0, %v2421
        %v2423 = vpop.f32.mrb[0].mxu0
        %2424 = vmatprep.mubr.f32.mxu0 0.0
        %2425 = vmatmul.mubr.f32.gmra.mrb[0].mxu0 %v2239
        %v2426 = vpop.f32.mrb[0].mxu0
        %v2427 = vadd.f32 0.0, %v2426
        %v2428 = vpop.f32.mrb[0].mxu0
        %2429 = vmatprep.mubr.f32.mxu0 0.0
        %2430 = vmatmul.mubr.f32.gmra.mrb[0].mxu0 %v2241
        %v2431 = vpop.f32.mrb[0].mxu0
        %v2432 = vadd.f32 0.0, %v2431
        %v2433 = vpop.f32.mrb[0].mxu0
        %2434 = vmatprep.mubr.f32.mxu0 0.0
        %2435 = vmatmul.mubr.f32.gmra.mrb[0].mxu0 %v2243
        %v2436 = vpop.f32.mrb[0].mxu0
        %v2437 = vadd.f32 0.0, %v2436
        %v2438 = vpop.f32.mrb[0].mxu0
        %2439 = vmatprep.mubr.f32.mxu0 0.0
        %2440 = vmatmul.mubr.f32.gmra.mrb[0].mxu0 %v2245
        %v2441 = vpop.f32.mrb[0].mxu0
        %v2442 = vadd.f32 0.0, %v2441
        %v2443 = vpop.f32.mrb[0].mxu0
        %2444 = vmatprep.mubr.f32.mxu0 0.0
        %2445 = vmatmul.mubr.f32.gmra.mrb[0].mxu0 %v2247
        %v2446 = vpop.f32.mrb[0].mxu0
        %v2447 = vadd.f32 0.0, %v2446
        %v2448 = vpop.f32.mrb[0].mxu0
        %2449 = vmatprep.mubr.f32.mxu0 0.0
        %2450 = vmatmul.mubr.f32.gmra.mrb[0].mxu0 %v2249
        %v2451 = vpop.f32.mrb[0].mxu0
        %v2452 = vadd.f32 0.0, %v2451
        %v2453 = vpop.f32.mrb[0].mxu0
        %2454 = vmatprep.mubr.f32.mxu0 0.0
        %2455 = vmatmul.mubr.f32.gmra.mrb[0].mxu0 %v2251
        %v2456 = vpop.f32.mrb[0].mxu0
        %v2457 = vadd.f32 0.0, %v2456
        %v2458 = vpop.f32.mrb[0].mxu0
        %2459 = vmatprep.mubr.f32.mxu0 0.0
        %2460 = vmatmul.mubr.f32.gmra.mrb[0].mxu0 %v2253
        %v2461 = vpop.f32.mrb[0].mxu0
        %v2462 = vadd.f32 0.0, %v2461
        %v2463 = vpop.f32.mrb[0].mxu0
        %2464 = vmatprep.mubr.f32.mxu0 0.0
        %2465 = vmatmul.mubr.f32.gmra.mrb[0].mxu0 %v2255
        %v2466 = vpop.f32.mrb[0].mxu0
        %v2467 = vadd.f32 0.0, %v2466
        %v2468 = vpop.f32.mrb[0].mxu0
        %2469 = vmatprep.mubr.f32.mxu0 0.0
        %2470 = vmatmul.mubr.f32.gmra.mrb[0].mxu0 %v2257
        %v2471 = vpop.f32.mrb[0].mxu0
        %v2472 = vadd.f32 0.0, %v2471
        %v2473 = vpop.f32.mrb[0].mxu0
        %2474 = vmatprep.mubr.f32.mxu0 0.0
        %2475 = vmatmul.mubr.f32.gmra.mrb[0].mxu0 %v2259
        %v2476 = vpop.f32.mrb[0].mxu0
        %v2477 = vadd.f32 0.0, %v2476
        %v2478 = vpop.f32.mrb[0].mxu0
        %2479 = vmatprep.mubr.f32.mxu0 0.0
        %2480 = vmatmul.mubr.f32.gmra.mrb[0].mxu0 %v2261
        %v2481 = vpop.f32.mrb[0].mxu0
        %v2482 = vadd.f32 0.0, %v2481
        %v2483 = vpop.f32.mrb[0].mxu0
        %2484 = vmatprep.mubr.f32.mxu0 0.0
        %2485 = vmatmul.mubr.f32.gmra.mrb[0].mxu0 %v2263
        %v2486 = vpop.f32.mrb[0].mxu0
        %v2487 = vadd.f32 0.0, %v2486
        %v2488 = vpop.f32.mrb[0].mxu0
        %2489 = vdwg.mxu0
        %v2490 = vadd.f32 %v2039, %v2332
        %v2491 = vadd.f32 %v2044, %v2337
        %v2492 = vadd.f32 %v2049, %v2342
        %v2493 = vadd.f32 %v2054, %v2347
        %v2494 = vadd.f32 %v2059, %v2352
        %v2495 = vadd.f32 %v2064, %v2357
        %v2496 = vadd.f32 %v2069, %v2362
        %v2497 = vadd.f32 %v2074, %v2367
        %v2498 = vadd.f32 %v2079, %v2372
        %v2499 = vadd.f32 %v2084, %v2377
        %v2500 = vadd.f32 %v2089, %v2382
        %v2501 = vadd.f32 %v2094, %v2387
        %v2502 = vadd.f32 %v2099, %v2392
        %v2503 = vadd.f32 %v2104, %v2397
        %v2504 = vadd.f32 %v2109, %v2402
        %v2505 = vadd.f32 %v2114, %v2407
        %v2506 = vadd.f32 %v2119, %v2412
        %v2507 = vadd.f32 %v2124, %v2417
        %v2508 = vadd.f32 %v2129, %v2422
        %v2509 = vadd.f32 %v2134, %v2427
        %v2510 = vadd.f32 %v2139, %v2432
        %v2511 = vadd.f32 %v2144, %v2437
        %v2512 = vadd.f32 %v2149, %v2442
        %v2513 = vadd.f32 %v2154, %v2447
        %v2514 = vadd.f32 %v2159, %v2452
        %v2515 = vadd.f32 %v2164, %v2457
        %v2516 = vadd.f32 %v2169, %v2462
        %v2517 = vadd.f32 %v2174, %v2467
        %v2518 = vadd.f32 %v2179, %v2472
        %v2519 = vadd.f32 %v2184, %v2477
        %v2520 = vadd.f32 %v2189, %v2482
        %v2521 = vadd.f32 %v2194, %v2487
        %v2522 = vld [vmem:[%s6 + $0x60] sm:$0xff]
        %v2523 = vld [vmem:[%s6 + $0x68] sm:$0xff]
        %v2524 = vld [vmem:[%s6 + $0x70] sm:$0xff]
        %v2525 = vld [vmem:[%s6 + $0x78] sm:$0xff]
        %v2526 = vsel %vm1179, %v1588, 0
        %v2528 = vsel %vm1179, %v1590, 0
        %2530 = vmatprep.subr.mxu0 0.0
        %2531 = vmatpush1.msra.mxu0 %v2522
        %2532 = vmatprep.subr.mxu0 0.0
        %2533 = vmatpush1.msra.mxu0 %v2523
        %2534 = vmatprep.subr.mxu0 0.0
        %2535 = vmatpush1.msra.mxu0 %v2524
        %2536 = vmatprep.subr.mxu0 0.0
        %2537 = vmatpush1.msra.mxu0 %v2525
        %2538 = vmatprep.subr.mxu0 0.0
        %2539 = vmatpush1.msra.mxu0 0.0
        %2540 = vmatprep.subr.mxu0 0.0
        %2541 = vmatpush1.msra.mxu0 0.0
        %2542 = vmatprep.subr.mxu0 0.0
        %2543 = vmatpush1.msra.mxu0 0.0
        %2544 = vmatprep.subr.mxu0 0.0
        %2545 = vmatpush1.msra.mxu0 0.0
        %2546 = vmatprep.subr.mxu0 0.0
        %2547 = vmatpush1.msra.mxu0 0.0
        %2548 = vmatprep.subr.mxu0 0.0
        %2549 = vmatpush1.msra.mxu0 0.0
        %2550 = vmatprep.subr.mxu0 0.0
        %2551 = vmatpush1.msra.mxu0 0.0
        %2552 = vmatprep.subr.mxu0 0.0
        %2553 = vmatpush1.msra.mxu0 0.0
        %2554 = vmatprep.subr.mxu0 0.0
        %2555 = vmatpush1.msra.mxu0 0.0
        %2556 = vmatprep.subr.mxu0 0.0
        %2557 = vmatpush1.msra.mxu0 0.0
        %2558 = vmatprep.subr.mxu0 0.0
        %2559 = vmatpush1.msra.mxu0 0.0
        %2560 = vmatprep.subr.mxu0 0.0
        %2561 = vmatpush1.msra.mxu0 0.0
        %2562 = vmatprep.subr.mxu0 0.0
        %2563 = vmatpush1.msra.mxu0 0.0
        %2564 = vmatprep.subr.mxu0 0.0
        %2565 = vmatpush1.msra.mxu0 0.0
        %2566 = vmatprep.subr.mxu0 0.0
        %2567 = vmatpush1.msra.mxu0 0.0
        %2568 = vmatprep.subr.mxu0 0.0
        %2569 = vmatpush1.msra.mxu0 0.0
        %2570 = vmatprep.subr.mxu0 0.0
        %2571 = vmatpush1.msra.mxu0 0.0
        %2572 = vmatprep.subr.mxu0 0.0
        %2573 = vmatpush1.msra.mxu0 0.0
        %2574 = vmatprep.subr.mxu0 0.0
        %2575 = vmatpush1.msra.mxu0 0.0
        %2576 = vmatprep.subr.mxu0 0.0
        %2577 = vmatpush1.msra.mxu0 0.0
        %2578 = vmatprep.subr.mxu0 0.0
        %2579 = vmatpush1.msra.mxu0 0.0
        %2580 = vmatprep.subr.mxu0 0.0
        %2581 = vmatpush1.msra.mxu0 0.0
        %2582 = vmatprep.subr.mxu0 0.0
        %2583 = vmatpush1.msra.mxu0 0.0
        %2584 = vmatprep.subr.mxu0 0.0
        %2585 = vmatpush1.msra.mxu0 0.0
        %2586 = vmatprep.subr.mxu0 0.0
        %2587 = vmatpush1.msra.mxu0 0.0
        %2588 = vmatprep.subr.mxu0 0.0
        %2589 = vmatpush1.msra.mxu0 0.0
        %2590 = vmatprep.subr.mxu0 0.0
        %2591 = vmatpush1.msra.mxu0 0.0
        %2592 = vmatprep.subr.mxu0 0.0
        %2593 = vmatpush1.msra.mxu0 0.0
        %2594 = vmatprep.mubr.f32.mxu0 0.0
        %2595 = vmatmul.mubr.f32.gmra.mrb[0].mxu0 %v1912
        %v2596 = vpop.f32.mrb[0].mxu0
        %v2597 = vadd.f32 0.0, %v2596
        %v2598 = vpop.f32.mrb[0].mxu0
        %2599 = vmatprep.mubr.f32.mxu0 0.0
        %2600 = vmatmul.mubr.f32.gmra.mrb[0].mxu0 %v1914
        %v2601 = vpop.f32.mrb[0].mxu0
        %v2602 = vadd.f32 0.0, %v2601
        %v2603 = vpop.f32.mrb[0].mxu0
        %2604 = vmatprep.mubr.f32.mxu0 0.0
        %2605 = vmatmul.mubr.f32.gmra.mrb[0].mxu0 %v1916
        %v2606 = vpop.f32.mrb[0].mxu0
        %v2607 = vadd.f32 0.0, %v2606
        %v2608 = vpop.f32.mrb[0].mxu0
        %2609 = vmatprep.mubr.f32.mxu0 0.0
        %2610 = vmatmul.mubr.f32.gmra.mrb[0].mxu0 %v1918
        %v2611 = vpop.f32.mrb[0].mxu0
        %v2612 = vadd.f32 0.0, %v2611
        %v2613 = vpop.f32.mrb[0].mxu0
        %2614 = vmatprep.mubr.f32.mxu0 0.0
        %2615 = vmatmul.mubr.f32.gmra.mrb[0].mxu0 %v1920
        %v2616 = vpop.f32.mrb[0].mxu0
        %v2617 = vadd.f32 0.0, %v2616
        %v2618 = vpop.f32.mrb[0].mxu0
        %2619 = vmatprep.mubr.f32.mxu0 0.0
        %2620 = vmatmul.mubr.f32.gmra.mrb[0].mxu0 %v1922
        %v2621 = vpop.f32.mrb[0].mxu0
        %v2622 = vadd.f32 0.0, %v2621
        %v2623 = vpop.f32.mrb[0].mxu0
        %2624 = vmatprep.mubr.f32.mxu0 0.0
        %2625 = vmatmul.mubr.f32.gmra.mrb[0].mxu0 %v1924
        %v2626 = vpop.f32.mrb[0].mxu0
        %v2627 = vadd.f32 0.0, %v2626
        %v2628 = vpop.f32.mrb[0].mxu0
        %2629 = vmatprep.mubr.f32.mxu0 0.0
        %2630 = vmatmul.mubr.f32.gmra.mrb[0].mxu0 %v1926
        %v2631 = vpop.f32.mrb[0].mxu0
        %v2632 = vadd.f32 0.0, %v2631
        %v2633 = vpop.f32.mrb[0].mxu0
        %2634 = vmatprep.mubr.f32.mxu0 0.0
        %2635 = vmatmul.mubr.f32.gmra.mrb[0].mxu0 %v1928
        %v2636 = vpop.f32.mrb[0].mxu0
        %v2637 = vadd.f32 0.0, %v2636
        %v2638 = vpop.f32.mrb[0].mxu0
        %2639 = vmatprep.mubr.f32.mxu0 0.0
        %2640 = vmatmul.mubr.f32.gmra.mrb[0].mxu0 %v1930
        %v2641 = vpop.f32.mrb[0].mxu0
        %v2642 = vadd.f32 0.0, %v2641
        %v2643 = vpop.f32.mrb[0].mxu0
        %2644 = vmatprep.mubr.f32.mxu0 0.0
        %2645 = vmatmul.mubr.f32.gmra.mrb[0].mxu0 %v1932
        %v2646 = vpop.f32.mrb[0].mxu0
        %v2647 = vadd.f32 0.0, %v2646
        %v2648 = vpop.f32.mrb[0].mxu0
        %2649 = vmatprep.mubr.f32.mxu0 0.0
        %2650 = vmatmul.mubr.f32.gmra.mrb[0].mxu0 %v1934
        %v2651 = vpop.f32.mrb[0].mxu0
        %v2652 = vadd.f32 0.0, %v2651
        %v2653 = vpop.f32.mrb[0].mxu0
        %2654 = vmatprep.mubr.f32.mxu0 0.0
        %2655 = vmatmul.mubr.f32.gmra.mrb[0].mxu0 %v1936
        %v2656 = vpop.f32.mrb[0].mxu0
        %v2657 = vadd.f32 0.0, %v2656
        %v2658 = vpop.f32.mrb[0].mxu0
        %2659 = vmatprep.mubr.f32.mxu0 0.0
        %2660 = vmatmul.mubr.f32.gmra.mrb[0].mxu0 %v1938
        %v2661 = vpop.f32.mrb[0].mxu0
        %v2662 = vadd.f32 0.0, %v2661
        %v2663 = vpop.f32.mrb[0].mxu0
        %2664 = vmatprep.mubr.f32.mxu0 0.0
        %2665 = vmatmul.mubr.f32.gmra.mrb[0].mxu0 %v1940
        %v2666 = vpop.f32.mrb[0].mxu0
        %v2667 = vadd.f32 0.0, %v2666
        %v2668 = vpop.f32.mrb[0].mxu0
        %2669 = vmatprep.mubr.f32.mxu0 0.0
        %2670 = vmatmul.mubr.f32.gmra.mrb[0].mxu0 %v1942
        %v2671 = vpop.f32.mrb[0].mxu0
        %v2672 = vadd.f32 0.0, %v2671
        %v2673 = vpop.f32.mrb[0].mxu0
        %2674 = vmatprep.mubr.f32.mxu0 0.0
        %2675 = vmatmul.mubr.f32.gmra.mrb[0].mxu0 %v1944
        %v2676 = vpop.f32.mrb[0].mxu0
        %v2677 = vadd.f32 0.0, %v2676
        %v2678 = vpop.f32.mrb[0].mxu0
        %2679 = vmatprep.mubr.f32.mxu0 0.0
        %2680 = vmatmul.mubr.f32.gmra.mrb[0].mxu0 %v1946
        %v2681 = vpop.f32.mrb[0].mxu0
        %v2682 = vadd.f32 0.0, %v2681
        %v2683 = vpop.f32.mrb[0].mxu0
        %2684 = vmatprep.mubr.f32.mxu0 0.0
        %2685 = vmatmul.mubr.f32.gmra.mrb[0].mxu0 %v1948
        %v2686 = vpop.f32.mrb[0].mxu0
        %v2687 = vadd.f32 0.0, %v2686
        %v2688 = vpop.f32.mrb[0].mxu0
        %2689 = vmatprep.mubr.f32.mxu0 0.0
        %2690 = vmatmul.mubr.f32.gmra.mrb[0].mxu0 %v1950
        %v2691 = vpop.f32.mrb[0].mxu0
        %v2692 = vadd.f32 0.0, %v2691
        %v2693 = vpop.f32.mrb[0].mxu0
        %2694 = vmatprep.mubr.f32.mxu0 0.0
        %2695 = vmatmul.mubr.f32.gmra.mrb[0].mxu0 %v1952
        %v2696 = vpop.f32.mrb[0].mxu0
        %v2697 = vadd.f32 0.0, %v2696
        %v2698 = vpop.f32.mrb[0].mxu0
        %2699 = vmatprep.mubr.f32.mxu0 0.0
        %2700 = vmatmul.mubr.f32.gmra.mrb[0].mxu0 %v1954
        %v2701 = vpop.f32.mrb[0].mxu0
        %v2702 = vadd.f32 0.0, %v2701
        %v2703 = vpop.f32.mrb[0].mxu0
        %2704 = vmatprep.mubr.f32.mxu0 0.0
        %2705 = vmatmul.mubr.f32.gmra.mrb[0].mxu0 %v1956
        %v2706 = vpop.f32.mrb[0].mxu0
        %v2707 = vadd.f32 0.0, %v2706
        %v2708 = vpop.f32.mrb[0].mxu0
        %2709 = vmatprep.mubr.f32.mxu0 0.0
        %2710 = vmatmul.mubr.f32.gmra.mrb[0].mxu0 %v1958
        %v2711 = vpop.f32.mrb[0].mxu0
        %v2712 = vadd.f32 0.0, %v2711
        %v2713 = vpop.f32.mrb[0].mxu0
        %2714 = vmatprep.mubr.f32.mxu0 0.0
        %2715 = vmatmul.mubr.f32.gmra.mrb[0].mxu0 %v1960
        %v2716 = vpop.f32.mrb[0].mxu0
        %v2717 = vadd.f32 0.0, %v2716
        %v2718 = vpop.f32.mrb[0].mxu0
        %2719 = vmatprep.mubr.f32.mxu0 0.0
        %2720 = vmatmul.mubr.f32.gmra.mrb[0].mxu0 %v1962
        %v2721 = vpop.f32.mrb[0].mxu0
        %v2722 = vadd.f32 0.0, %v2721
        %v2723 = vpop.f32.mrb[0].mxu0
        %2724 = vmatprep.mubr.f32.mxu0 0.0
        %2725 = vmatmul.mubr.f32.gmra.mrb[0].mxu0 %v1964
        %v2726 = vpop.f32.mrb[0].mxu0
        %v2727 = vadd.f32 0.0, %v2726
        %v2728 = vpop.f32.mrb[0].mxu0
        %2729 = vmatprep.mubr.f32.mxu0 0.0
        %2730 = vmatmul.mubr.f32.gmra.mrb[0].mxu0 %v1966
        %v2731 = vpop.f32.mrb[0].mxu0
        %v2732 = vadd.f32 0.0, %v2731
        %v2733 = vpop.f32.mrb[0].mxu0
        %2734 = vmatprep.mubr.f32.mxu0 0.0
        %2735 = vmatmul.mubr.f32.gmra.mrb[0].mxu0 %v1968
        %v2736 = vpop.f32.mrb[0].mxu0
        %v2737 = vadd.f32 0.0, %v2736
        %v2738 = vpop.f32.mrb[0].mxu0
        %2739 = vmatprep.mubr.f32.mxu0 0.0
        %2740 = vmatmul.mubr.f32.gmra.mrb[0].mxu0 %v1970
        %v2741 = vpop.f32.mrb[0].mxu0
        %v2742 = vadd.f32 0.0, %v2741
        %v2743 = vpop.f32.mrb[0].mxu0
        %2744 = vmatprep.mubr.f32.mxu0 0.0
        %2745 = vmatmul.mubr.f32.gmra.mrb[0].mxu0 %v2526
        %v2746 = vpop.f32.mrb[0].mxu0
        %v2747 = vadd.f32 0.0, %v2746
        %v2748 = vpop.f32.mrb[0].mxu0
        %2749 = vmatprep.mubr.f32.mxu0 0.0
        %2750 = vmatmul.mubr.f32.gmra.mrb[0].mxu0 %v2528
        %v2751 = vpop.f32.mrb[0].mxu0
        %v2752 = vadd.f32 0.0, %v2751
        %v2753 = vpop.f32.mrb[0].mxu0
        %2754 = vdwg.mxu0
        %v2755 = vadd.f32 %v2490, %v2597
        %v2756 = vadd.f32 %v2491, %v2602
        %v2757 = vadd.f32 %v2492, %v2607
        %v2758 = vadd.f32 %v2493, %v2612
        %v2759 = vadd.f32 %v2494, %v2617
        %v2760 = vadd.f32 %v2495, %v2622
        %v2761 = vadd.f32 %v2496, %v2627
        %v2762 = vadd.f32 %v2497, %v2632
        %v2763 = vadd.f32 %v2498, %v2637
        %v2764 = vadd.f32 %v2499, %v2642
        %v2765 = vadd.f32 %v2500, %v2647
        %v2766 = vadd.f32 %v2501, %v2652
        %v2767 = vadd.f32 %v2502, %v2657
        %v2768 = vadd.f32 %v2503, %v2662
        %v2769 = vadd.f32 %v2504, %v2667
        %v2770 = vadd.f32 %v2505, %v2672
        %v2771 = vadd.f32 %v2506, %v2677
        %v2772 = vadd.f32 %v2507, %v2682
        %v2773 = vadd.f32 %v2508, %v2687
        %v2774 = vadd.f32 %v2509, %v2692
        %v2775 = vadd.f32 %v2510, %v2697
        %v2776 = vadd.f32 %v2511, %v2702
        %v2777 = vadd.f32 %v2512, %v2707
        %v2778 = vadd.f32 %v2513, %v2712
        %v2779 = vadd.f32 %v2514, %v2717
        %v2780 = vadd.f32 %v2515, %v2722
        %v2781 = vadd.f32 %v2516, %v2727
        %v2782 = vadd.f32 %v2517, %v2732
        %v2783 = vadd.f32 %v2518, %v2737
        %v2784 = vadd.f32 %v2519, %v2742
        %v2785 = vadd.f32 %v2520, %v2747
        %v2786 = vadd.f32 %v2521, %v2752
        %v2787 = vld [vmem:[%s6 + $0x80] sm:$0xff]
        %v2788 = vld [vmem:[%s6 + $0x88] sm:$0xff]
        %v2789 = vld [vmem:[%s6 + $0x90] sm:$0xff]
        %v2790 = vld [vmem:[%s6 + $0x98] sm:$0xff]
        %v2791 = vsel %vm1179, %v1350, 0
        %v2793 = vsel %vm1179, %v1351, 0
        %2795 = vmatprep.subr.mxu0 0.0
        %2796 = vmatpush1.msra.mxu0 %v2787
        %2797 = vmatprep.subr.mxu0 0.0
        %2798 = vmatpush1.msra.mxu0 %v2788
        %2799 = vmatprep.subr.mxu0 0.0
        %2800 = vmatpush1.msra.mxu0 %v2789
        %2801 = vmatprep.subr.mxu0 0.0
        %2802 = vmatpush1.msra.mxu0 %v2790
        %2803 = vmatprep.subr.mxu0 0.0
        %2804 = vmatpush1.msra.mxu0 0.0
        %2805 = vmatprep.subr.mxu0 0.0
        %2806 = vmatpush1.msra.mxu0 0.0
        %2807 = vmatprep.subr.mxu0 0.0
        %2808 = vmatpush1.msra.mxu0 0.0
        %2809 = vmatprep.subr.mxu0 0.0
        %2810 = vmatpush1.msra.mxu0 0.0
        %2811 = vmatprep.subr.mxu0 0.0
        %2812 = vmatpush1.msra.mxu0 0.0
        %2813 = vmatprep.subr.mxu0 0.0
        %2814 = vmatpush1.msra.mxu0 0.0
        %2815 = vmatprep.subr.mxu0 0.0
        %2816 = vmatpush1.msra.mxu0 0.0
        %2817 = vmatprep.subr.mxu0 0.0
        %2818 = vmatpush1.msra.mxu0 0.0
        %2819 = vmatprep.subr.mxu0 0.0
        %2820 = vmatpush1.msra.mxu0 0.0
        %2821 = vmatprep.subr.mxu0 0.0
        %2822 = vmatpush1.msra.mxu0 0.0
        %2823 = vmatprep.subr.mxu0 0.0
        %2824 = vmatpush1.msra.mxu0 0.0
        %2825 = vmatprep.subr.mxu0 0.0
        %2826 = vmatpush1.msra.mxu0 0.0
        %2827 = vmatprep.subr.mxu0 0.0
        %2828 = vmatpush1.msra.mxu0 0.0
        %2829 = vmatprep.subr.mxu0 0.0
        %2830 = vmatpush1.msra.mxu0 0.0
        %2831 = vmatprep.subr.mxu0 0.0
        %2832 = vmatpush1.msra.mxu0 0.0
        %2833 = vmatprep.subr.mxu0 0.0
        %2834 = vmatpush1.msra.mxu0 0.0
        %2835 = vmatprep.subr.mxu0 0.0
        %2836 = vmatpush1.msra.mxu0 0.0
        %2837 = vmatprep.subr.mxu0 0.0
        %2838 = vmatpush1.msra.mxu0 0.0
        %2839 = vmatprep.subr.mxu0 0.0
        %2840 = vmatpush1.msra.mxu0 0.0
        %2841 = vmatprep.subr.mxu0 0.0
        %2842 = vmatpush1.msra.mxu0 0.0
        %2843 = vmatprep.subr.mxu0 0.0
        %2844 = vmatpush1.msra.mxu0 0.0
        %2845 = vmatprep.subr.mxu0 0.0
        %2846 = vmatpush1.msra.mxu0 0.0
        %2847 = vmatprep.subr.mxu0 0.0
        %2848 = vmatpush1.msra.mxu0 0.0
        %2849 = vmatprep.subr.mxu0 0.0
        %2850 = vmatpush1.msra.mxu0 0.0
        %2851 = vmatprep.subr.mxu0 0.0
        %2852 = vmatpush1.msra.mxu0 0.0
        %2853 = vmatprep.subr.mxu0 0.0
        %2854 = vmatpush1.msra.mxu0 0.0
        %2855 = vmatprep.subr.mxu0 0.0
        %2856 = vmatpush1.msra.mxu0 0.0
        %2857 = vmatprep.subr.mxu0 0.0
        %2858 = vmatpush1.msra.mxu0 0.0
        %2859 = vmatprep.mubr.f32.mxu0 0.0
        %2860 = vmatmul.mubr.f32.gmra.mrb[0].mxu0 %v1623
        %v2861 = vpop.f32.mrb[0].mxu0
        %v2862 = vadd.f32 0.0, %v2861
        %v2863 = vpop.f32.mrb[0].mxu0
        %2864 = vmatprep.mubr.f32.mxu0 0.0
        %2865 = vmatmul.mubr.f32.gmra.mrb[0].mxu0 %v1625
        %v2866 = vpop.f32.mrb[0].mxu0
        %v2867 = vadd.f32 0.0, %v2866
        %v2868 = vpop.f32.mrb[0].mxu0
        %2869 = vmatprep.mubr.f32.mxu0 0.0
        %2870 = vmatmul.mubr.f32.gmra.mrb[0].mxu0 %v1627
        %v2871 = vpop.f32.mrb[0].mxu0
        %v2872 = vadd.f32 0.0, %v2871
        %v2873 = vpop.f32.mrb[0].mxu0
        %2874 = vmatprep.mubr.f32.mxu0 0.0
        %2875 = vmatmul.mubr.f32.gmra.mrb[0].mxu0 %v1629
        %v2876 = vpop.f32.mrb[0].mxu0
        %v2877 = vadd.f32 0.0, %v2876
        %v2878 = vpop.f32.mrb[0].mxu0
        %2879 = vmatprep.mubr.f32.mxu0 0.0
        %2880 = vmatmul.mubr.f32.gmra.mrb[0].mxu0 %v1631
        %v2881 = vpop.f32.mrb[0].mxu0
        %v2882 = vadd.f32 0.0, %v2881
        %v2883 = vpop.f32.mrb[0].mxu0
        %2884 = vmatprep.mubr.f32.mxu0 0.0
        %2885 = vmatmul.mubr.f32.gmra.mrb[0].mxu0 %v1633
        %v2886 = vpop.f32.mrb[0].mxu0
        %v2887 = vadd.f32 0.0, %v2886
        %v2888 = vpop.f32.mrb[0].mxu0
        %2889 = vmatprep.mubr.f32.mxu0 0.0
        %2890 = vmatmul.mubr.f32.gmra.mrb[0].mxu0 %v1635
        %v2891 = vpop.f32.mrb[0].mxu0
        %v2892 = vadd.f32 0.0, %v2891
        %v2893 = vpop.f32.mrb[0].mxu0
        %2894 = vmatprep.mubr.f32.mxu0 0.0
        %2895 = vmatmul.mubr.f32.gmra.mrb[0].mxu0 %v1637
        %v2896 = vpop.f32.mrb[0].mxu0
        %v2897 = vadd.f32 0.0, %v2896
        %v2898 = vpop.f32.mrb[0].mxu0
        %2899 = vmatprep.mubr.f32.mxu0 0.0
        %2900 = vmatmul.mubr.f32.gmra.mrb[0].mxu0 %v1639
        %v2901 = vpop.f32.mrb[0].mxu0
        %v2902 = vadd.f32 0.0, %v2901
        %v2903 = vpop.f32.mrb[0].mxu0
        %2904 = vmatprep.mubr.f32.mxu0 0.0
        %2905 = vmatmul.mubr.f32.gmra.mrb[0].mxu0 %v1641
        %v2906 = vpop.f32.mrb[0].mxu0
        %v2907 = vadd.f32 0.0, %v2906
        %v2908 = vpop.f32.mrb[0].mxu0
        %2909 = vmatprep.mubr.f32.mxu0 0.0
        %2910 = vmatmul.mubr.f32.gmra.mrb[0].mxu0 %v1643
        %v2911 = vpop.f32.mrb[0].mxu0
        %v2912 = vadd.f32 0.0, %v2911
        %v2913 = vpop.f32.mrb[0].mxu0
        %2914 = vmatprep.mubr.f32.mxu0 0.0
        %2915 = vmatmul.mubr.f32.gmra.mrb[0].mxu0 %v1645
        %v2916 = vpop.f32.mrb[0].mxu0
        %v2917 = vadd.f32 0.0, %v2916
        %v2918 = vpop.f32.mrb[0].mxu0
        %2919 = vmatprep.mubr.f32.mxu0 0.0
        %2920 = vmatmul.mubr.f32.gmra.mrb[0].mxu0 %v1647
        %v2921 = vpop.f32.mrb[0].mxu0
        %v2922 = vadd.f32 0.0, %v2921
        %v2923 = vpop.f32.mrb[0].mxu0
        %2924 = vmatprep.mubr.f32.mxu0 0.0
        %2925 = vmatmul.mubr.f32.gmra.mrb[0].mxu0 %v1649
        %v2926 = vpop.f32.mrb[0].mxu0
        %v2927 = vadd.f32 0.0, %v2926
        %v2928 = vpop.f32.mrb[0].mxu0
        %2929 = vmatprep.mubr.f32.mxu0 0.0
        %2930 = vmatmul.mubr.f32.gmra.mrb[0].mxu0 %v1651
        %v2931 = vpop.f32.mrb[0].mxu0
        %v2932 = vadd.f32 0.0, %v2931
        %v2933 = vpop.f32.mrb[0].mxu0
        %2934 = vmatprep.mubr.f32.mxu0 0.0
        %2935 = vmatmul.mubr.f32.gmra.mrb[0].mxu0 %v1653
        %v2936 = vpop.f32.mrb[0].mxu0
        %v2937 = vadd.f32 0.0, %v2936
        %v2938 = vpop.f32.mrb[0].mxu0
        %2939 = vmatprep.mubr.f32.mxu0 0.0
        %2940 = vmatmul.mubr.f32.gmra.mrb[0].mxu0 %v1655
        %v2941 = vpop.f32.mrb[0].mxu0
        %v2942 = vadd.f32 0.0, %v2941
        %v2943 = vpop.f32.mrb[0].mxu0
        %2944 = vmatprep.mubr.f32.mxu0 0.0
        %2945 = vmatmul.mubr.f32.gmra.mrb[0].mxu0 %v1657
        %v2946 = vpop.f32.mrb[0].mxu0
        %v2947 = vadd.f32 0.0, %v2946
        %v2948 = vpop.f32.mrb[0].mxu0
        %2949 = vmatprep.mubr.f32.mxu0 0.0
        %2950 = vmatmul.mubr.f32.gmra.mrb[0].mxu0 %v1659
        %v2951 = vpop.f32.mrb[0].mxu0
        %v2952 = vadd.f32 0.0, %v2951
        %v2953 = vpop.f32.mrb[0].mxu0
        %2954 = vmatprep.mubr.f32.mxu0 0.0
        %2955 = vmatmul.mubr.f32.gmra.mrb[0].mxu0 %v1661
        %v2956 = vpop.f32.mrb[0].mxu0
        %v2957 = vadd.f32 0.0, %v2956
        %v2958 = vpop.f32.mrb[0].mxu0
        %2959 = vmatprep.mubr.f32.mxu0 0.0
        %2960 = vmatmul.mubr.f32.gmra.mrb[0].mxu0 %v1663
        %v2961 = vpop.f32.mrb[0].mxu0
        %v2962 = vadd.f32 0.0, %v2961
        %v2963 = vpop.f32.mrb[0].mxu0
        %2964 = vmatprep.mubr.f32.mxu0 0.0
        %2965 = vmatmul.mubr.f32.gmra.mrb[0].mxu0 %v1665
        %v2966 = vpop.f32.mrb[0].mxu0
        %v2967 = vadd.f32 0.0, %v2966
        %v2968 = vpop.f32.mrb[0].mxu0
        %2969 = vmatprep.mubr.f32.mxu0 0.0
        %2970 = vmatmul.mubr.f32.gmra.mrb[0].mxu0 %v1667
        %v2971 = vpop.f32.mrb[0].mxu0
        %v2972 = vadd.f32 0.0, %v2971
        %v2973 = vpop.f32.mrb[0].mxu0
        %2974 = vmatprep.mubr.f32.mxu0 0.0
        %2975 = vmatmul.mubr.f32.gmra.mrb[0].mxu0 %v1669
        %v2976 = vpop.f32.mrb[0].mxu0
        %v2977 = vadd.f32 0.0, %v2976
        %v2978 = vpop.f32.mrb[0].mxu0
        %2979 = vmatprep.mubr.f32.mxu0 0.0
        %2980 = vmatmul.mubr.f32.gmra.mrb[0].mxu0 %v1671
        %v2981 = vpop.f32.mrb[0].mxu0
        %v2982 = vadd.f32 0.0, %v2981
        %v2983 = vpop.f32.mrb[0].mxu0
        %2984 = vmatprep.mubr.f32.mxu0 0.0
        %2985 = vmatmul.mubr.f32.gmra.mrb[0].mxu0 %v1673
        %v2986 = vpop.f32.mrb[0].mxu0
        %v2987 = vadd.f32 0.0, %v2986
        %v2988 = vpop.f32.mrb[0].mxu0
        %2989 = vmatprep.mubr.f32.mxu0 0.0
        %2990 = vmatmul.mubr.f32.gmra.mrb[0].mxu0 %v1675
        %v2991 = vpop.f32.mrb[0].mxu0
        %v2992 = vadd.f32 0.0, %v2991
        %v2993 = vpop.f32.mrb[0].mxu0
        %2994 = vmatprep.mubr.f32.mxu0 0.0
        %2995 = vmatmul.mubr.f32.gmra.mrb[0].mxu0 %v1677
        %v2996 = vpop.f32.mrb[0].mxu0
        %v2997 = vadd.f32 0.0, %v2996
        %v2998 = vpop.f32.mrb[0].mxu0
        %2999 = vmatprep.mubr.f32.mxu0 0.0
        %3000 = vmatmul.mubr.f32.gmra.mrb[0].mxu0 %v1679
        %v3001 = vpop.f32.mrb[0].mxu0
        %v3002 = vadd.f32 0.0, %v3001
        %v3003 = vpop.f32.mrb[0].mxu0
        %3004 = vmatprep.mubr.f32.mxu0 0.0
        %3005 = vmatmul.mubr.f32.gmra.mrb[0].mxu0 %v1681
        %v3006 = vpop.f32.mrb[0].mxu0
        %v3007 = vadd.f32 0.0, %v3006
        %v3008 = vpop.f32.mrb[0].mxu0
        %3009 = vmatprep.mubr.f32.mxu0 0.0
        %3010 = vmatmul.mubr.f32.gmra.mrb[0].mxu0 %v2791
        %v3011 = vpop.f32.mrb[0].mxu0
        %v3012 = vadd.f32 0.0, %v3011
        %v3013 = vpop.f32.mrb[0].mxu0
        %3014 = vmatprep.mubr.f32.mxu0 0.0
        %3015 = vmatmul.mubr.f32.gmra.mrb[0].mxu0 %v2793
        %v3016 = vpop.f32.mrb[0].mxu0
        %v3017 = vadd.f32 0.0, %v3016
        %v3018 = vpop.f32.mrb[0].mxu0
        %3019 = vdwg.mxu0
        %v3020 = vadd.f32 %v2755, %v2862
        %v3021 = vadd.f32 %v2756, %v2867
        %v3022 = vadd.f32 %v2757, %v2872
        %v3023 = vadd.f32 %v2758, %v2877
        %v3024 = vadd.f32 %v2759, %v2882
        %v3025 = vadd.f32 %v2760, %v2887
        %v3026 = vadd.f32 %v2761, %v2892
        %v3027 = vadd.f32 %v2762, %v2897
        %v3028 = vadd.f32 %v2763, %v2902
        %v3029 = vadd.f32 %v2764, %v2907
        %v3030 = vadd.f32 %v2765, %v2912
        %v3031 = vadd.f32 %v2766, %v2917
        %v3032 = vadd.f32 %v2767, %v2922
        %v3033 = vadd.f32 %v2768, %v2927
        %v3034 = vadd.f32 %v2769, %v2932
        %v3035 = vadd.f32 %v2770, %v2937
        %v3036 = vadd.f32 %v2771, %v2942
        %v3037 = vadd.f32 %v2772, %v2947
        %v3038 = vadd.f32 %v2773, %v2952
        %v3039 = vadd.f32 %v2774, %v2957
        %v3040 = vadd.f32 %v2775, %v2962
        %v3041 = vadd.f32 %v2776, %v2967
        %v3042 = vadd.f32 %v2777, %v2972
        %v3043 = vadd.f32 %v2778, %v2977
        %v3044 = vadd.f32 %v2779, %v2982
        %v3045 = vadd.f32 %v2780, %v2987
        %v3046 = vadd.f32 %v2781, %v2992
        %v3047 = vadd.f32 %v2782, %v2997
        %v3048 = vadd.f32 %v2783, %v3002
        %v3049 = vadd.f32 %v2784, %v3007
        %v3050 = vadd.f32 %v2785, %v3012
        %v3051 = vadd.f32 %v2786, %v3017
        %v3052 = vld [vmem:[%s6 + $0xa0] sm:$0xff]
        %v3053 = vld [vmem:[%s6 + $0xa8] sm:$0xff]
        %v3054 = vld [vmem:[%s6 + $0xb0] sm:$0xff]
        %v3055 = vld [vmem:[%s6 + $0xb8] sm:$0xff]
        %v3056 = vsel %vm1179, %v1594, 0
        %v3058 = vsel %vm1179, %v1596, 0
        %3060 = vmatprep.subr.mxu0 0.0
        %3061 = vmatpush1.msra.mxu0 %v3052
        %3062 = vmatprep.subr.mxu0 0.0
        %3063 = vmatpush1.msra.mxu0 %v3053
        %3064 = vmatprep.subr.mxu0 0.0
        %3065 = vmatpush1.msra.mxu0 %v3054
        %3066 = vmatprep.subr.mxu0 0.0
        %3067 = vmatpush1.msra.mxu0 %v3055
        %3068 = vmatprep.subr.mxu0 0.0
        %3069 = vmatpush1.msra.mxu0 0.0
        %3070 = vmatprep.subr.mxu0 0.0
        %3071 = vmatpush1.msra.mxu0 0.0
        %3072 = vmatprep.subr.mxu0 0.0
        %3073 = vmatpush1.msra.mxu0 0.0
        %3074 = vmatprep.subr.mxu0 0.0
        %3075 = vmatpush1.msra.mxu0 0.0
        %3076 = vmatprep.subr.mxu0 0.0
        %3077 = vmatpush1.msra.mxu0 0.0
        %3078 = vmatprep.subr.mxu0 0.0
        %3079 = vmatpush1.msra.mxu0 0.0
        %3080 = vmatprep.subr.mxu0 0.0
        %3081 = vmatpush1.msra.mxu0 0.0
        %3082 = vmatprep.subr.mxu0 0.0
        %3083 = vmatpush1.msra.mxu0 0.0
        %3084 = vmatprep.subr.mxu0 0.0
        %3085 = vmatpush1.msra.mxu0 0.0
        %3086 = vmatprep.subr.mxu0 0.0
        %3087 = vmatpush1.msra.mxu0 0.0
        %3088 = vmatprep.subr.mxu0 0.0
        %3089 = vmatpush1.msra.mxu0 0.0
        %3090 = vmatprep.subr.mxu0 0.0
        %3091 = vmatpush1.msra.mxu0 0.0
        %3092 = vmatprep.subr.mxu0 0.0
        %3093 = vmatpush1.msra.mxu0 0.0
        %3094 = vmatprep.subr.mxu0 0.0
        %3095 = vmatpush1.msra.mxu0 0.0
        %3096 = vmatprep.subr.mxu0 0.0
        %3097 = vmatpush1.msra.mxu0 0.0
        %3098 = vmatprep.subr.mxu0 0.0
        %3099 = vmatpush1.msra.mxu0 0.0
        %3100 = vmatprep.subr.mxu0 0.0
        %3101 = vmatpush1.msra.mxu0 0.0
        %3102 = vmatprep.subr.mxu0 0.0
        %3103 = vmatpush1.msra.mxu0 0.0
        %3104 = vmatprep.subr.mxu0 0.0
        %3105 = vmatpush1.msra.mxu0 0.0
        %3106 = vmatprep.subr.mxu0 0.0
        %3107 = vmatpush1.msra.mxu0 0.0
        %3108 = vmatprep.subr.mxu0 0.0
        %3109 = vmatpush1.msra.mxu0 0.0
        %3110 = vmatprep.subr.mxu0 0.0
        %3111 = vmatpush1.msra.mxu0 0.0
        %3112 = vmatprep.subr.mxu0 0.0
        %3113 = vmatpush1.msra.mxu0 0.0
        %3114 = vmatprep.subr.mxu0 0.0
        %3115 = vmatpush1.msra.mxu0 0.0
        %3116 = vmatprep.subr.mxu0 0.0
        %3117 = vmatpush1.msra.mxu0 0.0
        %3118 = vmatprep.subr.mxu0 0.0
        %3119 = vmatpush1.msra.mxu0 0.0
        %3120 = vmatprep.subr.mxu0 0.0
        %3121 = vmatpush1.msra.mxu0 0.0
        %3122 = vmatprep.subr.mxu0 0.0
        %3123 = vmatpush1.msra.mxu0 0.0
        %3124 = vmatprep.mubr.f32.mxu0 0.0
        %3125 = vmatmul.mubr.f32.gmra.mrb[0].mxu0 %v2205
        %v3126 = vpop.f32.mrb[0].mxu0
        %v3127 = vadd.f32 0.0, %v3126
        %v3128 = vpop.f32.mrb[0].mxu0
        %3129 = vmatprep.mubr.f32.mxu0 0.0
        %3130 = vmatmul.mubr.f32.gmra.mrb[0].mxu0 %v2207
        %v3131 = vpop.f32.mrb[0].mxu0
        %v3132 = vadd.f32 0.0, %v3131
        %v3133 = vpop.f32.mrb[0].mxu0
        %3134 = vmatprep.mubr.f32.mxu0 0.0
        %3135 = vmatmul.mubr.f32.gmra.mrb[0].mxu0 %v2209
        %v3136 = vpop.f32.mrb[0].mxu0
        %v3137 = vadd.f32 0.0, %v3136
        %v3138 = vpop.f32.mrb[0].mxu0
        %3139 = vmatprep.mubr.f32.mxu0 0.0
        %3140 = vmatmul.mubr.f32.gmra.mrb[0].mxu0 %v2211
        %v3141 = vpop.f32.mrb[0].mxu0
        %v3142 = vadd.f32 0.0, %v3141
        %v3143 = vpop.f32.mrb[0].mxu0
        %3144 = vmatprep.mubr.f32.mxu0 0.0
        %3145 = vmatmul.mubr.f32.gmra.mrb[0].mxu0 %v2213
        %v3146 = vpop.f32.mrb[0].mxu0
        %v3147 = vadd.f32 0.0, %v3146
        %v3148 = vpop.f32.mrb[0].mxu0
        %3149 = vmatprep.mubr.f32.mxu0 0.0
        %3150 = vmatmul.mubr.f32.gmra.mrb[0].mxu0 %v2215
        %v3151 = vpop.f32.mrb[0].mxu0
        %v3152 = vadd.f32 0.0, %v3151
        %v3153 = vpop.f32.mrb[0].mxu0
        %3154 = vmatprep.mubr.f32.mxu0 0.0
        %3155 = vmatmul.mubr.f32.gmra.mrb[0].mxu0 %v2217
        %v3156 = vpop.f32.mrb[0].mxu0
        %v3157 = vadd.f32 0.0, %v3156
        %v3158 = vpop.f32.mrb[0].mxu0
        %3159 = vmatprep.mubr.f32.mxu0 0.0
        %3160 = vmatmul.mubr.f32.gmra.mrb[0].mxu0 %v2219
        %v3161 = vpop.f32.mrb[0].mxu0
        %v3162 = vadd.f32 0.0, %v3161
        %v3163 = vpop.f32.mrb[0].mxu0
        %3164 = vmatprep.mubr.f32.mxu0 0.0
        %3165 = vmatmul.mubr.f32.gmra.mrb[0].mxu0 %v2221
        %v3166 = vpop.f32.mrb[0].mxu0
        %v3167 = vadd.f32 0.0, %v3166
        %v3168 = vpop.f32.mrb[0].mxu0
        %3169 = vmatprep.mubr.f32.mxu0 0.0
        %3170 = vmatmul.mubr.f32.gmra.mrb[0].mxu0 %v2223
        %v3171 = vpop.f32.mrb[0].mxu0
        %v3172 = vadd.f32 0.0, %v3171
        %v3173 = vpop.f32.mrb[0].mxu0
        %3174 = vmatprep.mubr.f32.mxu0 0.0
        %3175 = vmatmul.mubr.f32.gmra.mrb[0].mxu0 %v2225
        %v3176 = vpop.f32.mrb[0].mxu0
        %v3177 = vadd.f32 0.0, %v3176
        %v3178 = vpop.f32.mrb[0].mxu0
        %3179 = vmatprep.mubr.f32.mxu0 0.0
        %3180 = vmatmul.mubr.f32.gmra.mrb[0].mxu0 %v2227
        %v3181 = vpop.f32.mrb[0].mxu0
        %v3182 = vadd.f32 0.0, %v3181
        %v3183 = vpop.f32.mrb[0].mxu0
        %3184 = vmatprep.mubr.f32.mxu0 0.0
        %3185 = vmatmul.mubr.f32.gmra.mrb[0].mxu0 %v2229
        %v3186 = vpop.f32.mrb[0].mxu0
        %v3187 = vadd.f32 0.0, %v3186
        %v3188 = vpop.f32.mrb[0].mxu0
        %3189 = vmatprep.mubr.f32.mxu0 0.0
        %3190 = vmatmul.mubr.f32.gmra.mrb[0].mxu0 %v2231
        %v3191 = vpop.f32.mrb[0].mxu0
        %v3192 = vadd.f32 0.0, %v3191
        %v3193 = vpop.f32.mrb[0].mxu0
        %3194 = vmatprep.mubr.f32.mxu0 0.0
        %3195 = vmatmul.mubr.f32.gmra.mrb[0].mxu0 %v2233
        %v3196 = vpop.f32.mrb[0].mxu0
        %v3197 = vadd.f32 0.0, %v3196
        %v3198 = vpop.f32.mrb[0].mxu0
        %3199 = vmatprep.mubr.f32.mxu0 0.0
        %3200 = vmatmul.mubr.f32.gmra.mrb[0].mxu0 %v2235
        %v3201 = vpop.f32.mrb[0].mxu0
        %v3202 = vadd.f32 0.0, %v3201
        %v3203 = vpop.f32.mrb[0].mxu0
        %3204 = vmatprep.mubr.f32.mxu0 0.0
        %3205 = vmatmul.mubr.f32.gmra.mrb[0].mxu0 %v2237
        %v3206 = vpop.f32.mrb[0].mxu0
        %v3207 = vadd.f32 0.0, %v3206
        %v3208 = vpop.f32.mrb[0].mxu0
        %3209 = vmatprep.mubr.f32.mxu0 0.0
        %3210 = vmatmul.mubr.f32.gmra.mrb[0].mxu0 %v2239
        %v3211 = vpop.f32.mrb[0].mxu0
        %v3212 = vadd.f32 0.0, %v3211
        %v3213 = vpop.f32.mrb[0].mxu0
        %3214 = vmatprep.mubr.f32.mxu0 0.0
        %3215 = vmatmul.mubr.f32.gmra.mrb[0].mxu0 %v2241
        %v3216 = vpop.f32.mrb[0].mxu0
        %v3217 = vadd.f32 0.0, %v3216
        %v3218 = vpop.f32.mrb[0].mxu0
        %3219 = vmatprep.mubr.f32.mxu0 0.0
        %3220 = vmatmul.mubr.f32.gmra.mrb[0].mxu0 %v2243
        %v3221 = vpop.f32.mrb[0].mxu0
        %v3222 = vadd.f32 0.0, %v3221
        %v3223 = vpop.f32.mrb[0].mxu0
        %3224 = vmatprep.mubr.f32.mxu0 0.0
        %3225 = vmatmul.mubr.f32.gmra.mrb[0].mxu0 %v2245
        %v3226 = vpop.f32.mrb[0].mxu0
        %v3227 = vadd.f32 0.0, %v3226
        %v3228 = vpop.f32.mrb[0].mxu0
        %3229 = vmatprep.mubr.f32.mxu0 0.0
        %3230 = vmatmul.mubr.f32.gmra.mrb[0].mxu0 %v2247
        %v3231 = vpop.f32.mrb[0].mxu0
        %v3232 = vadd.f32 0.0, %v3231
        %v3233 = vpop.f32.mrb[0].mxu0
        %3234 = vmatprep.mubr.f32.mxu0 0.0
        %3235 = vmatmul.mubr.f32.gmra.mrb[0].mxu0 %v2249
        %v3236 = vpop.f32.mrb[0].mxu0
        %v3237 = vadd.f32 0.0, %v3236
        %v3238 = vpop.f32.mrb[0].mxu0
        %3239 = vmatprep.mubr.f32.mxu0 0.0
        %3240 = vmatmul.mubr.f32.gmra.mrb[0].mxu0 %v2251
        %v3241 = vpop.f32.mrb[0].mxu0
        %v3242 = vadd.f32 0.0, %v3241
        %v3243 = vpop.f32.mrb[0].mxu0
        %3244 = vmatprep.mubr.f32.mxu0 0.0
        %3245 = vmatmul.mubr.f32.gmra.mrb[0].mxu0 %v2253
        %v3246 = vpop.f32.mrb[0].mxu0
        %v3247 = vadd.f32 0.0, %v3246
        %v3248 = vpop.f32.mrb[0].mxu0
        %3249 = vmatprep.mubr.f32.mxu0 0.0
        %3250 = vmatmul.mubr.f32.gmra.mrb[0].mxu0 %v2255
        %v3251 = vpop.f32.mrb[0].mxu0
        %v3252 = vadd.f32 0.0, %v3251
        %v3253 = vpop.f32.mrb[0].mxu0
        %3254 = vmatprep.mubr.f32.mxu0 0.0
        %3255 = vmatmul.mubr.f32.gmra.mrb[0].mxu0 %v2257
        %v3256 = vpop.f32.mrb[0].mxu0
        %v3257 = vadd.f32 0.0, %v3256
        %v3258 = vpop.f32.mrb[0].mxu0
        %3259 = vmatprep.mubr.f32.mxu0 0.0
        %3260 = vmatmul.mubr.f32.gmra.mrb[0].mxu0 %v2259
        %v3261 = vpop.f32.mrb[0].mxu0
        %v3262 = vadd.f32 0.0, %v3261
        %v3263 = vpop.f32.mrb[0].mxu0
        %3264 = vmatprep.mubr.f32.mxu0 0.0
        %3265 = vmatmul.mubr.f32.gmra.mrb[0].mxu0 %v2261
        %v3266 = vpop.f32.mrb[0].mxu0
        %v3267 = vadd.f32 0.0, %v3266
        %v3268 = vpop.f32.mrb[0].mxu0
        %3269 = vmatprep.mubr.f32.mxu0 0.0
        %3270 = vmatmul.mubr.f32.gmra.mrb[0].mxu0 %v2263
        %v3271 = vpop.f32.mrb[0].mxu0
        %v3272 = vadd.f32 0.0, %v3271
        %v3273 = vpop.f32.mrb[0].mxu0
        %3274 = vmatprep.mubr.f32.mxu0 0.0
        %3275 = vmatmul.mubr.f32.gmra.mrb[0].mxu0 %v3056
        %v3276 = vpop.f32.mrb[0].mxu0
        %v3277 = vadd.f32 0.0, %v3276
        %v3278 = vpop.f32.mrb[0].mxu0
        %3279 = vmatprep.mubr.f32.mxu0 0.0
        %3280 = vmatmul.mubr.f32.gmra.mrb[0].mxu0 %v3058
        %v3281 = vpop.f32.mrb[0].mxu0
        %v3282 = vadd.f32 0.0, %v3281
        %v3283 = vpop.f32.mrb[0].mxu0
        %3284 = vdwg.mxu0
        %v3285 = vadd.f32 %v3020, %v3127
        %v3286 = vadd.f32 %v3021, %v3132
        %v3287 = vadd.f32 %v3022, %v3137
        %v3288 = vadd.f32 %v3023, %v3142
        %v3289 = vadd.f32 %v3024, %v3147
        %v3290 = vadd.f32 %v3025, %v3152
        %v3291 = vadd.f32 %v3026, %v3157
        %v3292 = vadd.f32 %v3027, %v3162
        %v3293 = vadd.f32 %v3028, %v3167
        %v3294 = vadd.f32 %v3029, %v3172
        %v3295 = vadd.f32 %v3030, %v3177
        %v3296 = vadd.f32 %v3031, %v3182
        %v3297 = vadd.f32 %v3032, %v3187
        %v3298 = vadd.f32 %v3033, %v3192
        %v3299 = vadd.f32 %v3034, %v3197
        %v3300 = vadd.f32 %v3035, %v3202
        %v3301 = vadd.f32 %v3036, %v3207
        %v3302 = vadd.f32 %v3037, %v3212
        %v3303 = vadd.f32 %v3038, %v3217
        %v3304 = vadd.f32 %v3039, %v3222
        %v3305 = vadd.f32 %v3040, %v3227
        %v3306 = vadd.f32 %v3041, %v3232
        %v3307 = vadd.f32 %v3042, %v3237
        %v3308 = vadd.f32 %v3043, %v3242
        %v3309 = vadd.f32 %v3044, %v3247
        %v3310 = vadd.f32 %v3045, %v3252
        %v3311 = vadd.f32 %v3046, %v3257
        %v3312 = vadd.f32 %v3047, %v3262
        %v3313 = vadd.f32 %v3048, %v3267
        %v3314 = vadd.f32 %v3049, %v3272
        %v3315 = vadd.f32 %v3050, %v3277
        %v3316 = vadd.f32 %v3051, %v3282
        %v3317 = vld [vmem:[%s6 + $0xc0] sm:$0xff]
        %v3318 = vld [vmem:[%s6 + $0xc8] sm:$0xff]
        %v3319 = vld [vmem:[%s6 + $0xd0] sm:$0xff]
        %v3320 = vld [vmem:[%s6 + $0xd8] sm:$0xff]
        %v3321 = vsel %vm1179, %v1602, 0
        %v3323 = vsel %vm1179, %v1604, 0
        %3325 = vmatprep.subr.mxu0 0.0
        %3326 = vmatpush1.msra.mxu0 %v3317
        %3327 = vmatprep.subr.mxu0 0.0
        %3328 = vmatpush1.msra.mxu0 %v3318
        %3329 = vmatprep.subr.mxu0 0.0
        %3330 = vmatpush1.msra.mxu0 %v3319
        %3331 = vmatprep.subr.mxu0 0.0
        %3332 = vmatpush1.msra.mxu0 %v3320
        %3333 = vmatprep.subr.mxu0 0.0
        %3334 = vmatpush1.msra.mxu0 0.0
        %3335 = vmatprep.subr.mxu0 0.0
        %3336 = vmatpush1.msra.mxu0 0.0
        %3337 = vmatprep.subr.mxu0 0.0
        %3338 = vmatpush1.msra.mxu0 0.0
        %3339 = vmatprep.subr.mxu0 0.0
        %3340 = vmatpush1.msra.mxu0 0.0
        %3341 = vmatprep.subr.mxu0 0.0
        %3342 = vmatpush1.msra.mxu0 0.0
        %3343 = vmatprep.subr.mxu0 0.0
        %3344 = vmatpush1.msra.mxu0 0.0
        %3345 = vmatprep.subr.mxu0 0.0
        %3346 = vmatpush1.msra.mxu0 0.0
        %3347 = vmatprep.subr.mxu0 0.0
        %3348 = vmatpush1.msra.mxu0 0.0
        %3349 = vmatprep.subr.mxu0 0.0
        %3350 = vmatpush1.msra.mxu0 0.0
        %3351 = vmatprep.subr.mxu0 0.0
        %3352 = vmatpush1.msra.mxu0 0.0
        %3353 = vmatprep.subr.mxu0 0.0
        %3354 = vmatpush1.msra.mxu0 0.0
        %3355 = vmatprep.subr.mxu0 0.0
        %3356 = vmatpush1.msra.mxu0 0.0
        %3357 = vmatprep.subr.mxu0 0.0
        %3358 = vmatpush1.msra.mxu0 0.0
        %3359 = vmatprep.subr.mxu0 0.0
        %3360 = vmatpush1.msra.mxu0 0.0
        %3361 = vmatprep.subr.mxu0 0.0
        %3362 = vmatpush1.msra.mxu0 0.0
        %3363 = vmatprep.subr.mxu0 0.0
        %3364 = vmatpush1.msra.mxu0 0.0
        %3365 = vmatprep.subr.mxu0 0.0
        %3366 = vmatpush1.msra.mxu0 0.0
        %3367 = vmatprep.subr.mxu0 0.0
        %3368 = vmatpush1.msra.mxu0 0.0
        %3369 = vmatprep.subr.mxu0 0.0
        %3370 = vmatpush1.msra.mxu0 0.0
        %3371 = vmatprep.subr.mxu0 0.0
        %3372 = vmatpush1.msra.mxu0 0.0
        %3373 = vmatprep.subr.mxu0 0.0
        %3374 = vmatpush1.msra.mxu0 0.0
        %3375 = vmatprep.subr.mxu0 0.0
        %3376 = vmatpush1.msra.mxu0 0.0
        %3377 = vmatprep.subr.mxu0 0.0
        %3378 = vmatpush1.msra.mxu0 0.0
        %3379 = vmatprep.subr.mxu0 0.0
        %3380 = vmatpush1.msra.mxu0 0.0
        %3381 = vmatprep.subr.mxu0 0.0
        %3382 = vmatpush1.msra.mxu0 0.0
        %3383 = vmatprep.subr.mxu0 0.0
        %3384 = vmatpush1.msra.mxu0 0.0
        %3385 = vmatprep.subr.mxu0 0.0
        %3386 = vmatpush1.msra.mxu0 0.0
        %3387 = vmatprep.subr.mxu0 0.0
        %3388 = vmatpush1.msra.mxu0 0.0
        %3389 = vmatprep.mubr.f32.mxu0 0.0
        %3390 = vmatmul.mubr.f32.gmra.mrb[0].mxu0 %v1916
        %v3391 = vpop.f32.mrb[0].mxu0
        %v3392 = vadd.f32 0.0, %v3391
        %v3393 = vpop.f32.mrb[0].mxu0
        %3394 = vmatprep.mubr.f32.mxu0 0.0
        %3395 = vmatmul.mubr.f32.gmra.mrb[0].mxu0 %v1918
        %v3396 = vpop.f32.mrb[0].mxu0
        %v3397 = vadd.f32 0.0, %v3396
        %v3398 = vpop.f32.mrb[0].mxu0
        %3399 = vmatprep.mubr.f32.mxu0 0.0
        %3400 = vmatmul.mubr.f32.gmra.mrb[0].mxu0 %v1920
        %v3401 = vpop.f32.mrb[0].mxu0
        %v3402 = vadd.f32 0.0, %v3401
        %v3403 = vpop.f32.mrb[0].mxu0
        %3404 = vmatprep.mubr.f32.mxu0 0.0
        %3405 = vmatmul.mubr.f32.gmra.mrb[0].mxu0 %v1922
        %v3406 = vpop.f32.mrb[0].mxu0
        %v3407 = vadd.f32 0.0, %v3406
        %v3408 = vpop.f32.mrb[0].mxu0
        %3409 = vmatprep.mubr.f32.mxu0 0.0
        %3410 = vmatmul.mubr.f32.gmra.mrb[0].mxu0 %v1924
        %v3411 = vpop.f32.mrb[0].mxu0
        %v3412 = vadd.f32 0.0, %v3411
        %v3413 = vpop.f32.mrb[0].mxu0
        %3414 = vmatprep.mubr.f32.mxu0 0.0
        %3415 = vmatmul.mubr.f32.gmra.mrb[0].mxu0 %v1926
        %v3416 = vpop.f32.mrb[0].mxu0
        %v3417 = vadd.f32 0.0, %v3416
        %v3418 = vpop.f32.mrb[0].mxu0
        %3419 = vmatprep.mubr.f32.mxu0 0.0
        %3420 = vmatmul.mubr.f32.gmra.mrb[0].mxu0 %v1928
        %v3421 = vpop.f32.mrb[0].mxu0
        %v3422 = vadd.f32 0.0, %v3421
        %v3423 = vpop.f32.mrb[0].mxu0
        %3424 = vmatprep.mubr.f32.mxu0 0.0
        %3425 = vmatmul.mubr.f32.gmra.mrb[0].mxu0 %v1930
        %v3426 = vpop.f32.mrb[0].mxu0
        %v3427 = vadd.f32 0.0, %v3426
        %v3428 = vpop.f32.mrb[0].mxu0
        %3429 = vmatprep.mubr.f32.mxu0 0.0
        %3430 = vmatmul.mubr.f32.gmra.mrb[0].mxu0 %v1932
        %v3431 = vpop.f32.mrb[0].mxu0
        %v3432 = vadd.f32 0.0, %v3431
        %v3433 = vpop.f32.mrb[0].mxu0
        %3434 = vmatprep.mubr.f32.mxu0 0.0
        %3435 = vmatmul.mubr.f32.gmra.mrb[0].mxu0 %v1934
        %v3436 = vpop.f32.mrb[0].mxu0
        %v3437 = vadd.f32 0.0, %v3436
        %v3438 = vpop.f32.mrb[0].mxu0
        %3439 = vmatprep.mubr.f32.mxu0 0.0
        %3440 = vmatmul.mubr.f32.gmra.mrb[0].mxu0 %v1936
        %v3441 = vpop.f32.mrb[0].mxu0
        %v3442 = vadd.f32 0.0, %v3441
        %v3443 = vpop.f32.mrb[0].mxu0
        %3444 = vmatprep.mubr.f32.mxu0 0.0
        %3445 = vmatmul.mubr.f32.gmra.mrb[0].mxu0 %v1938
        %v3446 = vpop.f32.mrb[0].mxu0
        %v3447 = vadd.f32 0.0, %v3446
        %v3448 = vpop.f32.mrb[0].mxu0
        %3449 = vmatprep.mubr.f32.mxu0 0.0
        %3450 = vmatmul.mubr.f32.gmra.mrb[0].mxu0 %v1940
        %v3451 = vpop.f32.mrb[0].mxu0
        %v3452 = vadd.f32 0.0, %v3451
        %v3453 = vpop.f32.mrb[0].mxu0
        %3454 = vmatprep.mubr.f32.mxu0 0.0
        %3455 = vmatmul.mubr.f32.gmra.mrb[0].mxu0 %v1942
        %v3456 = vpop.f32.mrb[0].mxu0
        %v3457 = vadd.f32 0.0, %v3456
        %v3458 = vpop.f32.mrb[0].mxu0
        %3459 = vmatprep.mubr.f32.mxu0 0.0
        %3460 = vmatmul.mubr.f32.gmra.mrb[0].mxu0 %v1944
        %v3461 = vpop.f32.mrb[0].mxu0
        %v3462 = vadd.f32 0.0, %v3461
        %v3463 = vpop.f32.mrb[0].mxu0
        %3464 = vmatprep.mubr.f32.mxu0 0.0
        %3465 = vmatmul.mubr.f32.gmra.mrb[0].mxu0 %v1946
        %v3466 = vpop.f32.mrb[0].mxu0
        %v3467 = vadd.f32 0.0, %v3466
        %v3468 = vpop.f32.mrb[0].mxu0
        %3469 = vmatprep.mubr.f32.mxu0 0.0
        %3470 = vmatmul.mubr.f32.gmra.mrb[0].mxu0 %v1948
        %v3471 = vpop.f32.mrb[0].mxu0
        %v3472 = vadd.f32 0.0, %v3471
        %v3473 = vpop.f32.mrb[0].mxu0
        %3474 = vmatprep.mubr.f32.mxu0 0.0
        %3475 = vmatmul.mubr.f32.gmra.mrb[0].mxu0 %v1950
        %v3476 = vpop.f32.mrb[0].mxu0
        %v3477 = vadd.f32 0.0, %v3476
        %v3478 = vpop.f32.mrb[0].mxu0
        %3479 = vmatprep.mubr.f32.mxu0 0.0
        %3480 = vmatmul.mubr.f32.gmra.mrb[0].mxu0 %v1952
        %v3481 = vpop.f32.mrb[0].mxu0
        %v3482 = vadd.f32 0.0, %v3481
        %v3483 = vpop.f32.mrb[0].mxu0
        %3484 = vmatprep.mubr.f32.mxu0 0.0
        %3485 = vmatmul.mubr.f32.gmra.mrb[0].mxu0 %v1954
        %v3486 = vpop.f32.mrb[0].mxu0
        %v3487 = vadd.f32 0.0, %v3486
        %v3488 = vpop.f32.mrb[0].mxu0
        %3489 = vmatprep.mubr.f32.mxu0 0.0
        %3490 = vmatmul.mubr.f32.gmra.mrb[0].mxu0 %v1956
        %v3491 = vpop.f32.mrb[0].mxu0
        %v3492 = vadd.f32 0.0, %v3491
        %v3493 = vpop.f32.mrb[0].mxu0
        %3494 = vmatprep.mubr.f32.mxu0 0.0
        %3495 = vmatmul.mubr.f32.gmra.mrb[0].mxu0 %v1958
        %v3496 = vpop.f32.mrb[0].mxu0
        %v3497 = vadd.f32 0.0, %v3496
        %v3498 = vpop.f32.mrb[0].mxu0
        %3499 = vmatprep.mubr.f32.mxu0 0.0
        %3500 = vmatmul.mubr.f32.gmra.mrb[0].mxu0 %v1960
        %v3501 = vpop.f32.mrb[0].mxu0
        %v3502 = vadd.f32 0.0, %v3501
        %v3503 = vpop.f32.mrb[0].mxu0
        %3504 = vmatprep.mubr.f32.mxu0 0.0
        %3505 = vmatmul.mubr.f32.gmra.mrb[0].mxu0 %v1962
        %v3506 = vpop.f32.mrb[0].mxu0
        %v3507 = vadd.f32 0.0, %v3506
        %v3508 = vpop.f32.mrb[0].mxu0
        %3509 = vmatprep.mubr.f32.mxu0 0.0
        %3510 = vmatmul.mubr.f32.gmra.mrb[0].mxu0 %v1964
        %v3511 = vpop.f32.mrb[0].mxu0
        %v3512 = vadd.f32 0.0, %v3511
        %v3513 = vpop.f32.mrb[0].mxu0
        %3514 = vmatprep.mubr.f32.mxu0 0.0
        %3515 = vmatmul.mubr.f32.gmra.mrb[0].mxu0 %v1966
        %v3516 = vpop.f32.mrb[0].mxu0
        %v3517 = vadd.f32 0.0, %v3516
        %v3518 = vpop.f32.mrb[0].mxu0
        %3519 = vmatprep.mubr.f32.mxu0 0.0
        %3520 = vmatmul.mubr.f32.gmra.mrb[0].mxu0 %v1968
        %v3521 = vpop.f32.mrb[0].mxu0
        %v3522 = vadd.f32 0.0, %v3521
        %v3523 = vpop.f32.mrb[0].mxu0
        %3524 = vmatprep.mubr.f32.mxu0 0.0
        %3525 = vmatmul.mubr.f32.gmra.mrb[0].mxu0 %v1970
        %v3526 = vpop.f32.mrb[0].mxu0
        %v3527 = vadd.f32 0.0, %v3526
        %v3528 = vpop.f32.mrb[0].mxu0
        %3529 = vmatprep.mubr.f32.mxu0 0.0
        %3530 = vmatmul.mubr.f32.gmra.mrb[0].mxu0 %v2526
        %v3531 = vpop.f32.mrb[0].mxu0
        %v3532 = vadd.f32 0.0, %v3531
        %v3533 = vpop.f32.mrb[0].mxu0
        %3534 = vmatprep.mubr.f32.mxu0 0.0
        %3535 = vmatmul.mubr.f32.gmra.mrb[0].mxu0 %v2528
        %v3536 = vpop.f32.mrb[0].mxu0
        %v3537 = vadd.f32 0.0, %v3536
        %v3538 = vpop.f32.mrb[0].mxu0
        %3539 = vmatprep.mubr.f32.mxu0 0.0
        %3540 = vmatmul.mubr.f32.gmra.mrb[0].mxu0 %v3321
        %v3541 = vpop.f32.mrb[0].mxu0
        %v3542 = vadd.f32 0.0, %v3541
        %v3543 = vpop.f32.mrb[0].mxu0
        %3544 = vmatprep.mubr.f32.mxu0 0.0
        %3545 = vmatmul.mubr.f32.gmra.mrb[0].mxu0 %v3323
        %v3546 = vpop.f32.mrb[0].mxu0
        %v3547 = vadd.f32 0.0, %v3546
        %v3548 = vpop.f32.mrb[0].mxu0
        %3549 = vdwg.mxu0
        %v3550 = vadd.f32 %v3285, %v3392
        %v3551 = vadd.f32 %v3286, %v3397
        %v3552 = vadd.f32 %v3287, %v3402
        %v3553 = vadd.f32 %v3288, %v3407
        %v3554 = vadd.f32 %v3289, %v3412
        %v3555 = vadd.f32 %v3290, %v3417
        %v3556 = vadd.f32 %v3291, %v3422
        %v3557 = vadd.f32 %v3292, %v3427
        %v3558 = vadd.f32 %v3293, %v3432
        %v3559 = vadd.f32 %v3294, %v3437
        %v3560 = vadd.f32 %v3295, %v3442
        %v3561 = vadd.f32 %v3296, %v3447
        %v3562 = vadd.f32 %v3297, %v3452
        %v3563 = vadd.f32 %v3298, %v3457
        %v3564 = vadd.f32 %v3299, %v3462
        %v3565 = vadd.f32 %v3300, %v3467
        %v3566 = vadd.f32 %v3301, %v3472
        %v3567 = vadd.f32 %v3302, %v3477
        %v3568 = vadd.f32 %v3303, %v3482
        %v3569 = vadd.f32 %v3304, %v3487
        %v3570 = vadd.f32 %v3305, %v3492
        %v3571 = vadd.f32 %v3306, %v3497
        %v3572 = vadd.f32 %v3307, %v3502
        %v3573 = vadd.f32 %v3308, %v3507
        %v3574 = vadd.f32 %v3309, %v3512
        %v3575 = vadd.f32 %v3310, %v3517
        %v3576 = vadd.f32 %v3311, %v3522
        %v3577 = vadd.f32 %v3312, %v3527
        %v3578 = vadd.f32 %v3313, %v3532
        %v3579 = vadd.f32 %v3314, %v3537
        %v3580 = vadd.f32 %v3315, %v3542
        %v3581 = vadd.f32 %v3316, %v3547
        %v3582 = vld [vmem:[%s6 + $0xe0] sm:$0xff]
        %v3583 = vld [vmem:[%s6 + $0xe8] sm:$0xff]
        %v3584 = vld [vmem:[%s6 + $0xf0] sm:$0xff]
        %v3585 = vld [vmem:[%s6 + $0xf8] sm:$0xff]
        %v3586 = vsel %vm1179, %v1354, 0
        %v3588 = vsel %vm1179, %v1355, 0
        %3590 = vmatprep.subr.mxu0 0.0
        %3591 = vmatpush1.msra.mxu0 %v3582
        %3592 = vmatprep.subr.mxu0 0.0
        %3593 = vmatpush1.msra.mxu0 %v3583
        %3594 = vmatprep.subr.mxu0 0.0
        %3595 = vmatpush1.msra.mxu0 %v3584
        %3596 = vmatprep.subr.mxu0 0.0
        %3597 = vmatpush1.msra.mxu0 %v3585
        %3598 = vmatprep.subr.mxu0 0.0
        %3599 = vmatpush1.msra.mxu0 0.0
        %3600 = vmatprep.subr.mxu0 0.0
        %3601 = vmatpush1.msra.mxu0 0.0
        %3602 = vmatprep.subr.mxu0 0.0
        %3603 = vmatpush1.msra.mxu0 0.0
        %3604 = vmatprep.subr.mxu0 0.0
        %3605 = vmatpush1.msra.mxu0 0.0
        %3606 = vmatprep.subr.mxu0 0.0
        %3607 = vmatpush1.msra.mxu0 0.0
        %3608 = vmatprep.subr.mxu0 0.0
        %3609 = vmatpush1.msra.mxu0 0.0
        %3610 = vmatprep.subr.mxu0 0.0
        %3611 = vmatpush1.msra.mxu0 0.0
        %3612 = vmatprep.subr.mxu0 0.0
        %3613 = vmatpush1.msra.mxu0 0.0
        %3614 = vmatprep.subr.mxu0 0.0
        %3615 = vmatpush1.msra.mxu0 0.0
        %3616 = vmatprep.subr.mxu0 0.0
        %3617 = vmatpush1.msra.mxu0 0.0
        %3618 = vmatprep.subr.mxu0 0.0
        %3619 = vmatpush1.msra.mxu0 0.0
        %3620 = vmatprep.subr.mxu0 0.0
        %3621 = vmatpush1.msra.mxu0 0.0
        %3622 = vmatprep.subr.mxu0 0.0
        %3623 = vmatpush1.msra.mxu0 0.0
        %3624 = vmatprep.subr.mxu0 0.0
        %3625 = vmatpush1.msra.mxu0 0.0
        %3626 = vmatprep.subr.mxu0 0.0
        %3627 = vmatpush1.msra.mxu0 0.0
        %3628 = vmatprep.subr.mxu0 0.0
        %3629 = vmatpush1.msra.mxu0 0.0
        %3630 = vmatprep.subr.mxu0 0.0
        %3631 = vmatpush1.msra.mxu0 0.0
        %3632 = vmatprep.subr.mxu0 0.0
        %3633 = vmatpush1.msra.mxu0 0.0
        %3634 = vmatprep.subr.mxu0 0.0
        %3635 = vmatpush1.msra.mxu0 0.0
        %3636 = vmatprep.subr.mxu0 0.0
        %3637 = vmatpush1.msra.mxu0 0.0
        %3638 = vmatprep.subr.mxu0 0.0
        %3639 = vmatpush1.msra.mxu0 0.0
        %3640 = vmatprep.subr.mxu0 0.0
        %3641 = vmatpush1.msra.mxu0 0.0
        %3642 = vmatprep.subr.mxu0 0.0
        %3643 = vmatpush1.msra.mxu0 0.0
        %3644 = vmatprep.subr.mxu0 0.0
        %3645 = vmatpush1.msra.mxu0 0.0
        %3646 = vmatprep.subr.mxu0 0.0
        %3647 = vmatpush1.msra.mxu0 0.0
        %3648 = vmatprep.subr.mxu0 0.0
        %3649 = vmatpush1.msra.mxu0 0.0
        %3650 = vmatprep.subr.mxu0 0.0
        %3651 = vmatpush1.msra.mxu0 0.0
        %3652 = vmatprep.subr.mxu0 0.0
        %3653 = vmatpush1.msra.mxu0 0.0
        %3654 = vmatprep.mubr.f32.mxu0 0.0
        %3655 = vmatmul.mubr.f32.gmra.mrb[0].mxu0 %v1627
        %v3656 = vpop.f32.mrb[0].mxu0
        %v3657 = vadd.f32 0.0, %v3656
        %v3658 = vpop.f32.mrb[0].mxu0
        %3659 = vmatprep.mubr.f32.mxu0 0.0
        %3660 = vmatmul.mubr.f32.gmra.mrb[0].mxu0 %v1629
        %v3661 = vpop.f32.mrb[0].mxu0
        %v3662 = vadd.f32 0.0, %v3661
        %v3663 = vpop.f32.mrb[0].mxu0
        %3664 = vmatprep.mubr.f32.mxu0 0.0
        %3665 = vmatmul.mubr.f32.gmra.mrb[0].mxu0 %v1631
        %v3666 = vpop.f32.mrb[0].mxu0
        %v3667 = vadd.f32 0.0, %v3666
        %v3668 = vpop.f32.mrb[0].mxu0
        %3669 = vmatprep.mubr.f32.mxu0 0.0
        %3670 = vmatmul.mubr.f32.gmra.mrb[0].mxu0 %v1633
        %v3671 = vpop.f32.mrb[0].mxu0
        %v3672 = vadd.f32 0.0, %v3671
        %v3673 = vpop.f32.mrb[0].mxu0
        %3674 = vmatprep.mubr.f32.mxu0 0.0
        %3675 = vmatmul.mubr.f32.gmra.mrb[0].mxu0 %v1635
        %v3676 = vpop.f32.mrb[0].mxu0
        %v3677 = vadd.f32 0.0, %v3676
        %v3678 = vpop.f32.mrb[0].mxu0
        %3679 = vmatprep.mubr.f32.mxu0 0.0
        %3680 = vmatmul.mubr.f32.gmra.mrb[0].mxu0 %v1637
        %v3681 = vpop.f32.mrb[0].mxu0
        %v3682 = vadd.f32 0.0, %v3681
        %v3683 = vpop.f32.mrb[0].mxu0
        %3684 = vmatprep.mubr.f32.mxu0 0.0
        %3685 = vmatmul.mubr.f32.gmra.mrb[0].mxu0 %v1639
        %v3686 = vpop.f32.mrb[0].mxu0
        %v3687 = vadd.f32 0.0, %v3686
        %v3688 = vpop.f32.mrb[0].mxu0
        %3689 = vmatprep.mubr.f32.mxu0 0.0
        %3690 = vmatmul.mubr.f32.gmra.mrb[0].mxu0 %v1641
        %v3691 = vpop.f32.mrb[0].mxu0
        %v3692 = vadd.f32 0.0, %v3691
        %v3693 = vpop.f32.mrb[0].mxu0
        %3694 = vmatprep.mubr.f32.mxu0 0.0
        %3695 = vmatmul.mubr.f32.gmra.mrb[0].mxu0 %v1643
        %v3696 = vpop.f32.mrb[0].mxu0
        %v3697 = vadd.f32 0.0, %v3696
        %v3698 = vpop.f32.mrb[0].mxu0
        %3699 = vmatprep.mubr.f32.mxu0 0.0
        %3700 = vmatmul.mubr.f32.gmra.mrb[0].mxu0 %v1645
        %v3701 = vpop.f32.mrb[0].mxu0
        %v3702 = vadd.f32 0.0, %v3701
        %v3703 = vpop.f32.mrb[0].mxu0
        %3704 = vmatprep.mubr.f32.mxu0 0.0
        %3705 = vmatmul.mubr.f32.gmra.mrb[0].mxu0 %v1647
        %v3706 = vpop.f32.mrb[0].mxu0
        %v3707 = vadd.f32 0.0, %v3706
        %v3708 = vpop.f32.mrb[0].mxu0
        %3709 = vmatprep.mubr.f32.mxu0 0.0
        %3710 = vmatmul.mubr.f32.gmra.mrb[0].mxu0 %v1649
        %v3711 = vpop.f32.mrb[0].mxu0
        %v3712 = vadd.f32 0.0, %v3711
        %v3713 = vpop.f32.mrb[0].mxu0
        %3714 = vmatprep.mubr.f32.mxu0 0.0
        %3715 = vmatmul.mubr.f32.gmra.mrb[0].mxu0 %v1651
        %v3716 = vpop.f32.mrb[0].mxu0
        %v3717 = vadd.f32 0.0, %v3716
        %v3718 = vpop.f32.mrb[0].mxu0
        %3719 = vmatprep.mubr.f32.mxu0 0.0
        %3720 = vmatmul.mubr.f32.gmra.mrb[0].mxu0 %v1653
        %v3721 = vpop.f32.mrb[0].mxu0
        %v3722 = vadd.f32 0.0, %v3721
        %v3723 = vpop.f32.mrb[0].mxu0
        %3724 = vmatprep.mubr.f32.mxu0 0.0
        %3725 = vmatmul.mubr.f32.gmra.mrb[0].mxu0 %v1655
        %v3726 = vpop.f32.mrb[0].mxu0
        %v3727 = vadd.f32 0.0, %v3726
        %v3728 = vpop.f32.mrb[0].mxu0
        %3729 = vmatprep.mubr.f32.mxu0 0.0
        %3730 = vmatmul.mubr.f32.gmra.mrb[0].mxu0 %v1657
        %v3731 = vpop.f32.mrb[0].mxu0
        %v3732 = vadd.f32 0.0, %v3731
        %v3733 = vpop.f32.mrb[0].mxu0
        %3734 = vmatprep.mubr.f32.mxu0 0.0
        %3735 = vmatmul.mubr.f32.gmra.mrb[0].mxu0 %v1659
        %v3736 = vpop.f32.mrb[0].mxu0
        %v3737 = vadd.f32 0.0, %v3736
        %v3738 = vpop.f32.mrb[0].mxu0
        %3739 = vmatprep.mubr.f32.mxu0 0.0
        %3740 = vmatmul.mubr.f32.gmra.mrb[0].mxu0 %v1661
        %v3741 = vpop.f32.mrb[0].mxu0
        %v3742 = vadd.f32 0.0, %v3741
        %v3743 = vpop.f32.mrb[0].mxu0
        %3744 = vmatprep.mubr.f32.mxu0 0.0
        %3745 = vmatmul.mubr.f32.gmra.mrb[0].mxu0 %v1663
        %v3746 = vpop.f32.mrb[0].mxu0
        %v3747 = vadd.f32 0.0, %v3746
        %v3748 = vpop.f32.mrb[0].mxu0
        %3749 = vmatprep.mubr.f32.mxu0 0.0
        %3750 = vmatmul.mubr.f32.gmra.mrb[0].mxu0 %v1665
        %v3751 = vpop.f32.mrb[0].mxu0
        %v3752 = vadd.f32 0.0, %v3751
        %v3753 = vpop.f32.mrb[0].mxu0
        %3754 = vmatprep.mubr.f32.mxu0 0.0
        %3755 = vmatmul.mubr.f32.gmra.mrb[0].mxu0 %v1667
        %v3756 = vpop.f32.mrb[0].mxu0
        %v3757 = vadd.f32 0.0, %v3756
        %v3758 = vpop.f32.mrb[0].mxu0
        %3759 = vmatprep.mubr.f32.mxu0 0.0
        %3760 = vmatmul.mubr.f32.gmra.mrb[0].mxu0 %v1669
        %v3761 = vpop.f32.mrb[0].mxu0
        %v3762 = vadd.f32 0.0, %v3761
        %v3763 = vpop.f32.mrb[0].mxu0
        %3764 = vmatprep.mubr.f32.mxu0 0.0
        %3765 = vmatmul.mubr.f32.gmra.mrb[0].mxu0 %v1671
        %v3766 = vpop.f32.mrb[0].mxu0
        %v3767 = vadd.f32 0.0, %v3766
        %v3768 = vpop.f32.mrb[0].mxu0
        %3769 = vmatprep.mubr.f32.mxu0 0.0
        %3770 = vmatmul.mubr.f32.gmra.mrb[0].mxu0 %v1673
        %v3771 = vpop.f32.mrb[0].mxu0
        %v3772 = vadd.f32 0.0, %v3771
        %v3773 = vpop.f32.mrb[0].mxu0
        %3774 = vmatprep.mubr.f32.mxu0 0.0
        %3775 = vmatmul.mubr.f32.gmra.mrb[0].mxu0 %v1675
        %v3776 = vpop.f32.mrb[0].mxu0
        %v3777 = vadd.f32 0.0, %v3776
        %v3778 = vpop.f32.mrb[0].mxu0
        %3779 = vmatprep.mubr.f32.mxu0 0.0
        %3780 = vmatmul.mubr.f32.gmra.mrb[0].mxu0 %v1677
        %v3781 = vpop.f32.mrb[0].mxu0
        %v3782 = vadd.f32 0.0, %v3781
        %v3783 = vpop.f32.mrb[0].mxu0
        %3784 = vmatprep.mubr.f32.mxu0 0.0
        %3785 = vmatmul.mubr.f32.gmra.mrb[0].mxu0 %v1679
        %v3786 = vpop.f32.mrb[0].mxu0
        %v3787 = vadd.f32 0.0, %v3786
        %v3788 = vpop.f32.mrb[0].mxu0
        %3789 = vmatprep.mubr.f32.mxu0 0.0
        %3790 = vmatmul.mubr.f32.gmra.mrb[0].mxu0 %v1681
        %v3791 = vpop.f32.mrb[0].mxu0
        %v3792 = vadd.f32 0.0, %v3791
        %v3793 = vpop.f32.mrb[0].mxu0
        %3794 = vmatprep.mubr.f32.mxu0 0.0
        %3795 = vmatmul.mubr.f32.gmra.mrb[0].mxu0 %v2791
        %v3796 = vpop.f32.mrb[0].mxu0
        %v3797 = vadd.f32 0.0, %v3796
        %v3798 = vpop.f32.mrb[0].mxu0
        %3799 = vmatprep.mubr.f32.mxu0 0.0
        %3800 = vmatmul.mubr.f32.gmra.mrb[0].mxu0 %v2793
        %v3801 = vpop.f32.mrb[0].mxu0
        %v3802 = vadd.f32 0.0, %v3801
        %v3803 = vpop.f32.mrb[0].mxu0
        %3804 = vmatprep.mubr.f32.mxu0 0.0
        %3805 = vmatmul.mubr.f32.gmra.mrb[0].mxu0 %v3586
        %v3806 = vpop.f32.mrb[0].mxu0
        %v3807 = vadd.f32 0.0, %v3806
        %v3808 = vpop.f32.mrb[0].mxu0
        %3809 = vmatprep.mubr.f32.mxu0 0.0
        %3810 = vmatmul.mubr.f32.gmra.mrb[0].mxu0 %v3588
        %v3811 = vpop.f32.mrb[0].mxu0
        %v3812 = vadd.f32 0.0, %v3811
        %v3813 = vpop.f32.mrb[0].mxu0
        %3814 = vdwg.mxu0
        %v3815 = vadd.f32 %v3550, %v3657
        %v3816 = vadd.f32 %v3551, %v3662
        %v3817 = vadd.f32 %v3552, %v3667
        %v3818 = vadd.f32 %v3553, %v3672
        %v3819 = vadd.f32 %v3554, %v3677
        %v3820 = vadd.f32 %v3555, %v3682
        %v3821 = vadd.f32 %v3556, %v3687
        %v3822 = vadd.f32 %v3557, %v3692
        %v3823 = vadd.f32 %v3558, %v3697
        %v3824 = vadd.f32 %v3559, %v3702
        %v3825 = vadd.f32 %v3560, %v3707
        %v3826 = vadd.f32 %v3561, %v3712
        %v3827 = vadd.f32 %v3562, %v3717
        %v3828 = vadd.f32 %v3563, %v3722
        %v3829 = vadd.f32 %v3564, %v3727
        %v3830 = vadd.f32 %v3565, %v3732
        %v3831 = vadd.f32 %v3566, %v3737
        %v3832 = vadd.f32 %v3567, %v3742
        %v3833 = vadd.f32 %v3568, %v3747
        %v3834 = vadd.f32 %v3569, %v3752
        %v3835 = vadd.f32 %v3570, %v3757
        %v3836 = vadd.f32 %v3571, %v3762
        %v3837 = vadd.f32 %v3572, %v3767
        %v3838 = vadd.f32 %v3573, %v3772
        %v3839 = vadd.f32 %v3574, %v3777
        %v3840 = vadd.f32 %v3575, %v3782
        %v3841 = vadd.f32 %v3576, %v3787
        %v3842 = vadd.f32 %v3577, %v3792
        %v3843 = vadd.f32 %v3578, %v3797
        %v3844 = vadd.f32 %v3579, %v3802
        %v3845 = vadd.f32 %v3580, %v3807
        %v3846 = vadd.f32 %v3581, %v3812
        %v3847 = vld [vmem:[%s6 + $0x100] sm:$0xff]
        %v3848 = vld [vmem:[%s6 + $0x108] sm:$0xff]
        %v3849 = vld [vmem:[%s6 + $0x110] sm:$0xff]
        %v3850 = vld [vmem:[%s6 + $0x118] sm:$0xff]
        %v3851 = vsel %vm1179, %v1608, 0
        %v3853 = vsel %vm1179, %v1610, 0
        %3855 = vmatprep.subr.mxu0 0.0
        %3856 = vmatpush1.msra.mxu0 %v3847
        %3857 = vmatprep.subr.mxu0 0.0
        %3858 = vmatpush1.msra.mxu0 %v3848
        %3859 = vmatprep.subr.mxu0 0.0
        %3860 = vmatpush1.msra.mxu0 %v3849
        %3861 = vmatprep.subr.mxu0 0.0
        %3862 = vmatpush1.msra.mxu0 %v3850
        %3863 = vmatprep.subr.mxu0 0.0
        %3864 = vmatpush1.msra.mxu0 0.0
        %3865 = vmatprep.subr.mxu0 0.0
        %3866 = vmatpush1.msra.mxu0 0.0
        %3867 = vmatprep.subr.mxu0 0.0
        %3868 = vmatpush1.msra.mxu0 0.0
        %3869 = vmatprep.subr.mxu0 0.0
        %3870 = vmatpush1.msra.mxu0 0.0
        %3871 = vmatprep.subr.mxu0 0.0
        %3872 = vmatpush1.msra.mxu0 0.0
        %3873 = vmatprep.subr.mxu0 0.0
        %3874 = vmatpush1.msra.mxu0 0.0
        %3875 = vmatprep.subr.mxu0 0.0
        %3876 = vmatpush1.msra.mxu0 0.0
        %3877 = vmatprep.subr.mxu0 0.0
        %3878 = vmatpush1.msra.mxu0 0.0
        %3879 = vmatprep.subr.mxu0 0.0
        %3880 = vmatpush1.msra.mxu0 0.0
        %3881 = vmatprep.subr.mxu0 0.0
        %3882 = vmatpush1.msra.mxu0 0.0
        %3883 = vmatprep.subr.mxu0 0.0
        %3884 = vmatpush1.msra.mxu0 0.0
        %3885 = vmatprep.subr.mxu0 0.0
        %3886 = vmatpush1.msra.mxu0 0.0
        %3887 = vmatprep.subr.mxu0 0.0
        %3888 = vmatpush1.msra.mxu0 0.0
        %3889 = vmatprep.subr.mxu0 0.0
        %3890 = vmatpush1.msra.mxu0 0.0
        %3891 = vmatprep.subr.mxu0 0.0
        %3892 = vmatpush1.msra.mxu0 0.0
        %3893 = vmatprep.subr.mxu0 0.0
        %3894 = vmatpush1.msra.mxu0 0.0
        %3895 = vmatprep.subr.mxu0 0.0
        %3896 = vmatpush1.msra.mxu0 0.0
        %3897 = vmatprep.subr.mxu0 0.0
        %3898 = vmatpush1.msra.mxu0 0.0
        %3899 = vmatprep.subr.mxu0 0.0
        %3900 = vmatpush1.msra.mxu0 0.0
        %3901 = vmatprep.subr.mxu0 0.0
        %3902 = vmatpush1.msra.mxu0 0.0
        %3903 = vmatprep.subr.mxu0 0.0
        %3904 = vmatpush1.msra.mxu0 0.0
        %3905 = vmatprep.subr.mxu0 0.0
        %3906 = vmatpush1.msra.mxu0 0.0
        %3907 = vmatprep.subr.mxu0 0.0
        %3908 = vmatpush1.msra.mxu0 0.0
        %3909 = vmatprep.subr.mxu0 0.0
        %3910 = vmatpush1.msra.mxu0 0.0
        %3911 = vmatprep.subr.mxu0 0.0
        %3912 = vmatpush1.msra.mxu0 0.0
        %3913 = vmatprep.subr.mxu0 0.0
        %3914 = vmatpush1.msra.mxu0 0.0
        %3915 = vmatprep.subr.mxu0 0.0
        %3916 = vmatpush1.msra.mxu0 0.0
        %3917 = vmatprep.subr.mxu0 0.0
        %3918 = vmatpush1.msra.mxu0 0.0
        %3919 = vmatprep.mubr.f32.mxu0 0.0
        %3920 = vmatmul.mubr.f32.gmra.mrb[0].mxu0 %v2209
        %v3921 = vpop.f32.mrb[0].mxu0
        %v3922 = vadd.f32 0.0, %v3921
        %v3923 = vpop.f32.mrb[0].mxu0
        %3924 = vmatprep.mubr.f32.mxu0 0.0
        %3925 = vmatmul.mubr.f32.gmra.mrb[0].mxu0 %v2211
        %v3926 = vpop.f32.mrb[0].mxu0
        %v3927 = vadd.f32 0.0, %v3926
        %v3928 = vpop.f32.mrb[0].mxu0
        %3929 = vmatprep.mubr.f32.mxu0 0.0
        %3930 = vmatmul.mubr.f32.gmra.mrb[0].mxu0 %v2213
        %v3931 = vpop.f32.mrb[0].mxu0
        %v3932 = vadd.f32 0.0, %v3931
        %v3933 = vpop.f32.mrb[0].mxu0
        %3934 = vmatprep.mubr.f32.mxu0 0.0
        %3935 = vmatmul.mubr.f32.gmra.mrb[0].mxu0 %v2215
        %v3936 = vpop.f32.mrb[0].mxu0
        %v3937 = vadd.f32 0.0, %v3936
        %v3938 = vpop.f32.mrb[0].mxu0
        %3939 = vmatprep.mubr.f32.mxu0 0.0
        %3940 = vmatmul.mubr.f32.gmra.mrb[0].mxu0 %v2217
        %v3941 = vpop.f32.mrb[0].mxu0
        %v3942 = vadd.f32 0.0, %v3941
        %v3943 = vpop.f32.mrb[0].mxu0
        %3944 = vmatprep.mubr.f32.mxu0 0.0
        %3945 = vmatmul.mubr.f32.gmra.mrb[0].mxu0 %v2219
        %v3946 = vpop.f32.mrb[0].mxu0
        %v3947 = vadd.f32 0.0, %v3946
        %v3948 = vpop.f32.mrb[0].mxu0
        %3949 = vmatprep.mubr.f32.mxu0 0.0
        %3950 = vmatmul.mubr.f32.gmra.mrb[0].mxu0 %v2221
        %v3951 = vpop.f32.mrb[0].mxu0
        %v3952 = vadd.f32 0.0, %v3951
        %v3953 = vpop.f32.mrb[0].mxu0
        %3954 = vmatprep.mubr.f32.mxu0 0.0
        %3955 = vmatmul.mubr.f32.gmra.mrb[0].mxu0 %v2223
        %v3956 = vpop.f32.mrb[0].mxu0
        %v3957 = vadd.f32 0.0, %v3956
        %v3958 = vpop.f32.mrb[0].mxu0
        %3959 = vmatprep.mubr.f32.mxu0 0.0
        %3960 = vmatmul.mubr.f32.gmra.mrb[0].mxu0 %v2225
        %v3961 = vpop.f32.mrb[0].mxu0
        %v3962 = vadd.f32 0.0, %v3961
        %v3963 = vpop.f32.mrb[0].mxu0
        %3964 = vmatprep.mubr.f32.mxu0 0.0
        %3965 = vmatmul.mubr.f32.gmra.mrb[0].mxu0 %v2227
        %v3966 = vpop.f32.mrb[0].mxu0
        %v3967 = vadd.f32 0.0, %v3966
        %v3968 = vpop.f32.mrb[0].mxu0
        %3969 = vmatprep.mubr.f32.mxu0 0.0
        %3970 = vmatmul.mubr.f32.gmra.mrb[0].mxu0 %v2229
        %v3971 = vpop.f32.mrb[0].mxu0
        %v3972 = vadd.f32 0.0, %v3971
        %v3973 = vpop.f32.mrb[0].mxu0
        %3974 = vmatprep.mubr.f32.mxu0 0.0
        %3975 = vmatmul.mubr.f32.gmra.mrb[0].mxu0 %v2231
        %v3976 = vpop.f32.mrb[0].mxu0
        %v3977 = vadd.f32 0.0, %v3976
        %v3978 = vpop.f32.mrb[0].mxu0
        %3979 = vmatprep.mubr.f32.mxu0 0.0
        %3980 = vmatmul.mubr.f32.gmra.mrb[0].mxu0 %v2233
        %v3981 = vpop.f32.mrb[0].mxu0
        %v3982 = vadd.f32 0.0, %v3981
        %v3983 = vpop.f32.mrb[0].mxu0
        %3984 = vmatprep.mubr.f32.mxu0 0.0
        %3985 = vmatmul.mubr.f32.gmra.mrb[0].mxu0 %v2235
        %v3986 = vpop.f32.mrb[0].mxu0
        %v3987 = vadd.f32 0.0, %v3986
        %v3988 = vpop.f32.mrb[0].mxu0
        %3989 = vmatprep.mubr.f32.mxu0 0.0
        %3990 = vmatmul.mubr.f32.gmra.mrb[0].mxu0 %v2237
        %v3991 = vpop.f32.mrb[0].mxu0
        %v3992 = vadd.f32 0.0, %v3991
        %v3993 = vpop.f32.mrb[0].mxu0
        %3994 = vmatprep.mubr.f32.mxu0 0.0
        %3995 = vmatmul.mubr.f32.gmra.mrb[0].mxu0 %v2239
        %v3996 = vpop.f32.mrb[0].mxu0
        %v3997 = vadd.f32 0.0, %v3996
        %v3998 = vpop.f32.mrb[0].mxu0
        %3999 = vmatprep.mubr.f32.mxu0 0.0
        %4000 = vmatmul.mubr.f32.gmra.mrb[0].mxu0 %v2241
        %v4001 = vpop.f32.mrb[0].mxu0
        %v4002 = vadd.f32 0.0, %v4001
        %v4003 = vpop.f32.mrb[0].mxu0
        %4004 = vmatprep.mubr.f32.mxu0 0.0
        %4005 = vmatmul.mubr.f32.gmra.mrb[0].mxu0 %v2243
        %v4006 = vpop.f32.mrb[0].mxu0
        %v4007 = vadd.f32 0.0, %v4006
        %v4008 = vpop.f32.mrb[0].mxu0
        %4009 = vmatprep.mubr.f32.mxu0 0.0
        %4010 = vmatmul.mubr.f32.gmra.mrb[0].mxu0 %v2245
        %v4011 = vpop.f32.mrb[0].mxu0
        %v4012 = vadd.f32 0.0, %v4011
        %v4013 = vpop.f32.mrb[0].mxu0
        %4014 = vmatprep.mubr.f32.mxu0 0.0
        %4015 = vmatmul.mubr.f32.gmra.mrb[0].mxu0 %v2247
        %v4016 = vpop.f32.mrb[0].mxu0
        %v4017 = vadd.f32 0.0, %v4016
        %v4018 = vpop.f32.mrb[0].mxu0
        %4019 = vmatprep.mubr.f32.mxu0 0.0
        %4020 = vmatmul.mubr.f32.gmra.mrb[0].mxu0 %v2249
        %v4021 = vpop.f32.mrb[0].mxu0
        %v4022 = vadd.f32 0.0, %v4021
        %v4023 = vpop.f32.mrb[0].mxu0
        %4024 = vmatprep.mubr.f32.mxu0 0.0
        %4025 = vmatmul.mubr.f32.gmra.mrb[0].mxu0 %v2251
        %v4026 = vpop.f32.mrb[0].mxu0
        %v4027 = vadd.f32 0.0, %v4026
        %v4028 = vpop.f32.mrb[0].mxu0
        %4029 = vmatprep.mubr.f32.mxu0 0.0
        %4030 = vmatmul.mubr.f32.gmra.mrb[0].mxu0 %v2253
        %v4031 = vpop.f32.mrb[0].mxu0
        %v4032 = vadd.f32 0.0, %v4031
        %v4033 = vpop.f32.mrb[0].mxu0
        %4034 = vmatprep.mubr.f32.mxu0 0.0
        %4035 = vmatmul.mubr.f32.gmra.mrb[0].mxu0 %v2255
        %v4036 = vpop.f32.mrb[0].mxu0
        %v4037 = vadd.f32 0.0, %v4036
        %v4038 = vpop.f32.mrb[0].mxu0
        %4039 = vmatprep.mubr.f32.mxu0 0.0
        %4040 = vmatmul.mubr.f32.gmra.mrb[0].mxu0 %v2257
        %v4041 = vpop.f32.mrb[0].mxu0
        %v4042 = vadd.f32 0.0, %v4041
        %v4043 = vpop.f32.mrb[0].mxu0
        %4044 = vmatprep.mubr.f32.mxu0 0.0
        %4045 = vmatmul.mubr.f32.gmra.mrb[0].mxu0 %v2259
        %v4046 = vpop.f32.mrb[0].mxu0
        %v4047 = vadd.f32 0.0, %v4046
        %v4048 = vpop.f32.mrb[0].mxu0
        %4049 = vmatprep.mubr.f32.mxu0 0.0
        %4050 = vmatmul.mubr.f32.gmra.mrb[0].mxu0 %v2261
        %v4051 = vpop.f32.mrb[0].mxu0
        %v4052 = vadd.f32 0.0, %v4051
        %v4053 = vpop.f32.mrb[0].mxu0
        %4054 = vmatprep.mubr.f32.mxu0 0.0
        %4055 = vmatmul.mubr.f32.gmra.mrb[0].mxu0 %v2263
        %v4056 = vpop.f32.mrb[0].mxu0
        %v4057 = vadd.f32 0.0, %v4056
        %v4058 = vpop.f32.mrb[0].mxu0
        %4059 = vmatprep.mubr.f32.mxu0 0.0
        %4060 = vmatmul.mubr.f32.gmra.mrb[0].mxu0 %v3056
        %v4061 = vpop.f32.mrb[0].mxu0
        %v4062 = vadd.f32 0.0, %v4061
        %v4063 = vpop.f32.mrb[0].mxu0
        %4064 = vmatprep.mubr.f32.mxu0 0.0
        %4065 = vmatmul.mubr.f32.gmra.mrb[0].mxu0 %v3058
        %v4066 = vpop.f32.mrb[0].mxu0
        %v4067 = vadd.f32 0.0, %v4066
        %v4068 = vpop.f32.mrb[0].mxu0
        %4069 = vmatprep.mubr.f32.mxu0 0.0
        %4070 = vmatmul.mubr.f32.gmra.mrb[0].mxu0 %v3851
        %v4071 = vpop.f32.mrb[0].mxu0
        %v4072 = vadd.f32 0.0, %v4071
        %v4073 = vpop.f32.mrb[0].mxu0
        %4074 = vmatprep.mubr.f32.mxu0 0.0
        %4075 = vmatmul.mubr.f32.gmra.mrb[0].mxu0 %v3853
        %v4076 = vpop.f32.mrb[0].mxu0
        %v4077 = vadd.f32 0.0, %v4076
        %v4078 = vpop.f32.mrb[0].mxu0
        %4079 = vdwg.mxu0
        %v4080 = vadd.f32 %v3815, %v3922
        %v4081 = vadd.f32 %v3816, %v3927
        %v4082 = vadd.f32 %v3817, %v3932
        %v4083 = vadd.f32 %v3818, %v3937
        %v4084 = vadd.f32 %v3819, %v3942
        %v4085 = vadd.f32 %v3820, %v3947
        %v4086 = vadd.f32 %v3821, %v3952
        %v4087 = vadd.f32 %v3822, %v3957
        %v4088 = vadd.f32 %v3823, %v3962
        %v4089 = vadd.f32 %v3824, %v3967
        %v4090 = vadd.f32 %v3825, %v3972
        %v4091 = vadd.f32 %v3826, %v3977
        %v4092 = vadd.f32 %v3827, %v3982
        %v4093 = vadd.f32 %v3828, %v3987
        %v4094 = vadd.f32 %v3829, %v3992
        %v4095 = vadd.f32 %v3830, %v3997
        %v4096 = vadd.f32 %v3831, %v4002
        %v4097 = vadd.f32 %v3832, %v4007
        %v4098 = vadd.f32 %v3833, %v4012
        %v4099 = vadd.f32 %v3834, %v4017
        %v4100 = vadd.f32 %v3835, %v4022
        %v4101 = vadd.f32 %v3836, %v4027
        %v4102 = vadd.f32 %v3837, %v4032
        %v4103 = vadd.f32 %v3838, %v4037
        %v4104 = vadd.f32 %v3839, %v4042
        %v4105 = vadd.f32 %v3840, %v4047
        %v4106 = vadd.f32 %v3841, %v4052
        %v4107 = vadd.f32 %v3842, %v4057
        %v4108 = vadd.f32 %v3843, %v4062
        %v4109 = vadd.f32 %v3844, %v4067
        %v4110 = vadd.f32 %v3845, %v4072
        %v4111 = vadd.f32 %v3846, %v4077
        %v4112 = vld [vmem:[%s7] sm:$0x1]
        %v4114 = vlaneseq
        %v4115 = vshrl.u32 %v4114, 7
        %v4116 = vsub.s32 0, %v4115
        %v4117 = vrot.slane %v4112, %v4116
        %v4119 = vmul.f32 %v4080, %v4117
        %v4120 = vmul.f32 %v4081, %v4117
        %v4121 = vmul.f32 %v4082, %v4117
        %v4122 = vmul.f32 %v4083, %v4117
        %v4123 = vmul.f32 %v4084, %v4117
        %v4124 = vmul.f32 %v4085, %v4117
        %v4125 = vmul.f32 %v4086, %v4117
        %v4126 = vmul.f32 %v4087, %v4117
        %v4127 = vmul.f32 %v4088, %v4117
        %v4128 = vmul.f32 %v4089, %v4117
        %v4129 = vmul.f32 %v4090, %v4117
        %v4130 = vmul.f32 %v4091, %v4117
        %v4131 = vmul.f32 %v4092, %v4117
        %v4132 = vmul.f32 %v4093, %v4117
        %v4133 = vmul.f32 %v4094, %v4117
        %v4134 = vmul.f32 %v4095, %v4117
        %v4135 = vmul.f32 %v4096, %v4117
        %v4136 = vmul.f32 %v4097, %v4117
        %v4137 = vmul.f32 %v4098, %v4117
        %v4138 = vmul.f32 %v4099, %v4117
        %v4139 = vmul.f32 %v4100, %v4117
        %v4140 = vmul.f32 %v4101, %v4117
        %v4141 = vmul.f32 %v4102, %v4117
        %v4142 = vmul.f32 %v4103, %v4117
        %v4143 = vmul.f32 %v4104, %v4117
        %v4144 = vmul.f32 %v4105, %v4117
        %v4145 = vmul.f32 %v4106, %v4117
        %v4146 = vmul.f32 %v4107, %v4117
        %v4147 = vmul.f32 %v4108, %v4117
        %v4148 = vmul.f32 %v4109, %v4117
        %v4149 = vmul.f32 %v4110, %v4117
        %v4150 = vmul.f32 %v4111, %v4117
        %v4151 = vld [vmem:[%s8] sm:$0x1]
        %v4153 = vlaneseq
        %v4154 = vshrl.u32 %v4153, 7
        %v4155 = vsub.s32 0, %v4154
        %v4156 = vrot.slane %v4151, %v4155
        %v4158 = vadd.f32 %v4119, %v4156
        %v4159 = vadd.f32 %v4120, %v4156
        %v4160 = vadd.f32 %v4121, %v4156
        %v4161 = vadd.f32 %v4122, %v4156
        %v4162 = vadd.f32 %v4123, %v4156
        %v4163 = vadd.f32 %v4124, %v4156
        %v4164 = vadd.f32 %v4125, %v4156
        %v4165 = vadd.f32 %v4126, %v4156
        %v4166 = vadd.f32 %v4127, %v4156
        %v4167 = vadd.f32 %v4128, %v4156
        %v4168 = vadd.f32 %v4129, %v4156
        %v4169 = vadd.f32 %v4130, %v4156
        %v4170 = vadd.f32 %v4131, %v4156
        %v4171 = vadd.f32 %v4132, %v4156
        %v4172 = vadd.f32 %v4133, %v4156
        %v4173 = vadd.f32 %v4134, %v4156
        %v4174 = vadd.f32 %v4135, %v4156
        %v4175 = vadd.f32 %v4136, %v4156
        %v4176 = vadd.f32 %v4137, %v4156
        %v4177 = vadd.f32 %v4138, %v4156
        %v4178 = vadd.f32 %v4139, %v4156
        %v4179 = vadd.f32 %v4140, %v4156
        %v4180 = vadd.f32 %v4141, %v4156
        %v4181 = vadd.f32 %v4142, %v4156
        %v4182 = vadd.f32 %v4143, %v4156
        %v4183 = vadd.f32 %v4144, %v4156
        %v4184 = vadd.f32 %v4145, %v4156
        %v4185 = vadd.f32 %v4146, %v4156
        %v4186 = vadd.f32 %v4147, %v4156
        %v4187 = vadd.f32 %v4148, %v4156
        %v4188 = vadd.f32 %v4149, %v4156
        %v4189 = vadd.f32 %v4150, %v4156
        %v4190 = vmax.f32 %v4158, 0.0
        %v4191 = vmax.f32 %v4159, 0.0
        %v4192 = vmax.f32 %v4160, 0.0
        %v4193 = vmax.f32 %v4161, 0.0
        %v4194 = vmax.f32 %v4162, 0.0
        %v4195 = vmax.f32 %v4163, 0.0
        %v4196 = vmax.f32 %v4164, 0.0
        %v4197 = vmax.f32 %v4165, 0.0
        %v4198 = vmax.f32 %v4166, 0.0
        %v4199 = vmax.f32 %v4167, 0.0
        %v4200 = vmax.f32 %v4168, 0.0
        %v4201 = vmax.f32 %v4169, 0.0
        %v4202 = vmax.f32 %v4170, 0.0
        %v4203 = vmax.f32 %v4171, 0.0
        %v4204 = vmax.f32 %v4172, 0.0
        %v4205 = vmax.f32 %v4173, 0.0
        %v4206 = vmax.f32 %v4174, 0.0
        %v4207 = vmax.f32 %v4175, 0.0
        %v4208 = vmax.f32 %v4176, 0.0
        %v4209 = vmax.f32 %v4177, 0.0
        %v4210 = vmax.f32 %v4178, 0.0
        %v4211 = vmax.f32 %v4179, 0.0
        %v4212 = vmax.f32 %v4180, 0.0
        %v4213 = vmax.f32 %v4181, 0.0
        %v4214 = vmax.f32 %v4182, 0.0
        %v4215 = vmax.f32 %v4183, 0.0
        %v4216 = vmax.f32 %v4184, 0.0
        %v4217 = vmax.f32 %v4185, 0.0
        %v4218 = vmax.f32 %v4186, 0.0
        %v4219 = vmax.f32 %v4187, 0.0
        %v4220 = vmax.f32 %v4188, 0.0
        %v4221 = vmax.f32 %v4189, 0.0
        %4222 = vst.msk [vmem:[%s340] sm:$0xff] %vm1179, %v4190
        %4223 = vst.msk [vmem:[%s340 + $0x8] sm:$0xff] %vm1179, %v4191
        %4224 = vst.msk [vmem:[%s340 + $0x10] sm:$0xff] %vm1179, %v4192
        %4225 = vst.msk [vmem:[%s340 + $0x18] sm:$0xff] %vm1179, %v4193
        %4226 = vst.msk [vmem:[%s340 + $0x20] sm:$0xff] %vm1179, %v4194
        %4227 = vst.msk [vmem:[%s340 + $0x28] sm:$0xff] %vm1179, %v4195
        %4228 = vst.msk [vmem:[%s340 + $0x30] sm:$0xff] %vm1179, %v4196
        %4229 = vst.msk [vmem:[%s340 + $0x38] sm:$0xff] %vm1179, %v4197
        %4230 = vst.msk [vmem:[%s340 + $0x40] sm:$0xff] %vm1179, %v4198
        %4231 = vst.msk [vmem:[%s340 + $0x48] sm:$0xff] %vm1179, %v4199
        %4232 = vst.msk [vmem:[%s340 + $0x50] sm:$0xff] %vm1179, %v4200
        %4233 = vst.msk [vmem:[%s340 + $0x58] sm:$0xff] %vm1179, %v4201
        %4234 = vst.msk [vmem:[%s340 + $0x60] sm:$0xff] %vm1179, %v4202
        %4235 = vst.msk [vmem:[%s340 + $0x68] sm:$0xff] %vm1179, %v4203
        %4236 = vst.msk [vmem:[%s340 + $0x70] sm:$0xff] %vm1179, %v4204
        %4237 = vst.msk [vmem:[%s340 + $0x78] sm:$0xff] %vm1179, %v4205
        %4238 = vst.msk [vmem:[%s340 + $0x80] sm:$0xff] %vm1179, %v4206
        %4239 = vst.msk [vmem:[%s340 + $0x88] sm:$0xff] %vm1179, %v4207
        %4240 = vst.msk [vmem:[%s340 + $0x90] sm:$0xff] %vm1179, %v4208
        %4241 = vst.msk [vmem:[%s340 + $0x98] sm:$0xff] %vm1179, %v4209
        %4242 = vst.msk [vmem:[%s340 + $0xa0] sm:$0xff] %vm1179, %v4210
        %4243 = vst.msk [vmem:[%s340 + $0xa8] sm:$0xff] %vm1179, %v4211
        %4244 = vst.msk [vmem:[%s340 + $0xb0] sm:$0xff] %vm1179, %v4212
        %4245 = vst.msk [vmem:[%s340 + $0xb8] sm:$0xff] %vm1179, %v4213
        %4246 = vst.msk [vmem:[%s340 + $0xc0] sm:$0xff] %vm1179, %v4214
        %4247 = vst.msk [vmem:[%s340 + $0xc8] sm:$0xff] %vm1179, %v4215
        %4248 = vst.msk [vmem:[%s340 + $0xd0] sm:$0xff] %vm1179, %v4216
        %4249 = vst.msk [vmem:[%s340 + $0xd8] sm:$0xff] %vm1179, %v4217
        %4250 = vst.msk [vmem:[%s340 + $0xe0] sm:$0xff] %vm1179, %v4218
        %4251 = vst.msk [vmem:[%s340 + $0xe8] sm:$0xff] %vm1179, %v4219
        %4252 = vst.msk [vmem:[%s340 + $0xf0] sm:$0xff] %vm1179, %v4220
        %4253 = vst.msk [vmem:[%s340 + $0xf8] sm:$0xff] %vm1179, %v4221
        %s4254 = sand.u32 %s230, 1
        %s4255 = scalar_lea.sflag [#allocation4], %s4254
        %s4256 = sand.u32 %s230, 1
        %s4257 = smul.addr %s4256, 256
        %s4258 = scalar_lea.vmem [#allocation3], %s4257
        // Predicated region
        $region57: #{upsample_forward.1} parent=55 // pred_check
          %p4259 = pneg %p240
        $region58: #{upsample_forward.1} parent=55 // pred_check_branch
          %4261 = sbr.rel (%p4259) target = $region60
        $region59: #{upsample_forward.1} parent=55 // pred_region
          %s4263 = ssub.s32 4096, 4096
          %4264 = vsyncadd %s4255, %s4263
          %s4265 = smul.addr %s23, 32
          %s4266 = smul.addr %s4265, 128
          %s4267 = scalar_lea.hbm %s9, %s4266
          %s4268 = sshll.u32 %s4258, 4
          %s4269 = int_to_ptr.vmem [resolvable:$true] %s4268
          %4274 = dma.vmem_to_hbm [thread:$0]  %s4269, 4096, %s4267, %s4255, 128, 128, 8
        $region60: #{upsample_forward.1} parent=55 // pred_fallthru
          _
      $region56: #{upsample_forward.1} parent=5 // pred_fallthru
        _
      %p4275 = scmp.le.s32.totalorder 2, %s18
      // Predicated region
      $region61: #{upsample_forward.1} parent=5 // pred_check
        %p4276 = pneg %p4275
      $region62: #{upsample_forward.1} parent=5 // pred_check_branch
        %4278 = sbr.rel (%p4276) target = $region64
      $region63: #{upsample_forward.1} parent=5 // pred_region
        %s4279 = ssub.s32 %s18, 2
        // Predicated region
        $region65: #{upsample_forward.1} parent=63 // pred_check
          %p4280 = pneg %p246
        $region66: #{upsample_forward.1} parent=63 // pred_check_branch
          %4282 = sbr.rel (%p4280) target = $region68
        $region67: #{upsample_forward.1} parent=63 // pred_region
          %s4283 = sand.u32 %s231, 1
          %s4284 = scalar_lea.sflag [#allocation4], %s4283
          %s4285 = sand.u32 %s231, 1
          %s4286 = smul.addr %s4285, 256
          %s4287 = scalar_lea.vmem [#allocation3], %s4286
          %4288 = dma.done %s4284, 4096
        $region68: #{upsample_forward.1} parent=63 // pred_fallthru
          _
      $region64: #{upsample_forward.1} parent=5 // pred_fallthru
        _
    $region6: #{upsample_forward.1} parent=1 // loop_footer
      %s22 = sadd.s32 1, %s18
    $region7: #{upsample_forward.1} parent=1 // loop_footer_branch
      %17 = sbr.rel target = $region3
    $region8: #{upsample_forward.1} parent=1 // loop_exit
      _
    %4289 = vsyncpa [#allocation4], 1
    %s4290 = scalar_lea.sflag [#allocation4], 1
    %4291 = vsyncpa %s4290, 1

</llo_original>
